<compile_context>
chip_gen: v6e
topology: v6e:2x2x1
jax: 0.10.0
libtpu: 0.0.40
codegen_flags: <defaults>
</compile_context>

<pallas_src>
import functools

import numpy as np
import jax
import jax.numpy as jnp
from jax import lax
from jax.experimental import pallas as pl
from jax.experimental.pallas import tpu as pltpu  # noqa: F401  (TPU backend; defaults suffice here)

EPS = 1e-5  # PyTorch BatchNorm default eps


# --------------------------- parameter preparation (one-time, outside jit) ---------------------------


def _band_matrices(w_oihw, width):
    """PyTorch (Cout,Cin,3,3) conv weight -> (3, width*Cin, width*Cout) banded matrices.

    band[kh][w_in*Cin+ci, w_out*Cout+co] = w[co, ci, kh, w_in - w_out + 1]  (stride=1, pad=1),
    so the conv over the w axis becomes one lane-dense matmul per kernel row kh.
    """
    cout, cin, kh_sz, kw_sz = w_oihw.shape
    bands = []
    for kh in range(kh_sz):
        b = jnp.zeros((width * cin, width * cout), jnp.float32)
        for kw in range(kw_sz):
            # D[w_in, w_out] = 1 iff w_in = w_out + kw - 1 (w padding handled by band truncation)
            diag = np.eye(width, k=1 - kw, dtype=np.float32)
            b = b + jnp.kron(jnp.asarray(diag), w_oihw[:, :, kh, kw].T)
        bands.append(b)
    return jnp.stack(bands, axis=0)


def _row_shift_mats(batch, height):
    """(2, R, R) selectors: [0] reads row h-1 (zero at h=0), [1] reads row h+1 (zero at h=H-1)."""
    rows = batch * height
    r = np.arange(rows)
    up = np.eye(rows, k=-1, dtype=np.float32) * ((r % height) != 0)[:, None]
    dn = np.eye(rows, k=1, dtype=np.float32) * ((r % height) != height - 1)[:, None]
    return jnp.asarray(np.stack([up, dn], axis=0))


def _pool_row_sel(batch, height):
    """(2, R/2, R) selectors picking even / odd h rows (2x2 maxpool, h direction)."""
    eye = np.eye(batch * height, dtype=np.float32)
    return jnp.asarray(np.stack([eye[0::2], eye[1::2]], axis=0))


def _pool_lane_sel(width, chans):
    """(2, W*C, (W/2)*C) selectors picking even / odd w lane-groups (2x2 maxpool, w direction)."""
    lanes, half = width * chans, (width // 2) * chans
    idx = np.arange(half)
    src = (idx // chans) * (2 * chans) + (idx % chans)
    sel = np.zeros((2, lanes, half), np.float32)
    sel[0, src, idx] = 1.0
    sel[1, src + chans, idx] = 1.0
    return jnp.asarray(sel)


def _chan_sel(width, chans):
    """G (W*C, C): sums the W lane-groups per channel.  Gt (C, W*C): spreads per-channel rows to lanes."""
    g = np.tile(np.eye(chans, dtype=np.float32), (width, 1))
    return jnp.asarray(g), jnp.asarray(np.ascontiguousarray(g.T))


def prepare_params(params, *, batch, image_channels, n_filters, image_size=32):
    """Build the flat tuple of constant kernel operands (order matches _forward_kernel)."""
    cins = [image_channels, n_filters[0], n_filters[1], n_filters[2]]
    couts = list(n_filters)
    sizes = [image_size, image_size // 2, image_size // 4, image_size // 4]
    pooled = [True, True, False, True]

    prep = []
    for i in range(4):
        cin, cout, s = cins[i], couts[i], sizes[i]
        prep.append(_band_matrices(params[f"conv{i+1}_w"], s))                        # band  (3, s*cin, s*cout)
        prep.append(jnp.tile(params[f"conv{i+1}_b"], s).reshape(1, s * cout))         # per-lane bias (1, s*cout)
        prep.append(jnp.stack([params[f"bn{i+1}_g"], params[f"bn{i+1}_b"]], axis=0))  # (2, cout) gamma/beta
        g, gt = _chan_sel(s, cout)
        prep.append(g)                                                                # (s*cout, cout)
        prep.append(gt)                                                               # (cout, s*cout)
        prep.append(_row_shift_mats(batch, s))                                        # (2, R, R)
        if pooled[i]:
            prep.append(_pool_row_sel(batch, s))                                      # (2, R/2, R)
            prep.append(_pool_lane_sel(s, cout))                                      # (2, s*cout, s*cout/2)

    # Classifier: fold torch's (C,H,W)-flatten order into the fc1 weight at prep time.
    c_f, s_f = n_filters[3], image_size // 8
    w1 = params["fc1_w"]                                                              # (64, C*S*S) torch layout
    w1p = jnp.transpose(w1.reshape(64, c_f, s_f, s_f), (2, 3, 1, 0)).reshape(s_f, s_f * c_f, 64)
    sh = np.zeros((s_f, batch, batch * s_f), np.float32)                              # per-h row selectors
    for h in range(s_f):
        for n in range(batch):
            sh[h, n, n * s_f + h] = 1.0
    prep.append(jnp.asarray(sh))                                                      # (4, N, N*4)
    prep.append(w1p)                                                                  # (4, s_f*c_f, 64)
    prep.append(params["fc1_b"].reshape(1, -1))                                       # (1, 64)
    prep.append(jnp.stack([params["bn5_g"], params["bn5_b"]], axis=0))                # (2, 64)
    prep.append(params["fc2_w"].T)                                                    # (64, num_classes)
    prep.append(params["fc2_b"].reshape(1, -1))                                       # (1, num_classes)
    return tuple(prep)


# ------------------------------------ the single fused kernel ------------------------------------


def _forward_kernel(*refs):
    (x_ref,
     band1, blane1, gb1, g1, gt1, ss1, sr1, sw1,
     band2, blane2, gb2, g2, gt2, ss2, sr2, sw2,
     band3, blane3, gb3, g3, gt3, ss3,
     band4, blane4, gb4, g4, gt4, ss4, sr4, sw4,
     shc, w1p, b1, gb5, w2, b2,
     out_ref) = refs

    def dot(a, b):
        return jnp.dot(a, b, preferred_element_type=jnp.float32)

    def conv_relu_bn(a, band, blane, gb, g, gt, ss):
        # a: (N*H, W*Cin) lane-dense slab (rows=(n,h), lanes=(w,c)) -> (N*H, W*Cout)
        acc = dot(a, band[1])                           # kh = 1 (center row)
        acc = acc + dot(dot(ss[0], a), band[0])         # kh = 0 (reads row h-1, zero-padded)
        acc = acc + dot(dot(ss[1], a), band[2])         # kh = 2 (reads row h+1, zero-padded)
        y = jnp.maximum(acc + blane[...], 0.0)          # conv bias + ReLU
        gbv = gb[...]                                   # (2, C): [gamma; beta]
        gv, gtv = g[...], gt[...]
        chans = gbv.shape[1]
        inv_cnt = 1.0 / (y.shape[0] * (y.shape[1] // chans))     # 1 / (N*H*W) per channel
        mean_c = dot(jnp.sum(y, axis=0, keepdims=True), gv) * inv_cnt       # (1, C)
        d = y - dot(mean_c, gtv)
        var_c = dot(jnp.sum(d * d, axis=0, keepdims=True), gv) * inv_cnt    # biased var (train mode)
        scale_c = gbv[0:1, :] * lax.rsqrt(var_c + EPS)
        return d * dot(scale_c, gtv) + dot(gbv[1:2, :], gtv)

    def maxpool2x2(y, sr, sw):
        t = jnp.maximum(dot(sr[0], y), dot(sr[1], y))            # pool over h (rows)
        return jnp.maximum(dot(t, sw[0]), dot(t, sw[1]))         # pool over w (lane groups)

    a = x_ref[...]                                               # (N*32, 32*3)
    a = conv_relu_bn(a, band1, blane1, gb1, g1, gt1, ss1)        # (N*32, 32*8)
    a = maxpool2x2(a, sr1, sw1)                                  # (N*16, 16*8)
    a = conv_relu_bn(a, band2, blane2, gb2, g2, gt2, ss2)        # (N*16, 16*16)
    a = maxpool2x2(a, sr2, sw2)                                  # (N*8,  8*16)
    a = conv_relu_bn(a, band3, blane3, gb3, g3, gt3, ss3)        # (N*8,  8*32)
    a = conv_relu_bn(a, band4, blane4, gb4, g4, gt4, ss4)        # (N*8,  8*32)
    a = maxpool2x2(a, sr4, sw4)                                  # (N*4,  4*32)

    # Classifier: fc1 (torch (C,H,W)-flatten order pre-folded into w1p) + ReLU + BN1d + fc2.
    h = dot(dot(shc[0], a), w1p[0])
    for i in range(1, shc.shape[0]):
        h = h + dot(dot(shc[i], a), w1p[i])
    h = jnp.maximum(h + b1[...], 0.0)                            # (N, 64)
    inv_n = 1.0 / h.shape[0]
    mean = jnp.sum(h, axis=0, keepdims=True) * inv_n
    d = h - mean
    var = jnp.sum(d * d, axis=0, keepdims=True) * inv_n
    gb5v = gb5[...]
    hn = d * (gb5v[0:1, :] * lax.rsqrt(var + EPS)) + gb5v[1:2, :]
    out_ref[...] = dot(hn, w2[...]) + b2[...]


# ----------------------------------------- JAX wrapper -----------------------------------------


def model_forward(prep, x_nchw):
    n, c, h, w = x_nchw.shape
    # NCHW -> lane-dense slab: rows (n, h), lanes (w, c).  The only XLA glue in the hot path.
    x_slab = jnp.transpose(x_nchw.astype(jnp.float32), (0, 2, 3, 1)).reshape(n * h, w * c)
    num_classes = prep[-1].shape[1]
    out = pl.pallas_call(
        _forward_kernel,
        out_shape=jax.ShapeDtypeStruct((n, num_classes), jnp.float32),
    )(x_slab, *prep)
    # TODO(synk): BatchNorm running_mean/running_var buffer updates are a training-time side
    # effect that does not change the forward output; not materialized here.
    # TODO(synk): for large batches add a leading grid axis over batch with
    # dimension_semantics=("parallel",) so v7x's second TensorCore is used; at N=2 it is pure overhead.
    # TODO(synk): optional bf16 matmul operands (v5e MXU speedup) are omitted to keep f32 fidelity.
    assert out.shape == (n, num_classes)
    return out


def init_params(key, image_channels, n_filters, ksize, num_classes):
    """Random parameters in PyTorch layouts (conv OIHW, linear (out,in))."""
    p = {}
    chans = [image_channels] + list(n_filters)
    keys = iter(jax.random.split(key, 32))
    for i in range(4):
        cin, cout = chans[i], chans[i + 1]
        fan_in = cin * ksize * ksize
        p[f"conv{i+1}_w"] = jax.random.normal(
            next(keys), (cout, cin, ksize, ksize), jnp.float32) * (2.0 / fan_in) ** 0.5
        p[f"conv{i+1}_b"] = 0.1 * jax.random.normal(next(keys), (cout,), jnp.float32)
        p[f"bn{i+1}_g"] = 1.0 + 0.1 * jax.random.normal(next(keys), (cout,), jnp.float32)
        p[f"bn{i+1}_b"] = 0.1 * jax.random.normal(next(keys), (cout,), jnp.float32)
    feat = n_filters[3] * 4 * 4
    p["fc1_w"] = jax.random.normal(next(keys), (64, feat), jnp.float32) * (2.0 / feat) ** 0.5
    p["fc1_b"] = 0.1 * jax.random.normal(next(keys), (64,), jnp.float32)
    p["bn5_g"] = 1.0 + 0.1 * jax.random.normal(next(keys), (64,), jnp.float32)
    p["bn5_b"] = 0.1 * jax.random.normal(next(keys), (64,), jnp.float32)
    p["fc2_w"] = jax.random.normal(next(keys), (num_classes, 64), jnp.float32) * (1.0 / 64) ** 0.5
    p["fc2_b"] = 0.1 * jax.random.normal(next(keys), (num_classes,), jnp.float32)
    return p


if __name__ == "__main__":
    image_channels = 3
    num_classes = 10
    kernel_size = 3
    padding = 1
    n_filters = [8, 16, 32, 32]
    batch = 2

    key = jax.random.PRNGKey(0)
    pkey, xkey = jax.random.split(key)
    params = init_params(pkey, image_channels, n_filters, kernel_size, num_classes)
    prep = prepare_params(params, batch=batch, image_channels=image_channels,
                          n_filters=n_filters, image_size=32)
    x = jax.random.normal(xkey, (batch, image_channels, 32, 32), jnp.float32)

    fwd = jax.jit(model_forward)
    out = jax.block_until_ready(fwd(prep, x))
    assert out.shape == (batch, num_classes)
    assert bool(jnp.all(jnp.isfinite(out)))
    print("KERNEL_OK")
</pallas_src>

<mosaic_0001>
module attributes {stable_mosaic.version = 11 : i64} {
  func.func @_forward_kernel(%arg0: memref<64x96xf32, #tpu.memory_space<vmem>>, %arg1: memref<3x96x256xf32, #tpu.memory_space<vmem>>, %arg2: memref<1x256xf32, #tpu.memory_space<vmem>>, %arg3: memref<2x8xf32, #tpu.memory_space<vmem>>, %arg4: memref<256x8xf32, #tpu.memory_space<vmem>>, %arg5: memref<8x256xf32, #tpu.memory_space<vmem>>, %arg6: memref<2x64x64xf32, #tpu.memory_space<vmem>>, %arg7: memref<2x32x64xf32, #tpu.memory_space<vmem>>, %arg8: memref<2x256x128xf32, #tpu.memory_space<vmem>>, %arg9: memref<3x128x256xf32, #tpu.memory_space<vmem>>, %arg10: memref<1x256xf32, #tpu.memory_space<vmem>>, %arg11: memref<2x16xf32, #tpu.memory_space<vmem>>, %arg12: memref<256x16xf32, #tpu.memory_space<vmem>>, %arg13: memref<16x256xf32, #tpu.memory_space<vmem>>, %arg14: memref<2x32x32xf32, #tpu.memory_space<vmem>>, %arg15: memref<2x16x32xf32, #tpu.memory_space<vmem>>, %arg16: memref<2x256x128xf32, #tpu.memory_space<vmem>>, %arg17: memref<3x128x256xf32, #tpu.memory_space<vmem>>, %arg18: memref<1x256xf32, #tpu.memory_space<vmem>>, %arg19: memref<2x32xf32, #tpu.memory_space<vmem>>, %arg20: memref<256x32xf32, #tpu.memory_space<vmem>>, %arg21: memref<32x256xf32, #tpu.memory_space<vmem>>, %arg22: memref<2x16x16xf32, #tpu.memory_space<vmem>>, %arg23: memref<3x256x256xf32, #tpu.memory_space<vmem>>, %arg24: memref<1x256xf32, #tpu.memory_space<vmem>>, %arg25: memref<2x32xf32, #tpu.memory_space<vmem>>, %arg26: memref<256x32xf32, #tpu.memory_space<vmem>>, %arg27: memref<32x256xf32, #tpu.memory_space<vmem>>, %arg28: memref<2x16x16xf32, #tpu.memory_space<vmem>>, %arg29: memref<2x8x16xf32, #tpu.memory_space<vmem>>, %arg30: memref<2x256x128xf32, #tpu.memory_space<vmem>>, %arg31: memref<4x2x8xf32, #tpu.memory_space<vmem>>, %arg32: memref<4x128x64xf32, #tpu.memory_space<vmem>>, %arg33: memref<1x64xf32, #tpu.memory_space<vmem>>, %arg34: memref<2x64xf32, #tpu.memory_space<vmem>>, %arg35: memref<64x10xf32, #tpu.memory_space<vmem>>, %arg36: memref<1x10xf32, #tpu.memory_space<vmem>>, %arg37: memref<2x10xf32, #tpu.memory_space<vmem>>) attributes {dimension_semantics = [], scalar_prefetch = 0 : i64, scratch_operands = 0 : i64, tpu.core_type = #tpu.core_type<tc>} {
    %c0 = arith.constant 0 : index
    %c0_0 = arith.constant 0 : index
    %0 = vector.load %arg0[%c0, %c0_0] : memref<64x96xf32, #tpu.memory_space<vmem>>, vector<64x96xf32>
    %c1 = arith.constant 1 : index
    %c0_1 = arith.constant 0 : index
    %c0_2 = arith.constant 0 : index
    %1 = vector.load %arg1[%c1, %c0_1, %c0_2] : memref<3x96x256xf32, #tpu.memory_space<vmem>>, vector<1x96x256xf32>
    %2 = vector.shape_cast %1 : vector<1x96x256xf32> to vector<96x256xf32>
    %cst = arith.constant dense<0.000000e+00> : vector<64x256xf32>
    %3 = tpu.matmul %0, %2, %cst {dimension_numbers = #tpu.dot_dimension_numbers<[1], [0], [0], [1], [0, 0, 1, 1], [], []>} : vector<64x96xf32>, vector<96x256xf32>, vector<64x256xf32> -> vector<64x256xf32>
    %c0_3 = arith.constant 0 : index
    %c0_4 = arith.constant 0 : index
    %c0_5 = arith.constant 0 : index
    %4 = vector.load %arg6[%c0_3, %c0_4, %c0_5] : memref<2x64x64xf32, #tpu.memory_space<vmem>>, vector<1x64x64xf32>
    %5 = vector.shape_cast %4 : vector<1x64x64xf32> to vector<64x64xf32>
    %cst_6 = arith.constant dense<0.000000e+00> : vector<64x96xf32>
    %6 = tpu.matmul %5, %0, %cst_6 {dimension_numbers = #tpu.dot_dimension_numbers<[1], [0], [0], [1], [0, 0, 1, 1], [], []>} : vector<64x64xf32>, vector<64x96xf32>, vector<64x96xf32> -> vector<64x96xf32>
    %c0_7 = arith.constant 0 : index
    %c0_8 = arith.constant 0 : index
    %c0_9 = arith.constant 0 : index
    %7 = vector.load %arg1[%c0_7, %c0_8, %c0_9] : memref<3x96x256xf32, #tpu.memory_space<vmem>>, vector<1x96x256xf32>
    %8 = vector.shape_cast %7 : vector<1x96x256xf32> to vector<96x256xf32>
    %cst_10 = arith.constant dense<0.000000e+00> : vector<64x256xf32>
    %9 = tpu.matmul %6, %8, %cst_10 {dimension_numbers = #tpu.dot_dimension_numbers<[1], [0], [0], [1], [0, 0, 1, 1], [], []>} : vector<64x96xf32>, vector<96x256xf32>, vector<64x256xf32> -> vector<64x256xf32>
    %10 = arith.addf %3, %9 : vector<64x256xf32>
    %c1_11 = arith.constant 1 : index
    %c0_12 = arith.constant 0 : index
    %c0_13 = arith.constant 0 : index
    %11 = vector.load %arg6[%c1_11, %c0_12, %c0_13] : memref<2x64x64xf32, #tpu.memory_space<vmem>>, vector<1x64x64xf32>
    %12 = vector.shape_cast %11 : vector<1x64x64xf32> to vector<64x64xf32>
    %cst_14 = arith.constant dense<0.000000e+00> : vector<64x96xf32>
    %13 = tpu.matmul %12, %0, %cst_14 {dimension_numbers = #tpu.dot_dimension_numbers<[1], [0], [0], [1], [0, 0, 1, 1], [], []>} : vector<64x64xf32>, vector<64x96xf32>, vector<64x96xf32> -> vector<64x96xf32>
    %c2 = arith.constant 2 : index
    %c0_15 = arith.constant 0 : index
    %c0_16 = arith.constant 0 : index
    %14 = vector.load %arg1[%c2, %c0_15, %c0_16] : memref<3x96x256xf32, #tpu.memory_space<vmem>>, vector<1x96x256xf32>
    %15 = vector.shape_cast %14 : vector<1x96x256xf32> to vector<96x256xf32>
    %cst_17 = arith.constant dense<0.000000e+00> : vector<64x256xf32>
    %16 = tpu.matmul %13, %15, %cst_17 {dimension_numbers = #tpu.dot_dimension_numbers<[1], [0], [0], [1], [0, 0, 1, 1], [], []>} : vector<64x96xf32>, vector<96x256xf32>, vector<64x256xf32> -> vector<64x256xf32>
    %17 = arith.addf %10, %16 : vector<64x256xf32>
    %c0_18 = arith.constant 0 : index
    %c0_19 = arith.constant 0 : index
    %18 = vector.load %arg2[%c0_18, %c0_19] : memref<1x256xf32, #tpu.memory_space<vmem>>, vector<1x256xf32>
    %19 = vector.broadcast %18 : vector<1x256xf32> to vector<64x256xf32>
    %20 = arith.addf %17, %19 : vector<64x256xf32>
    %cst_20 = arith.constant 0.000000e+00 : f32
    %21 = vector.broadcast %cst_20 : f32 to vector<64x256xf32>
    %22 = arith.maximumf %20, %21 : vector<64x256xf32>
    %c0_21 = arith.constant 0 : index
    %c0_22 = arith.constant 0 : index
    %23 = vector.load %arg3[%c0_21, %c0_22] : memref<2x8xf32, #tpu.memory_space<vmem>>, vector<2x8xf32>
    %c0_23 = arith.constant 0 : index
    %c0_24 = arith.constant 0 : index
    %24 = vector.load %arg4[%c0_23, %c0_24] : memref<256x8xf32, #tpu.memory_space<vmem>>, vector<256x8xf32>
    %c0_25 = arith.constant 0 : index
    %c0_26 = arith.constant 0 : index
    %25 = vector.load %arg5[%c0_25, %c0_26] : memref<8x256xf32, #tpu.memory_space<vmem>>, vector<8x256xf32>
    %cst_27 = arith.constant dense<0.000000e+00> : vector<256xf32>
    %26 = vector.multi_reduction <add>, %22, %cst_27 [0] : vector<64x256xf32> to vector<256xf32>
    %27 = vector.shape_cast %26 : vector<256xf32> to vector<1x256xf32>
    %cst_28 = arith.constant dense<0.000000e+00> : vector<1x8xf32>
    %28 = tpu.matmul %27, %24, %cst_28 {dimension_numbers = #tpu.dot_dimension_numbers<[1], [0], [0], [1], [0, 0, 1, 1], [], []>} : vector<1x256xf32>, vector<256x8xf32>, vector<1x8xf32> -> vector<1x8xf32>
    %cst_29 = arith.constant 4.8828125E-4 : f32
    %29 = vector.broadcast %cst_29 : f32 to vector<1x8xf32>
    %30 = arith.mulf %28, %29 : vector<1x8xf32>
    %cst_30 = arith.constant dense<0.000000e+00> : vector<1x256xf32>
    %31 = tpu.matmul %30, %25, %cst_30 {dimension_numbers = #tpu.dot_dimension_numbers<[1], [0], [0], [1], [0, 0, 1, 1], [], []>} : vector<1x8xf32>, vector<8x256xf32>, vector<1x256xf32> -> vector<1x256xf32>
    %32 = vector.broadcast %31 : vector<1x256xf32> to vector<64x256xf32>
    %33 = arith.subf %22, %32 : vector<64x256xf32>
    %34 = arith.mulf %33, %33 : vector<64x256xf32>
    %cst_31 = arith.constant dense<0.000000e+00> : vector<256xf32>
    %35 = vector.multi_reduction <add>, %34, %cst_31 [0] : vector<64x256xf32> to vector<256xf32>
    %36 = vector.shape_cast %35 : vector<256xf32> to vector<1x256xf32>
    %cst_32 = arith.constant dense<0.000000e+00> : vector<1x8xf32>
    %37 = tpu.matmul %36, %24, %cst_32 {dimension_numbers = #tpu.dot_dimension_numbers<[1], [0], [0], [1], [0, 0, 1, 1], [], []>} : vector<1x256xf32>, vector<256x8xf32>, vector<1x8xf32> -> vector<1x8xf32>
    %cst_33 = arith.constant 4.8828125E-4 : f32
    %38 = vector.broadcast %cst_33 : f32 to vector<1x8xf32>
    %39 = arith.mulf %37, %38 : vector<1x8xf32>
    %40 = vector.extract_strided_slice %23 {offsets = [0, 0], sizes = [1, 8], strides = [1, 1]} : vector<2x8xf32> to vector<1x8xf32>
    %cst_34 = arith.constant 9.99999974E-6 : f32
    %41 = vector.broadcast %cst_34 : f32 to vector<1x8xf32>
    %42 = arith.addf %39, %41 : vector<1x8xf32>
    %43 = math.rsqrt %42 : vector<1x8xf32>
    %44 = arith.mulf %40, %43 : vector<1x8xf32>
    %cst_35 = arith.constant dense<0.000000e+00> : vector<1x256xf32>
    %45 = tpu.matmul %44, %25, %cst_35 {dimension_numbers = #tpu.dot_dimension_numbers<[1], [0], [0], [1], [0, 0, 1, 1], [], []>} : vector<1x8xf32>, vector<8x256xf32>, vector<1x256xf32> -> vector<1x256xf32>
    %46 = vector.broadcast %45 : vector<1x256xf32> to vector<64x256xf32>
    %47 = arith.mulf %33, %46 : vector<64x256xf32>
    %48 = vector.extract_strided_slice %23 {offsets = [1, 0], sizes = [1, 8], strides = [1, 1]} : vector<2x8xf32> to vector<1x8xf32>
    %cst_36 = arith.constant dense<0.000000e+00> : vector<1x256xf32>
    %49 = tpu.matmul %48, %25, %cst_36 {dimension_numbers = #tpu.dot_dimension_numbers<[1], [0], [0], [1], [0, 0, 1, 1], [], []>} : vector<1x8xf32>, vector<8x256xf32>, vector<1x256xf32> -> vector<1x256xf32>
    %50 = vector.broadcast %49 : vector<1x256xf32> to vector<64x256xf32>
    %51 = arith.addf %47, %50 : vector<64x256xf32>
    %c0_37 = arith.constant 0 : index
    %c0_38 = arith.constant 0 : index
    %c0_39 = arith.constant 0 : index
    %52 = vector.load %arg7[%c0_37, %c0_38, %c0_39] : memref<2x32x64xf32, #tpu.memory_space<vmem>>, vector<1x32x64xf32>
    %53 = vector.shape_cast %52 : vector<1x32x64xf32> to vector<32x64xf32>
    %cst_40 = arith.constant dense<0.000000e+00> : vector<32x256xf32>
    %54 = tpu.matmul %53, %51, %cst_40 {dimension_numbers = #tpu.dot_dimension_numbers<[1], [0], [0], [1], [0, 0, 1, 1], [], []>} : vector<32x64xf32>, vector<64x256xf32>, vector<32x256xf32> -> vector<32x256xf32>
    %c1_41 = arith.constant 1 : index
    %c0_42 = arith.constant 0 : index
    %c0_43 = arith.constant 0 : index
    %55 = vector.load %arg7[%c1_41, %c0_42, %c0_43] : memref<2x32x64xf32, #tpu.memory_space<vmem>>, vector<1x32x64xf32>
    %56 = vector.shape_cast %55 : vector<1x32x64xf32> to vector<32x64xf32>
    %cst_44 = arith.constant dense<0.000000e+00> : vector<32x256xf32>
    %57 = tpu.matmul %56, %51, %cst_44 {dimension_numbers = #tpu.dot_dimension_numbers<[1], [0], [0], [1], [0, 0, 1, 1], [], []>} : vector<32x64xf32>, vector<64x256xf32>, vector<32x256xf32> -> vector<32x256xf32>
    %58 = arith.maximumf %54, %57 : vector<32x256xf32>
    %c0_45 = arith.constant 0 : index
    %c0_46 = arith.constant 0 : index
    %c0_47 = arith.constant 0 : index
    %59 = vector.load %arg8[%c0_45, %c0_46, %c0_47] : memref<2x256x128xf32, #tpu.memory_space<vmem>>, vector<1x256x128xf32>
    %60 = vector.shape_cast %59 : vector<1x256x128xf32> to vector<256x128xf32>
    %cst_48 = arith.constant dense<0.000000e+00> : vector<32x128xf32>
    %61 = tpu.matmul %58, %60, %cst_48 {dimension_numbers = #tpu.dot_dimension_numbers<[1], [0], [0], [1], [0, 0, 1, 1], [], []>} : vector<32x256xf32>, vector<256x128xf32>, vector<32x128xf32> -> vector<32x128xf32>
    %c1_49 = arith.constant 1 : index
    %c0_50 = arith.constant 0 : index
    %c0_51 = arith.constant 0 : index
    %62 = vector.load %arg8[%c1_49, %c0_50, %c0_51] : memref<2x256x128xf32, #tpu.memory_space<vmem>>, vector<1x256x128xf32>
    %63 = vector.shape_cast %62 : vector<1x256x128xf32> to vector<256x128xf32>
    %cst_52 = arith.constant dense<0.000000e+00> : vector<32x128xf32>
    %64 = tpu.matmul %58, %63, %cst_52 {dimension_numbers = #tpu.dot_dimension_numbers<[1], [0], [0], [1], [0, 0, 1, 1], [], []>} : vector<32x256xf32>, vector<256x128xf32>, vector<32x128xf32> -> vector<32x128xf32>
    %65 = arith.maximumf %61, %64 : vector<32x128xf32>
    %c1_53 = arith.constant 1 : index
    %c0_54 = arith.constant 0 : index
    %c0_55 = arith.constant 0 : index
    %66 = vector.load %arg9[%c1_53, %c0_54, %c0_55] : memref<3x128x256xf32, #tpu.memory_space<vmem>>, vector<1x128x256xf32>
    %67 = vector.shape_cast %66 : vector<1x128x256xf32> to vector<128x256xf32>
    %cst_56 = arith.constant dense<0.000000e+00> : vector<32x256xf32>
    %68 = tpu.matmul %65, %67, %cst_56 {dimension_numbers = #tpu.dot_dimension_numbers<[1], [0], [0], [1], [0, 0, 1, 1], [], []>} : vector<32x128xf32>, vector<128x256xf32>, vector<32x256xf32> -> vector<32x256xf32>
    %c0_57 = arith.constant 0 : index
    %c0_58 = arith.constant 0 : index
    %c0_59 = arith.constant 0 : index
    %69 = vector.load %arg14[%c0_57, %c0_58, %c0_59] : memref<2x32x32xf32, #tpu.memory_space<vmem>>, vector<1x32x32xf32>
    %70 = vector.shape_cast %69 : vector<1x32x32xf32> to vector<32x32xf32>
    %cst_60 = arith.constant dense<0.000000e+00> : vector<32x128xf32>
    %71 = tpu.matmul %70, %65, %cst_60 {dimension_numbers = #tpu.dot_dimension_numbers<[1], [0], [0], [1], [0, 0, 1, 1], [], []>} : vector<32x32xf32>, vector<32x128xf32>, vector<32x128xf32> -> vector<32x128xf32>
    %c0_61 = arith.constant 0 : index
    %c0_62 = arith.constant 0 : index
    %c0_63 = arith.constant 0 : index
    %72 = vector.load %arg9[%c0_61, %c0_62, %c0_63] : memref<3x128x256xf32, #tpu.memory_space<vmem>>, vector<1x128x256xf32>
    %73 = vector.shape_cast %72 : vector<1x128x256xf32> to vector<128x256xf32>
    %cst_64 = arith.constant dense<0.000000e+00> : vector<32x256xf32>
    %74 = tpu.matmul %71, %73, %cst_64 {dimension_numbers = #tpu.dot_dimension_numbers<[1], [0], [0], [1], [0, 0, 1, 1], [], []>} : vector<32x128xf32>, vector<128x256xf32>, vector<32x256xf32> -> vector<32x256xf32>
    %75 = arith.addf %68, %74 : vector<32x256xf32>
    %c1_65 = arith.constant 1 : index
    %c0_66 = arith.constant 0 : index
    %c0_67 = arith.constant 0 : index
    %76 = vector.load %arg14[%c1_65, %c0_66, %c0_67] : memref<2x32x32xf32, #tpu.memory_space<vmem>>, vector<1x32x32xf32>
    %77 = vector.shape_cast %76 : vector<1x32x32xf32> to vector<32x32xf32>
    %cst_68 = arith.constant dense<0.000000e+00> : vector<32x128xf32>
    %78 = tpu.matmul %77, %65, %cst_68 {dimension_numbers = #tpu.dot_dimension_numbers<[1], [0], [0], [1], [0, 0, 1, 1], [], []>} : vector<32x32xf32>, vector<32x128xf32>, vector<32x128xf32> -> vector<32x128xf32>
    %c2_69 = arith.constant 2 : index
    %c0_70 = arith.constant 0 : index
    %c0_71 = arith.constant 0 : index
    %79 = vector.load %arg9[%c2_69, %c0_70, %c0_71] : memref<3x128x256xf32, #tpu.memory_space<vmem>>, vector<1x128x256xf32>
    %80 = vector.shape_cast %79 : vector<1x128x256xf32> to vector<128x256xf32>
    %cst_72 = arith.constant dense<0.000000e+00> : vector<32x256xf32>
    %81 = tpu.matmul %78, %80, %cst_72 {dimension_numbers = #tpu.dot_dimension_numbers<[1], [0], [0], [1], [0, 0, 1, 1], [], []>} : vector<32x128xf32>, vector<128x256xf32>, vector<32x256xf32> -> vector<32x256xf32>
    %82 = arith.addf %75, %81 : vector<32x256xf32>
    %c0_73 = arith.constant 0 : index
    %c0_74 = arith.constant 0 : index
    %83 = vector.load %arg10[%c0_73, %c0_74] : memref<1x256xf32, #tpu.memory_space<vmem>>, vector<1x256xf32>
    %84 = vector.broadcast %83 : vector<1x256xf32> to vector<32x256xf32>
    %85 = arith.addf %82, %84 : vector<32x256xf32>
    %cst_75 = arith.constant 0.000000e+00 : f32
    %86 = vector.broadcast %cst_75 : f32 to vector<32x256xf32>
    %87 = arith.maximumf %85, %86 : vector<32x256xf32>
    %c0_76 = arith.constant 0 : index
    %c0_77 = arith.constant 0 : index
    %88 = vector.load %arg11[%c0_76, %c0_77] : memref<2x16xf32, #tpu.memory_space<vmem>>, vector<2x16xf32>
    %c0_78 = arith.constant 0 : index
    %c0_79 = arith.constant 0 : index
    %89 = vector.load %arg12[%c0_78, %c0_79] : memref<256x16xf32, #tpu.memory_space<vmem>>, vector<256x16xf32>
    %c0_80 = arith.constant 0 : index
    %c0_81 = arith.constant 0 : index
    %90 = vector.load %arg13[%c0_80, %c0_81] : memref<16x256xf32, #tpu.memory_space<vmem>>, vector<16x256xf32>
    %cst_82 = arith.constant dense<0.000000e+00> : vector<256xf32>
    %91 = vector.multi_reduction <add>, %87, %cst_82 [0] : vector<32x256xf32> to vector<256xf32>
    %92 = vector.shape_cast %91 : vector<256xf32> to vector<1x256xf32>
    %cst_83 = arith.constant dense<0.000000e+00> : vector<1x16xf32>
    %93 = tpu.matmul %92, %89, %cst_83 {dimension_numbers = #tpu.dot_dimension_numbers<[1], [0], [0], [1], [0, 0, 1, 1], [], []>} : vector<1x256xf32>, vector<256x16xf32>, vector<1x16xf32> -> vector<1x16xf32>
    %cst_84 = arith.constant 0.001953125 : f32
    %94 = vector.broadcast %cst_84 : f32 to vector<1x16xf32>
    %95 = arith.mulf %93, %94 : vector<1x16xf32>
    %cst_85 = arith.constant dense<0.000000e+00> : vector<1x256xf32>
    %96 = tpu.matmul %95, %90, %cst_85 {dimension_numbers = #tpu.dot_dimension_numbers<[1], [0], [0], [1], [0, 0, 1, 1], [], []>} : vector<1x16xf32>, vector<16x256xf32>, vector<1x256xf32> -> vector<1x256xf32>
    %97 = vector.broadcast %96 : vector<1x256xf32> to vector<32x256xf32>
    %98 = arith.subf %87, %97 : vector<32x256xf32>
    %99 = arith.mulf %98, %98 : vector<32x256xf32>
    %cst_86 = arith.constant dense<0.000000e+00> : vector<256xf32>
    %100 = vector.multi_reduction <add>, %99, %cst_86 [0] : vector<32x256xf32> to vector<256xf32>
    %101 = vector.shape_cast %100 : vector<256xf32> to vector<1x256xf32>
    %cst_87 = arith.constant dense<0.000000e+00> : vector<1x16xf32>
    %102 = tpu.matmul %101, %89, %cst_87 {dimension_numbers = #tpu.dot_dimension_numbers<[1], [0], [0], [1], [0, 0, 1, 1], [], []>} : vector<1x256xf32>, vector<256x16xf32>, vector<1x16xf32> -> vector<1x16xf32>
    %cst_88 = arith.constant 0.001953125 : f32
    %103 = vector.broadcast %cst_88 : f32 to vector<1x16xf32>
    %104 = arith.mulf %102, %103 : vector<1x16xf32>
    %105 = vector.extract_strided_slice %88 {offsets = [0, 0], sizes = [1, 16], strides = [1, 1]} : vector<2x16xf32> to vector<1x16xf32>
    %cst_89 = arith.constant 9.99999974E-6 : f32
    %106 = vector.broadcast %cst_89 : f32 to vector<1x16xf32>
    %107 = arith.addf %104, %106 : vector<1x16xf32>
    %108 = math.rsqrt %107 : vector<1x16xf32>
    %109 = arith.mulf %105, %108 : vector<1x16xf32>
    %cst_90 = arith.constant dense<0.000000e+00> : vector<1x256xf32>
    %110 = tpu.matmul %109, %90, %cst_90 {dimension_numbers = #tpu.dot_dimension_numbers<[1], [0], [0], [1], [0, 0, 1, 1], [], []>} : vector<1x16xf32>, vector<16x256xf32>, vector<1x256xf32> -> vector<1x256xf32>
    %111 = vector.broadcast %110 : vector<1x256xf32> to vector<32x256xf32>
    %112 = arith.mulf %98, %111 : vector<32x256xf32>
    %113 = vector.extract_strided_slice %88 {offsets = [1, 0], sizes = [1, 16], strides = [1, 1]} : vector<2x16xf32> to vector<1x16xf32>
    %cst_91 = arith.constant dense<0.000000e+00> : vector<1x256xf32>
    %114 = tpu.matmul %113, %90, %cst_91 {dimension_numbers = #tpu.dot_dimension_numbers<[1], [0], [0], [1], [0, 0, 1, 1], [], []>} : vector<1x16xf32>, vector<16x256xf32>, vector<1x256xf32> -> vector<1x256xf32>
    %115 = vector.broadcast %114 : vector<1x256xf32> to vector<32x256xf32>
    %116 = arith.addf %112, %115 : vector<32x256xf32>
    %c0_92 = arith.constant 0 : index
    %c0_93 = arith.constant 0 : index
    %c0_94 = arith.constant 0 : index
    %117 = vector.load %arg15[%c0_92, %c0_93, %c0_94] : memref<2x16x32xf32, #tpu.memory_space<vmem>>, vector<1x16x32xf32>
    %118 = vector.shape_cast %117 : vector<1x16x32xf32> to vector<16x32xf32>
    %cst_95 = arith.constant dense<0.000000e+00> : vector<16x256xf32>
    %119 = tpu.matmul %118, %116, %cst_95 {dimension_numbers = #tpu.dot_dimension_numbers<[1], [0], [0], [1], [0, 0, 1, 1], [], []>} : vector<16x32xf32>, vector<32x256xf32>, vector<16x256xf32> -> vector<16x256xf32>
    %c1_96 = arith.constant 1 : index
    %c0_97 = arith.constant 0 : index
    %c0_98 = arith.constant 0 : index
    %120 = vector.load %arg15[%c1_96, %c0_97, %c0_98] : memref<2x16x32xf32, #tpu.memory_space<vmem>>, vector<1x16x32xf32>
    %121 = vector.shape_cast %120 : vector<1x16x32xf32> to vector<16x32xf32>
    %cst_99 = arith.constant dense<0.000000e+00> : vector<16x256xf32>
    %122 = tpu.matmul %121, %116, %cst_99 {dimension_numbers = #tpu.dot_dimension_numbers<[1], [0], [0], [1], [0, 0, 1, 1], [], []>} : vector<16x32xf32>, vector<32x256xf32>, vector<16x256xf32> -> vector<16x256xf32>
    %123 = arith.maximumf %119, %122 : vector<16x256xf32>
    %c0_100 = arith.constant 0 : index
    %c0_101 = arith.constant 0 : index
    %c0_102 = arith.constant 0 : index
    %124 = vector.load %arg16[%c0_100, %c0_101, %c0_102] : memref<2x256x128xf32, #tpu.memory_space<vmem>>, vector<1x256x128xf32>
    %125 = vector.shape_cast %124 : vector<1x256x128xf32> to vector<256x128xf32>
    %cst_103 = arith.constant dense<0.000000e+00> : vector<16x128xf32>
    %126 = tpu.matmul %123, %125, %cst_103 {dimension_numbers = #tpu.dot_dimension_numbers<[1], [0], [0], [1], [0, 0, 1, 1], [], []>} : vector<16x256xf32>, vector<256x128xf32>, vector<16x128xf32> -> vector<16x128xf32>
    %c1_104 = arith.constant 1 : index
    %c0_105 = arith.constant 0 : index
    %c0_106 = arith.constant 0 : index
    %127 = vector.load %arg16[%c1_104, %c0_105, %c0_106] : memref<2x256x128xf32, #tpu.memory_space<vmem>>, vector<1x256x128xf32>
    %128 = vector.shape_cast %127 : vector<1x256x128xf32> to vector<256x128xf32>
    %cst_107 = arith.constant dense<0.000000e+00> : vector<16x128xf32>
    %129 = tpu.matmul %123, %128, %cst_107 {dimension_numbers = #tpu.dot_dimension_numbers<[1], [0], [0], [1], [0, 0, 1, 1], [], []>} : vector<16x256xf32>, vector<256x128xf32>, vector<16x128xf32> -> vector<16x128xf32>
    %130 = arith.maximumf %126, %129 : vector<16x128xf32>
    %c1_108 = arith.constant 1 : index
    %c0_109 = arith.constant 0 : index
    %c0_110 = arith.constant 0 : index
    %131 = vector.load %arg17[%c1_108, %c0_109, %c0_110] : memref<3x128x256xf32, #tpu.memory_space<vmem>>, vector<1x128x256xf32>
    %132 = vector.shape_cast %131 : vector<1x128x256xf32> to vector<128x256xf32>
    %cst_111 = arith.constant dense<0.000000e+00> : vector<16x256xf32>
    %133 = tpu.matmul %130, %132, %cst_111 {dimension_numbers = #tpu.dot_dimension_numbers<[1], [0], [0], [1], [0, 0, 1, 1], [], []>} : vector<16x128xf32>, vector<128x256xf32>, vector<16x256xf32> -> vector<16x256xf32>
    %c0_112 = arith.constant 0 : index
    %c0_113 = arith.constant 0 : index
    %c0_114 = arith.constant 0 : index
    %134 = vector.load %arg22[%c0_112, %c0_113, %c0_114] : memref<2x16x16xf32, #tpu.memory_space<vmem>>, vector<1x16x16xf32>
    %135 = vector.shape_cast %134 : vector<1x16x16xf32> to vector<16x16xf32>
    %cst_115 = arith.constant dense<0.000000e+00> : vector<16x128xf32>
    %136 = tpu.matmul %135, %130, %cst_115 {dimension_numbers = #tpu.dot_dimension_numbers<[1], [0], [0], [1], [0, 0, 1, 1], [], []>} : vector<16x16xf32>, vector<16x128xf32>, vector<16x128xf32> -> vector<16x128xf32>
    %c0_116 = arith.constant 0 : index
    %c0_117 = arith.constant 0 : index
    %c0_118 = arith.constant 0 : index
    %137 = vector.load %arg17[%c0_116, %c0_117, %c0_118] : memref<3x128x256xf32, #tpu.memory_space<vmem>>, vector<1x128x256xf32>
    %138 = vector.shape_cast %137 : vector<1x128x256xf32> to vector<128x256xf32>
    %cst_119 = arith.constant dense<0.000000e+00> : vector<16x256xf32>
    %139 = tpu.matmul %136, %138, %cst_119 {dimension_numbers = #tpu.dot_dimension_numbers<[1], [0], [0], [1], [0, 0, 1, 1], [], []>} : vector<16x128xf32>, vector<128x256xf32>, vector<16x256xf32> -> vector<16x256xf32>
    %140 = arith.addf %133, %139 : vector<16x256xf32>
    %c1_120 = arith.constant 1 : index
    %c0_121 = arith.constant 0 : index
    %c0_122 = arith.constant 0 : index
    %141 = vector.load %arg22[%c1_120, %c0_121, %c0_122] : memref<2x16x16xf32, #tpu.memory_space<vmem>>, vector<1x16x16xf32>
    %142 = vector.shape_cast %141 : vector<1x16x16xf32> to vector<16x16xf32>
    %cst_123 = arith.constant dense<0.000000e+00> : vector<16x128xf32>
    %143 = tpu.matmul %142, %130, %cst_123 {dimension_numbers = #tpu.dot_dimension_numbers<[1], [0], [0], [1], [0, 0, 1, 1], [], []>} : vector<16x16xf32>, vector<16x128xf32>, vector<16x128xf32> -> vector<16x128xf32>
    %c2_124 = arith.constant 2 : index
    %c0_125 = arith.constant 0 : index
    %c0_126 = arith.constant 0 : index
    %144 = vector.load %arg17[%c2_124, %c0_125, %c0_126] : memref<3x128x256xf32, #tpu.memory_space<vmem>>, vector<1x128x256xf32>
    %145 = vector.shape_cast %144 : vector<1x128x256xf32> to vector<128x256xf32>
    %cst_127 = arith.constant dense<0.000000e+00> : vector<16x256xf32>
    %146 = tpu.matmul %143, %145, %cst_127 {dimension_numbers = #tpu.dot_dimension_numbers<[1], [0], [0], [1], [0, 0, 1, 1], [], []>} : vector<16x128xf32>, vector<128x256xf32>, vector<16x256xf32> -> vector<16x256xf32>
    %147 = arith.addf %140, %146 : vector<16x256xf32>
    %c0_128 = arith.constant 0 : index
    %c0_129 = arith.constant 0 : index
    %148 = vector.load %arg18[%c0_128, %c0_129] : memref<1x256xf32, #tpu.memory_space<vmem>>, vector<1x256xf32>
    %149 = vector.broadcast %148 : vector<1x256xf32> to vector<16x256xf32>
    %150 = arith.addf %147, %149 : vector<16x256xf32>
    %cst_130 = arith.constant 0.000000e+00 : f32
    %151 = vector.broadcast %cst_130 : f32 to vector<16x256xf32>
    %152 = arith.maximumf %150, %151 : vector<16x256xf32>
    %c0_131 = arith.constant 0 : index
    %c0_132 = arith.constant 0 : index
    %153 = vector.load %arg19[%c0_131, %c0_132] : memref<2x32xf32, #tpu.memory_space<vmem>>, vector<2x32xf32>
    %c0_133 = arith.constant 0 : index
    %c0_134 = arith.constant 0 : index
    %154 = vector.load %arg20[%c0_133, %c0_134] : memref<256x32xf32, #tpu.memory_space<vmem>>, vector<256x32xf32>
    %c0_135 = arith.constant 0 : index
    %c0_136 = arith.constant 0 : index
    %155 = vector.load %arg21[%c0_135, %c0_136] : memref<32x256xf32, #tpu.memory_space<vmem>>, vector<32x256xf32>
    %cst_137 = arith.constant dense<0.000000e+00> : vector<256xf32>
    %156 = vector.multi_reduction <add>, %152, %cst_137 [0] : vector<16x256xf32> to vector<256xf32>
    %157 = vector.shape_cast %156 : vector<256xf32> to vector<1x256xf32>
    %cst_138 = arith.constant dense<0.000000e+00> : vector<1x32xf32>
    %158 = tpu.matmul %157, %154, %cst_138 {dimension_numbers = #tpu.dot_dimension_numbers<[1], [0], [0], [1], [0, 0, 1, 1], [], []>} : vector<1x256xf32>, vector<256x32xf32>, vector<1x32xf32> -> vector<1x32xf32>
    %cst_139 = arith.constant 7.812500e-03 : f32
    %159 = vector.broadcast %cst_139 : f32 to vector<1x32xf32>
    %160 = arith.mulf %158, %159 : vector<1x32xf32>
    %cst_140 = arith.constant dense<0.000000e+00> : vector<1x256xf32>
    %161 = tpu.matmul %160, %155, %cst_140 {dimension_numbers = #tpu.dot_dimension_numbers<[1], [0], [0], [1], [0, 0, 1, 1], [], []>} : vector<1x32xf32>, vector<32x256xf32>, vector<1x256xf32> -> vector<1x256xf32>
    %162 = vector.broadcast %161 : vector<1x256xf32> to vector<16x256xf32>
    %163 = arith.subf %152, %162 : vector<16x256xf32>
    %164 = arith.mulf %163, %163 : vector<16x256xf32>
    %cst_141 = arith.constant dense<0.000000e+00> : vector<256xf32>
    %165 = vector.multi_reduction <add>, %164, %cst_141 [0] : vector<16x256xf32> to vector<256xf32>
    %166 = vector.shape_cast %165 : vector<256xf32> to vector<1x256xf32>
    %cst_142 = arith.constant dense<0.000000e+00> : vector<1x32xf32>
    %167 = tpu.matmul %166, %154, %cst_142 {dimension_numbers = #tpu.dot_dimension_numbers<[1], [0], [0], [1], [0, 0, 1, 1], [], []>} : vector<1x256xf32>, vector<256x32xf32>, vector<1x32xf32> -> vector<1x32xf32>
    %cst_143 = arith.constant 7.812500e-03 : f32
    %168 = vector.broadcast %cst_143 : f32 to vector<1x32xf32>
    %169 = arith.mulf %167, %168 : vector<1x32xf32>
    %170 = vector.extract_strided_slice %153 {offsets = [0, 0], sizes = [1, 32], strides = [1, 1]} : vector<2x32xf32> to vector<1x32xf32>
    %cst_144 = arith.constant 9.99999974E-6 : f32
    %171 = vector.broadcast %cst_144 : f32 to vector<1x32xf32>
    %172 = arith.addf %169, %171 : vector<1x32xf32>
    %173 = math.rsqrt %172 : vector<1x32xf32>
    %174 = arith.mulf %170, %173 : vector<1x32xf32>
    %cst_145 = arith.constant dense<0.000000e+00> : vector<1x256xf32>
    %175 = tpu.matmul %174, %155, %cst_145 {dimension_numbers = #tpu.dot_dimension_numbers<[1], [0], [0], [1], [0, 0, 1, 1], [], []>} : vector<1x32xf32>, vector<32x256xf32>, vector<1x256xf32> -> vector<1x256xf32>
    %176 = vector.broadcast %175 : vector<1x256xf32> to vector<16x256xf32>
    %177 = arith.mulf %163, %176 : vector<16x256xf32>
    %178 = vector.extract_strided_slice %153 {offsets = [1, 0], sizes = [1, 32], strides = [1, 1]} : vector<2x32xf32> to vector<1x32xf32>
    %cst_146 = arith.constant dense<0.000000e+00> : vector<1x256xf32>
    %179 = tpu.matmul %178, %155, %cst_146 {dimension_numbers = #tpu.dot_dimension_numbers<[1], [0], [0], [1], [0, 0, 1, 1], [], []>} : vector<1x32xf32>, vector<32x256xf32>, vector<1x256xf32> -> vector<1x256xf32>
    %180 = vector.broadcast %179 : vector<1x256xf32> to vector<16x256xf32>
    %181 = arith.addf %177, %180 : vector<16x256xf32>
    %c1_147 = arith.constant 1 : index
    %c0_148 = arith.constant 0 : index
    %c0_149 = arith.constant 0 : index
    %182 = vector.load %arg23[%c1_147, %c0_148, %c0_149] : memref<3x256x256xf32, #tpu.memory_space<vmem>>, vector<1x256x256xf32>
    %183 = vector.shape_cast %182 : vector<1x256x256xf32> to vector<256x256xf32>
    %cst_150 = arith.constant dense<0.000000e+00> : vector<16x256xf32>
    %184 = tpu.matmul %181, %183, %cst_150 {dimension_numbers = #tpu.dot_dimension_numbers<[1], [0], [0], [1], [0, 0, 1, 1], [], []>} : vector<16x256xf32>, vector<256x256xf32>, vector<16x256xf32> -> vector<16x256xf32>
    %c0_151 = arith.constant 0 : index
    %c0_152 = arith.constant 0 : index
    %c0_153 = arith.constant 0 : index
    %185 = vector.load %arg28[%c0_151, %c0_152, %c0_153] : memref<2x16x16xf32, #tpu.memory_space<vmem>>, vector<1x16x16xf32>
    %186 = vector.shape_cast %185 : vector<1x16x16xf32> to vector<16x16xf32>
    %cst_154 = arith.constant dense<0.000000e+00> : vector<16x256xf32>
    %187 = tpu.matmul %186, %181, %cst_154 {dimension_numbers = #tpu.dot_dimension_numbers<[1], [0], [0], [1], [0, 0, 1, 1], [], []>} : vector<16x16xf32>, vector<16x256xf32>, vector<16x256xf32> -> vector<16x256xf32>
    %c0_155 = arith.constant 0 : index
    %c0_156 = arith.constant 0 : index
    %c0_157 = arith.constant 0 : index
    %188 = vector.load %arg23[%c0_155, %c0_156, %c0_157] : memref<3x256x256xf32, #tpu.memory_space<vmem>>, vector<1x256x256xf32>
    %189 = vector.shape_cast %188 : vector<1x256x256xf32> to vector<256x256xf32>
    %cst_158 = arith.constant dense<0.000000e+00> : vector<16x256xf32>
    %190 = tpu.matmul %187, %189, %cst_158 {dimension_numbers = #tpu.dot_dimension_numbers<[1], [0], [0], [1], [0, 0, 1, 1], [], []>} : vector<16x256xf32>, vector<256x256xf32>, vector<16x256xf32> -> vector<16x256xf32>
    %191 = arith.addf %184, %190 : vector<16x256xf32>
    %c1_159 = arith.constant 1 : index
    %c0_160 = arith.constant 0 : index
    %c0_161 = arith.constant 0 : index
    %192 = vector.load %arg28[%c1_159, %c0_160, %c0_161] : memref<2x16x16xf32, #tpu.memory_space<vmem>>, vector<1x16x16xf32>
    %193 = vector.shape_cast %192 : vector<1x16x16xf32> to vector<16x16xf32>
    %cst_162 = arith.constant dense<0.000000e+00> : vector<16x256xf32>
    %194 = tpu.matmul %193, %181, %cst_162 {dimension_numbers = #tpu.dot_dimension_numbers<[1], [0], [0], [1], [0, 0, 1, 1], [], []>} : vector<16x16xf32>, vector<16x256xf32>, vector<16x256xf32> -> vector<16x256xf32>
    %c2_163 = arith.constant 2 : index
    %c0_164 = arith.constant 0 : index
    %c0_165 = arith.constant 0 : index
    %195 = vector.load %arg23[%c2_163, %c0_164, %c0_165] : memref<3x256x256xf32, #tpu.memory_space<vmem>>, vector<1x256x256xf32>
    %196 = vector.shape_cast %195 : vector<1x256x256xf32> to vector<256x256xf32>
    %cst_166 = arith.constant dense<0.000000e+00> : vector<16x256xf32>
    %197 = tpu.matmul %194, %196, %cst_166 {dimension_numbers = #tpu.dot_dimension_numbers<[1], [0], [0], [1], [0, 0, 1, 1], [], []>} : vector<16x256xf32>, vector<256x256xf32>, vector<16x256xf32> -> vector<16x256xf32>
    %198 = arith.addf %191, %197 : vector<16x256xf32>
    %c0_167 = arith.constant 0 : index
    %c0_168 = arith.constant 0 : index
    %199 = vector.load %arg24[%c0_167, %c0_168] : memref<1x256xf32, #tpu.memory_space<vmem>>, vector<1x256xf32>
    %200 = vector.broadcast %199 : vector<1x256xf32> to vector<16x256xf32>
    %201 = arith.addf %198, %200 : vector<16x256xf32>
    %cst_169 = arith.constant 0.000000e+00 : f32
    %202 = vector.broadcast %cst_169 : f32 to vector<16x256xf32>
    %203 = arith.maximumf %201, %202 : vector<16x256xf32>
    %c0_170 = arith.constant 0 : index
    %c0_171 = arith.constant 0 : index
    %204 = vector.load %arg25[%c0_170, %c0_171] : memref<2x32xf32, #tpu.memory_space<vmem>>, vector<2x32xf32>
    %c0_172 = arith.constant 0 : index
    %c0_173 = arith.constant 0 : index
    %205 = vector.load %arg26[%c0_172, %c0_173] : memref<256x32xf32, #tpu.memory_space<vmem>>, vector<256x32xf32>
    %c0_174 = arith.constant 0 : index
    %c0_175 = arith.constant 0 : index
    %206 = vector.load %arg27[%c0_174, %c0_175] : memref<32x256xf32, #tpu.memory_space<vmem>>, vector<32x256xf32>
    %cst_176 = arith.constant dense<0.000000e+00> : vector<256xf32>
    %207 = vector.multi_reduction <add>, %203, %cst_176 [0] : vector<16x256xf32> to vector<256xf32>
    %208 = vector.shape_cast %207 : vector<256xf32> to vector<1x256xf32>
    %cst_177 = arith.constant dense<0.000000e+00> : vector<1x32xf32>
    %209 = tpu.matmul %208, %205, %cst_177 {dimension_numbers = #tpu.dot_dimension_numbers<[1], [0], [0], [1], [0, 0, 1, 1], [], []>} : vector<1x256xf32>, vector<256x32xf32>, vector<1x32xf32> -> vector<1x32xf32>
    %cst_178 = arith.constant 7.812500e-03 : f32
    %210 = vector.broadcast %cst_178 : f32 to vector<1x32xf32>
    %211 = arith.mulf %209, %210 : vector<1x32xf32>
    %cst_179 = arith.constant dense<0.000000e+00> : vector<1x256xf32>
    %212 = tpu.matmul %211, %206, %cst_179 {dimension_numbers = #tpu.dot_dimension_numbers<[1], [0], [0], [1], [0, 0, 1, 1], [], []>} : vector<1x32xf32>, vector<32x256xf32>, vector<1x256xf32> -> vector<1x256xf32>
    %213 = vector.broadcast %212 : vector<1x256xf32> to vector<16x256xf32>
    %214 = arith.subf %203, %213 : vector<16x256xf32>
    %215 = arith.mulf %214, %214 : vector<16x256xf32>
    %cst_180 = arith.constant dense<0.000000e+00> : vector<256xf32>
    %216 = vector.multi_reduction <add>, %215, %cst_180 [0] : vector<16x256xf32> to vector<256xf32>
    %217 = vector.shape_cast %216 : vector<256xf32> to vector<1x256xf32>
    %cst_181 = arith.constant dense<0.000000e+00> : vector<1x32xf32>
    %218 = tpu.matmul %217, %205, %cst_181 {dimension_numbers = #tpu.dot_dimension_numbers<[1], [0], [0], [1], [0, 0, 1, 1], [], []>} : vector<1x256xf32>, vector<256x32xf32>, vector<1x32xf32> -> vector<1x32xf32>
    %cst_182 = arith.constant 7.812500e-03 : f32
    %219 = vector.broadcast %cst_182 : f32 to vector<1x32xf32>
    %220 = arith.mulf %218, %219 : vector<1x32xf32>
    %221 = vector.extract_strided_slice %204 {offsets = [0, 0], sizes = [1, 32], strides = [1, 1]} : vector<2x32xf32> to vector<1x32xf32>
    %cst_183 = arith.constant 9.99999974E-6 : f32
    %222 = vector.broadcast %cst_183 : f32 to vector<1x32xf32>
    %223 = arith.addf %220, %222 : vector<1x32xf32>
    %224 = math.rsqrt %223 : vector<1x32xf32>
    %225 = arith.mulf %221, %224 : vector<1x32xf32>
    %cst_184 = arith.constant dense<0.000000e+00> : vector<1x256xf32>
    %226 = tpu.matmul %225, %206, %cst_184 {dimension_numbers = #tpu.dot_dimension_numbers<[1], [0], [0], [1], [0, 0, 1, 1], [], []>} : vector<1x32xf32>, vector<32x256xf32>, vector<1x256xf32> -> vector<1x256xf32>
    %227 = vector.broadcast %226 : vector<1x256xf32> to vector<16x256xf32>
    %228 = arith.mulf %214, %227 : vector<16x256xf32>
    %229 = vector.extract_strided_slice %204 {offsets = [1, 0], sizes = [1, 32], strides = [1, 1]} : vector<2x32xf32> to vector<1x32xf32>
    %cst_185 = arith.constant dense<0.000000e+00> : vector<1x256xf32>
    %230 = tpu.matmul %229, %206, %cst_185 {dimension_numbers = #tpu.dot_dimension_numbers<[1], [0], [0], [1], [0, 0, 1, 1], [], []>} : vector<1x32xf32>, vector<32x256xf32>, vector<1x256xf32> -> vector<1x256xf32>
    %231 = vector.broadcast %230 : vector<1x256xf32> to vector<16x256xf32>
    %232 = arith.addf %228, %231 : vector<16x256xf32>
    %c0_186 = arith.constant 0 : index
    %c0_187 = arith.constant 0 : index
    %c0_188 = arith.constant 0 : index
    %233 = vector.load %arg29[%c0_186, %c0_187, %c0_188] : memref<2x8x16xf32, #tpu.memory_space<vmem>>, vector<1x8x16xf32>
    %234 = vector.shape_cast %233 : vector<1x8x16xf32> to vector<8x16xf32>
    %cst_189 = arith.constant dense<0.000000e+00> : vector<8x256xf32>
    %235 = tpu.matmul %234, %232, %cst_189 {dimension_numbers = #tpu.dot_dimension_numbers<[1], [0], [0], [1], [0, 0, 1, 1], [], []>} : vector<8x16xf32>, vector<16x256xf32>, vector<8x256xf32> -> vector<8x256xf32>
    %c1_190 = arith.constant 1 : index
    %c0_191 = arith.constant 0 : index
    %c0_192 = arith.constant 0 : index
    %236 = vector.load %arg29[%c1_190, %c0_191, %c0_192] : memref<2x8x16xf32, #tpu.memory_space<vmem>>, vector<1x8x16xf32>
    %237 = vector.shape_cast %236 : vector<1x8x16xf32> to vector<8x16xf32>
    %cst_193 = arith.constant dense<0.000000e+00> : vector<8x256xf32>
    %238 = tpu.matmul %237, %232, %cst_193 {dimension_numbers = #tpu.dot_dimension_numbers<[1], [0], [0], [1], [0, 0, 1, 1], [], []>} : vector<8x16xf32>, vector<16x256xf32>, vector<8x256xf32> -> vector<8x256xf32>
    %239 = arith.maximumf %235, %238 : vector<8x256xf32>
    %c0_194 = arith.constant 0 : index
    %c0_195 = arith.constant 0 : index
    %c0_196 = arith.constant 0 : index
    %240 = vector.load %arg30[%c0_194, %c0_195, %c0_196] : memref<2x256x128xf32, #tpu.memory_space<vmem>>, vector<1x256x128xf32>
    %241 = vector.shape_cast %240 : vector<1x256x128xf32> to vector<256x128xf32>
    %cst_197 = arith.constant dense<0.000000e+00> : vector<8x128xf32>
    %242 = tpu.matmul %239, %241, %cst_197 {dimension_numbers = #tpu.dot_dimension_numbers<[1], [0], [0], [1], [0, 0, 1, 1], [], []>} : vector<8x256xf32>, vector<256x128xf32>, vector<8x128xf32> -> vector<8x128xf32>
    %c1_198 = arith.constant 1 : index
    %c0_199 = arith.constant 0 : index
    %c0_200 = arith.constant 0 : index
    %243 = vector.load %arg30[%c1_198, %c0_199, %c0_200] : memref<2x256x128xf32, #tpu.memory_space<vmem>>, vector<1x256x128xf32>
    %244 = vector.shape_cast %243 : vector<1x256x128xf32> to vector<256x128xf32>
    %cst_201 = arith.constant dense<0.000000e+00> : vector<8x128xf32>
    %245 = tpu.matmul %239, %244, %cst_201 {dimension_numbers = #tpu.dot_dimension_numbers<[1], [0], [0], [1], [0, 0, 1, 1], [], []>} : vector<8x256xf32>, vector<256x128xf32>, vector<8x128xf32> -> vector<8x128xf32>
    %246 = arith.maximumf %242, %245 : vector<8x128xf32>
    %c0_202 = arith.constant 0 : index
    %c0_203 = arith.constant 0 : index
    %c0_204 = arith.constant 0 : index
    %247 = vector.load %arg31[%c0_202, %c0_203, %c0_204] : memref<4x2x8xf32, #tpu.memory_space<vmem>>, vector<1x2x8xf32>
    %248 = vector.shape_cast %247 : vector<1x2x8xf32> to vector<2x8xf32>
    %cst_205 = arith.constant dense<0.000000e+00> : vector<2x128xf32>
    %249 = tpu.matmul %248, %246, %cst_205 {dimension_numbers = #tpu.dot_dimension_numbers<[1], [0], [0], [1], [0, 0, 1, 1], [], []>} : vector<2x8xf32>, vector<8x128xf32>, vector<2x128xf32> -> vector<2x128xf32>
    %c0_206 = arith.constant 0 : index
    %c0_207 = arith.constant 0 : index
    %c0_208 = arith.constant 0 : index
    %250 = vector.load %arg32[%c0_206, %c0_207, %c0_208] : memref<4x128x64xf32, #tpu.memory_space<vmem>>, vector<1x128x64xf32>
    %251 = vector.shape_cast %250 : vector<1x128x64xf32> to vector<128x64xf32>
    %cst_209 = arith.constant dense<0.000000e+00> : vector<2x64xf32>
    %252 = tpu.matmul %249, %251, %cst_209 {dimension_numbers = #tpu.dot_dimension_numbers<[1], [0], [0], [1], [0, 0, 1, 1], [], []>} : vector<2x128xf32>, vector<128x64xf32>, vector<2x64xf32> -> vector<2x64xf32>
    %c1_210 = arith.constant 1 : index
    %c0_211 = arith.constant 0 : index
    %c0_212 = arith.constant 0 : index
    %253 = vector.load %arg31[%c1_210, %c0_211, %c0_212] : memref<4x2x8xf32, #tpu.memory_space<vmem>>, vector<1x2x8xf32>
    %254 = vector.shape_cast %253 : vector<1x2x8xf32> to vector<2x8xf32>
    %cst_213 = arith.constant dense<0.000000e+00> : vector<2x128xf32>
    %255 = tpu.matmul %254, %246, %cst_213 {dimension_numbers = #tpu.dot_dimension_numbers<[1], [0], [0], [1], [0, 0, 1, 1], [], []>} : vector<2x8xf32>, vector<8x128xf32>, vector<2x128xf32> -> vector<2x128xf32>
    %c1_214 = arith.constant 1 : index
    %c0_215 = arith.constant 0 : index
    %c0_216 = arith.constant 0 : index
    %256 = vector.load %arg32[%c1_214, %c0_215, %c0_216] : memref<4x128x64xf32, #tpu.memory_space<vmem>>, vector<1x128x64xf32>
    %257 = vector.shape_cast %256 : vector<1x128x64xf32> to vector<128x64xf32>
    %cst_217 = arith.constant dense<0.000000e+00> : vector<2x64xf32>
    %258 = tpu.matmul %255, %257, %cst_217 {dimension_numbers = #tpu.dot_dimension_numbers<[1], [0], [0], [1], [0, 0, 1, 1], [], []>} : vector<2x128xf32>, vector<128x64xf32>, vector<2x64xf32> -> vector<2x64xf32>
    %259 = arith.addf %252, %258 : vector<2x64xf32>
    %c2_218 = arith.constant 2 : index
    %c0_219 = arith.constant 0 : index
    %c0_220 = arith.constant 0 : index
    %260 = vector.load %arg31[%c2_218, %c0_219, %c0_220] : memref<4x2x8xf32, #tpu.memory_space<vmem>>, vector<1x2x8xf32>
    %261 = vector.shape_cast %260 : vector<1x2x8xf32> to vector<2x8xf32>
    %cst_221 = arith.constant dense<0.000000e+00> : vector<2x128xf32>
    %262 = tpu.matmul %261, %246, %cst_221 {dimension_numbers = #tpu.dot_dimension_numbers<[1], [0], [0], [1], [0, 0, 1, 1], [], []>} : vector<2x8xf32>, vector<8x128xf32>, vector<2x128xf32> -> vector<2x128xf32>
    %c2_222 = arith.constant 2 : index
    %c0_223 = arith.constant 0 : index
    %c0_224 = arith.constant 0 : index
    %263 = vector.load %arg32[%c2_222, %c0_223, %c0_224] : memref<4x128x64xf32, #tpu.memory_space<vmem>>, vector<1x128x64xf32>
    %264 = vector.shape_cast %263 : vector<1x128x64xf32> to vector<128x64xf32>
    %cst_225 = arith.constant dense<0.000000e+00> : vector<2x64xf32>
    %265 = tpu.matmul %262, %264, %cst_225 {dimension_numbers = #tpu.dot_dimension_numbers<[1], [0], [0], [1], [0, 0, 1, 1], [], []>} : vector<2x128xf32>, vector<128x64xf32>, vector<2x64xf32> -> vector<2x64xf32>
    %266 = arith.addf %259, %265 : vector<2x64xf32>
    %c3 = arith.constant 3 : index
    %c0_226 = arith.constant 0 : index
    %c0_227 = arith.constant 0 : index
    %267 = vector.load %arg31[%c3, %c0_226, %c0_227] : memref<4x2x8xf32, #tpu.memory_space<vmem>>, vector<1x2x8xf32>
    %268 = vector.shape_cast %267 : vector<1x2x8xf32> to vector<2x8xf32>
    %cst_228 = arith.constant dense<0.000000e+00> : vector<2x128xf32>
    %269 = tpu.matmul %268, %246, %cst_228 {dimension_numbers = #tpu.dot_dimension_numbers<[1], [0], [0], [1], [0, 0, 1, 1], [], []>} : vector<2x8xf32>, vector<8x128xf32>, vector<2x128xf32> -> vector<2x128xf32>
    %c3_229 = arith.constant 3 : index
    %c0_230 = arith.constant 0 : index
    %c0_231 = arith.constant 0 : index
    %270 = vector.load %arg32[%c3_229, %c0_230, %c0_231] : memref<4x128x64xf32, #tpu.memory_space<vmem>>, vector<1x128x64xf32>
    %271 = vector.shape_cast %270 : vector<1x128x64xf32> to vector<128x64xf32>
    %cst_232 = arith.constant dense<0.000000e+00> : vector<2x64xf32>
    %272 = tpu.matmul %269, %271, %cst_232 {dimension_numbers = #tpu.dot_dimension_numbers<[1], [0], [0], [1], [0, 0, 1, 1], [], []>} : vector<2x128xf32>, vector<128x64xf32>, vector<2x64xf32> -> vector<2x64xf32>
    %273 = arith.addf %266, %272 : vector<2x64xf32>
    %c0_233 = arith.constant 0 : index
    %c0_234 = arith.constant 0 : index
    %274 = vector.load %arg33[%c0_233, %c0_234] : memref<1x64xf32, #tpu.memory_space<vmem>>, vector<1x64xf32>
    %275 = vector.broadcast %274 : vector<1x64xf32> to vector<2x64xf32>
    %276 = arith.addf %273, %275 : vector<2x64xf32>
    %cst_235 = arith.constant 0.000000e+00 : f32
    %277 = vector.broadcast %cst_235 : f32 to vector<2x64xf32>
    %278 = arith.maximumf %276, %277 : vector<2x64xf32>
    %cst_236 = arith.constant dense<0.000000e+00> : vector<64xf32>
    %279 = vector.multi_reduction <add>, %278, %cst_236 [0] : vector<2x64xf32> to vector<64xf32>
    %280 = vector.shape_cast %279 : vector<64xf32> to vector<1x64xf32>
    %cst_237 = arith.constant 5.000000e-01 : f32
    %281 = vector.broadcast %cst_237 : f32 to vector<1x64xf32>
    %282 = arith.mulf %280, %281 : vector<1x64xf32>
    %283 = vector.broadcast %282 : vector<1x64xf32> to vector<2x64xf32>
    %284 = arith.subf %278, %283 : vector<2x64xf32>
    %285 = arith.mulf %284, %284 : vector<2x64xf32>
    %cst_238 = arith.constant dense<0.000000e+00> : vector<64xf32>
    %286 = vector.multi_reduction <add>, %285, %cst_238 [0] : vector<2x64xf32> to vector<64xf32>
    %287 = vector.shape_cast %286 : vector<64xf32> to vector<1x64xf32>
    %cst_239 = arith.constant 5.000000e-01 : f32
    %288 = vector.broadcast %cst_239 : f32 to vector<1x64xf32>
    %289 = arith.mulf %287, %288 : vector<1x64xf32>
    %c0_240 = arith.constant 0 : index
    %c0_241 = arith.constant 0 : index
    %290 = vector.load %arg34[%c0_240, %c0_241] : memref<2x64xf32, #tpu.memory_space<vmem>>, vector<2x64xf32>
    %291 = vector.extract_strided_slice %290 {offsets = [0, 0], sizes = [1, 64], strides = [1, 1]} : vector<2x64xf32> to vector<1x64xf32>
    %cst_242 = arith.constant 9.99999974E-6 : f32
    %292 = vector.broadcast %cst_242 : f32 to vector<1x64xf32>
    %293 = arith.addf %289, %292 : vector<1x64xf32>
    %294 = math.rsqrt %293 : vector<1x64xf32>
    %295 = arith.mulf %291, %294 : vector<1x64xf32>
    %296 = vector.broadcast %295 : vector<1x64xf32> to vector<2x64xf32>
    %297 = arith.mulf %284, %296 : vector<2x64xf32>
    %298 = vector.extract_strided_slice %290 {offsets = [1, 0], sizes = [1, 64], strides = [1, 1]} : vector<2x64xf32> to vector<1x64xf32>
    %299 = vector.broadcast %298 : vector<1x64xf32> to vector<2x64xf32>
    %300 = arith.addf %297, %299 : vector<2x64xf32>
    %c0_243 = arith.constant 0 : index
    %c0_244 = arith.constant 0 : index
    %301 = vector.load %arg35[%c0_243, %c0_244] : memref<64x10xf32, #tpu.memory_space<vmem>>, vector<64x10xf32>
    %cst_245 = arith.constant dense<0.000000e+00> : vector<2x10xf32>
    %302 = tpu.matmul %300, %301, %cst_245 {dimension_numbers = #tpu.dot_dimension_numbers<[1], [0], [0], [1], [0, 0, 1, 1], [], []>} : vector<2x64xf32>, vector<64x10xf32>, vector<2x10xf32> -> vector<2x10xf32>
    %c0_246 = arith.constant 0 : index
    %c0_247 = arith.constant 0 : index
    %303 = vector.load %arg36[%c0_246, %c0_247] : memref<1x10xf32, #tpu.memory_space<vmem>>, vector<1x10xf32>
    %304 = vector.broadcast %303 : vector<1x10xf32> to vector<2x10xf32>
    %305 = arith.addf %302, %304 : vector<2x10xf32>
    %c0_248 = arith.constant 0 : index
    %c0_249 = arith.constant 0 : index
    %306 = vector.load %arg37[%c0_248, %c0_249] : memref<2x10xf32, #tpu.memory_space<vmem>>, vector<2x10xf32>
    tpu.vector_store %arg37[%c0_248, %c0_249], %305 {strides = array<i32>} : memref<2x10xf32, #tpu.memory_space<vmem>>, vector<2x10xf32>,
    return
  }
}

</mosaic_0001>

<llo_original>
// kernel: model_forward.1
$region0: #{model_forward.1}
  #allocation0 [shape = 'u32[]', space=smem, size = 0x4, offset = 0x4, fixed_abs, tag = 'smem constant byte address 0x4 - core index']
  #allocation1 [shape = 'u32[144,128]{1,0:T(1,128)}', space=vmem, size = 0x12000, scoped, tag = 'internal scratch']
  %s0 = inlined_call_operand.smem [shape: u32[38], index: -1, kind: input, shape index: {}]
  %s1 = sld [smem:[%s0]]
  %s2 = scalar_lea.smem %s0, 1
  %s3 = sld [smem:[%s2]]
  %s4 = scalar_lea.smem %s0, 2
  %s5 = sld [smem:[%s4]]
  %s6 = scalar_lea.smem %s0, 3
  %s7 = sld [smem:[%s6]]
  %s8 = scalar_lea.smem %s0, 4
  %s9 = sld [smem:[%s8]]
  %s10 = scalar_lea.smem %s0, 5
  %s11 = sld [smem:[%s10]]
  %s12 = scalar_lea.smem %s0, 6
  %s13 = sld [smem:[%s12]]
  %s14 = scalar_lea.smem %s0, 7
  %s15 = sld [smem:[%s14]]
  %s16 = scalar_lea.smem %s0, 8
  %s17 = sld [smem:[%s16]]
  %s18 = scalar_lea.smem %s0, 9
  %s19 = sld [smem:[%s18]]
  %s20 = scalar_lea.smem %s0, 10
  %s21 = sld [smem:[%s20]]
  %s22 = scalar_lea.smem %s0, 11
  %s23 = sld [smem:[%s22]]
  %s24 = scalar_lea.smem %s0, 12
  %s25 = sld [smem:[%s24]]
  %s26 = scalar_lea.smem %s0, 13
  %s27 = sld [smem:[%s26]]
  %s28 = scalar_lea.smem %s0, 14
  %s29 = sld [smem:[%s28]]
  %s30 = scalar_lea.smem %s0, 15
  %s31 = sld [smem:[%s30]]
  %s32 = scalar_lea.smem %s0, 16
  %s33 = sld [smem:[%s32]]
  %s34 = scalar_lea.smem %s0, 17
  %s35 = sld [smem:[%s34]]
  %s36 = scalar_lea.smem %s0, 18
  %s37 = sld [smem:[%s36]]
  %s38 = scalar_lea.smem %s0, 19
  %s39 = sld [smem:[%s38]]
  %s40 = scalar_lea.smem %s0, 20
  %s41 = sld [smem:[%s40]]
  %s42 = scalar_lea.smem %s0, 21
  %s43 = sld [smem:[%s42]]
  %s44 = scalar_lea.smem %s0, 22
  %s45 = sld [smem:[%s44]]
  %s46 = scalar_lea.smem %s0, 23
  %s47 = sld [smem:[%s46]]
  %s48 = scalar_lea.smem %s0, 24
  %s49 = sld [smem:[%s48]]
  %s50 = scalar_lea.smem %s0, 25
  %s51 = sld [smem:[%s50]]
  %s52 = scalar_lea.smem %s0, 26
  %s53 = sld [smem:[%s52]]
  %s54 = scalar_lea.smem %s0, 27
  %s55 = sld [smem:[%s54]]
  %s56 = scalar_lea.smem %s0, 28
  %s57 = sld [smem:[%s56]]
  %s58 = scalar_lea.smem %s0, 29
  %s59 = sld [smem:[%s58]]
  %s60 = scalar_lea.smem %s0, 30
  %s61 = sld [smem:[%s60]]
  %s62 = scalar_lea.smem %s0, 31
  %s63 = sld [smem:[%s62]]
  %s64 = scalar_lea.smem %s0, 32
  %s65 = sld [smem:[%s64]]
  %s66 = scalar_lea.smem %s0, 33
  %s67 = sld [smem:[%s66]]
  %s68 = scalar_lea.smem %s0, 34
  %s69 = sld [smem:[%s68]]
  %s70 = scalar_lea.smem %s0, 35
  %s71 = sld [smem:[%s70]]
  %s72 = scalar_lea.smem %s0, 36
  %s73 = sld [smem:[%s72]]
  %s74 = scalar_lea.smem %s0, 37
  %s75 = sld [smem:[%s74]]
  %s76 = sld [smem:[#allocation0]]
  $region250: #{model_forward.1} parent=0
    _
  %s78 = ssub.s32 1, %s76
  %s79 = scalar_select 0, %s78, %s76
  $region1: #{model_forward.1} parent=0
    #allocation2 [shape = 'u8[1024]{0}', space=vmem, size = 0x400, scoped, tag = 'input window, operand 2, single buffered']
    #allocation3 [shape = 's32[1]{0}', space=sflag, size = 0x4, scoped, tag = 'scoped memory for model_forward.1']
    #allocation4 [shape = 's32[1]{0}', space=sflag, size = 0x4, scoped, tag = 'scoped memory for model_forward.1']
    #allocation5 [shape = 'u8[1024]{0}', space=vmem, size = 0x400, scoped, tag = 'input window, operand 3, single buffered']
    #allocation6 [shape = 's32[1]{0}', space=sflag, size = 0x4, scoped, tag = 'scoped memory for model_forward.1']
    #allocation7 [shape = 'u8[8192]{0}', space=vmem, size = 0x2000, scoped, tag = 'input window, operand 5, single buffered']
    #allocation8 [shape = 'u8[65536]{0}', space=vmem, size = 0x10000, scoped, tag = 'input window, operand 6, single buffered']
    #allocation9 [shape = 's32[1]{0}', space=sflag, size = 0x4, scoped, tag = 'scoped memory for model_forward.1']
    #allocation10 [shape = 'u8[32768]{0}', space=vmem, size = 0x8000, scoped, tag = 'input window, operand 7, single buffered']
    #allocation11 [shape = 'u8[262144]{0}', space=vmem, size = 0x40000, scoped, tag = 'input window, operand 8, single buffered']
    #allocation12 [shape = 's32[1]{0}', space=sflag, size = 0x4, scoped, tag = 'scoped memory for model_forward.1']
    #allocation13 [shape = 'u8[1024]{0}', space=vmem, size = 0x400, scoped, tag = 'input window, operand 10, single buffered']
    #allocation14 [shape = 'u8[1024]{0}', space=vmem, size = 0x400, scoped, tag = 'input window, operand 11, single buffered']
    #allocation15 [shape = 's32[1]{0}', space=sflag, size = 0x4, scoped, tag = 'scoped memory for model_forward.1']
    #allocation16 [shape = 'u8[32768]{0}', space=vmem, size = 0x8000, scoped, tag = 'input window, operand 14, single buffered']
    #allocation17 [shape = 'u8[16384]{0}', space=vmem, size = 0x4000, scoped, tag = 'input window, operand 15, single buffered']
    #allocation18 [shape = 's32[1]{0}', space=sflag, size = 0x4, scoped, tag = 'scoped memory for model_forward.1']
    #allocation19 [shape = 'u8[262144]{0}', space=vmem, size = 0x40000, scoped, tag = 'input window, operand 16, single buffered']
    #allocation20 [shape = 'u8[393216]{0}', space=vmem, size = 0x60000, scoped, tag = 'input window, operand 17, single buffered']
    #allocation21 [shape = 's32[1]{0}', space=sflag, size = 0x4, scoped, tag = 'scoped memory for model_forward.1']
    #allocation22 [shape = 'u8[1024]{0}', space=vmem, size = 0x400, scoped, tag = 'input window, operand 18, single buffered']
    #allocation23 [shape = 'u8[1024]{0}', space=vmem, size = 0x400, scoped, tag = 'input window, operand 19, single buffered']
    #allocation24 [shape = 's32[1]{0}', space=sflag, size = 0x4, scoped, tag = 'scoped memory for model_forward.1']
    #allocation25 [shape = 'u8[32768]{0}', space=vmem, size = 0x8000, scoped, tag = 'input window, operand 21, single buffered']
    #allocation26 [shape = 'u8[16384]{0}', space=vmem, size = 0x4000, scoped, tag = 'input window, operand 22, single buffered']
    #allocation27 [shape = 's32[1]{0}', space=sflag, size = 0x4, scoped, tag = 'scoped memory for model_forward.1']
    #allocation28 [shape = 'u8[1024]{0}', space=vmem, size = 0x400, scoped, tag = 'input window, operand 24, single buffered']
    #allocation29 [shape = 'u8[1024]{0}', space=vmem, size = 0x400, scoped, tag = 'input window, operand 25, single buffered']
    #allocation30 [shape = 's32[1]{0}', space=sflag, size = 0x4, scoped, tag = 'scoped memory for model_forward.1']
    #allocation31 [shape = 'u8[32768]{0}', space=vmem, size = 0x8000, scoped, tag = 'input window, operand 27, single buffered']
    #allocation32 [shape = 'u8[16384]{0}', space=vmem, size = 0x4000, scoped, tag = 'input window, operand 28, single buffered']
    #allocation33 [shape = 's32[1]{0}', space=sflag, size = 0x4, scoped, tag = 'scoped memory for model_forward.1']
    #allocation34 [shape = 'u8[8192]{0}', space=vmem, size = 0x2000, scoped, tag = 'input window, operand 29, single buffered']
    #allocation35 [shape = 'u8[262144]{0}', space=vmem, size = 0x40000, scoped, tag = 'input window, operand 30, single buffered']
    #allocation36 [shape = 's32[1]{0}', space=sflag, size = 0x4, scoped, tag = 'scoped memory for model_forward.1']
    #allocation37 [shape = 'u8[4096]{0}', space=vmem, size = 0x1000, scoped, tag = 'input window, operand 31, single buffered']
    #allocation38 [shape = 'u8[1024]{0}', space=vmem, size = 0x400, scoped, tag = 'output window, operand 0, single buffered']
    %80 = vsyncpa [#allocation3], 0
    %81 = vsyncpa [#allocation6], 0
    %82 = vsyncpa [#allocation9], 0
    %83 = vsyncpa [#allocation12], 0
    %84 = vsyncpa [#allocation15], 0
    %85 = vsyncpa [#allocation18], 0
    %86 = vsyncpa [#allocation21], 0
    %87 = vsyncpa [#allocation24], 0
    %88 = vsyncpa [#allocation27], 0
    %89 = vsyncpa [#allocation30], 0
    %90 = vsyncpa [#allocation33], 0
    %91 = vsyncpa [#allocation36], 0
    %92 = vsyncpa [#allocation4], 0
    // Predicated region
    $region2: #{model_forward.1} parent=1 // pred_check
      _
    $region3: #{model_forward.1} parent=1 // pred_check_branch
      %94 = sbr.rel (0) target = $region5
    $region4: #{model_forward.1} parent=1 // pred_region
      _
    $region5: #{model_forward.1} parent=1 // pred_fallthru
      _
    // Predicated region
    $region6: #{model_forward.1} parent=1 // pred_check
      _
    $region7: #{model_forward.1} parent=1 // pred_check_branch
      %96 = sbr.rel (0) target = $region9
    $region8: #{model_forward.1} parent=1 // pred_region
      _
    $region9: #{model_forward.1} parent=1 // pred_fallthru
      _
    // Predicated region
    $region10: #{model_forward.1} parent=1 // pred_check
      _
    $region11: #{model_forward.1} parent=1 // pred_check_branch
      %98 = sbr.rel (0) target = $region13
    $region12: #{model_forward.1} parent=1 // pred_region
      %s100 = ssub.s32 32, 32
      %101 = vsyncadd [#allocation3], %s100
      %s103 = sshll.u32 [#allocation2], 4
      %s104 = int_to_ptr.vmem [resolvable:$true] %s103
      %106 = dma.hbm_to_vmem [thread:$0]  %s5, 32, %s104, [#allocation3]
    $region13: #{model_forward.1} parent=1 // pred_fallthru
      _
    // Predicated region
    $region14: #{model_forward.1} parent=1 // pred_check
      _
    $region15: #{model_forward.1} parent=1 // pred_check_branch
      %108 = sbr.rel (0) target = $region17
    $region16: #{model_forward.1} parent=1 // pred_region
      %s110 = ssub.s32 32, 32
      %111 = vsyncadd [#allocation6], %s110
      %s113 = sshll.u32 [#allocation5], 4
      %s114 = int_to_ptr.vmem [resolvable:$true] %s113
      %116 = dma.hbm_to_vmem [thread:$0]  %s7, 32, %s114, [#allocation6]
    $region17: #{model_forward.1} parent=1 // pred_fallthru
      _
    // Predicated region
    $region18: #{model_forward.1} parent=1 // pred_check
      _
    $region19: #{model_forward.1} parent=1 // pred_check_branch
      %118 = sbr.rel (0) target = $region21
    $region20: #{model_forward.1} parent=1 // pred_region
      _
    $region21: #{model_forward.1} parent=1 // pred_fallthru
      _
    // Predicated region
    $region22: #{model_forward.1} parent=1 // pred_check
      _
    $region23: #{model_forward.1} parent=1 // pred_check_branch
      %120 = sbr.rel (0) target = $region25
    $region24: #{model_forward.1} parent=1 // pred_region
      %s122 = ssub.s32 256, 256
      %123 = vsyncadd [#allocation6], %s122
      %s125 = sshll.u32 [#allocation7], 4
      %s126 = int_to_ptr.vmem [resolvable:$true] %s125
      %128 = dma.hbm_to_vmem [thread:$0]  %s11, 256, %s126, [#allocation6]
    $region25: #{model_forward.1} parent=1 // pred_fallthru
      _
    // Predicated region
    $region26: #{model_forward.1} parent=1 // pred_check
      _
    $region27: #{model_forward.1} parent=1 // pred_check_branch
      %130 = sbr.rel (0) target = $region29
    $region28: #{model_forward.1} parent=1 // pred_region
      %s132 = ssub.s32 2048, 2048
      %133 = vsyncadd [#allocation9], %s132
      %s134 = sshll.u32 [#allocation8], 4
      %s135 = int_to_ptr.vmem [resolvable:$true] %s134
      %140 = dma.hbm_to_vmem [thread:$0]  %s13, 2048, %s135, [#allocation9], 128, 128, 8
    $region29: #{model_forward.1} parent=1 // pred_fallthru
      _
    // Predicated region
    $region30: #{model_forward.1} parent=1 // pred_check
      _
    $region31: #{model_forward.1} parent=1 // pred_check_branch
      %142 = sbr.rel (0) target = $region33
    $region32: #{model_forward.1} parent=1 // pred_region
      %s144 = ssub.s32 1024, 1024
      %145 = vsyncadd [#allocation9], %s144
      %s146 = sshll.u32 [#allocation10], 4
      %s147 = int_to_ptr.vmem [resolvable:$true] %s146
      %152 = dma.hbm_to_vmem [thread:$0]  %s15, 1024, %s147, [#allocation9], 128, 128, 8
    $region33: #{model_forward.1} parent=1 // pred_fallthru
      _
    // Predicated region
    $region34: #{model_forward.1} parent=1 // pred_check
      _
    $region35: #{model_forward.1} parent=1 // pred_check_branch
      %154 = sbr.rel (0) target = $region37
    $region36: #{model_forward.1} parent=1 // pred_region
      %s156 = ssub.s32 8192, 8192
      %157 = vsyncadd [#allocation12], %s156
      %s158 = sshll.u32 [#allocation11], 4
      %s159 = int_to_ptr.vmem [resolvable:$true] %s158
      %164 = dma.hbm_to_vmem [thread:$0]  %s17, 8192, %s159, [#allocation12], 128, 128, 8
    $region37: #{model_forward.1} parent=1 // pred_fallthru
      _
    // Predicated region
    $region38: #{model_forward.1} parent=1 // pred_check
      _
    $region39: #{model_forward.1} parent=1 // pred_check_branch
      %166 = sbr.rel (0) target = $region41
    $region40: #{model_forward.1} parent=1 // pred_region
      _
    $region41: #{model_forward.1} parent=1 // pred_fallthru
      _
    // Predicated region
    $region42: #{model_forward.1} parent=1 // pred_check
      _
    $region43: #{model_forward.1} parent=1 // pred_check_branch
      %168 = sbr.rel (0) target = $region45
    $region44: #{model_forward.1} parent=1 // pred_region
      %s170 = ssub.s32 32, 32
      %171 = vsyncadd [#allocation12], %s170
      %s173 = sshll.u32 [#allocation13], 4
      %s174 = int_to_ptr.vmem [resolvable:$true] %s173
      %176 = dma.hbm_to_vmem [thread:$0]  %s21, 32, %s174, [#allocation12]
    $region45: #{model_forward.1} parent=1 // pred_fallthru
      _
    // Predicated region
    $region46: #{model_forward.1} parent=1 // pred_check
      _
    $region47: #{model_forward.1} parent=1 // pred_check_branch
      %178 = sbr.rel (0) target = $region49
    $region48: #{model_forward.1} parent=1 // pred_region
      %s180 = ssub.s32 32, 32
      %181 = vsyncadd [#allocation15], %s180
      %s183 = sshll.u32 [#allocation14], 4
      %s184 = int_to_ptr.vmem [resolvable:$true] %s183
      %186 = dma.hbm_to_vmem [thread:$0]  %s23, 32, %s184, [#allocation15]
    $region49: #{model_forward.1} parent=1 // pred_fallthru
      _
    // Predicated region
    $region50: #{model_forward.1} parent=1 // pred_check
      _
    $region51: #{model_forward.1} parent=1 // pred_check_branch
      %188 = sbr.rel (0) target = $region53
    $region52: #{model_forward.1} parent=1 // pred_region
      _
    $region53: #{model_forward.1} parent=1 // pred_fallthru
      _
    // Predicated region
    $region54: #{model_forward.1} parent=1 // pred_check
      _
    $region55: #{model_forward.1} parent=1 // pred_check_branch
      %190 = sbr.rel (0) target = $region57
    $region56: #{model_forward.1} parent=1 // pred_region
      _
    $region57: #{model_forward.1} parent=1 // pred_fallthru
      _
    // Predicated region
    $region58: #{model_forward.1} parent=1 // pred_check
      _
    $region59: #{model_forward.1} parent=1 // pred_check_branch
      %192 = sbr.rel (0) target = $region61
    $region60: #{model_forward.1} parent=1 // pred_region
      %s194 = ssub.s32 1024, 1024
      %195 = vsyncadd [#allocation15], %s194
      %s196 = sshll.u32 [#allocation16], 4
      %s197 = int_to_ptr.vmem [resolvable:$true] %s196
      %202 = dma.hbm_to_vmem [thread:$0]  %s29, 1024, %s197, [#allocation15], 128, 128, 8
    $region61: #{model_forward.1} parent=1 // pred_fallthru
      _
    // Predicated region
    $region62: #{model_forward.1} parent=1 // pred_check
      _
    $region63: #{model_forward.1} parent=1 // pred_check_branch
      %204 = sbr.rel (0) target = $region65
    $region64: #{model_forward.1} parent=1 // pred_region
      %s206 = ssub.s32 512, 512
      %207 = vsyncadd [#allocation18], %s206
      %s208 = sshll.u32 [#allocation17], 4
      %s209 = int_to_ptr.vmem [resolvable:$true] %s208
      %214 = dma.hbm_to_vmem [thread:$0]  %s31, 512, %s209, [#allocation18], 128, 128, 8
    $region65: #{model_forward.1} parent=1 // pred_fallthru
      _
    // Predicated region
    $region66: #{model_forward.1} parent=1 // pred_check
      _
    $region67: #{model_forward.1} parent=1 // pred_check_branch
      %216 = sbr.rel (0) target = $region69
    $region68: #{model_forward.1} parent=1 // pred_region
      %s218 = ssub.s32 8192, 8192
      %219 = vsyncadd [#allocation18], %s218
      %s220 = sshll.u32 [#allocation19], 4
      %s221 = int_to_ptr.vmem [resolvable:$true] %s220
      %226 = dma.hbm_to_vmem [thread:$0]  %s33, 8192, %s221, [#allocation18], 128, 128, 8
    $region69: #{model_forward.1} parent=1 // pred_fallthru
      _
    // Predicated region
    $region70: #{model_forward.1} parent=1 // pred_check
      _
    $region71: #{model_forward.1} parent=1 // pred_check_branch
      %228 = sbr.rel (0) target = $region73
    $region72: #{model_forward.1} parent=1 // pred_region
      %s230 = ssub.s32 12288, 12288
      %231 = vsyncadd [#allocation21], %s230
      %s232 = sshll.u32 [#allocation20], 4
      %s233 = int_to_ptr.vmem [resolvable:$true] %s232
      %238 = dma.hbm_to_vmem [thread:$0]  %s35, 12288, %s233, [#allocation21], 256, 256, 16
    $region73: #{model_forward.1} parent=1 // pred_fallthru
      _
    // Predicated region
    $region74: #{model_forward.1} parent=1 // pred_check
      _
    $region75: #{model_forward.1} parent=1 // pred_check_branch
      %240 = sbr.rel (0) target = $region77
    $region76: #{model_forward.1} parent=1 // pred_region
      %s242 = ssub.s32 32, 32
      %243 = vsyncadd [#allocation21], %s242
      %s245 = sshll.u32 [#allocation22], 4
      %s246 = int_to_ptr.vmem [resolvable:$true] %s245
      %248 = dma.hbm_to_vmem [thread:$0]  %s37, 32, %s246, [#allocation21]
    $region77: #{model_forward.1} parent=1 // pred_fallthru
      _
    // Predicated region
    $region78: #{model_forward.1} parent=1 // pred_check
      _
    $region79: #{model_forward.1} parent=1 // pred_check_branch
      %250 = sbr.rel (0) target = $region81
    $region80: #{model_forward.1} parent=1 // pred_region
      %s252 = ssub.s32 32, 32
      %253 = vsyncadd [#allocation24], %s252
      %s255 = sshll.u32 [#allocation23], 4
      %s256 = int_to_ptr.vmem [resolvable:$true] %s255
      %258 = dma.hbm_to_vmem [thread:$0]  %s39, 32, %s256, [#allocation24]
    $region81: #{model_forward.1} parent=1 // pred_fallthru
      _
    // Predicated region
    $region82: #{model_forward.1} parent=1 // pred_check
      _
    $region83: #{model_forward.1} parent=1 // pred_check_branch
      %260 = sbr.rel (0) target = $region85
    $region84: #{model_forward.1} parent=1 // pred_region
      _
    $region85: #{model_forward.1} parent=1 // pred_fallthru
      _
    // Predicated region
    $region86: #{model_forward.1} parent=1 // pred_check
      _
    $region87: #{model_forward.1} parent=1 // pred_check_branch
      %262 = sbr.rel (0) target = $region89
    $region88: #{model_forward.1} parent=1 // pred_region
      %s264 = ssub.s32 1024, 1024
      %265 = vsyncadd [#allocation24], %s264
      %s266 = sshll.u32 [#allocation25], 4
      %s267 = int_to_ptr.vmem [resolvable:$true] %s266
      %272 = dma.hbm_to_vmem [thread:$0]  %s43, 1024, %s267, [#allocation24], 256, 256, 16
    $region89: #{model_forward.1} parent=1 // pred_fallthru
      _
    // Predicated region
    $region90: #{model_forward.1} parent=1 // pred_check
      _
    $region91: #{model_forward.1} parent=1 // pred_check_branch
      %274 = sbr.rel (0) target = $region93
    $region92: #{model_forward.1} parent=1 // pred_region
      %s276 = ssub.s32 512, 512
      %277 = vsyncadd [#allocation27], %s276
      %s278 = sshll.u32 [#allocation26], 4
      %s279 = int_to_ptr.vmem [resolvable:$true] %s278
      %284 = dma.hbm_to_vmem [thread:$0]  %s45, 512, %s279, [#allocation27], 128, 128, 8
    $region93: #{model_forward.1} parent=1 // pred_fallthru
      _
    // Predicated region
    $region94: #{model_forward.1} parent=1 // pred_check
      _
    $region95: #{model_forward.1} parent=1 // pred_check_branch
      %286 = sbr.rel (0) target = $region97
    $region96: #{model_forward.1} parent=1 // pred_region
      _
    $region97: #{model_forward.1} parent=1 // pred_fallthru
      _
    // Predicated region
    $region98: #{model_forward.1} parent=1 // pred_check
      _
    $region99: #{model_forward.1} parent=1 // pred_check_branch
      %288 = sbr.rel (0) target = $region101
    $region100: #{model_forward.1} parent=1 // pred_region
      %s290 = ssub.s32 32, 32
      %291 = vsyncadd [#allocation27], %s290
      %s293 = sshll.u32 [#allocation28], 4
      %s294 = int_to_ptr.vmem [resolvable:$true] %s293
      %296 = dma.hbm_to_vmem [thread:$0]  %s49, 32, %s294, [#allocation27]
    $region101: #{model_forward.1} parent=1 // pred_fallthru
      _
    // Predicated region
    $region102: #{model_forward.1} parent=1 // pred_check
      _
    $region103: #{model_forward.1} parent=1 // pred_check_branch
      %298 = sbr.rel (0) target = $region105
    $region104: #{model_forward.1} parent=1 // pred_region
      %s300 = ssub.s32 32, 32
      %301 = vsyncadd [#allocation30], %s300
      %s303 = sshll.u32 [#allocation29], 4
      %s304 = int_to_ptr.vmem [resolvable:$true] %s303
      %306 = dma.hbm_to_vmem [thread:$0]  %s51, 32, %s304, [#allocation30]
    $region105: #{model_forward.1} parent=1 // pred_fallthru
      _
    // Predicated region
    $region106: #{model_forward.1} parent=1 // pred_check
      _
    $region107: #{model_forward.1} parent=1 // pred_check_branch
      %308 = sbr.rel (0) target = $region109
    $region108: #{model_forward.1} parent=1 // pred_region
      _
    $region109: #{model_forward.1} parent=1 // pred_fallthru
      _
    // Predicated region
    $region110: #{model_forward.1} parent=1 // pred_check
      _
    $region111: #{model_forward.1} parent=1 // pred_check_branch
      %310 = sbr.rel (0) target = $region113
    $region112: #{model_forward.1} parent=1 // pred_region
      %s312 = ssub.s32 1024, 1024
      %313 = vsyncadd [#allocation30], %s312
      %s314 = sshll.u32 [#allocation31], 4
      %s315 = int_to_ptr.vmem [resolvable:$true] %s314
      %320 = dma.hbm_to_vmem [thread:$0]  %s55, 1024, %s315, [#allocation30], 256, 256, 16
    $region113: #{model_forward.1} parent=1 // pred_fallthru
      _
    // Predicated region
    $region114: #{model_forward.1} parent=1 // pred_check
      _
    $region115: #{model_forward.1} parent=1 // pred_check_branch
      %322 = sbr.rel (0) target = $region117
    $region116: #{model_forward.1} parent=1 // pred_region
      %s324 = ssub.s32 512, 512
      %325 = vsyncadd [#allocation33], %s324
      %s326 = sshll.u32 [#allocation32], 4
      %s327 = int_to_ptr.vmem [resolvable:$true] %s326
      %332 = dma.hbm_to_vmem [thread:$0]  %s57, 512, %s327, [#allocation33], 128, 128, 8
    $region117: #{model_forward.1} parent=1 // pred_fallthru
      _
    // Predicated region
    $region118: #{model_forward.1} parent=1 // pred_check
      _
    $region119: #{model_forward.1} parent=1 // pred_check_branch
      %334 = sbr.rel (0) target = $region121
    $region120: #{model_forward.1} parent=1 // pred_region
      %s336 = ssub.s32 256, 256
      %337 = vsyncadd [#allocation33], %s336
      %s338 = sshll.u32 [#allocation34], 4
      %s339 = int_to_ptr.vmem [resolvable:$true] %s338
      %344 = dma.hbm_to_vmem [thread:$0]  %s59, 256, %s339, [#allocation33], 128, 128, 8
    $region121: #{model_forward.1} parent=1 // pred_fallthru
      _
    // Predicated region
    $region122: #{model_forward.1} parent=1 // pred_check
      _
    $region123: #{model_forward.1} parent=1 // pred_check_branch
      %346 = sbr.rel (0) target = $region125
    $region124: #{model_forward.1} parent=1 // pred_region
      %s348 = ssub.s32 8192, 8192
      %349 = vsyncadd [#allocation36], %s348
      %s350 = sshll.u32 [#allocation35], 4
      %s351 = int_to_ptr.vmem [resolvable:$true] %s350
      %356 = dma.hbm_to_vmem [thread:$0]  %s61, 8192, %s351, [#allocation36], 128, 128, 8
    $region125: #{model_forward.1} parent=1 // pred_fallthru
      _
    // Predicated region
    $region126: #{model_forward.1} parent=1 // pred_check
      _
    $region127: #{model_forward.1} parent=1 // pred_check_branch
      %358 = sbr.rel (0) target = $region129
    $region128: #{model_forward.1} parent=1 // pred_region
      %s360 = ssub.s32 128, 128
      %361 = vsyncadd [#allocation36], %s360
      %s362 = sshll.u32 [#allocation37], 4
      %s363 = int_to_ptr.vmem [resolvable:$true] %s362
      %368 = dma.hbm_to_vmem [thread:$0]  %s63, 128, %s363, [#allocation36], 32, 32, 2
    $region129: #{model_forward.1} parent=1 // pred_fallthru
      _
    // Predicated region
    $region130: #{model_forward.1} parent=1 // pred_check
      _
    $region131: #{model_forward.1} parent=1 // pred_check_branch
      %370 = sbr.rel (0) target = $region133
    $region132: #{model_forward.1} parent=1 // pred_region
      _
    $region133: #{model_forward.1} parent=1 // pred_fallthru
      _
    // Predicated region
    $region134: #{model_forward.1} parent=1 // pred_check
      _
    $region135: #{model_forward.1} parent=1 // pred_check_branch
      %372 = sbr.rel (0) target = $region137
    $region136: #{model_forward.1} parent=1 // pred_region
      _
    $region137: #{model_forward.1} parent=1 // pred_fallthru
      _
    // Predicated region
    $region138: #{model_forward.1} parent=1 // pred_check
      _
    $region139: #{model_forward.1} parent=1 // pred_check_branch
      %374 = sbr.rel (0) target = $region141
    $region140: #{model_forward.1} parent=1 // pred_region
      _
    $region141: #{model_forward.1} parent=1 // pred_fallthru
      _
    // Predicated region
    $region142: #{model_forward.1} parent=1 // pred_check
      _
    $region143: #{model_forward.1} parent=1 // pred_check_branch
      %376 = sbr.rel (0) target = $region145
    $region144: #{model_forward.1} parent=1 // pred_region
      _
    $region145: #{model_forward.1} parent=1 // pred_fallthru
      _
    // Predicated region
    $region146: #{model_forward.1} parent=1 // pred_check
      _
    $region147: #{model_forward.1} parent=1 // pred_check_branch
      %378 = sbr.rel (0) target = $region149
    $region148: #{model_forward.1} parent=1 // pred_region
      _
    $region149: #{model_forward.1} parent=1 // pred_fallthru
      _
    // Predicated region
    $region150: #{model_forward.1} parent=1 // pred_check
      _
    $region151: #{model_forward.1} parent=1 // pred_check_branch
      %380 = sbr.rel (0) target = $region153
    $region152: #{model_forward.1} parent=1 // pred_region
      %381 = dma.done [#allocation3], 32
    $region153: #{model_forward.1} parent=1 // pred_fallthru
      _
    // Predicated region
    $region154: #{model_forward.1} parent=1 // pred_check
      _
    $region155: #{model_forward.1} parent=1 // pred_check_branch
      %383 = sbr.rel (0) target = $region157
    $region156: #{model_forward.1} parent=1 // pred_region
      %384 = dma.done [#allocation6], 32
    $region157: #{model_forward.1} parent=1 // pred_fallthru
      _
    // Predicated region
    $region158: #{model_forward.1} parent=1 // pred_check
      _
    $region159: #{model_forward.1} parent=1 // pred_check_branch
      %386 = sbr.rel (0) target = $region161
    $region160: #{model_forward.1} parent=1 // pred_region
      %387 = dma.done [#allocation6], 256
    $region161: #{model_forward.1} parent=1 // pred_fallthru
      _
    // Predicated region
    $region162: #{model_forward.1} parent=1 // pred_check
      _
    $region163: #{model_forward.1} parent=1 // pred_check_branch
      %389 = sbr.rel (0) target = $region165
    $region164: #{model_forward.1} parent=1 // pred_region
      %390 = dma.done [#allocation9], 2048
    $region165: #{model_forward.1} parent=1 // pred_fallthru
      _
    // Predicated region
    $region166: #{model_forward.1} parent=1 // pred_check
      _
    $region167: #{model_forward.1} parent=1 // pred_check_branch
      %392 = sbr.rel (0) target = $region169
    $region168: #{model_forward.1} parent=1 // pred_region
      %393 = dma.done [#allocation9], 1024
    $region169: #{model_forward.1} parent=1 // pred_fallthru
      _
    // Predicated region
    $region170: #{model_forward.1} parent=1 // pred_check
      _
    $region171: #{model_forward.1} parent=1 // pred_check_branch
      %395 = sbr.rel (0) target = $region173
    $region172: #{model_forward.1} parent=1 // pred_region
      %396 = dma.done [#allocation12], 8192
    $region173: #{model_forward.1} parent=1 // pred_fallthru
      _
    // Predicated region
    $region174: #{model_forward.1} parent=1 // pred_check
      _
    $region175: #{model_forward.1} parent=1 // pred_check_branch
      %398 = sbr.rel (0) target = $region177
    $region176: #{model_forward.1} parent=1 // pred_region
      %399 = dma.done [#allocation12], 32
    $region177: #{model_forward.1} parent=1 // pred_fallthru
      _
    // Predicated region
    $region178: #{model_forward.1} parent=1 // pred_check
      _
    $region179: #{model_forward.1} parent=1 // pred_check_branch
      %401 = sbr.rel (0) target = $region181
    $region180: #{model_forward.1} parent=1 // pred_region
      %402 = dma.done [#allocation15], 32
    $region181: #{model_forward.1} parent=1 // pred_fallthru
      _
    // Predicated region
    $region182: #{model_forward.1} parent=1 // pred_check
      _
    $region183: #{model_forward.1} parent=1 // pred_check_branch
      %404 = sbr.rel (0) target = $region185
    $region184: #{model_forward.1} parent=1 // pred_region
      %405 = dma.done [#allocation15], 1024
    $region185: #{model_forward.1} parent=1 // pred_fallthru
      _
    // Predicated region
    $region186: #{model_forward.1} parent=1 // pred_check
      _
    $region187: #{model_forward.1} parent=1 // pred_check_branch
      %407 = sbr.rel (0) target = $region189
    $region188: #{model_forward.1} parent=1 // pred_region
      %408 = dma.done [#allocation18], 512
    $region189: #{model_forward.1} parent=1 // pred_fallthru
      _
    // Predicated region
    $region190: #{model_forward.1} parent=1 // pred_check
      _
    $region191: #{model_forward.1} parent=1 // pred_check_branch
      %410 = sbr.rel (0) target = $region193
    $region192: #{model_forward.1} parent=1 // pred_region
      %411 = dma.done [#allocation18], 8192
    $region193: #{model_forward.1} parent=1 // pred_fallthru
      _
    // Predicated region
    $region194: #{model_forward.1} parent=1 // pred_check
      _
    $region195: #{model_forward.1} parent=1 // pred_check_branch
      %413 = sbr.rel (0) target = $region197
    $region196: #{model_forward.1} parent=1 // pred_region
      %414 = dma.done [#allocation21], 12288
    $region197: #{model_forward.1} parent=1 // pred_fallthru
      _
    // Predicated region
    $region198: #{model_forward.1} parent=1 // pred_check
      _
    $region199: #{model_forward.1} parent=1 // pred_check_branch
      %416 = sbr.rel (0) target = $region201
    $region200: #{model_forward.1} parent=1 // pred_region
      %417 = dma.done [#allocation21], 32
    $region201: #{model_forward.1} parent=1 // pred_fallthru
      _
    // Predicated region
    $region202: #{model_forward.1} parent=1 // pred_check
      _
    $region203: #{model_forward.1} parent=1 // pred_check_branch
      %419 = sbr.rel (0) target = $region205
    $region204: #{model_forward.1} parent=1 // pred_region
      %420 = dma.done [#allocation24], 32
    $region205: #{model_forward.1} parent=1 // pred_fallthru
      _
    // Predicated region
    $region206: #{model_forward.1} parent=1 // pred_check
      _
    $region207: #{model_forward.1} parent=1 // pred_check_branch
      %422 = sbr.rel (0) target = $region209
    $region208: #{model_forward.1} parent=1 // pred_region
      %423 = dma.done [#allocation24], 1024
    $region209: #{model_forward.1} parent=1 // pred_fallthru
      _
    // Predicated region
    $region210: #{model_forward.1} parent=1 // pred_check
      _
    $region211: #{model_forward.1} parent=1 // pred_check_branch
      %425 = sbr.rel (0) target = $region213
    $region212: #{model_forward.1} parent=1 // pred_region
      %426 = dma.done [#allocation27], 512
    $region213: #{model_forward.1} parent=1 // pred_fallthru
      _
    // Predicated region
    $region214: #{model_forward.1} parent=1 // pred_check
      _
    $region215: #{model_forward.1} parent=1 // pred_check_branch
      %428 = sbr.rel (0) target = $region217
    $region216: #{model_forward.1} parent=1 // pred_region
      %429 = dma.done [#allocation27], 32
    $region217: #{model_forward.1} parent=1 // pred_fallthru
      _
    // Predicated region
    $region218: #{model_forward.1} parent=1 // pred_check
      _
    $region219: #{model_forward.1} parent=1 // pred_check_branch
      %431 = sbr.rel (0) target = $region221
    $region220: #{model_forward.1} parent=1 // pred_region
      %432 = dma.done [#allocation30], 32
    $region221: #{model_forward.1} parent=1 // pred_fallthru
      _
    // Predicated region
    $region222: #{model_forward.1} parent=1 // pred_check
      _
    $region223: #{model_forward.1} parent=1 // pred_check_branch
      %434 = sbr.rel (0) target = $region225
    $region224: #{model_forward.1} parent=1 // pred_region
      %435 = dma.done [#allocation30], 1024
    $region225: #{model_forward.1} parent=1 // pred_fallthru
      _
    // Predicated region
    $region226: #{model_forward.1} parent=1 // pred_check
      _
    $region227: #{model_forward.1} parent=1 // pred_check_branch
      %437 = sbr.rel (0) target = $region229
    $region228: #{model_forward.1} parent=1 // pred_region
      %438 = dma.done [#allocation33], 512
    $region229: #{model_forward.1} parent=1 // pred_fallthru
      _
    // Predicated region
    $region230: #{model_forward.1} parent=1 // pred_check
      _
    $region231: #{model_forward.1} parent=1 // pred_check_branch
      %440 = sbr.rel (0) target = $region233
    $region232: #{model_forward.1} parent=1 // pred_region
      %441 = dma.done [#allocation33], 256
    $region233: #{model_forward.1} parent=1 // pred_fallthru
      _
    // Predicated region
    $region234: #{model_forward.1} parent=1 // pred_check
      _
    $region235: #{model_forward.1} parent=1 // pred_check_branch
      %443 = sbr.rel (0) target = $region237
    $region236: #{model_forward.1} parent=1 // pred_region
      %444 = dma.done [#allocation36], 8192
    $region237: #{model_forward.1} parent=1 // pred_fallthru
      _
    // Predicated region
    $region238: #{model_forward.1} parent=1 // pred_check
      _
    $region239: #{model_forward.1} parent=1 // pred_check_branch
      %446 = sbr.rel (0) target = $region241
    $region240: #{model_forward.1} parent=1 // pred_region
      %447 = dma.done [#allocation36], 128
    $region241: #{model_forward.1} parent=1 // pred_fallthru
      _
    %v448 = vld [vmem:[%s1] sm:$0xff]
    %v449 = vld [vmem:[%s1 + $0x8] sm:$0xff]
    %v450 = vld [vmem:[%s1 + $0x10] sm:$0xff]
    %v451 = vld [vmem:[%s1 + $0x18] sm:$0xff]
    %v452 = vld [vmem:[%s1 + $0x20] sm:$0xff]
    %v453 = vld [vmem:[%s1 + $0x28] sm:$0xff]
    %v454 = vld [vmem:[%s1 + $0x30] sm:$0xff]
    %v455 = vld [vmem:[%s1 + $0x38] sm:$0xff]
    %s456 = scalar_lea.vmem %s3, 192
    %v457 = vld [vmem:[%s456] sm:$0xff]
    %v458 = vld [vmem:[%s456 + $0x8] sm:$0xff]
    %v459 = vld [vmem:[%s456 + $0x10] sm:$0xff]
    %v460 = vld [vmem:[%s456 + $0x18] sm:$0xff]
    %v461 = vld [vmem:[%s456 + $0x20] sm:$0xff]
    %v462 = vld [vmem:[%s456 + $0x28] sm:$0xff]
    %v463 = vld [vmem:[%s456 + $0x30] sm:$0xff]
    %v464 = vld [vmem:[%s456 + $0x38] sm:$0xff]
    %v465 = vld [vmem:[%s456 + $0x40] sm:$0xff]
    %v466 = vld [vmem:[%s456 + $0x48] sm:$0xff]
    %v467 = vld [vmem:[%s456 + $0x50] sm:$0xff]
    %v468 = vld [vmem:[%s456 + $0x58] sm:$0xff]
    %v469 = vld [vmem:[%s456 + $0x60] sm:$0xff]
    %v470 = vld [vmem:[%s456 + $0x68] sm:$0xff]
    %v471 = vld [vmem:[%s456 + $0x70] sm:$0xff]
    %v472 = vld [vmem:[%s456 + $0x78] sm:$0xff]
    %v473 = vld [vmem:[%s456 + $0x80] sm:$0xff]
    %v474 = vld [vmem:[%s456 + $0x88] sm:$0xff]
    %v475 = vld [vmem:[%s456 + $0x90] sm:$0xff]
    %v476 = vld [vmem:[%s456 + $0x98] sm:$0xff]
    %v477 = vld [vmem:[%s456 + $0xa0] sm:$0xff]
    %v478 = vld [vmem:[%s456 + $0xa8] sm:$0xff]
    %v479 = vld [vmem:[%s456 + $0xb0] sm:$0xff]
    %v480 = vld [vmem:[%s456 + $0xb8] sm:$0xff]
    %v481 = vld [vmem:[#allocation8] sm:$0xff]
    %v482 = vld [vmem:[#allocation8 + $0x8] sm:$0xff]
    %v483 = vld [vmem:[#allocation8 + $0x10] sm:$0xff]
    %v484 = vld [vmem:[#allocation8 + $0x18] sm:$0xff]
    %v485 = vld [vmem:[#allocation8 + $0x20] sm:$0xff]
    %v486 = vld [vmem:[#allocation8 + $0x28] sm:$0xff]
    %v487 = vld [vmem:[#allocation8 + $0x30] sm:$0xff]
    %v488 = vld [vmem:[#allocation8 + $0x38] sm:$0xff]
    %vm489 = vcmask 523264
    %v491 = vsel %vm489, %v481, 0
    %v494 = vsel %vm489, %v482, 0
    %v497 = vsel %vm489, %v483, 0
    %v500 = vsel %vm489, %v484, 0
    %v503 = vsel %vm489, %v485, 0
    %v506 = vsel %vm489, %v486, 0
    %v509 = vsel %vm489, %v487, 0
    %v512 = vsel %vm489, %v488, 0
    %514 = vmatprep.subr.mxu0 0.0
    %515 = vmatpush1.msra.mxu0 0.0
    %516 = vmatprep.subr.mxu0 0.0
    %517 = vmatpush1.msra.mxu0 0.0
    %518 = vmatprep.subr.mxu0 0.0
    %519 = vmatpush1.msra.mxu0 0.0
    %520 = vmatprep.subr.mxu0 0.0
    %521 = vmatpush1.msra.mxu0 0.0
    %522 = vmatprep.subr.mxu0 0.0
    %523 = vmatpush1.msra.mxu0 0.0
    %524 = vmatprep.subr.mxu0 0.0
    %525 = vmatpush1.msra.mxu0 0.0
    %526 = vmatprep.subr.mxu0 0.0
    %527 = vmatpush1.msra.mxu0 0.0
    %528 = vmatprep.subr.mxu0 0.0
    %529 = vmatpush1.msra.mxu0 0.0
    %530 = vmatprep.subr.mxu0 0.0
    %531 = vmatpush1.msra.mxu0 %v455
    %532 = vmatprep.subr.mxu0 0.0
    %533 = vmatpush1.msra.mxu0 %v454
    %534 = vmatprep.subr.mxu0 0.0
    %535 = vmatpush1.msra.mxu0 %v453
    %536 = vmatprep.subr.mxu0 0.0
    %537 = vmatpush1.msra.mxu0 %v452
    %538 = vmatprep.subr.mxu0 0.0
    %539 = vmatpush1.msra.mxu0 %v451
    %540 = vmatprep.subr.mxu0 0.0
    %541 = vmatpush1.msra.mxu0 %v450
    %542 = vmatprep.subr.mxu0 0.0
    %543 = vmatpush1.msra.mxu0 %v449
    %544 = vmatprep.subr.mxu0 0.0
    %545 = vmatpush1.msra.mxu0 %v448
    %546 = vmatprep.subr.mxu0 0.0
    %547 = vmatpush2.msra.mxu0 0.0
    %548 = vmatprep.subr.mxu0 0.0
    %549 = vmatpush2.msra.mxu0 0.0
    %550 = vmatprep.subr.mxu0 0.0
    %551 = vmatpush2.msra.mxu0 0.0
    %552 = vmatprep.subr.mxu0 0.0
    %553 = vmatpush2.msra.mxu0 0.0
    %554 = vmatprep.subr.mxu0 0.0
    %555 = vmatpush2.msra.mxu0 0.0
    %556 = vmatprep.subr.mxu0 0.0
    %557 = vmatpush2.msra.mxu0 0.0
    %558 = vmatprep.subr.mxu0 0.0
    %559 = vmatpush2.msra.mxu0 0.0
    %560 = vmatprep.subr.mxu0 0.0
    %561 = vmatpush2.msra.mxu0 0.0
    %562 = vmatprep.subr.mxu0 0.0
    %563 = vmatpush2.msra.mxu0 0.0
    %564 = vmatprep.subr.mxu0 0.0
    %565 = vmatpush2.msra.mxu0 0.0
    %566 = vmatprep.subr.mxu0 0.0
    %567 = vmatpush2.msra.mxu0 0.0
    %568 = vmatprep.subr.mxu0 0.0
    %569 = vmatpush2.msra.mxu0 0.0
    %570 = vmatprep.subr.mxu0 0.0
    %571 = vmatpush2.msra.mxu0 0.0
    %572 = vmatprep.subr.mxu0 0.0
    %573 = vmatpush2.msra.mxu0 0.0
    %574 = vmatprep.subr.mxu0 0.0
    %575 = vmatpush2.msra.mxu0 0.0
    %576 = vmatprep.subr.mxu0 0.0
    %577 = vmatpush2.msra.mxu0 0.0
    %578 = vmatprep.mubr.f32.mxu0 0.0
    %579 = vmatmul.mubr.f32.gmra.mxu0 %v491
    %v580 = vpop.f32.mrf.mxu0
    %v581 = vadd.f32 0.0, %v580
    %v582 = vpop.f32.mrf.mxu0
    %583 = vmatprep.mubr.f32.mxu0 0.0
    %584 = vmatmul.mubr.f32.gmra.mxu0 %v494
    %v585 = vpop.f32.mrf.mxu0
    %v586 = vadd.f32 0.0, %v585
    %v587 = vpop.f32.mrf.mxu0
    %588 = vmatprep.mubr.f32.mxu0 0.0
    %589 = vmatmul.mubr.f32.gmra.mxu0 %v497
    %v590 = vpop.f32.mrf.mxu0
    %v591 = vadd.f32 0.0, %v590
    %v592 = vpop.f32.mrf.mxu0
    %593 = vmatprep.mubr.f32.mxu0 0.0
    %594 = vmatmul.mubr.f32.gmra.mxu0 %v500
    %v595 = vpop.f32.mrf.mxu0
    %v596 = vadd.f32 0.0, %v595
    %v597 = vpop.f32.mrf.mxu0
    %598 = vmatprep.mubr.f32.mxu0 0.0
    %599 = vmatmul.mubr.f32.gmra.mxu0 %v503
    %v600 = vpop.f32.mrf.mxu0
    %v601 = vadd.f32 0.0, %v600
    %v602 = vpop.f32.mrf.mxu0
    %603 = vmatprep.mubr.f32.mxu0 0.0
    %604 = vmatmul.mubr.f32.gmra.mxu0 %v506
    %v605 = vpop.f32.mrf.mxu0
    %v606 = vadd.f32 0.0, %v605
    %v607 = vpop.f32.mrf.mxu0
    %608 = vmatprep.mubr.f32.mxu0 0.0
    %609 = vmatmul.mubr.f32.gmra.mxu0 %v509
    %v610 = vpop.f32.mrf.mxu0
    %v611 = vadd.f32 0.0, %v610
    %v612 = vpop.f32.mrf.mxu0
    %613 = vmatprep.mubr.f32.mxu0 0.0
    %614 = vmatmul.mubr.f32.gmra.mxu0 %v512
    %v615 = vpop.f32.mrf.mxu0
    %v616 = vadd.f32 0.0, %v615
    %v617 = vpop.f32.mrf.mxu0
    %618 = vdwg.mxu0
    %v619 = vld [vmem:[%s3] sm:$0xff]
    %v620 = vld [vmem:[%s3 + $0x8] sm:$0xff]
    %v621 = vld [vmem:[%s3 + $0x10] sm:$0xff]
    %v622 = vld [vmem:[%s3 + $0x18] sm:$0xff]
    %v623 = vld [vmem:[%s3 + $0x20] sm:$0xff]
    %v624 = vld [vmem:[%s3 + $0x28] sm:$0xff]
    %v625 = vld [vmem:[%s3 + $0x30] sm:$0xff]
    %v626 = vld [vmem:[%s3 + $0x38] sm:$0xff]
    %v627 = vld [vmem:[%s3 + $0x40] sm:$0xff]
    %v628 = vld [vmem:[%s3 + $0x48] sm:$0xff]
    %v629 = vld [vmem:[%s3 + $0x50] sm:$0xff]
    %v630 = vld [vmem:[%s3 + $0x58] sm:$0xff]
    %v631 = vld [vmem:[%s3 + $0x60] sm:$0xff]
    %v632 = vld [vmem:[%s3 + $0x68] sm:$0xff]
    %v633 = vld [vmem:[%s3 + $0x70] sm:$0xff]
    %v634 = vld [vmem:[%s3 + $0x78] sm:$0xff]
    %v635 = vld [vmem:[%s3 + $0x80] sm:$0xff]
    %v636 = vld [vmem:[%s3 + $0x88] sm:$0xff]
    %v637 = vld [vmem:[%s3 + $0x90] sm:$0xff]
    %v638 = vld [vmem:[%s3 + $0x98] sm:$0xff]
    %v639 = vld [vmem:[%s3 + $0xa0] sm:$0xff]
    %v640 = vld [vmem:[%s3 + $0xa8] sm:$0xff]
    %v641 = vld [vmem:[%s3 + $0xb0] sm:$0xff]
    %v642 = vld [vmem:[%s3 + $0xb8] sm:$0xff]
    %vm643 = vcmask 785408
    %v645 = vsel %vm643, %v581, 0
    %v648 = vsel %vm643, %v586, 0
    %v651 = vsel %vm643, %v591, 0
    %v654 = vsel %vm643, %v596, 0
    %v657 = vsel %vm643, %v601, 0
    %v660 = vsel %vm643, %v606, 0
    %v663 = vsel %vm643, %v611, 0
    %v666 = vsel %vm643, %v616, 0
    %668 = vmatprep.subr.mxu0 0.0
    %669 = vmatpush1.msra.mxu0 0.0
    %670 = vmatprep.subr.mxu0 0.0
    %671 = vmatpush1.msra.mxu0 0.0
    %672 = vmatprep.subr.mxu0 0.0
    %673 = vmatpush1.msra.mxu0 0.0
    %674 = vmatprep.subr.mxu0 0.0
    %675 = vmatpush1.msra.mxu0 0.0
    %676 = vmatprep.subr.mxu0 %v642
    %677 = vmatpush1.msra.mxu0 %v641
    %678 = vmatprep.subr.mxu0 %v640
    %679 = vmatpush1.msra.mxu0 %v639
    %680 = vmatprep.subr.mxu0 %v638
    %681 = vmatpush1.msra.mxu0 %v637
    %682 = vmatprep.subr.mxu0 %v636
    %683 = vmatpush1.msra.mxu0 %v635
    %684 = vmatprep.subr.mxu0 %v634
    %685 = vmatpush1.msra.mxu0 %v633
    %686 = vmatprep.subr.mxu0 %v632
    %687 = vmatpush1.msra.mxu0 %v631
    %688 = vmatprep.subr.mxu0 %v630
    %689 = vmatpush1.msra.mxu0 %v629
    %690 = vmatprep.subr.mxu0 %v628
    %691 = vmatpush1.msra.mxu0 %v627
    %692 = vmatprep.subr.mxu0 %v626
    %693 = vmatpush1.msra.mxu0 %v625
    %694 = vmatprep.subr.mxu0 %v624
    %695 = vmatpush1.msra.mxu0 %v623
    %696 = vmatprep.subr.mxu0 %v622
    %697 = vmatpush1.msra.mxu0 %v621
    %698 = vmatprep.subr.mxu0 %v620
    %699 = vmatpush1.msra.mxu0 %v619
    %700 = vmatprep.subr.mxu0 0.0
    %701 = vmatpush2.msra.mxu0 0.0
    %702 = vmatprep.subr.mxu0 0.0
    %703 = vmatpush2.msra.mxu0 0.0
    %704 = vmatprep.subr.mxu0 0.0
    %705 = vmatpush2.msra.mxu0 0.0
    %706 = vmatprep.subr.mxu0 0.0
    %707 = vmatpush2.msra.mxu0 0.0
    %708 = vmatprep.subr.mxu0 0.0
    %709 = vmatpush2.msra.mxu0 0.0
    %710 = vmatprep.subr.mxu0 0.0
    %711 = vmatpush2.msra.mxu0 0.0
    %712 = vmatprep.subr.mxu0 0.0
    %713 = vmatpush2.msra.mxu0 0.0
    %714 = vmatprep.subr.mxu0 0.0
    %715 = vmatpush2.msra.mxu0 0.0
    %716 = vmatprep.subr.mxu0 0.0
    %717 = vmatpush2.msra.mxu0 0.0
    %718 = vmatprep.subr.mxu0 0.0
    %719 = vmatpush2.msra.mxu0 0.0
    %720 = vmatprep.subr.mxu0 0.0
    %721 = vmatpush2.msra.mxu0 0.0
    %722 = vmatprep.subr.mxu0 0.0
    %723 = vmatpush2.msra.mxu0 0.0
    %724 = vmatprep.subr.mxu0 0.0
    %725 = vmatpush2.msra.mxu0 0.0
    %726 = vmatprep.subr.mxu0 0.0
    %727 = vmatpush2.msra.mxu0 0.0
    %728 = vmatprep.subr.mxu0 0.0
    %729 = vmatpush2.msra.mxu0 0.0
    %730 = vmatprep.subr.mxu0 0.0
    %731 = vmatpush2.msra.mxu0 0.0
    %732 = vmatprep.mubr.f32.mxu0 0.0
    %733 = vmatmul.mubr.f32.gmra.mxu0 %v645
    %v734 = vpop.f32.mrf.mxu0
    %v735 = vadd.f32 0.0, %v734
    %v736 = vpop.f32.mrf.mxu0
    %v737 = vadd.f32 0.0, %v736
    %738 = vmatprep.mubr.f32.mxu0 0.0
    %739 = vmatmul.mubr.f32.gmra.mxu0 %v648
    %v740 = vpop.f32.mrf.mxu0
    %v741 = vadd.f32 0.0, %v740
    %v742 = vpop.f32.mrf.mxu0
    %v743 = vadd.f32 0.0, %v742
    %744 = vmatprep.mubr.f32.mxu0 0.0
    %745 = vmatmul.mubr.f32.gmra.mxu0 %v651
    %v746 = vpop.f32.mrf.mxu0
    %v747 = vadd.f32 0.0, %v746
    %v748 = vpop.f32.mrf.mxu0
    %v749 = vadd.f32 0.0, %v748
    %750 = vmatprep.mubr.f32.mxu0 0.0
    %751 = vmatmul.mubr.f32.gmra.mxu0 %v654
    %v752 = vpop.f32.mrf.mxu0
    %v753 = vadd.f32 0.0, %v752
    %v754 = vpop.f32.mrf.mxu0
    %v755 = vadd.f32 0.0, %v754
    %756 = vmatprep.mubr.f32.mxu0 0.0
    %757 = vmatmul.mubr.f32.gmra.mxu0 %v657
    %v758 = vpop.f32.mrf.mxu0
    %v759 = vadd.f32 0.0, %v758
    %v760 = vpop.f32.mrf.mxu0
    %v761 = vadd.f32 0.0, %v760
    %762 = vmatprep.mubr.f32.mxu0 0.0
    %763 = vmatmul.mubr.f32.gmra.mxu0 %v660
    %v764 = vpop.f32.mrf.mxu0
    %v765 = vadd.f32 0.0, %v764
    %v766 = vpop.f32.mrf.mxu0
    %v767 = vadd.f32 0.0, %v766
    %768 = vmatprep.mubr.f32.mxu0 0.0
    %769 = vmatmul.mubr.f32.gmra.mxu0 %v663
    %v770 = vpop.f32.mrf.mxu0
    %v771 = vadd.f32 0.0, %v770
    %v772 = vpop.f32.mrf.mxu0
    %v773 = vadd.f32 0.0, %v772
    %774 = vmatprep.mubr.f32.mxu0 0.0
    %775 = vmatmul.mubr.f32.gmra.mxu0 %v666
    %v776 = vpop.f32.mrf.mxu0
    %v777 = vadd.f32 0.0, %v776
    %v778 = vpop.f32.mrf.mxu0
    %v779 = vadd.f32 0.0, %v778
    %780 = vdwg.mxu0
    %v782 = vsel %vm643, %v448, 0
    %v785 = vsel %vm643, %v449, 0
    %v788 = vsel %vm643, %v450, 0
    %v791 = vsel %vm643, %v451, 0
    %v794 = vsel %vm643, %v452, 0
    %v797 = vsel %vm643, %v453, 0
    %v800 = vsel %vm643, %v454, 0
    %v803 = vsel %vm643, %v455, 0
    %805 = vmatprep.subr.mxu0 0.0
    %806 = vmatpush1.msra.mxu0 0.0
    %807 = vmatprep.subr.mxu0 0.0
    %808 = vmatpush1.msra.mxu0 0.0
    %809 = vmatprep.subr.mxu0 0.0
    %810 = vmatpush1.msra.mxu0 0.0
    %811 = vmatprep.subr.mxu0 0.0
    %812 = vmatpush1.msra.mxu0 0.0
    %813 = vmatprep.subr.mxu0 %v480
    %814 = vmatpush1.msra.mxu0 %v479
    %815 = vmatprep.subr.mxu0 %v478
    %816 = vmatpush1.msra.mxu0 %v477
    %817 = vmatprep.subr.mxu0 %v476
    %818 = vmatpush1.msra.mxu0 %v475
    %819 = vmatprep.subr.mxu0 %v474
    %820 = vmatpush1.msra.mxu0 %v473
    %821 = vmatprep.subr.mxu0 %v472
    %822 = vmatpush1.msra.mxu0 %v471
    %823 = vmatprep.subr.mxu0 %v470
    %824 = vmatpush1.msra.mxu0 %v469
    %825 = vmatprep.subr.mxu0 %v468
    %826 = vmatpush1.msra.mxu0 %v467
    %827 = vmatprep.subr.mxu0 %v466
    %828 = vmatpush1.msra.mxu0 %v465
    %829 = vmatprep.subr.mxu0 %v464
    %830 = vmatpush1.msra.mxu0 %v463
    %831 = vmatprep.subr.mxu0 %v462
    %832 = vmatpush1.msra.mxu0 %v461
    %833 = vmatprep.subr.mxu0 %v460
    %834 = vmatpush1.msra.mxu0 %v459
    %835 = vmatprep.subr.mxu0 %v458
    %836 = vmatpush1.msra.mxu0 %v457
    %837 = vmatprep.subr.mxu0 0.0
    %838 = vmatpush2.msra.mxu0 0.0
    %839 = vmatprep.subr.mxu0 0.0
    %840 = vmatpush2.msra.mxu0 0.0
    %841 = vmatprep.subr.mxu0 0.0
    %842 = vmatpush2.msra.mxu0 0.0
    %843 = vmatprep.subr.mxu0 0.0
    %844 = vmatpush2.msra.mxu0 0.0
    %845 = vmatprep.subr.mxu0 0.0
    %846 = vmatpush2.msra.mxu0 0.0
    %847 = vmatprep.subr.mxu0 0.0
    %848 = vmatpush2.msra.mxu0 0.0
    %849 = vmatprep.subr.mxu0 0.0
    %850 = vmatpush2.msra.mxu0 0.0
    %851 = vmatprep.subr.mxu0 0.0
    %852 = vmatpush2.msra.mxu0 0.0
    %853 = vmatprep.subr.mxu0 0.0
    %854 = vmatpush2.msra.mxu0 0.0
    %855 = vmatprep.subr.mxu0 0.0
    %856 = vmatpush2.msra.mxu0 0.0
    %857 = vmatprep.subr.mxu0 0.0
    %858 = vmatpush2.msra.mxu0 0.0
    %859 = vmatprep.subr.mxu0 0.0
    %860 = vmatpush2.msra.mxu0 0.0
    %861 = vmatprep.subr.mxu0 0.0
    %862 = vmatpush2.msra.mxu0 0.0
    %863 = vmatprep.subr.mxu0 0.0
    %864 = vmatpush2.msra.mxu0 0.0
    %865 = vmatprep.subr.mxu0 0.0
    %866 = vmatpush2.msra.mxu0 0.0
    %867 = vmatprep.subr.mxu0 0.0
    %868 = vmatpush2.msra.mxu0 0.0
    %869 = vmatprep.mubr.f32.mxu0 0.0
    %870 = vmatmul.mubr.f32.gmra.mxu0 %v782
    %v871 = vpop.f32.mrf.mxu0
    %v872 = vadd.f32 %v735, %v871
    %v873 = vpop.f32.mrf.mxu0
    %v874 = vadd.f32 %v737, %v873
    %875 = vmatprep.mubr.f32.mxu0 0.0
    %876 = vmatmul.mubr.f32.gmra.mxu0 %v785
    %v877 = vpop.f32.mrf.mxu0
    %v878 = vadd.f32 %v741, %v877
    %v879 = vpop.f32.mrf.mxu0
    %v880 = vadd.f32 %v743, %v879
    %881 = vmatprep.mubr.f32.mxu0 0.0
    %882 = vmatmul.mubr.f32.gmra.mxu0 %v788
    %v883 = vpop.f32.mrf.mxu0
    %v884 = vadd.f32 %v747, %v883
    %v885 = vpop.f32.mrf.mxu0
    %v886 = vadd.f32 %v749, %v885
    %887 = vmatprep.mubr.f32.mxu0 0.0
    %888 = vmatmul.mubr.f32.gmra.mxu0 %v791
    %v889 = vpop.f32.mrf.mxu0
    %v890 = vadd.f32 %v753, %v889
    %v891 = vpop.f32.mrf.mxu0
    %v892 = vadd.f32 %v755, %v891
    %893 = vmatprep.mubr.f32.mxu0 0.0
    %894 = vmatmul.mubr.f32.gmra.mxu0 %v794
    %v895 = vpop.f32.mrf.mxu0
    %v896 = vadd.f32 %v759, %v895
    %v897 = vpop.f32.mrf.mxu0
    %v898 = vadd.f32 %v761, %v897
    %899 = vmatprep.mubr.f32.mxu0 0.0
    %900 = vmatmul.mubr.f32.gmra.mxu0 %v797
    %v901 = vpop.f32.mrf.mxu0
    %v902 = vadd.f32 %v765, %v901
    %v903 = vpop.f32.mrf.mxu0
    %v904 = vadd.f32 %v767, %v903
    %905 = vmatprep.mubr.f32.mxu0 0.0
    %906 = vmatmul.mubr.f32.gmra.mxu0 %v800
    %v907 = vpop.f32.mrf.mxu0
    %v908 = vadd.f32 %v771, %v907
    %v909 = vpop.f32.mrf.mxu0
    %v910 = vadd.f32 %v773, %v909
    %911 = vmatprep.mubr.f32.mxu0 0.0
    %912 = vmatmul.mubr.f32.gmra.mxu0 %v803
    %v913 = vpop.f32.mrf.mxu0
    %v914 = vadd.f32 %v777, %v913
    %v915 = vpop.f32.mrf.mxu0
    %v916 = vadd.f32 %v779, %v915
    %917 = vdwg.mxu0
    %s918 = scalar_lea.vmem [#allocation8], 64
    %v919 = vld [vmem:[%s918] sm:$0xff]
    %v920 = vld [vmem:[%s918 + $0x8] sm:$0xff]
    %v921 = vld [vmem:[%s918 + $0x10] sm:$0xff]
    %v922 = vld [vmem:[%s918 + $0x18] sm:$0xff]
    %v923 = vld [vmem:[%s918 + $0x20] sm:$0xff]
    %v924 = vld [vmem:[%s918 + $0x28] sm:$0xff]
    %v925 = vld [vmem:[%s918 + $0x30] sm:$0xff]
    %v926 = vld [vmem:[%s918 + $0x38] sm:$0xff]
    %v928 = vsel %vm489, %v919, 0
    %v931 = vsel %vm489, %v920, 0
    %v934 = vsel %vm489, %v921, 0
    %v937 = vsel %vm489, %v922, 0
    %v940 = vsel %vm489, %v923, 0
    %v943 = vsel %vm489, %v924, 0
    %v946 = vsel %vm489, %v925, 0
    %v949 = vsel %vm489, %v926, 0
    %951 = vmatprep.subr.mxu0 0.0
    %952 = vmatpush1.msra.mxu0 0.0
    %953 = vmatprep.subr.mxu0 0.0
    %954 = vmatpush1.msra.mxu0 0.0
    %955 = vmatprep.subr.mxu0 0.0
    %956 = vmatpush1.msra.mxu0 0.0
    %957 = vmatprep.subr.mxu0 0.0
    %958 = vmatpush1.msra.mxu0 0.0
    %959 = vmatprep.subr.mxu0 0.0
    %960 = vmatpush1.msra.mxu0 0.0
    %961 = vmatprep.subr.mxu0 0.0
    %962 = vmatpush1.msra.mxu0 0.0
    %963 = vmatprep.subr.mxu0 0.0
    %964 = vmatpush1.msra.mxu0 0.0
    %965 = vmatprep.subr.mxu0 0.0
    %966 = vmatpush1.msra.mxu0 0.0
    %967 = vmatprep.subr.mxu0 0.0
    %968 = vmatpush1.msra.mxu0 %v455
    %969 = vmatprep.subr.mxu0 0.0
    %970 = vmatpush1.msra.mxu0 %v454
    %971 = vmatprep.subr.mxu0 0.0
    %972 = vmatpush1.msra.mxu0 %v453
    %973 = vmatprep.subr.mxu0 0.0
    %974 = vmatpush1.msra.mxu0 %v452
    %975 = vmatprep.subr.mxu0 0.0
    %976 = vmatpush1.msra.mxu0 %v451
    %977 = vmatprep.subr.mxu0 0.0
    %978 = vmatpush1.msra.mxu0 %v450
    %979 = vmatprep.subr.mxu0 0.0
    %980 = vmatpush1.msra.mxu0 %v449
    %981 = vmatprep.subr.mxu0 0.0
    %982 = vmatpush1.msra.mxu0 %v448
    %983 = vmatprep.subr.mxu0 0.0
    %984 = vmatpush2.msra.mxu0 0.0
    %985 = vmatprep.subr.mxu0 0.0
    %986 = vmatpush2.msra.mxu0 0.0
    %987 = vmatprep.subr.mxu0 0.0
    %988 = vmatpush2.msra.mxu0 0.0
    %989 = vmatprep.subr.mxu0 0.0
    %990 = vmatpush2.msra.mxu0 0.0
    %991 = vmatprep.subr.mxu0 0.0
    %992 = vmatpush2.msra.mxu0 0.0
    %993 = vmatprep.subr.mxu0 0.0
    %994 = vmatpush2.msra.mxu0 0.0
    %995 = vmatprep.subr.mxu0 0.0
    %996 = vmatpush2.msra.mxu0 0.0
    %997 = vmatprep.subr.mxu0 0.0
    %998 = vmatpush2.msra.mxu0 0.0
    %999 = vmatprep.subr.mxu0 0.0
    %1000 = vmatpush2.msra.mxu0 0.0
    %1001 = vmatprep.subr.mxu0 0.0
    %1002 = vmatpush2.msra.mxu0 0.0
    %1003 = vmatprep.subr.mxu0 0.0
    %1004 = vmatpush2.msra.mxu0 0.0
    %1005 = vmatprep.subr.mxu0 0.0
    %1006 = vmatpush2.msra.mxu0 0.0
    %1007 = vmatprep.subr.mxu0 0.0
    %1008 = vmatpush2.msra.mxu0 0.0
    %1009 = vmatprep.subr.mxu0 0.0
    %1010 = vmatpush2.msra.mxu0 0.0
    %1011 = vmatprep.subr.mxu0 0.0
    %1012 = vmatpush2.msra.mxu0 0.0
    %1013 = vmatprep.subr.mxu0 0.0
    %1014 = vmatpush2.msra.mxu0 0.0
    %1015 = vmatprep.mubr.f32.mxu0 0.0
    %1016 = vmatmul.mubr.f32.gmra.mxu0 %v928
    %v1017 = vpop.f32.mrf.mxu0
    %v1018 = vadd.f32 0.0, %v1017
    %v1019 = vpop.f32.mrf.mxu0
    %1020 = vmatprep.mubr.f32.mxu0 0.0
    %1021 = vmatmul.mubr.f32.gmra.mxu0 %v931
    %v1022 = vpop.f32.mrf.mxu0
    %v1023 = vadd.f32 0.0, %v1022
    %v1024 = vpop.f32.mrf.mxu0
    %1025 = vmatprep.mubr.f32.mxu0 0.0
    %1026 = vmatmul.mubr.f32.gmra.mxu0 %v934
    %v1027 = vpop.f32.mrf.mxu0
    %v1028 = vadd.f32 0.0, %v1027
    %v1029 = vpop.f32.mrf.mxu0
    %1030 = vmatprep.mubr.f32.mxu0 0.0
    %1031 = vmatmul.mubr.f32.gmra.mxu0 %v937
    %v1032 = vpop.f32.mrf.mxu0
    %v1033 = vadd.f32 0.0, %v1032
    %v1034 = vpop.f32.mrf.mxu0
    %1035 = vmatprep.mubr.f32.mxu0 0.0
    %1036 = vmatmul.mubr.f32.gmra.mxu0 %v940
    %v1037 = vpop.f32.mrf.mxu0
    %v1038 = vadd.f32 0.0, %v1037
    %v1039 = vpop.f32.mrf.mxu0
    %1040 = vmatprep.mubr.f32.mxu0 0.0
    %1041 = vmatmul.mubr.f32.gmra.mxu0 %v943
    %v1042 = vpop.f32.mrf.mxu0
    %v1043 = vadd.f32 0.0, %v1042
    %v1044 = vpop.f32.mrf.mxu0
    %1045 = vmatprep.mubr.f32.mxu0 0.0
    %1046 = vmatmul.mubr.f32.gmra.mxu0 %v946
    %v1047 = vpop.f32.mrf.mxu0
    %v1048 = vadd.f32 0.0, %v1047
    %v1049 = vpop.f32.mrf.mxu0
    %1050 = vmatprep.mubr.f32.mxu0 0.0
    %1051 = vmatmul.mubr.f32.gmra.mxu0 %v949
    %v1052 = vpop.f32.mrf.mxu0
    %v1053 = vadd.f32 0.0, %v1052
    %v1054 = vpop.f32.mrf.mxu0
    %1055 = vdwg.mxu0
    %s1056 = scalar_lea.vmem %s3, 384
    %v1057 = vld [vmem:[%s1056] sm:$0xff]
    %v1058 = vld [vmem:[%s1056 + $0x8] sm:$0xff]
    %v1059 = vld [vmem:[%s1056 + $0x10] sm:$0xff]
    %v1060 = vld [vmem:[%s1056 + $0x18] sm:$0xff]
    %v1061 = vld [vmem:[%s1056 + $0x20] sm:$0xff]
    %v1062 = vld [vmem:[%s1056 + $0x28] sm:$0xff]
    %v1063 = vld [vmem:[%s1056 + $0x30] sm:$0xff]
    %v1064 = vld [vmem:[%s1056 + $0x38] sm:$0xff]
    %v1065 = vld [vmem:[%s1056 + $0x40] sm:$0xff]
    %v1066 = vld [vmem:[%s1056 + $0x48] sm:$0xff]
    %v1067 = vld [vmem:[%s1056 + $0x50] sm:$0xff]
    %v1068 = vld [vmem:[%s1056 + $0x58] sm:$0xff]
    %v1069 = vld [vmem:[%s1056 + $0x60] sm:$0xff]
    %v1070 = vld [vmem:[%s1056 + $0x68] sm:$0xff]
    %v1071 = vld [vmem:[%s1056 + $0x70] sm:$0xff]
    %v1072 = vld [vmem:[%s1056 + $0x78] sm:$0xff]
    %v1073 = vld [vmem:[%s1056 + $0x80] sm:$0xff]
    %v1074 = vld [vmem:[%s1056 + $0x88] sm:$0xff]
    %v1075 = vld [vmem:[%s1056 + $0x90] sm:$0xff]
    %v1076 = vld [vmem:[%s1056 + $0x98] sm:$0xff]
    %v1077 = vld [vmem:[%s1056 + $0xa0] sm:$0xff]
    %v1078 = vld [vmem:[%s1056 + $0xa8] sm:$0xff]
    %v1079 = vld [vmem:[%s1056 + $0xb0] sm:$0xff]
    %v1080 = vld [vmem:[%s1056 + $0xb8] sm:$0xff]
    %v1082 = vsel %vm643, %v1018, 0
    %v1085 = vsel %vm643, %v1023, 0
    %v1088 = vsel %vm643, %v1028, 0
    %v1091 = vsel %vm643, %v1033, 0
    %v1094 = vsel %vm643, %v1038, 0
    %v1097 = vsel %vm643, %v1043, 0
    %v1100 = vsel %vm643, %v1048, 0
    %v1103 = vsel %vm643, %v1053, 0
    %1105 = vmatprep.subr.mxu0 0.0
    %1106 = vmatpush1.msra.mxu0 0.0
    %1107 = vmatprep.subr.mxu0 0.0
    %1108 = vmatpush1.msra.mxu0 0.0
    %1109 = vmatprep.subr.mxu0 0.0
    %1110 = vmatpush1.msra.mxu0 0.0
    %1111 = vmatprep.subr.mxu0 0.0
    %1112 = vmatpush1.msra.mxu0 0.0
    %1113 = vmatprep.subr.mxu0 %v1080
    %1114 = vmatpush1.msra.mxu0 %v1079
    %1115 = vmatprep.subr.mxu0 %v1078
    %1116 = vmatpush1.msra.mxu0 %v1077
    %1117 = vmatprep.subr.mxu0 %v1076
    %1118 = vmatpush1.msra.mxu0 %v1075
    %1119 = vmatprep.subr.mxu0 %v1074
    %1120 = vmatpush1.msra.mxu0 %v1073
    %1121 = vmatprep.subr.mxu0 %v1072
    %1122 = vmatpush1.msra.mxu0 %v1071
    %1123 = vmatprep.subr.mxu0 %v1070
    %1124 = vmatpush1.msra.mxu0 %v1069
    %1125 = vmatprep.subr.mxu0 %v1068
    %1126 = vmatpush1.msra.mxu0 %v1067
    %1127 = vmatprep.subr.mxu0 %v1066
    %1128 = vmatpush1.msra.mxu0 %v1065
    %1129 = vmatprep.subr.mxu0 %v1064
    %1130 = vmatpush1.msra.mxu0 %v1063
    %1131 = vmatprep.subr.mxu0 %v1062
    %1132 = vmatpush1.msra.mxu0 %v1061
    %1133 = vmatprep.subr.mxu0 %v1060
    %1134 = vmatpush1.msra.mxu0 %v1059
    %1135 = vmatprep.subr.mxu0 %v1058
    %1136 = vmatpush1.msra.mxu0 %v1057
    %1137 = vmatprep.subr.mxu0 0.0
    %1138 = vmatpush2.msra.mxu0 0.0
    %1139 = vmatprep.subr.mxu0 0.0
    %1140 = vmatpush2.msra.mxu0 0.0
    %1141 = vmatprep.subr.mxu0 0.0
    %1142 = vmatpush2.msra.mxu0 0.0
    %1143 = vmatprep.subr.mxu0 0.0
    %1144 = vmatpush2.msra.mxu0 0.0
    %1145 = vmatprep.subr.mxu0 0.0
    %1146 = vmatpush2.msra.mxu0 0.0
    %1147 = vmatprep.subr.mxu0 0.0
    %1148 = vmatpush2.msra.mxu0 0.0
    %1149 = vmatprep.subr.mxu0 0.0
    %1150 = vmatpush2.msra.mxu0 0.0
    %1151 = vmatprep.subr.mxu0 0.0
    %1152 = vmatpush2.msra.mxu0 0.0
    %1153 = vmatprep.subr.mxu0 0.0
    %1154 = vmatpush2.msra.mxu0 0.0
    %1155 = vmatprep.subr.mxu0 0.0
    %1156 = vmatpush2.msra.mxu0 0.0
    %1157 = vmatprep.subr.mxu0 0.0
    %1158 = vmatpush2.msra.mxu0 0.0
    %1159 = vmatprep.subr.mxu0 0.0
    %1160 = vmatpush2.msra.mxu0 0.0
    %1161 = vmatprep.subr.mxu0 0.0
    %1162 = vmatpush2.msra.mxu0 0.0
    %1163 = vmatprep.subr.mxu0 0.0
    %1164 = vmatpush2.msra.mxu0 0.0
    %1165 = vmatprep.subr.mxu0 0.0
    %1166 = vmatpush2.msra.mxu0 0.0
    %1167 = vmatprep.subr.mxu0 0.0
    %1168 = vmatpush2.msra.mxu0 0.0
    %1169 = vmatprep.mubr.f32.mxu0 0.0
    %1170 = vmatmul.mubr.f32.gmra.mxu0 %v1082
    %v1171 = vpop.f32.mrf.mxu0
    %v1172 = vadd.f32 0.0, %v1171
    %v1173 = vpop.f32.mrf.mxu0
    %v1174 = vadd.f32 0.0, %v1173
    %1175 = vmatprep.mubr.f32.mxu0 0.0
    %1176 = vmatmul.mubr.f32.gmra.mxu0 %v1085
    %v1177 = vpop.f32.mrf.mxu0
    %v1178 = vadd.f32 0.0, %v1177
    %v1179 = vpop.f32.mrf.mxu0
    %v1180 = vadd.f32 0.0, %v1179
    %1181 = vmatprep.mubr.f32.mxu0 0.0
    %1182 = vmatmul.mubr.f32.gmra.mxu0 %v1088
    %v1183 = vpop.f32.mrf.mxu0
    %v1184 = vadd.f32 0.0, %v1183
    %v1185 = vpop.f32.mrf.mxu0
    %v1186 = vadd.f32 0.0, %v1185
    %1187 = vmatprep.mubr.f32.mxu0 0.0
    %1188 = vmatmul.mubr.f32.gmra.mxu0 %v1091
    %v1189 = vpop.f32.mrf.mxu0
    %v1190 = vadd.f32 0.0, %v1189
    %v1191 = vpop.f32.mrf.mxu0
    %v1192 = vadd.f32 0.0, %v1191
    %1193 = vmatprep.mubr.f32.mxu0 0.0
    %1194 = vmatmul.mubr.f32.gmra.mxu0 %v1094
    %v1195 = vpop.f32.mrf.mxu0
    %v1196 = vadd.f32 0.0, %v1195
    %v1197 = vpop.f32.mrf.mxu0
    %v1198 = vadd.f32 0.0, %v1197
    %1199 = vmatprep.mubr.f32.mxu0 0.0
    %1200 = vmatmul.mubr.f32.gmra.mxu0 %v1097
    %v1201 = vpop.f32.mrf.mxu0
    %v1202 = vadd.f32 0.0, %v1201
    %v1203 = vpop.f32.mrf.mxu0
    %v1204 = vadd.f32 0.0, %v1203
    %1205 = vmatprep.mubr.f32.mxu0 0.0
    %1206 = vmatmul.mubr.f32.gmra.mxu0 %v1100
    %v1207 = vpop.f32.mrf.mxu0
    %v1208 = vadd.f32 0.0, %v1207
    %v1209 = vpop.f32.mrf.mxu0
    %v1210 = vadd.f32 0.0, %v1209
    %1211 = vmatprep.mubr.f32.mxu0 0.0
    %1212 = vmatmul.mubr.f32.gmra.mxu0 %v1103
    %v1213 = vpop.f32.mrf.mxu0
    %v1214 = vadd.f32 0.0, %v1213
    %v1215 = vpop.f32.mrf.mxu0
    %v1216 = vadd.f32 0.0, %v1215
    %1217 = vdwg.mxu0
    %v1218 = vadd.f32 %v872, %v1172
    %v1219 = vadd.f32 %v874, %v1174
    %v1220 = vadd.f32 %v878, %v1178
    %v1221 = vadd.f32 %v880, %v1180
    %v1222 = vadd.f32 %v884, %v1184
    %v1223 = vadd.f32 %v886, %v1186
    %v1224 = vadd.f32 %v890, %v1190
    %v1225 = vadd.f32 %v892, %v1192
    %v1226 = vadd.f32 %v896, %v1196
    %v1227 = vadd.f32 %v898, %v1198
    %v1228 = vadd.f32 %v902, %v1202
    %v1229 = vadd.f32 %v904, %v1204
    %v1230 = vadd.f32 %v908, %v1208
    %v1231 = vadd.f32 %v910, %v1210
    %v1232 = vadd.f32 %v914, %v1214
    %v1233 = vadd.f32 %v916, %v1216
    %v1234 = vld [vmem:[#allocation2] sm:$0x3]
    %v1236 = vlaneseq
    %v1237 = vshrl.u32 %v1236, 7
    %v1238 = vsub.s32 0, %v1237
    %v1239 = vrot.slane %v1234, %v1238
    %v1240 = vlaneseq
    %v1241 = vshrl.u32 %v1240, 7
    %v1242 = vsub.s32 1, %v1241
    %v1243 = vrot.slane %v1234, %v1242
    %v1246 = vadd.f32 %v1218, %v1239
    %v1247 = vadd.f32 %v1219, %v1243
    %v1248 = vadd.f32 %v1220, %v1239
    %v1249 = vadd.f32 %v1221, %v1243
    %v1250 = vadd.f32 %v1222, %v1239
    %v1251 = vadd.f32 %v1223, %v1243
    %v1252 = vadd.f32 %v1224, %v1239
    %v1253 = vadd.f32 %v1225, %v1243
    %v1254 = vadd.f32 %v1226, %v1239
    %v1255 = vadd.f32 %v1227, %v1243
    %v1256 = vadd.f32 %v1228, %v1239
    %v1257 = vadd.f32 %v1229, %v1243
    %v1258 = vadd.f32 %v1230, %v1239
    %v1259 = vadd.f32 %v1231, %v1243
    %v1260 = vadd.f32 %v1232, %v1239
    %v1261 = vadd.f32 %v1233, %v1243
    %v1262 = vmax.f32 %v1246, 0.0
    %v1263 = vmax.f32 %v1247, 0.0
    %v1264 = vmax.f32 %v1248, 0.0
    %v1265 = vmax.f32 %v1249, 0.0
    %v1266 = vmax.f32 %v1250, 0.0
    %v1267 = vmax.f32 %v1251, 0.0
    %v1268 = vmax.f32 %v1252, 0.0
    %v1269 = vmax.f32 %v1253, 0.0
    %v1270 = vmax.f32 %v1254, 0.0
    %v1271 = vmax.f32 %v1255, 0.0
    %v1272 = vmax.f32 %v1256, 0.0
    %v1273 = vmax.f32 %v1257, 0.0
    %v1274 = vmax.f32 %v1258, 0.0
    %v1275 = vmax.f32 %v1259, 0.0
    %v1276 = vmax.f32 %v1260, 0.0
    %v1277 = vmax.f32 %v1261, 0.0
    %v1278 = vld [vmem:[#allocation5] sm:$0x3]
    %v1279 = vld [vmem:[%s9] sm:$0xff]
    %v1280 = vld [vmem:[%s9 + $0x8] sm:$0xff]
    %v1281 = vld [vmem:[%s9 + $0x10] sm:$0xff]
    %v1282 = vld [vmem:[%s9 + $0x18] sm:$0xff]
    %v1283 = vld [vmem:[%s9 + $0x20] sm:$0xff]
    %v1284 = vld [vmem:[%s9 + $0x28] sm:$0xff]
    %v1285 = vld [vmem:[%s9 + $0x30] sm:$0xff]
    %v1286 = vld [vmem:[%s9 + $0x38] sm:$0xff]
    %v1287 = vld [vmem:[%s9 + $0x40] sm:$0xff]
    %v1288 = vld [vmem:[%s9 + $0x48] sm:$0xff]
    %v1289 = vld [vmem:[%s9 + $0x50] sm:$0xff]
    %v1290 = vld [vmem:[%s9 + $0x58] sm:$0xff]
    %v1291 = vld [vmem:[%s9 + $0x60] sm:$0xff]
    %v1292 = vld [vmem:[%s9 + $0x68] sm:$0xff]
    %v1293 = vld [vmem:[%s9 + $0x70] sm:$0xff]
    %v1294 = vld [vmem:[%s9 + $0x78] sm:$0xff]
    %v1295 = vld [vmem:[%s9 + $0x80] sm:$0xff]
    %v1296 = vld [vmem:[%s9 + $0x88] sm:$0xff]
    %v1297 = vld [vmem:[%s9 + $0x90] sm:$0xff]
    %v1298 = vld [vmem:[%s9 + $0x98] sm:$0xff]
    %v1299 = vld [vmem:[%s9 + $0xa0] sm:$0xff]
    %v1300 = vld [vmem:[%s9 + $0xa8] sm:$0xff]
    %v1301 = vld [vmem:[%s9 + $0xb0] sm:$0xff]
    %v1302 = vld [vmem:[%s9 + $0xb8] sm:$0xff]
    %v1303 = vld [vmem:[%s9 + $0xc0] sm:$0xff]
    %v1304 = vld [vmem:[%s9 + $0xc8] sm:$0xff]
    %v1305 = vld [vmem:[%s9 + $0xd0] sm:$0xff]
    %v1306 = vld [vmem:[%s9 + $0xd8] sm:$0xff]
    %v1307 = vld [vmem:[%s9 + $0xe0] sm:$0xff]
    %v1308 = vld [vmem:[%s9 + $0xe8] sm:$0xff]
    %v1309 = vld [vmem:[%s9 + $0xf0] sm:$0xff]
    %v1310 = vld [vmem:[%s9 + $0xf8] sm:$0xff]
    %v1311 = vld [vmem:[#allocation7] sm:$0xff]
    %v1312 = vld [vmem:[#allocation7 + $0x8] sm:$0xff]
    %v1313 = vadd.f32 %v1262, %v1264
    %v1314 = vadd.f32 %v1313, %v1266
    %v1315 = vadd.f32 %v1314, %v1268
    %v1316 = vadd.f32 %v1315, %v1270
    %v1317 = vadd.f32 %v1316, %v1272
    %v1318 = vadd.f32 %v1317, %v1274
    %v1319 = vadd.f32 %v1318, %v1276
    %v1320 = vrot.slane %v1319, 4
    %v1321 = vadd.f32 %v1319, %v1320
    %v1322 = vrot.slane %v1321, 2
    %v1323 = vadd.f32 %v1321, %v1322
    %v1324 = vrot.slane %v1323, 1
    %v1325 = vadd.f32 %v1323, %v1324
    %v1326 = vadd.f32 %v1263, %v1265
    %v1327 = vadd.f32 %v1326, %v1267
    %v1328 = vadd.f32 %v1327, %v1269
    %v1329 = vadd.f32 %v1328, %v1271
    %v1330 = vadd.f32 %v1329, %v1273
    %v1331 = vadd.f32 %v1330, %v1275
    %v1332 = vadd.f32 %v1331, %v1277
    %v1333 = vrot.slane %v1332, 4
    %v1334 = vadd.f32 %v1332, %v1333
    %v1335 = vrot.slane %v1334, 2
    %v1336 = vadd.f32 %v1334, %v1335
    %v1337 = vrot.slane %v1336, 1
    %v1338 = vadd.f32 %v1336, %v1337
    %1339 = vmatprep.subr.mxu0 0.0
    %1340 = vmatpush1.msra.mxu0 %v1294
    %1341 = vmatprep.subr.mxu0 0.0
    %1342 = vmatpush1.msra.mxu0 %v1293
    %1343 = vmatprep.subr.mxu0 0.0
    %1344 = vmatpush1.msra.mxu0 %v1292
    %1345 = vmatprep.subr.mxu0 0.0
    %1346 = vmatpush1.msra.mxu0 %v1291
    %1347 = vmatprep.subr.mxu0 0.0
    %1348 = vmatpush1.msra.mxu0 %v1290
    %1349 = vmatprep.subr.mxu0 0.0
    %1350 = vmatpush1.msra.mxu0 %v1289
    %1351 = vmatprep.subr.mxu0 0.0
    %1352 = vmatpush1.msra.mxu0 %v1288
    %1353 = vmatprep.subr.mxu0 0.0
    %1354 = vmatpush1.msra.mxu0 %v1287
    %1355 = vmatprep.subr.mxu0 0.0
    %1356 = vmatpush1.msra.mxu0 %v1286
    %1357 = vmatprep.subr.mxu0 0.0
    %1358 = vmatpush1.msra.mxu0 %v1285
    %1359 = vmatprep.subr.mxu0 0.0
    %1360 = vmatpush1.msra.mxu0 %v1284
    %1361 = vmatprep.subr.mxu0 0.0
    %1362 = vmatpush1.msra.mxu0 %v1283
    %1363 = vmatprep.subr.mxu0 0.0
    %1364 = vmatpush1.msra.mxu0 %v1282
    %1365 = vmatprep.subr.mxu0 0.0
    %1366 = vmatpush1.msra.mxu0 %v1281
    %1367 = vmatprep.subr.mxu0 0.0
    %1368 = vmatpush1.msra.mxu0 %v1280
    %1369 = vmatprep.subr.mxu0 0.0
    %1370 = vmatpush1.msra.mxu0 %v1279
    %1371 = vmatprep.subr.mxu0 0.0
    %1372 = vmatpush2.msra.mxu0 %v1310
    %1373 = vmatprep.subr.mxu0 0.0
    %1374 = vmatpush2.msra.mxu0 %v1309
    %1375 = vmatprep.subr.mxu0 0.0
    %1376 = vmatpush2.msra.mxu0 %v1308
    %1377 = vmatprep.subr.mxu0 0.0
    %1378 = vmatpush2.msra.mxu0 %v1307
    %1379 = vmatprep.subr.mxu0 0.0
    %1380 = vmatpush2.msra.mxu0 %v1306
    %1381 = vmatprep.subr.mxu0 0.0
    %1382 = vmatpush2.msra.mxu0 %v1305
    %1383 = vmatprep.subr.mxu0 0.0
    %1384 = vmatpush2.msra.mxu0 %v1304
    %1385 = vmatprep.subr.mxu0 0.0
    %1386 = vmatpush2.msra.mxu0 %v1303
    %1387 = vmatprep.subr.mxu0 0.0
    %1388 = vmatpush2.msra.mxu0 %v1302
    %1389 = vmatprep.subr.mxu0 0.0
    %1390 = vmatpush2.msra.mxu0 %v1301
    %1391 = vmatprep.subr.mxu0 0.0
    %1392 = vmatpush2.msra.mxu0 %v1300
    %1393 = vmatprep.subr.mxu0 0.0
    %1394 = vmatpush2.msra.mxu0 %v1299
    %1395 = vmatprep.subr.mxu0 0.0
    %1396 = vmatpush2.msra.mxu0 %v1298
    %1397 = vmatprep.subr.mxu0 0.0
    %1398 = vmatpush2.msra.mxu0 %v1297
    %1399 = vmatprep.subr.mxu0 0.0
    %1400 = vmatpush2.msra.mxu0 %v1296
    %1401 = vmatprep.subr.mxu0 0.0
    %1402 = vmatpush2.msra.mxu0 %v1295
    %1403 = vmatprep.mubr.f32.mxu0 %v1338
    %1404 = vmatmul.mubr.f32.gmra.mxu0 %v1325
    %v1405 = vpop.f32.mrf.mxu0
    %v1406 = vadd.f32 0.0, %v1405
    %v1407 = vpop.f32.mrf.mxu0
    %1408 = vdwg.mxu0
    %v1409 = vmul.f32 %v1406, 0.00048828125
    %vm1410 = vcmask 64512
    %v1412 = vsel %vm1410, %v1409, 0
    %1414 = vmatprep.subr.mxu0 0.0
    %1415 = vmatpush1.msra.mxu0 0.0
    %1416 = vmatprep.subr.mxu0 0.0
    %1417 = vmatpush1.msra.mxu0 0.0
    %1418 = vmatprep.subr.mxu0 0.0
    %1419 = vmatpush1.msra.mxu0 0.0
    %1420 = vmatprep.subr.mxu0 0.0
    %1421 = vmatpush1.msra.mxu0 0.0
    %1422 = vmatprep.subr.mxu0 0.0
    %1423 = vmatpush1.msra.mxu0 0.0
    %1424 = vmatprep.subr.mxu0 0.0
    %1425 = vmatpush1.msra.mxu0 0.0
    %1426 = vmatprep.subr.mxu0 0.0
    %1427 = vmatpush1.msra.mxu0 0.0
    %1428 = vmatprep.subr.mxu0 0.0
    %1429 = vmatpush1.msra.mxu0 0.0
    %1430 = vmatprep.subr.mxu0 0.0
    %1431 = vmatpush1.msra.mxu0 0.0
    %1432 = vmatprep.subr.mxu0 0.0
    %1433 = vmatpush1.msra.mxu0 0.0
    %1434 = vmatprep.subr.mxu0 0.0
    %1435 = vmatpush1.msra.mxu0 0.0
    %1436 = vmatprep.subr.mxu0 0.0
    %1437 = vmatpush1.msra.mxu0 0.0
    %1438 = vmatprep.subr.mxu0 0.0
    %1439 = vmatpush1.msra.mxu0 0.0
    %1440 = vmatprep.subr.mxu0 0.0
    %1441 = vmatpush1.msra.mxu0 0.0
    %1442 = vmatprep.subr.mxu0 0.0
    %1443 = vmatpush1.msra.mxu0 0.0
    %1444 = vmatprep.subr.mxu0 %v1312
    %1445 = vmatpush1.msra.mxu0 %v1311
    %1446 = vmatprep.subr.mxu0 0.0
    %1447 = vmatpush2.msra.mxu0 0.0
    %1448 = vmatprep.subr.mxu0 0.0
    %1449 = vmatpush2.msra.mxu0 0.0
    %1450 = vmatprep.subr.mxu0 0.0
    %1451 = vmatpush2.msra.mxu0 0.0
    %1452 = vmatprep.subr.mxu0 0.0
    %1453 = vmatpush2.msra.mxu0 0.0
    %1454 = vmatprep.subr.mxu0 0.0
    %1455 = vmatpush2.msra.mxu0 0.0
    %1456 = vmatprep.subr.mxu0 0.0
    %1457 = vmatpush2.msra.mxu0 0.0
    %1458 = vmatprep.subr.mxu0 0.0
    %1459 = vmatpush2.msra.mxu0 0.0
    %1460 = vmatprep.subr.mxu0 0.0
    %1461 = vmatpush2.msra.mxu0 0.0
    %1462 = vmatprep.subr.mxu0 0.0
    %1463 = vmatpush2.msra.mxu0 0.0
    %1464 = vmatprep.subr.mxu0 0.0
    %1465 = vmatpush2.msra.mxu0 0.0
    %1466 = vmatprep.subr.mxu0 0.0
    %1467 = vmatpush2.msra.mxu0 0.0
    %1468 = vmatprep.subr.mxu0 0.0
    %1469 = vmatpush2.msra.mxu0 0.0
    %1470 = vmatprep.subr.mxu0 0.0
    %1471 = vmatpush2.msra.mxu0 0.0
    %1472 = vmatprep.subr.mxu0 0.0
    %1473 = vmatpush2.msra.mxu0 0.0
    %1474 = vmatprep.subr.mxu0 0.0
    %1475 = vmatpush2.msra.mxu0 0.0
    %1476 = vmatprep.subr.mxu0 0.0
    %1477 = vmatpush2.msra.mxu0 0.0
    %1478 = vmatprep.mubr.f32.mxu0 0.0
    %1479 = vmatmul.mubr.f32.gmra.mxu0 %v1412
    %v1480 = vpop.f32.mrf.mxu0
    %v1481 = vadd.f32 0.0, %v1480
    %v1482 = vpop.f32.mrf.mxu0
    %v1483 = vadd.f32 0.0, %v1482
    %1484 = vdwg.mxu0
    %v1485 = vlaneseq
    %v1486 = vshrl.u32 %v1485, 7
    %v1487 = vsub.s32 0, %v1486
    %v1488 = vrot.slane %v1481, %v1487
    %v1489 = vlaneseq
    %v1490 = vshrl.u32 %v1489, 7
    %v1491 = vsub.s32 0, %v1490
    %v1492 = vrot.slane %v1483, %v1491
    %v1493 = vsub.f32 %v1262, %v1488
    %v1494 = vsub.f32 %v1263, %v1492
    %v1495 = vsub.f32 %v1264, %v1488
    %v1496 = vsub.f32 %v1265, %v1492
    %v1497 = vsub.f32 %v1266, %v1488
    %v1498 = vsub.f32 %v1267, %v1492
    %v1499 = vsub.f32 %v1268, %v1488
    %v1500 = vsub.f32 %v1269, %v1492
    %v1501 = vsub.f32 %v1270, %v1488
    %v1502 = vsub.f32 %v1271, %v1492
    %v1503 = vsub.f32 %v1272, %v1488
    %v1504 = vsub.f32 %v1273, %v1492
    %v1505 = vsub.f32 %v1274, %v1488
    %v1506 = vsub.f32 %v1275, %v1492
    %v1507 = vsub.f32 %v1276, %v1488
    %v1508 = vsub.f32 %v1277, %v1492
    %v1509 = vmul.f32 %v1493, %v1493
    %v1510 = vmul.f32 %v1494, %v1494
    %v1511 = vmul.f32 %v1495, %v1495
    %v1512 = vmul.f32 %v1496, %v1496
    %v1513 = vmul.f32 %v1497, %v1497
    %v1514 = vmul.f32 %v1498, %v1498
    %v1515 = vmul.f32 %v1499, %v1499
    %v1516 = vmul.f32 %v1500, %v1500
    %v1517 = vmul.f32 %v1501, %v1501
    %v1518 = vmul.f32 %v1502, %v1502
    %v1519 = vmul.f32 %v1503, %v1503
    %v1520 = vmul.f32 %v1504, %v1504
    %v1521 = vmul.f32 %v1505, %v1505
    %v1522 = vmul.f32 %v1506, %v1506
    %v1523 = vmul.f32 %v1507, %v1507
    %v1524 = vmul.f32 %v1508, %v1508
    %v1525 = vadd.f32 %v1509, %v1511
    %v1526 = vadd.f32 %v1525, %v1513
    %v1527 = vadd.f32 %v1526, %v1515
    %v1528 = vadd.f32 %v1527, %v1517
    %v1529 = vadd.f32 %v1528, %v1519
    %v1530 = vadd.f32 %v1529, %v1521
    %v1531 = vadd.f32 %v1530, %v1523
    %v1532 = vrot.slane %v1531, 4
    %v1533 = vadd.f32 %v1531, %v1532
    %v1534 = vrot.slane %v1533, 2
    %v1535 = vadd.f32 %v1533, %v1534
    %v1536 = vrot.slane %v1535, 1
    %v1537 = vadd.f32 %v1535, %v1536
    %v1538 = vadd.f32 %v1510, %v1512
    %v1539 = vadd.f32 %v1538, %v1514
    %v1540 = vadd.f32 %v1539, %v1516
    %v1541 = vadd.f32 %v1540, %v1518
    %v1542 = vadd.f32 %v1541, %v1520
    %v1543 = vadd.f32 %v1542, %v1522
    %v1544 = vadd.f32 %v1543, %v1524
    %v1545 = vrot.slane %v1544, 4
    %v1546 = vadd.f32 %v1544, %v1545
    %v1547 = vrot.slane %v1546, 2
    %v1548 = vadd.f32 %v1546, %v1547
    %v1549 = vrot.slane %v1548, 1
    %v1550 = vadd.f32 %v1548, %v1549
    %1551 = vmatprep.subr.mxu0 0.0
    %1552 = vmatpush1.msra.mxu0 %v1294
    %1553 = vmatprep.subr.mxu0 0.0
    %1554 = vmatpush1.msra.mxu0 %v1293
    %1555 = vmatprep.subr.mxu0 0.0
    %1556 = vmatpush1.msra.mxu0 %v1292
    %1557 = vmatprep.subr.mxu0 0.0
    %1558 = vmatpush1.msra.mxu0 %v1291
    %1559 = vmatprep.subr.mxu0 0.0
    %1560 = vmatpush1.msra.mxu0 %v1290
    %1561 = vmatprep.subr.mxu0 0.0
    %1562 = vmatpush1.msra.mxu0 %v1289
    %1563 = vmatprep.subr.mxu0 0.0
    %1564 = vmatpush1.msra.mxu0 %v1288
    %1565 = vmatprep.subr.mxu0 0.0
    %1566 = vmatpush1.msra.mxu0 %v1287
    %1567 = vmatprep.subr.mxu0 0.0
    %1568 = vmatpush1.msra.mxu0 %v1286
    %1569 = vmatprep.subr.mxu0 0.0
    %1570 = vmatpush1.msra.mxu0 %v1285
    %1571 = vmatprep.subr.mxu0 0.0
    %1572 = vmatpush1.msra.mxu0 %v1284
    %1573 = vmatprep.subr.mxu0 0.0
    %1574 = vmatpush1.msra.mxu0 %v1283
    %1575 = vmatprep.subr.mxu0 0.0
    %1576 = vmatpush1.msra.mxu0 %v1282
    %1577 = vmatprep.subr.mxu0 0.0
    %1578 = vmatpush1.msra.mxu0 %v1281
    %1579 = vmatprep.subr.mxu0 0.0
    %1580 = vmatpush1.msra.mxu0 %v1280
    %1581 = vmatprep.subr.mxu0 0.0
    %1582 = vmatpush1.msra.mxu0 %v1279
    %1583 = vmatprep.subr.mxu0 0.0
    %1584 = vmatpush2.msra.mxu0 %v1310
    %1585 = vmatprep.subr.mxu0 0.0
    %1586 = vmatpush2.msra.mxu0 %v1309
    %1587 = vmatprep.subr.mxu0 0.0
    %1588 = vmatpush2.msra.mxu0 %v1308
    %1589 = vmatprep.subr.mxu0 0.0
    %1590 = vmatpush2.msra.mxu0 %v1307
    %1591 = vmatprep.subr.mxu0 0.0
    %1592 = vmatpush2.msra.mxu0 %v1306
    %1593 = vmatprep.subr.mxu0 0.0
    %1594 = vmatpush2.msra.mxu0 %v1305
    %1595 = vmatprep.subr.mxu0 0.0
    %1596 = vmatpush2.msra.mxu0 %v1304
    %1597 = vmatprep.subr.mxu0 0.0
    %1598 = vmatpush2.msra.mxu0 %v1303
    %1599 = vmatprep.subr.mxu0 0.0
    %1600 = vmatpush2.msra.mxu0 %v1302
    %1601 = vmatprep.subr.mxu0 0.0
    %1602 = vmatpush2.msra.mxu0 %v1301
    %1603 = vmatprep.subr.mxu0 0.0
    %1604 = vmatpush2.msra.mxu0 %v1300
    %1605 = vmatprep.subr.mxu0 0.0
    %1606 = vmatpush2.msra.mxu0 %v1299
    %1607 = vmatprep.subr.mxu0 0.0
    %1608 = vmatpush2.msra.mxu0 %v1298
    %1609 = vmatprep.subr.mxu0 0.0
    %1610 = vmatpush2.msra.mxu0 %v1297
    %1611 = vmatprep.subr.mxu0 0.0
    %1612 = vmatpush2.msra.mxu0 %v1296
    %1613 = vmatprep.subr.mxu0 0.0
    %1614 = vmatpush2.msra.mxu0 %v1295
    %1615 = vmatprep.mubr.f32.mxu0 %v1550
    %1616 = vmatmul.mubr.f32.gmra.mxu0 %v1537
    %v1617 = vpop.f32.mrf.mxu0
    %v1618 = vadd.f32 0.0, %v1617
    %v1619 = vpop.f32.mrf.mxu0
    %1620 = vdwg.mxu0
    %v1621 = vmul.f32 %v1618, 0.00048828125
    %v1622 = vadd.f32 %v1621, 1e-05
    %v1623 = vrsqrt.pop %v1622
    %v1624 = vmul.f32 %v1278, %v1623
    %v1626 = vsel %vm1410, %v1624, 0
    %1628 = vmatprep.subr.mxu0 0.0
    %1629 = vmatpush1.msra.mxu0 0.0
    %1630 = vmatprep.subr.mxu0 0.0
    %1631 = vmatpush1.msra.mxu0 0.0
    %1632 = vmatprep.subr.mxu0 0.0
    %1633 = vmatpush1.msra.mxu0 0.0
    %1634 = vmatprep.subr.mxu0 0.0
    %1635 = vmatpush1.msra.mxu0 0.0
    %1636 = vmatprep.subr.mxu0 0.0
    %1637 = vmatpush1.msra.mxu0 0.0
    %1638 = vmatprep.subr.mxu0 0.0
    %1639 = vmatpush1.msra.mxu0 0.0
    %1640 = vmatprep.subr.mxu0 0.0
    %1641 = vmatpush1.msra.mxu0 0.0
    %1642 = vmatprep.subr.mxu0 0.0
    %1643 = vmatpush1.msra.mxu0 0.0
    %1644 = vmatprep.subr.mxu0 0.0
    %1645 = vmatpush1.msra.mxu0 0.0
    %1646 = vmatprep.subr.mxu0 0.0
    %1647 = vmatpush1.msra.mxu0 0.0
    %1648 = vmatprep.subr.mxu0 0.0
    %1649 = vmatpush1.msra.mxu0 0.0
    %1650 = vmatprep.subr.mxu0 0.0
    %1651 = vmatpush1.msra.mxu0 0.0
    %1652 = vmatprep.subr.mxu0 0.0
    %1653 = vmatpush1.msra.mxu0 0.0
    %1654 = vmatprep.subr.mxu0 0.0
    %1655 = vmatpush1.msra.mxu0 0.0
    %1656 = vmatprep.subr.mxu0 0.0
    %1657 = vmatpush1.msra.mxu0 0.0
    %1658 = vmatprep.subr.mxu0 %v1312
    %1659 = vmatpush1.msra.mxu0 %v1311
    %1660 = vmatprep.subr.mxu0 0.0
    %1661 = vmatpush2.msra.mxu0 0.0
    %1662 = vmatprep.subr.mxu0 0.0
    %1663 = vmatpush2.msra.mxu0 0.0
    %1664 = vmatprep.subr.mxu0 0.0
    %1665 = vmatpush2.msra.mxu0 0.0
    %1666 = vmatprep.subr.mxu0 0.0
    %1667 = vmatpush2.msra.mxu0 0.0
    %1668 = vmatprep.subr.mxu0 0.0
    %1669 = vmatpush2.msra.mxu0 0.0
    %1670 = vmatprep.subr.mxu0 0.0
    %1671 = vmatpush2.msra.mxu0 0.0
    %1672 = vmatprep.subr.mxu0 0.0
    %1673 = vmatpush2.msra.mxu0 0.0
    %1674 = vmatprep.subr.mxu0 0.0
    %1675 = vmatpush2.msra.mxu0 0.0
    %1676 = vmatprep.subr.mxu0 0.0
    %1677 = vmatpush2.msra.mxu0 0.0
    %1678 = vmatprep.subr.mxu0 0.0
    %1679 = vmatpush2.msra.mxu0 0.0
    %1680 = vmatprep.subr.mxu0 0.0
    %1681 = vmatpush2.msra.mxu0 0.0
    %1682 = vmatprep.subr.mxu0 0.0
    %1683 = vmatpush2.msra.mxu0 0.0
    %1684 = vmatprep.subr.mxu0 0.0
    %1685 = vmatpush2.msra.mxu0 0.0
    %1686 = vmatprep.subr.mxu0 0.0
    %1687 = vmatpush2.msra.mxu0 0.0
    %1688 = vmatprep.subr.mxu0 0.0
    %1689 = vmatpush2.msra.mxu0 0.0
    %1690 = vmatprep.subr.mxu0 0.0
    %1691 = vmatpush2.msra.mxu0 0.0
    %1692 = vmatprep.mubr.f32.mxu0 0.0
    %1693 = vmatmul.mubr.f32.gmra.mxu0 %v1626
    %v1694 = vpop.f32.mrf.mxu0
    %v1695 = vadd.f32 0.0, %v1694
    %v1696 = vpop.f32.mrf.mxu0
    %v1697 = vadd.f32 0.0, %v1696
    %1698 = vdwg.mxu0
    %v1699 = vlaneseq
    %v1700 = vshrl.u32 %v1699, 7
    %v1701 = vsub.s32 0, %v1700
    %v1702 = vrot.slane %v1695, %v1701
    %v1703 = vlaneseq
    %v1704 = vshrl.u32 %v1703, 7
    %v1705 = vsub.s32 0, %v1704
    %v1706 = vrot.slane %v1697, %v1705
    %v1707 = vmul.f32 %v1493, %v1702
    %v1708 = vmul.f32 %v1494, %v1706
    %v1709 = vmul.f32 %v1495, %v1702
    %v1710 = vmul.f32 %v1496, %v1706
    %v1711 = vmul.f32 %v1497, %v1702
    %v1712 = vmul.f32 %v1498, %v1706
    %v1713 = vmul.f32 %v1499, %v1702
    %v1714 = vmul.f32 %v1500, %v1706
    %v1715 = vmul.f32 %v1501, %v1702
    %v1716 = vmul.f32 %v1502, %v1706
    %v1717 = vmul.f32 %v1503, %v1702
    %v1718 = vmul.f32 %v1504, %v1706
    %v1719 = vmul.f32 %v1505, %v1702
    %v1720 = vmul.f32 %v1506, %v1706
    %v1721 = vmul.f32 %v1507, %v1702
    %v1722 = vmul.f32 %v1508, %v1706
    %v1724 = vrot.slane %v1278, 1
    %v1725 = vsel %vm1410, %v1724, 0
    %1727 = vmatprep.subr.mxu0 0.0
    %1728 = vmatpush1.msra.mxu0 0.0
    %1729 = vmatprep.subr.mxu0 0.0
    %1730 = vmatpush1.msra.mxu0 0.0
    %1731 = vmatprep.subr.mxu0 0.0
    %1732 = vmatpush1.msra.mxu0 0.0
    %1733 = vmatprep.subr.mxu0 0.0
    %1734 = vmatpush1.msra.mxu0 0.0
    %1735 = vmatprep.subr.mxu0 0.0
    %1736 = vmatpush1.msra.mxu0 0.0
    %1737 = vmatprep.subr.mxu0 0.0
    %1738 = vmatpush1.msra.mxu0 0.0
    %1739 = vmatprep.subr.mxu0 0.0
    %1740 = vmatpush1.msra.mxu0 0.0
    %1741 = vmatprep.subr.mxu0 0.0
    %1742 = vmatpush1.msra.mxu0 0.0
    %1743 = vmatprep.subr.mxu0 0.0
    %1744 = vmatpush1.msra.mxu0 0.0
    %1745 = vmatprep.subr.mxu0 0.0
    %1746 = vmatpush1.msra.mxu0 0.0
    %1747 = vmatprep.subr.mxu0 0.0
    %1748 = vmatpush1.msra.mxu0 0.0
    %1749 = vmatprep.subr.mxu0 0.0
    %1750 = vmatpush1.msra.mxu0 0.0
    %1751 = vmatprep.subr.mxu0 0.0
    %1752 = vmatpush1.msra.mxu0 0.0
    %1753 = vmatprep.subr.mxu0 0.0
    %1754 = vmatpush1.msra.mxu0 0.0
    %1755 = vmatprep.subr.mxu0 0.0
    %1756 = vmatpush1.msra.mxu0 0.0
    %1757 = vmatprep.subr.mxu0 %v1312
    %1758 = vmatpush1.msra.mxu0 %v1311
    %1759 = vmatprep.subr.mxu0 0.0
    %1760 = vmatpush2.msra.mxu0 0.0
    %1761 = vmatprep.subr.mxu0 0.0
    %1762 = vmatpush2.msra.mxu0 0.0
    %1763 = vmatprep.subr.mxu0 0.0
    %1764 = vmatpush2.msra.mxu0 0.0
    %1765 = vmatprep.subr.mxu0 0.0
    %1766 = vmatpush2.msra.mxu0 0.0
    %1767 = vmatprep.subr.mxu0 0.0
    %1768 = vmatpush2.msra.mxu0 0.0
    %1769 = vmatprep.subr.mxu0 0.0
    %1770 = vmatpush2.msra.mxu0 0.0
    %1771 = vmatprep.subr.mxu0 0.0
    %1772 = vmatpush2.msra.mxu0 0.0
    %1773 = vmatprep.subr.mxu0 0.0
    %1774 = vmatpush2.msra.mxu0 0.0
    %1775 = vmatprep.subr.mxu0 0.0
    %1776 = vmatpush2.msra.mxu0 0.0
    %1777 = vmatprep.subr.mxu0 0.0
    %1778 = vmatpush2.msra.mxu0 0.0
    %1779 = vmatprep.subr.mxu0 0.0
    %1780 = vmatpush2.msra.mxu0 0.0
    %1781 = vmatprep.subr.mxu0 0.0
    %1782 = vmatpush2.msra.mxu0 0.0
    %1783 = vmatprep.subr.mxu0 0.0
    %1784 = vmatpush2.msra.mxu0 0.0
    %1785 = vmatprep.subr.mxu0 0.0
    %1786 = vmatpush2.msra.mxu0 0.0
    %1787 = vmatprep.subr.mxu0 0.0
    %1788 = vmatpush2.msra.mxu0 0.0
    %1789 = vmatprep.subr.mxu0 0.0
    %1790 = vmatpush2.msra.mxu0 0.0
    %1791 = vmatprep.mubr.f32.mxu0 0.0
    %1792 = vmatmul.mubr.f32.gmra.mxu0 %v1725
    %v1793 = vpop.f32.mrf.mxu0
    %v1794 = vadd.f32 0.0, %v1793
    %v1795 = vpop.f32.mrf.mxu0
    %v1796 = vadd.f32 0.0, %v1795
    %1797 = vdwg.mxu0
    %v1798 = vlaneseq
    %v1799 = vshrl.u32 %v1798, 7
    %v1800 = vsub.s32 0, %v1799
    %v1801 = vrot.slane %v1794, %v1800
    %v1802 = vlaneseq
    %v1803 = vshrl.u32 %v1802, 7
    %v1804 = vsub.s32 0, %v1803
    %v1805 = vrot.slane %v1796, %v1804
    %v1806 = vadd.f32 %v1707, %v1801
    %v1807 = vadd.f32 %v1708, %v1805
    %v1808 = vadd.f32 %v1709, %v1801
    %v1809 = vadd.f32 %v1710, %v1805
    %v1810 = vadd.f32 %v1711, %v1801
    %v1811 = vadd.f32 %v1712, %v1805
    %v1812 = vadd.f32 %v1713, %v1801
    %v1813 = vadd.f32 %v1714, %v1805
    %v1814 = vadd.f32 %v1715, %v1801
    %v1815 = vadd.f32 %v1716, %v1805
    %v1816 = vadd.f32 %v1717, %v1801
    %v1817 = vadd.f32 %v1718, %v1805
    %v1818 = vadd.f32 %v1719, %v1801
    %v1819 = vadd.f32 %v1720, %v1805
    %v1820 = vadd.f32 %v1721, %v1801
    %v1821 = vadd.f32 %v1722, %v1805
    %v1822 = vld [vmem:[#allocation10] sm:$0xff]
    %v1823 = vld [vmem:[#allocation10 + $0x8] sm:$0xff]
    %v1824 = vld [vmem:[#allocation10 + $0x10] sm:$0xff]
    %v1825 = vld [vmem:[#allocation10 + $0x18] sm:$0xff]
    %v1827 = vsel %vm489, %v1822, 0
    %v1830 = vsel %vm489, %v1823, 0
    %v1833 = vsel %vm489, %v1824, 0
    %v1836 = vsel %vm489, %v1825, 0
    %1838 = vmatprep.subr.mxu0 0.0
    %1839 = vmatpush1.msra.mxu0 0.0
    %1840 = vmatprep.subr.mxu0 0.0
    %1841 = vmatpush1.msra.mxu0 0.0
    %1842 = vmatprep.subr.mxu0 0.0
    %1843 = vmatpush1.msra.mxu0 0.0
    %1844 = vmatprep.subr.mxu0 0.0
    %1845 = vmatpush1.msra.mxu0 0.0
    %1846 = vmatprep.subr.mxu0 0.0
    %1847 = vmatpush1.msra.mxu0 0.0
    %1848 = vmatprep.subr.mxu0 0.0
    %1849 = vmatpush1.msra.mxu0 0.0
    %1850 = vmatprep.subr.mxu0 0.0
    %1851 = vmatpush1.msra.mxu0 0.0
    %1852 = vmatprep.subr.mxu0 0.0
    %1853 = vmatpush1.msra.mxu0 0.0
    %1854 = vmatprep.subr.mxu0 %v1821
    %1855 = vmatpush1.msra.mxu0 %v1820
    %1856 = vmatprep.subr.mxu0 %v1819
    %1857 = vmatpush1.msra.mxu0 %v1818
    %1858 = vmatprep.subr.mxu0 %v1817
    %1859 = vmatpush1.msra.mxu0 %v1816
    %1860 = vmatprep.subr.mxu0 %v1815
    %1861 = vmatpush1.msra.mxu0 %v1814
    %1862 = vmatprep.subr.mxu0 %v1813
    %1863 = vmatpush1.msra.mxu0 %v1812
    %1864 = vmatprep.subr.mxu0 %v1811
    %1865 = vmatpush1.msra.mxu0 %v1810
    %1866 = vmatprep.subr.mxu0 %v1809
    %1867 = vmatpush1.msra.mxu0 %v1808
    %1868 = vmatprep.subr.mxu0 %v1807
    %1869 = vmatpush1.msra.mxu0 %v1806
    %1870 = vmatprep.subr.mxu0 0.0
    %1871 = vmatpush2.msra.mxu0 0.0
    %1872 = vmatprep.subr.mxu0 0.0
    %1873 = vmatpush2.msra.mxu0 0.0
    %1874 = vmatprep.subr.mxu0 0.0
    %1875 = vmatpush2.msra.mxu0 0.0
    %1876 = vmatprep.subr.mxu0 0.0
    %1877 = vmatpush2.msra.mxu0 0.0
    %1878 = vmatprep.subr.mxu0 0.0
    %1879 = vmatpush2.msra.mxu0 0.0
    %1880 = vmatprep.subr.mxu0 0.0
    %1881 = vmatpush2.msra.mxu0 0.0
    %1882 = vmatprep.subr.mxu0 0.0
    %1883 = vmatpush2.msra.mxu0 0.0
    %1884 = vmatprep.subr.mxu0 0.0
    %1885 = vmatpush2.msra.mxu0 0.0
    %1886 = vmatprep.subr.mxu0 0.0
    %1887 = vmatpush2.msra.mxu0 0.0
    %1888 = vmatprep.subr.mxu0 0.0
    %1889 = vmatpush2.msra.mxu0 0.0
    %1890 = vmatprep.subr.mxu0 0.0
    %1891 = vmatpush2.msra.mxu0 0.0
    %1892 = vmatprep.subr.mxu0 0.0
    %1893 = vmatpush2.msra.mxu0 0.0
    %1894 = vmatprep.subr.mxu0 0.0
    %1895 = vmatpush2.msra.mxu0 0.0
    %1896 = vmatprep.subr.mxu0 0.0
    %1897 = vmatpush2.msra.mxu0 0.0
    %1898 = vmatprep.subr.mxu0 0.0
    %1899 = vmatpush2.msra.mxu0 0.0
    %1900 = vmatprep.subr.mxu0 0.0
    %1901 = vmatpush2.msra.mxu0 0.0
    %1902 = vmatprep.mubr.f32.mxu0 0.0
    %1903 = vmatmul.mubr.f32.gmra.mxu0 %v1827
    %v1904 = vpop.f32.mrf.mxu0
    %v1905 = vadd.f32 0.0, %v1904
    %v1906 = vpop.f32.mrf.mxu0
    %v1907 = vadd.f32 0.0, %v1906
    %1908 = vmatprep.mubr.f32.mxu0 0.0
    %1909 = vmatmul.mubr.f32.gmra.mxu0 %v1830
    %v1910 = vpop.f32.mrf.mxu0
    %v1911 = vadd.f32 0.0, %v1910
    %v1912 = vpop.f32.mrf.mxu0
    %v1913 = vadd.f32 0.0, %v1912
    %1914 = vmatprep.mubr.f32.mxu0 0.0
    %1915 = vmatmul.mubr.f32.gmra.mxu0 %v1833
    %v1916 = vpop.f32.mrf.mxu0
    %v1917 = vadd.f32 0.0, %v1916
    %v1918 = vpop.f32.mrf.mxu0
    %v1919 = vadd.f32 0.0, %v1918
    %1920 = vmatprep.mubr.f32.mxu0 0.0
    %1921 = vmatmul.mubr.f32.gmra.mxu0 %v1836
    %v1922 = vpop.f32.mrf.mxu0
    %v1923 = vadd.f32 0.0, %v1922
    %v1924 = vpop.f32.mrf.mxu0
    %v1925 = vadd.f32 0.0, %v1924
    %1926 = vdwg.mxu0
    %s1927 = scalar_lea.vmem [#allocation10], 32
    %v1928 = vld [vmem:[%s1927] sm:$0xff]
    %v1929 = vld [vmem:[%s1927 + $0x8] sm:$0xff]
    %v1930 = vld [vmem:[%s1927 + $0x10] sm:$0xff]
    %v1931 = vld [vmem:[%s1927 + $0x18] sm:$0xff]
    %v1933 = vsel %vm489, %v1928, 0
    %v1936 = vsel %vm489, %v1929, 0
    %v1939 = vsel %vm489, %v1930, 0
    %v1942 = vsel %vm489, %v1931, 0
    %1944 = vmatprep.subr.mxu0 0.0
    %1945 = vmatpush1.msra.mxu0 0.0
    %1946 = vmatprep.subr.mxu0 0.0
    %1947 = vmatpush1.msra.mxu0 0.0
    %1948 = vmatprep.subr.mxu0 0.0
    %1949 = vmatpush1.msra.mxu0 0.0
    %1950 = vmatprep.subr.mxu0 0.0
    %1951 = vmatpush1.msra.mxu0 0.0
    %1952 = vmatprep.subr.mxu0 0.0
    %1953 = vmatpush1.msra.mxu0 0.0
    %1954 = vmatprep.subr.mxu0 0.0
    %1955 = vmatpush1.msra.mxu0 0.0
    %1956 = vmatprep.subr.mxu0 0.0
    %1957 = vmatpush1.msra.mxu0 0.0
    %1958 = vmatprep.subr.mxu0 0.0
    %1959 = vmatpush1.msra.mxu0 0.0
    %1960 = vmatprep.subr.mxu0 %v1821
    %1961 = vmatpush1.msra.mxu0 %v1820
    %1962 = vmatprep.subr.mxu0 %v1819
    %1963 = vmatpush1.msra.mxu0 %v1818
    %1964 = vmatprep.subr.mxu0 %v1817
    %1965 = vmatpush1.msra.mxu0 %v1816
    %1966 = vmatprep.subr.mxu0 %v1815
    %1967 = vmatpush1.msra.mxu0 %v1814
    %1968 = vmatprep.subr.mxu0 %v1813
    %1969 = vmatpush1.msra.mxu0 %v1812
    %1970 = vmatprep.subr.mxu0 %v1811
    %1971 = vmatpush1.msra.mxu0 %v1810
    %1972 = vmatprep.subr.mxu0 %v1809
    %1973 = vmatpush1.msra.mxu0 %v1808
    %1974 = vmatprep.subr.mxu0 %v1807
    %1975 = vmatpush1.msra.mxu0 %v1806
    %1976 = vmatprep.subr.mxu0 0.0
    %1977 = vmatpush2.msra.mxu0 0.0
    %1978 = vmatprep.subr.mxu0 0.0
    %1979 = vmatpush2.msra.mxu0 0.0
    %1980 = vmatprep.subr.mxu0 0.0
    %1981 = vmatpush2.msra.mxu0 0.0
    %1982 = vmatprep.subr.mxu0 0.0
    %1983 = vmatpush2.msra.mxu0 0.0
    %1984 = vmatprep.subr.mxu0 0.0
    %1985 = vmatpush2.msra.mxu0 0.0
    %1986 = vmatprep.subr.mxu0 0.0
    %1987 = vmatpush2.msra.mxu0 0.0
    %1988 = vmatprep.subr.mxu0 0.0
    %1989 = vmatpush2.msra.mxu0 0.0
    %1990 = vmatprep.subr.mxu0 0.0
    %1991 = vmatpush2.msra.mxu0 0.0
    %1992 = vmatprep.subr.mxu0 0.0
    %1993 = vmatpush2.msra.mxu0 0.0
    %1994 = vmatprep.subr.mxu0 0.0
    %1995 = vmatpush2.msra.mxu0 0.0
    %1996 = vmatprep.subr.mxu0 0.0
    %1997 = vmatpush2.msra.mxu0 0.0
    %1998 = vmatprep.subr.mxu0 0.0
    %1999 = vmatpush2.msra.mxu0 0.0
    %2000 = vmatprep.subr.mxu0 0.0
    %2001 = vmatpush2.msra.mxu0 0.0
    %2002 = vmatprep.subr.mxu0 0.0
    %2003 = vmatpush2.msra.mxu0 0.0
    %2004 = vmatprep.subr.mxu0 0.0
    %2005 = vmatpush2.msra.mxu0 0.0
    %2006 = vmatprep.subr.mxu0 0.0
    %2007 = vmatpush2.msra.mxu0 0.0
    %2008 = vmatprep.mubr.f32.mxu0 0.0
    %2009 = vmatmul.mubr.f32.gmra.mxu0 %v1933
    %v2010 = vpop.f32.mrf.mxu0
    %v2011 = vadd.f32 0.0, %v2010
    %v2012 = vpop.f32.mrf.mxu0
    %v2013 = vadd.f32 0.0, %v2012
    %2014 = vmatprep.mubr.f32.mxu0 0.0
    %2015 = vmatmul.mubr.f32.gmra.mxu0 %v1936
    %v2016 = vpop.f32.mrf.mxu0
    %v2017 = vadd.f32 0.0, %v2016
    %v2018 = vpop.f32.mrf.mxu0
    %v2019 = vadd.f32 0.0, %v2018
    %2020 = vmatprep.mubr.f32.mxu0 0.0
    %2021 = vmatmul.mubr.f32.gmra.mxu0 %v1939
    %v2022 = vpop.f32.mrf.mxu0
    %v2023 = vadd.f32 0.0, %v2022
    %v2024 = vpop.f32.mrf.mxu0
    %v2025 = vadd.f32 0.0, %v2024
    %2026 = vmatprep.mubr.f32.mxu0 0.0
    %2027 = vmatmul.mubr.f32.gmra.mxu0 %v1942
    %v2028 = vpop.f32.mrf.mxu0
    %v2029 = vadd.f32 0.0, %v2028
    %v2030 = vpop.f32.mrf.mxu0
    %v2031 = vadd.f32 0.0, %v2030
    %2032 = vdwg.mxu0
    %v2033 = vmax.f32 %v1905, %v2011
    %v2034 = vmax.f32 %v1907, %v2013
    %v2035 = vmax.f32 %v1911, %v2017
    %v2036 = vmax.f32 %v1913, %v2019
    %v2037 = vmax.f32 %v1917, %v2023
    %v2038 = vmax.f32 %v1919, %v2025
    %v2039 = vmax.f32 %v1923, %v2029
    %v2040 = vmax.f32 %v1925, %v2031
    %v2041 = vld [vmem:[#allocation11] sm:$0xff]
    %v2042 = vld [vmem:[#allocation11 + $0x8] sm:$0xff]
    %v2043 = vld [vmem:[#allocation11 + $0x10] sm:$0xff]
    %v2044 = vld [vmem:[#allocation11 + $0x18] sm:$0xff]
    %v2045 = vld [vmem:[#allocation11 + $0x20] sm:$0xff]
    %v2046 = vld [vmem:[#allocation11 + $0x28] sm:$0xff]
    %v2047 = vld [vmem:[#allocation11 + $0x30] sm:$0xff]
    %v2048 = vld [vmem:[#allocation11 + $0x38] sm:$0xff]
    %v2049 = vld [vmem:[#allocation11 + $0x40] sm:$0xff]
    %v2050 = vld [vmem:[#allocation11 + $0x48] sm:$0xff]
    %v2051 = vld [vmem:[#allocation11 + $0x50] sm:$0xff]
    %v2052 = vld [vmem:[#allocation11 + $0x58] sm:$0xff]
    %v2053 = vld [vmem:[#allocation11 + $0x60] sm:$0xff]
    %v2054 = vld [vmem:[#allocation11 + $0x68] sm:$0xff]
    %v2055 = vld [vmem:[#allocation11 + $0x70] sm:$0xff]
    %v2056 = vld [vmem:[#allocation11 + $0x78] sm:$0xff]
    %v2057 = vld [vmem:[#allocation11 + $0x80] sm:$0xff]
    %v2058 = vld [vmem:[#allocation11 + $0x88] sm:$0xff]
    %v2059 = vld [vmem:[#allocation11 + $0x90] sm:$0xff]
    %v2060 = vld [vmem:[#allocation11 + $0x98] sm:$0xff]
    %v2061 = vld [vmem:[#allocation11 + $0xa0] sm:$0xff]
    %v2062 = vld [vmem:[#allocation11 + $0xa8] sm:$0xff]
    %v2063 = vld [vmem:[#allocation11 + $0xb0] sm:$0xff]
    %v2064 = vld [vmem:[#allocation11 + $0xb8] sm:$0xff]
    %v2065 = vld [vmem:[#allocation11 + $0xc0] sm:$0xff]
    %v2066 = vld [vmem:[#allocation11 + $0xc8] sm:$0xff]
    %v2067 = vld [vmem:[#allocation11 + $0xd0] sm:$0xff]
    %v2068 = vld [vmem:[#allocation11 + $0xd8] sm:$0xff]
    %v2069 = vld [vmem:[#allocation11 + $0xe0] sm:$0xff]
    %v2070 = vld [vmem:[#allocation11 + $0xe8] sm:$0xff]
    %v2071 = vld [vmem:[#allocation11 + $0xf0] sm:$0xff]
    %v2072 = vld [vmem:[#allocation11 + $0xf8] sm:$0xff]
    %2073 = vmatprep.subr.mxu0 0.0
    %2074 = vmatpush1.msra.mxu0 %v2056
    %2075 = vmatprep.subr.mxu0 0.0
    %2076 = vmatpush1.msra.mxu0 %v2055
    %2077 = vmatprep.subr.mxu0 0.0
    %2078 = vmatpush1.msra.mxu0 %v2054
    %2079 = vmatprep.subr.mxu0 0.0
    %2080 = vmatpush1.msra.mxu0 %v2053
    %2081 = vmatprep.subr.mxu0 0.0
    %2082 = vmatpush1.msra.mxu0 %v2052
    %2083 = vmatprep.subr.mxu0 0.0
    %2084 = vmatpush1.msra.mxu0 %v2051
    %2085 = vmatprep.subr.mxu0 0.0
    %2086 = vmatpush1.msra.mxu0 %v2050
    %2087 = vmatprep.subr.mxu0 0.0
    %2088 = vmatpush1.msra.mxu0 %v2049
    %2089 = vmatprep.subr.mxu0 0.0
    %2090 = vmatpush1.msra.mxu0 %v2048
    %2091 = vmatprep.subr.mxu0 0.0
    %2092 = vmatpush1.msra.mxu0 %v2047
    %2093 = vmatprep.subr.mxu0 0.0
    %2094 = vmatpush1.msra.mxu0 %v2046
    %2095 = vmatprep.subr.mxu0 0.0
    %2096 = vmatpush1.msra.mxu0 %v2045
    %2097 = vmatprep.subr.mxu0 0.0
    %2098 = vmatpush1.msra.mxu0 %v2044
    %2099 = vmatprep.subr.mxu0 0.0
    %2100 = vmatpush1.msra.mxu0 %v2043
    %2101 = vmatprep.subr.mxu0 0.0
    %2102 = vmatpush1.msra.mxu0 %v2042
    %2103 = vmatprep.subr.mxu0 0.0
    %2104 = vmatpush1.msra.mxu0 %v2041
    %2105 = vmatprep.subr.mxu0 0.0
    %2106 = vmatpush2.msra.mxu0 %v2072
    %2107 = vmatprep.subr.mxu0 0.0
    %2108 = vmatpush2.msra.mxu0 %v2071
    %2109 = vmatprep.subr.mxu0 0.0
    %2110 = vmatpush2.msra.mxu0 %v2070
    %2111 = vmatprep.subr.mxu0 0.0
    %2112 = vmatpush2.msra.mxu0 %v2069
    %2113 = vmatprep.subr.mxu0 0.0
    %2114 = vmatpush2.msra.mxu0 %v2068
    %2115 = vmatprep.subr.mxu0 0.0
    %2116 = vmatpush2.msra.mxu0 %v2067
    %2117 = vmatprep.subr.mxu0 0.0
    %2118 = vmatpush2.msra.mxu0 %v2066
    %2119 = vmatprep.subr.mxu0 0.0
    %2120 = vmatpush2.msra.mxu0 %v2065
    %2121 = vmatprep.subr.mxu0 0.0
    %2122 = vmatpush2.msra.mxu0 %v2064
    %2123 = vmatprep.subr.mxu0 0.0
    %2124 = vmatpush2.msra.mxu0 %v2063
    %2125 = vmatprep.subr.mxu0 0.0
    %2126 = vmatpush2.msra.mxu0 %v2062
    %2127 = vmatprep.subr.mxu0 0.0
    %2128 = vmatpush2.msra.mxu0 %v2061
    %2129 = vmatprep.subr.mxu0 0.0
    %2130 = vmatpush2.msra.mxu0 %v2060
    %2131 = vmatprep.subr.mxu0 0.0
    %2132 = vmatpush2.msra.mxu0 %v2059
    %2133 = vmatprep.subr.mxu0 0.0
    %2134 = vmatpush2.msra.mxu0 %v2058
    %2135 = vmatprep.subr.mxu0 0.0
    %2136 = vmatpush2.msra.mxu0 %v2057
    %2137 = vmatprep.mubr.f32.mxu0 %v2034
    %2138 = vmatmul.mubr.f32.gmra.mxu0 %v2033
    %v2139 = vpop.f32.mrf.mxu0
    %v2140 = vadd.f32 0.0, %v2139
    %v2141 = vpop.f32.mrf.mxu0
    %2142 = vmatprep.mubr.f32.mxu0 %v2036
    %2143 = vmatmul.mubr.f32.gmra.mxu0 %v2035
    %v2144 = vpop.f32.mrf.mxu0
    %v2145 = vadd.f32 0.0, %v2144
    %v2146 = vpop.f32.mrf.mxu0
    %2147 = vmatprep.mubr.f32.mxu0 %v2038
    %2148 = vmatmul.mubr.f32.gmra.mxu0 %v2037
    %v2149 = vpop.f32.mrf.mxu0
    %v2150 = vadd.f32 0.0, %v2149
    %v2151 = vpop.f32.mrf.mxu0
    %2152 = vmatprep.mubr.f32.mxu0 %v2040
    %2153 = vmatmul.mubr.f32.gmra.mxu0 %v2039
    %v2154 = vpop.f32.mrf.mxu0
    %v2155 = vadd.f32 0.0, %v2154
    %v2156 = vpop.f32.mrf.mxu0
    %2157 = vdwg.mxu0
    %s2158 = scalar_lea.vmem [#allocation11], 256
    %v2159 = vld [vmem:[%s2158] sm:$0xff]
    %v2160 = vld [vmem:[%s2158 + $0x8] sm:$0xff]
    %v2161 = vld [vmem:[%s2158 + $0x10] sm:$0xff]
    %v2162 = vld [vmem:[%s2158 + $0x18] sm:$0xff]
    %v2163 = vld [vmem:[%s2158 + $0x20] sm:$0xff]
    %v2164 = vld [vmem:[%s2158 + $0x28] sm:$0xff]
    %v2165 = vld [vmem:[%s2158 + $0x30] sm:$0xff]
    %v2166 = vld [vmem:[%s2158 + $0x38] sm:$0xff]
    %v2167 = vld [vmem:[%s2158 + $0x40] sm:$0xff]
    %v2168 = vld [vmem:[%s2158 + $0x48] sm:$0xff]
    %v2169 = vld [vmem:[%s2158 + $0x50] sm:$0xff]
    %v2170 = vld [vmem:[%s2158 + $0x58] sm:$0xff]
    %v2171 = vld [vmem:[%s2158 + $0x60] sm:$0xff]
    %v2172 = vld [vmem:[%s2158 + $0x68] sm:$0xff]
    %v2173 = vld [vmem:[%s2158 + $0x70] sm:$0xff]
    %v2174 = vld [vmem:[%s2158 + $0x78] sm:$0xff]
    %v2175 = vld [vmem:[%s2158 + $0x80] sm:$0xff]
    %v2176 = vld [vmem:[%s2158 + $0x88] sm:$0xff]
    %v2177 = vld [vmem:[%s2158 + $0x90] sm:$0xff]
    %v2178 = vld [vmem:[%s2158 + $0x98] sm:$0xff]
    %v2179 = vld [vmem:[%s2158 + $0xa0] sm:$0xff]
    %v2180 = vld [vmem:[%s2158 + $0xa8] sm:$0xff]
    %v2181 = vld [vmem:[%s2158 + $0xb0] sm:$0xff]
    %v2182 = vld [vmem:[%s2158 + $0xb8] sm:$0xff]
    %v2183 = vld [vmem:[%s2158 + $0xc0] sm:$0xff]
    %v2184 = vld [vmem:[%s2158 + $0xc8] sm:$0xff]
    %v2185 = vld [vmem:[%s2158 + $0xd0] sm:$0xff]
    %v2186 = vld [vmem:[%s2158 + $0xd8] sm:$0xff]
    %v2187 = vld [vmem:[%s2158 + $0xe0] sm:$0xff]
    %v2188 = vld [vmem:[%s2158 + $0xe8] sm:$0xff]
    %v2189 = vld [vmem:[%s2158 + $0xf0] sm:$0xff]
    %v2190 = vld [vmem:[%s2158 + $0xf8] sm:$0xff]
    %2191 = vmatprep.subr.mxu0 0.0
    %2192 = vmatpush1.msra.mxu0 %v2174
    %2193 = vmatprep.subr.mxu0 0.0
    %2194 = vmatpush1.msra.mxu0 %v2173
    %2195 = vmatprep.subr.mxu0 0.0
    %2196 = vmatpush1.msra.mxu0 %v2172
    %2197 = vmatprep.subr.mxu0 0.0
    %2198 = vmatpush1.msra.mxu0 %v2171
    %2199 = vmatprep.subr.mxu0 0.0
    %2200 = vmatpush1.msra.mxu0 %v2170
    %2201 = vmatprep.subr.mxu0 0.0
    %2202 = vmatpush1.msra.mxu0 %v2169
    %2203 = vmatprep.subr.mxu0 0.0
    %2204 = vmatpush1.msra.mxu0 %v2168
    %2205 = vmatprep.subr.mxu0 0.0
    %2206 = vmatpush1.msra.mxu0 %v2167
    %2207 = vmatprep.subr.mxu0 0.0
    %2208 = vmatpush1.msra.mxu0 %v2166
    %2209 = vmatprep.subr.mxu0 0.0
    %2210 = vmatpush1.msra.mxu0 %v2165
    %2211 = vmatprep.subr.mxu0 0.0
    %2212 = vmatpush1.msra.mxu0 %v2164
    %2213 = vmatprep.subr.mxu0 0.0
    %2214 = vmatpush1.msra.mxu0 %v2163
    %2215 = vmatprep.subr.mxu0 0.0
    %2216 = vmatpush1.msra.mxu0 %v2162
    %2217 = vmatprep.subr.mxu0 0.0
    %2218 = vmatpush1.msra.mxu0 %v2161
    %2219 = vmatprep.subr.mxu0 0.0
    %2220 = vmatpush1.msra.mxu0 %v2160
    %2221 = vmatprep.subr.mxu0 0.0
    %2222 = vmatpush1.msra.mxu0 %v2159
    %2223 = vmatprep.subr.mxu0 0.0
    %2224 = vmatpush2.msra.mxu0 %v2190
    %2225 = vmatprep.subr.mxu0 0.0
    %2226 = vmatpush2.msra.mxu0 %v2189
    %2227 = vmatprep.subr.mxu0 0.0
    %2228 = vmatpush2.msra.mxu0 %v2188
    %2229 = vmatprep.subr.mxu0 0.0
    %2230 = vmatpush2.msra.mxu0 %v2187
    %2231 = vmatprep.subr.mxu0 0.0
    %2232 = vmatpush2.msra.mxu0 %v2186
    %2233 = vmatprep.subr.mxu0 0.0
    %2234 = vmatpush2.msra.mxu0 %v2185
    %2235 = vmatprep.subr.mxu0 0.0
    %2236 = vmatpush2.msra.mxu0 %v2184
    %2237 = vmatprep.subr.mxu0 0.0
    %2238 = vmatpush2.msra.mxu0 %v2183
    %2239 = vmatprep.subr.mxu0 0.0
    %2240 = vmatpush2.msra.mxu0 %v2182
    %2241 = vmatprep.subr.mxu0 0.0
    %2242 = vmatpush2.msra.mxu0 %v2181
    %2243 = vmatprep.subr.mxu0 0.0
    %2244 = vmatpush2.msra.mxu0 %v2180
    %2245 = vmatprep.subr.mxu0 0.0
    %2246 = vmatpush2.msra.mxu0 %v2179
    %2247 = vmatprep.subr.mxu0 0.0
    %2248 = vmatpush2.msra.mxu0 %v2178
    %2249 = vmatprep.subr.mxu0 0.0
    %2250 = vmatpush2.msra.mxu0 %v2177
    %2251 = vmatprep.subr.mxu0 0.0
    %2252 = vmatpush2.msra.mxu0 %v2176
    %2253 = vmatprep.subr.mxu0 0.0
    %2254 = vmatpush2.msra.mxu0 %v2175
    %2255 = vmatprep.mubr.f32.mxu0 %v2034
    %2256 = vmatmul.mubr.f32.gmra.mxu0 %v2033
    %v2257 = vpop.f32.mrf.mxu0
    %v2258 = vadd.f32 0.0, %v2257
    %v2259 = vpop.f32.mrf.mxu0
    %2260 = vmatprep.mubr.f32.mxu0 %v2036
    %2261 = vmatmul.mubr.f32.gmra.mxu0 %v2035
    %v2262 = vpop.f32.mrf.mxu0
    %v2263 = vadd.f32 0.0, %v2262
    %v2264 = vpop.f32.mrf.mxu0
    %2265 = vmatprep.mubr.f32.mxu0 %v2038
    %2266 = vmatmul.mubr.f32.gmra.mxu0 %v2037
    %v2267 = vpop.f32.mrf.mxu0
    %v2268 = vadd.f32 0.0, %v2267
    %v2269 = vpop.f32.mrf.mxu0
    %2270 = vmatprep.mubr.f32.mxu0 %v2040
    %2271 = vmatmul.mubr.f32.gmra.mxu0 %v2039
    %v2272 = vpop.f32.mrf.mxu0
    %v2273 = vadd.f32 0.0, %v2272
    %v2274 = vpop.f32.mrf.mxu0
    %2275 = vdwg.mxu0
    %v2276 = vmax.f32 %v2140, %v2258
    %v2277 = vmax.f32 %v2145, %v2263
    %v2278 = vmax.f32 %v2150, %v2268
    %v2279 = vmax.f32 %v2155, %v2273
    %s2280 = scalar_lea.vmem %s19, 256
    %v2281 = vld [vmem:[%s2280] sm:$0xff]
    %v2282 = vld [vmem:[%s2280 + $0x8] sm:$0xff]
    %v2283 = vld [vmem:[%s2280 + $0x10] sm:$0xff]
    %v2284 = vld [vmem:[%s2280 + $0x18] sm:$0xff]
    %v2285 = vld [vmem:[%s2280 + $0x20] sm:$0xff]
    %v2286 = vld [vmem:[%s2280 + $0x28] sm:$0xff]
    %v2287 = vld [vmem:[%s2280 + $0x30] sm:$0xff]
    %v2288 = vld [vmem:[%s2280 + $0x38] sm:$0xff]
    %v2289 = vld [vmem:[%s2280 + $0x40] sm:$0xff]
    %v2290 = vld [vmem:[%s2280 + $0x48] sm:$0xff]
    %v2291 = vld [vmem:[%s2280 + $0x50] sm:$0xff]
    %v2292 = vld [vmem:[%s2280 + $0x58] sm:$0xff]
    %v2293 = vld [vmem:[%s2280 + $0x60] sm:$0xff]
    %v2294 = vld [vmem:[%s2280 + $0x68] sm:$0xff]
    %v2295 = vld [vmem:[%s2280 + $0x70] sm:$0xff]
    %v2296 = vld [vmem:[%s2280 + $0x78] sm:$0xff]
    %v2297 = vld [vmem:[%s2280 + $0x80] sm:$0xff]
    %v2298 = vld [vmem:[%s2280 + $0x88] sm:$0xff]
    %v2299 = vld [vmem:[%s2280 + $0x90] sm:$0xff]
    %v2300 = vld [vmem:[%s2280 + $0x98] sm:$0xff]
    %v2301 = vld [vmem:[%s2280 + $0xa0] sm:$0xff]
    %v2302 = vld [vmem:[%s2280 + $0xa8] sm:$0xff]
    %v2303 = vld [vmem:[%s2280 + $0xb0] sm:$0xff]
    %v2304 = vld [vmem:[%s2280 + $0xb8] sm:$0xff]
    %v2305 = vld [vmem:[%s2280 + $0xc0] sm:$0xff]
    %v2306 = vld [vmem:[%s2280 + $0xc8] sm:$0xff]
    %v2307 = vld [vmem:[%s2280 + $0xd0] sm:$0xff]
    %v2308 = vld [vmem:[%s2280 + $0xd8] sm:$0xff]
    %v2309 = vld [vmem:[%s2280 + $0xe0] sm:$0xff]
    %v2310 = vld [vmem:[%s2280 + $0xe8] sm:$0xff]
    %v2311 = vld [vmem:[%s2280 + $0xf0] sm:$0xff]
    %v2312 = vld [vmem:[%s2280 + $0xf8] sm:$0xff]
    %v2313 = vld [vmem:[#allocation16] sm:$0xff]
    %v2314 = vld [vmem:[#allocation16 + $0x8] sm:$0xff]
    %v2315 = vld [vmem:[#allocation16 + $0x10] sm:$0xff]
    %v2316 = vld [vmem:[#allocation16 + $0x18] sm:$0xff]
    %vm2317 = vcmask 261120
    %v2319 = vsel %vm2317, %v2313, 0
    %v2322 = vsel %vm2317, %v2314, 0
    %v2325 = vsel %vm2317, %v2315, 0
    %v2328 = vsel %vm2317, %v2316, 0
    %2330 = vmatprep.subr.mxu0 0.0
    %2331 = vmatpush1.msra.mxu0 0.0
    %2332 = vmatprep.subr.mxu0 0.0
    %2333 = vmatpush1.msra.mxu0 0.0
    %2334 = vmatprep.subr.mxu0 0.0
    %2335 = vmatpush1.msra.mxu0 0.0
    %2336 = vmatprep.subr.mxu0 0.0
    %2337 = vmatpush1.msra.mxu0 0.0
    %2338 = vmatprep.subr.mxu0 0.0
    %2339 = vmatpush1.msra.mxu0 0.0
    %2340 = vmatprep.subr.mxu0 0.0
    %2341 = vmatpush1.msra.mxu0 0.0
    %2342 = vmatprep.subr.mxu0 0.0
    %2343 = vmatpush1.msra.mxu0 0.0
    %2344 = vmatprep.subr.mxu0 0.0
    %2345 = vmatpush1.msra.mxu0 0.0
    %2346 = vmatprep.subr.mxu0 0.0
    %2347 = vmatpush1.msra.mxu0 0.0
    %2348 = vmatprep.subr.mxu0 0.0
    %2349 = vmatpush1.msra.mxu0 0.0
    %2350 = vmatprep.subr.mxu0 0.0
    %2351 = vmatpush1.msra.mxu0 0.0
    %2352 = vmatprep.subr.mxu0 0.0
    %2353 = vmatpush1.msra.mxu0 0.0
    %2354 = vmatprep.subr.mxu0 0.0
    %2355 = vmatpush1.msra.mxu0 %v2279
    %2356 = vmatprep.subr.mxu0 0.0
    %2357 = vmatpush1.msra.mxu0 %v2278
    %2358 = vmatprep.subr.mxu0 0.0
    %2359 = vmatpush1.msra.mxu0 %v2277
    %2360 = vmatprep.subr.mxu0 0.0
    %2361 = vmatpush1.msra.mxu0 %v2276
    %2362 = vmatprep.subr.mxu0 0.0
    %2363 = vmatpush2.msra.mxu0 0.0
    %2364 = vmatprep.subr.mxu0 0.0
    %2365 = vmatpush2.msra.mxu0 0.0
    %2366 = vmatprep.subr.mxu0 0.0
    %2367 = vmatpush2.msra.mxu0 0.0
    %2368 = vmatprep.subr.mxu0 0.0
    %2369 = vmatpush2.msra.mxu0 0.0
    %2370 = vmatprep.subr.mxu0 0.0
    %2371 = vmatpush2.msra.mxu0 0.0
    %2372 = vmatprep.subr.mxu0 0.0
    %2373 = vmatpush2.msra.mxu0 0.0
    %2374 = vmatprep.subr.mxu0 0.0
    %2375 = vmatpush2.msra.mxu0 0.0
    %2376 = vmatprep.subr.mxu0 0.0
    %2377 = vmatpush2.msra.mxu0 0.0
    %2378 = vmatprep.subr.mxu0 0.0
    %2379 = vmatpush2.msra.mxu0 0.0
    %2380 = vmatprep.subr.mxu0 0.0
    %2381 = vmatpush2.msra.mxu0 0.0
    %2382 = vmatprep.subr.mxu0 0.0
    %2383 = vmatpush2.msra.mxu0 0.0
    %2384 = vmatprep.subr.mxu0 0.0
    %2385 = vmatpush2.msra.mxu0 0.0
    %2386 = vmatprep.subr.mxu0 0.0
    %2387 = vmatpush2.msra.mxu0 0.0
    %2388 = vmatprep.subr.mxu0 0.0
    %2389 = vmatpush2.msra.mxu0 0.0
    %2390 = vmatprep.subr.mxu0 0.0
    %2391 = vmatpush2.msra.mxu0 0.0
    %2392 = vmatprep.subr.mxu0 0.0
    %2393 = vmatpush2.msra.mxu0 0.0
    %2394 = vmatprep.mubr.f32.mxu0 0.0
    %2395 = vmatmul.mubr.f32.gmra.mxu0 %v2319
    %v2396 = vpop.f32.mrf.mxu0
    %v2397 = vadd.f32 0.0, %v2396
    %v2398 = vpop.f32.mrf.mxu0
    %2399 = vmatprep.mubr.f32.mxu0 0.0
    %2400 = vmatmul.mubr.f32.gmra.mxu0 %v2322
    %v2401 = vpop.f32.mrf.mxu0
    %v2402 = vadd.f32 0.0, %v2401
    %v2403 = vpop.f32.mrf.mxu0
    %2404 = vmatprep.mubr.f32.mxu0 0.0
    %2405 = vmatmul.mubr.f32.gmra.mxu0 %v2325
    %v2406 = vpop.f32.mrf.mxu0
    %v2407 = vadd.f32 0.0, %v2406
    %v2408 = vpop.f32.mrf.mxu0
    %2409 = vmatprep.mubr.f32.mxu0 0.0
    %2410 = vmatmul.mubr.f32.gmra.mxu0 %v2328
    %v2411 = vpop.f32.mrf.mxu0
    %v2412 = vadd.f32 0.0, %v2411
    %v2413 = vpop.f32.mrf.mxu0
    %2414 = vdwg.mxu0
    %v2415 = vld [vmem:[%s19] sm:$0xff]
    %v2416 = vld [vmem:[%s19 + $0x8] sm:$0xff]
    %v2417 = vld [vmem:[%s19 + $0x10] sm:$0xff]
    %v2418 = vld [vmem:[%s19 + $0x18] sm:$0xff]
    %v2419 = vld [vmem:[%s19 + $0x20] sm:$0xff]
    %v2420 = vld [vmem:[%s19 + $0x28] sm:$0xff]
    %v2421 = vld [vmem:[%s19 + $0x30] sm:$0xff]
    %v2422 = vld [vmem:[%s19 + $0x38] sm:$0xff]
    %v2423 = vld [vmem:[%s19 + $0x40] sm:$0xff]
    %v2424 = vld [vmem:[%s19 + $0x48] sm:$0xff]
    %v2425 = vld [vmem:[%s19 + $0x50] sm:$0xff]
    %v2426 = vld [vmem:[%s19 + $0x58] sm:$0xff]
    %v2427 = vld [vmem:[%s19 + $0x60] sm:$0xff]
    %v2428 = vld [vmem:[%s19 + $0x68] sm:$0xff]
    %v2429 = vld [vmem:[%s19 + $0x70] sm:$0xff]
    %v2430 = vld [vmem:[%s19 + $0x78] sm:$0xff]
    %v2431 = vld [vmem:[%s19 + $0x80] sm:$0xff]
    %v2432 = vld [vmem:[%s19 + $0x88] sm:$0xff]
    %v2433 = vld [vmem:[%s19 + $0x90] sm:$0xff]
    %v2434 = vld [vmem:[%s19 + $0x98] sm:$0xff]
    %v2435 = vld [vmem:[%s19 + $0xa0] sm:$0xff]
    %v2436 = vld [vmem:[%s19 + $0xa8] sm:$0xff]
    %v2437 = vld [vmem:[%s19 + $0xb0] sm:$0xff]
    %v2438 = vld [vmem:[%s19 + $0xb8] sm:$0xff]
    %v2439 = vld [vmem:[%s19 + $0xc0] sm:$0xff]
    %v2440 = vld [vmem:[%s19 + $0xc8] sm:$0xff]
    %v2441 = vld [vmem:[%s19 + $0xd0] sm:$0xff]
    %v2442 = vld [vmem:[%s19 + $0xd8] sm:$0xff]
    %v2443 = vld [vmem:[%s19 + $0xe0] sm:$0xff]
    %v2444 = vld [vmem:[%s19 + $0xe8] sm:$0xff]
    %v2445 = vld [vmem:[%s19 + $0xf0] sm:$0xff]
    %v2446 = vld [vmem:[%s19 + $0xf8] sm:$0xff]
    %2447 = vmatprep.subr.mxu0 %v2446
    %2448 = vmatpush1.msra.mxu0 %v2445
    %2449 = vmatprep.subr.mxu0 %v2444
    %2450 = vmatpush1.msra.mxu0 %v2443
    %2451 = vmatprep.subr.mxu0 %v2442
    %2452 = vmatpush1.msra.mxu0 %v2441
    %2453 = vmatprep.subr.mxu0 %v2440
    %2454 = vmatpush1.msra.mxu0 %v2439
    %2455 = vmatprep.subr.mxu0 %v2438
    %2456 = vmatpush1.msra.mxu0 %v2437
    %2457 = vmatprep.subr.mxu0 %v2436
    %2458 = vmatpush1.msra.mxu0 %v2435
    %2459 = vmatprep.subr.mxu0 %v2434
    %2460 = vmatpush1.msra.mxu0 %v2433
    %2461 = vmatprep.subr.mxu0 %v2432
    %2462 = vmatpush1.msra.mxu0 %v2431
    %2463 = vmatprep.subr.mxu0 %v2430
    %2464 = vmatpush1.msra.mxu0 %v2429
    %2465 = vmatprep.subr.mxu0 %v2428
    %2466 = vmatpush1.msra.mxu0 %v2427
    %2467 = vmatprep.subr.mxu0 %v2426
    %2468 = vmatpush1.msra.mxu0 %v2425
    %2469 = vmatprep.subr.mxu0 %v2424
    %2470 = vmatpush1.msra.mxu0 %v2423
    %2471 = vmatprep.subr.mxu0 %v2422
    %2472 = vmatpush1.msra.mxu0 %v2421
    %2473 = vmatprep.subr.mxu0 %v2420
    %2474 = vmatpush1.msra.mxu0 %v2419
    %2475 = vmatprep.subr.mxu0 %v2418
    %2476 = vmatpush1.msra.mxu0 %v2417
    %2477 = vmatprep.subr.mxu0 %v2416
    %2478 = vmatpush1.msra.mxu0 %v2415
    %2479 = vmatprep.subr.mxu0 0.0
    %2480 = vmatpush2.msra.mxu0 0.0
    %2481 = vmatprep.subr.mxu0 0.0
    %2482 = vmatpush2.msra.mxu0 0.0
    %2483 = vmatprep.subr.mxu0 0.0
    %2484 = vmatpush2.msra.mxu0 0.0
    %2485 = vmatprep.subr.mxu0 0.0
    %2486 = vmatpush2.msra.mxu0 0.0
    %2487 = vmatprep.subr.mxu0 0.0
    %2488 = vmatpush2.msra.mxu0 0.0
    %2489 = vmatprep.subr.mxu0 0.0
    %2490 = vmatpush2.msra.mxu0 0.0
    %2491 = vmatprep.subr.mxu0 0.0
    %2492 = vmatpush2.msra.mxu0 0.0
    %2493 = vmatprep.subr.mxu0 0.0
    %2494 = vmatpush2.msra.mxu0 0.0
    %2495 = vmatprep.subr.mxu0 0.0
    %2496 = vmatpush2.msra.mxu0 0.0
    %2497 = vmatprep.subr.mxu0 0.0
    %2498 = vmatpush2.msra.mxu0 0.0
    %2499 = vmatprep.subr.mxu0 0.0
    %2500 = vmatpush2.msra.mxu0 0.0
    %2501 = vmatprep.subr.mxu0 0.0
    %2502 = vmatpush2.msra.mxu0 0.0
    %2503 = vmatprep.subr.mxu0 0.0
    %2504 = vmatpush2.msra.mxu0 0.0
    %2505 = vmatprep.subr.mxu0 0.0
    %2506 = vmatpush2.msra.mxu0 0.0
    %2507 = vmatprep.subr.mxu0 0.0
    %2508 = vmatpush2.msra.mxu0 0.0
    %2509 = vmatprep.subr.mxu0 0.0
    %2510 = vmatpush2.msra.mxu0 0.0
    %2511 = vmatprep.mubr.f32.mxu0 0.0
    %2512 = vmatmul.mubr.f32.gmra.mxu0 %v2397
    %v2513 = vpop.f32.mrf.mxu0
    %v2514 = vadd.f32 0.0, %v2513
    %v2515 = vpop.f32.mrf.mxu0
    %v2516 = vadd.f32 0.0, %v2515
    %2517 = vmatprep.mubr.f32.mxu0 0.0
    %2518 = vmatmul.mubr.f32.gmra.mxu0 %v2402
    %v2519 = vpop.f32.mrf.mxu0
    %v2520 = vadd.f32 0.0, %v2519
    %v2521 = vpop.f32.mrf.mxu0
    %v2522 = vadd.f32 0.0, %v2521
    %2523 = vmatprep.mubr.f32.mxu0 0.0
    %2524 = vmatmul.mubr.f32.gmra.mxu0 %v2407
    %v2525 = vpop.f32.mrf.mxu0
    %v2526 = vadd.f32 0.0, %v2525
    %v2527 = vpop.f32.mrf.mxu0
    %v2528 = vadd.f32 0.0, %v2527
    %2529 = vmatprep.mubr.f32.mxu0 0.0
    %2530 = vmatmul.mubr.f32.gmra.mxu0 %v2412
    %v2531 = vpop.f32.mrf.mxu0
    %v2532 = vadd.f32 0.0, %v2531
    %v2533 = vpop.f32.mrf.mxu0
    %v2534 = vadd.f32 0.0, %v2533
    %2535 = vdwg.mxu0
    %2536 = vmatprep.subr.mxu0 %v2312
    %2537 = vmatpush1.msra.mxu0 %v2311
    %2538 = vmatprep.subr.mxu0 %v2310
    %2539 = vmatpush1.msra.mxu0 %v2309
    %2540 = vmatprep.subr.mxu0 %v2308
    %2541 = vmatpush1.msra.mxu0 %v2307
    %2542 = vmatprep.subr.mxu0 %v2306
    %2543 = vmatpush1.msra.mxu0 %v2305
    %2544 = vmatprep.subr.mxu0 %v2304
    %2545 = vmatpush1.msra.mxu0 %v2303
    %2546 = vmatprep.subr.mxu0 %v2302
    %2547 = vmatpush1.msra.mxu0 %v2301
    %2548 = vmatprep.subr.mxu0 %v2300
    %2549 = vmatpush1.msra.mxu0 %v2299
    %2550 = vmatprep.subr.mxu0 %v2298
    %2551 = vmatpush1.msra.mxu0 %v2297
    %2552 = vmatprep.subr.mxu0 %v2296
    %2553 = vmatpush1.msra.mxu0 %v2295
    %2554 = vmatprep.subr.mxu0 %v2294
    %2555 = vmatpush1.msra.mxu0 %v2293
    %2556 = vmatprep.subr.mxu0 %v2292
    %2557 = vmatpush1.msra.mxu0 %v2291
    %2558 = vmatprep.subr.mxu0 %v2290
    %2559 = vmatpush1.msra.mxu0 %v2289
    %2560 = vmatprep.subr.mxu0 %v2288
    %2561 = vmatpush1.msra.mxu0 %v2287
    %2562 = vmatprep.subr.mxu0 %v2286
    %2563 = vmatpush1.msra.mxu0 %v2285
    %2564 = vmatprep.subr.mxu0 %v2284
    %2565 = vmatpush1.msra.mxu0 %v2283
    %2566 = vmatprep.subr.mxu0 %v2282
    %2567 = vmatpush1.msra.mxu0 %v2281
    %2568 = vmatprep.subr.mxu0 0.0
    %2569 = vmatpush2.msra.mxu0 0.0
    %2570 = vmatprep.subr.mxu0 0.0
    %2571 = vmatpush2.msra.mxu0 0.0
    %2572 = vmatprep.subr.mxu0 0.0
    %2573 = vmatpush2.msra.mxu0 0.0
    %2574 = vmatprep.subr.mxu0 0.0
    %2575 = vmatpush2.msra.mxu0 0.0
    %2576 = vmatprep.subr.mxu0 0.0
    %2577 = vmatpush2.msra.mxu0 0.0
    %2578 = vmatprep.subr.mxu0 0.0
    %2579 = vmatpush2.msra.mxu0 0.0
    %2580 = vmatprep.subr.mxu0 0.0
    %2581 = vmatpush2.msra.mxu0 0.0
    %2582 = vmatprep.subr.mxu0 0.0
    %2583 = vmatpush2.msra.mxu0 0.0
    %2584 = vmatprep.subr.mxu0 0.0
    %2585 = vmatpush2.msra.mxu0 0.0
    %2586 = vmatprep.subr.mxu0 0.0
    %2587 = vmatpush2.msra.mxu0 0.0
    %2588 = vmatprep.subr.mxu0 0.0
    %2589 = vmatpush2.msra.mxu0 0.0
    %2590 = vmatprep.subr.mxu0 0.0
    %2591 = vmatpush2.msra.mxu0 0.0
    %2592 = vmatprep.subr.mxu0 0.0
    %2593 = vmatpush2.msra.mxu0 0.0
    %2594 = vmatprep.subr.mxu0 0.0
    %2595 = vmatpush2.msra.mxu0 0.0
    %2596 = vmatprep.subr.mxu0 0.0
    %2597 = vmatpush2.msra.mxu0 0.0
    %2598 = vmatprep.subr.mxu0 0.0
    %2599 = vmatpush2.msra.mxu0 0.0
    %2600 = vmatprep.mubr.f32.mxu0 0.0
    %2601 = vmatmul.mubr.f32.gmra.mxu0 %v2276
    %v2602 = vpop.f32.mrf.mxu0
    %v2603 = vadd.f32 %v2514, %v2602
    %v2604 = vpop.f32.mrf.mxu0
    %v2605 = vadd.f32 %v2516, %v2604
    %2606 = vmatprep.mubr.f32.mxu0 0.0
    %2607 = vmatmul.mubr.f32.gmra.mxu0 %v2277
    %v2608 = vpop.f32.mrf.mxu0
    %v2609 = vadd.f32 %v2520, %v2608
    %v2610 = vpop.f32.mrf.mxu0
    %v2611 = vadd.f32 %v2522, %v2610
    %2612 = vmatprep.mubr.f32.mxu0 0.0
    %2613 = vmatmul.mubr.f32.gmra.mxu0 %v2278
    %v2614 = vpop.f32.mrf.mxu0
    %v2615 = vadd.f32 %v2526, %v2614
    %v2616 = vpop.f32.mrf.mxu0
    %v2617 = vadd.f32 %v2528, %v2616
    %2618 = vmatprep.mubr.f32.mxu0 0.0
    %2619 = vmatmul.mubr.f32.gmra.mxu0 %v2279
    %v2620 = vpop.f32.mrf.mxu0
    %v2621 = vadd.f32 %v2532, %v2620
    %v2622 = vpop.f32.mrf.mxu0
    %v2623 = vadd.f32 %v2534, %v2622
    %2624 = vdwg.mxu0
    %s2625 = scalar_lea.vmem [#allocation16], 32
    %v2626 = vld [vmem:[%s2625] sm:$0xff]
    %v2627 = vld [vmem:[%s2625 + $0x8] sm:$0xff]
    %v2628 = vld [vmem:[%s2625 + $0x10] sm:$0xff]
    %v2629 = vld [vmem:[%s2625 + $0x18] sm:$0xff]
    %v2631 = vsel %vm2317, %v2626, 0
    %v2634 = vsel %vm2317, %v2627, 0
    %v2637 = vsel %vm2317, %v2628, 0
    %v2640 = vsel %vm2317, %v2629, 0
    %2642 = vmatprep.subr.mxu0 0.0
    %2643 = vmatpush1.msra.mxu0 0.0
    %2644 = vmatprep.subr.mxu0 0.0
    %2645 = vmatpush1.msra.mxu0 0.0
    %2646 = vmatprep.subr.mxu0 0.0
    %2647 = vmatpush1.msra.mxu0 0.0
    %2648 = vmatprep.subr.mxu0 0.0
    %2649 = vmatpush1.msra.mxu0 0.0
    %2650 = vmatprep.subr.mxu0 0.0
    %2651 = vmatpush1.msra.mxu0 0.0
    %2652 = vmatprep.subr.mxu0 0.0
    %2653 = vmatpush1.msra.mxu0 0.0
    %2654 = vmatprep.subr.mxu0 0.0
    %2655 = vmatpush1.msra.mxu0 0.0
    %2656 = vmatprep.subr.mxu0 0.0
    %2657 = vmatpush1.msra.mxu0 0.0
    %2658 = vmatprep.subr.mxu0 0.0
    %2659 = vmatpush1.msra.mxu0 0.0
    %2660 = vmatprep.subr.mxu0 0.0
    %2661 = vmatpush1.msra.mxu0 0.0
    %2662 = vmatprep.subr.mxu0 0.0
    %2663 = vmatpush1.msra.mxu0 0.0
    %2664 = vmatprep.subr.mxu0 0.0
    %2665 = vmatpush1.msra.mxu0 0.0
    %2666 = vmatprep.subr.mxu0 0.0
    %2667 = vmatpush1.msra.mxu0 %v2279
    %2668 = vmatprep.subr.mxu0 0.0
    %2669 = vmatpush1.msra.mxu0 %v2278
    %2670 = vmatprep.subr.mxu0 0.0
    %2671 = vmatpush1.msra.mxu0 %v2277
    %2672 = vmatprep.subr.mxu0 0.0
    %2673 = vmatpush1.msra.mxu0 %v2276
    %2674 = vmatprep.subr.mxu0 0.0
    %2675 = vmatpush2.msra.mxu0 0.0
    %2676 = vmatprep.subr.mxu0 0.0
    %2677 = vmatpush2.msra.mxu0 0.0
    %2678 = vmatprep.subr.mxu0 0.0
    %2679 = vmatpush2.msra.mxu0 0.0
    %2680 = vmatprep.subr.mxu0 0.0
    %2681 = vmatpush2.msra.mxu0 0.0
    %2682 = vmatprep.subr.mxu0 0.0
    %2683 = vmatpush2.msra.mxu0 0.0
    %2684 = vmatprep.subr.mxu0 0.0
    %2685 = vmatpush2.msra.mxu0 0.0
    %2686 = vmatprep.subr.mxu0 0.0
    %2687 = vmatpush2.msra.mxu0 0.0
    %2688 = vmatprep.subr.mxu0 0.0
    %2689 = vmatpush2.msra.mxu0 0.0
    %2690 = vmatprep.subr.mxu0 0.0
    %2691 = vmatpush2.msra.mxu0 0.0
    %2692 = vmatprep.subr.mxu0 0.0
    %2693 = vmatpush2.msra.mxu0 0.0
    %2694 = vmatprep.subr.mxu0 0.0
    %2695 = vmatpush2.msra.mxu0 0.0
    %2696 = vmatprep.subr.mxu0 0.0
    %2697 = vmatpush2.msra.mxu0 0.0
    %2698 = vmatprep.subr.mxu0 0.0
    %2699 = vmatpush2.msra.mxu0 0.0
    %2700 = vmatprep.subr.mxu0 0.0
    %2701 = vmatpush2.msra.mxu0 0.0
    %2702 = vmatprep.subr.mxu0 0.0
    %2703 = vmatpush2.msra.mxu0 0.0
    %2704 = vmatprep.subr.mxu0 0.0
    %2705 = vmatpush2.msra.mxu0 0.0
    %2706 = vmatprep.mubr.f32.mxu0 0.0
    %2707 = vmatmul.mubr.f32.gmra.mxu0 %v2631
    %v2708 = vpop.f32.mrf.mxu0
    %v2709 = vadd.f32 0.0, %v2708
    %v2710 = vpop.f32.mrf.mxu0
    %2711 = vmatprep.mubr.f32.mxu0 0.0
    %2712 = vmatmul.mubr.f32.gmra.mxu0 %v2634
    %v2713 = vpop.f32.mrf.mxu0
    %v2714 = vadd.f32 0.0, %v2713
    %v2715 = vpop.f32.mrf.mxu0
    %2716 = vmatprep.mubr.f32.mxu0 0.0
    %2717 = vmatmul.mubr.f32.gmra.mxu0 %v2637
    %v2718 = vpop.f32.mrf.mxu0
    %v2719 = vadd.f32 0.0, %v2718
    %v2720 = vpop.f32.mrf.mxu0
    %2721 = vmatprep.mubr.f32.mxu0 0.0
    %2722 = vmatmul.mubr.f32.gmra.mxu0 %v2640
    %v2723 = vpop.f32.mrf.mxu0
    %v2724 = vadd.f32 0.0, %v2723
    %v2725 = vpop.f32.mrf.mxu0
    %2726 = vdwg.mxu0
    %s2727 = scalar_lea.vmem %s19, 512
    %v2728 = vld [vmem:[%s2727] sm:$0xff]
    %v2729 = vld [vmem:[%s2727 + $0x8] sm:$0xff]
    %v2730 = vld [vmem:[%s2727 + $0x10] sm:$0xff]
    %v2731 = vld [vmem:[%s2727 + $0x18] sm:$0xff]
    %v2732 = vld [vmem:[%s2727 + $0x20] sm:$0xff]
    %v2733 = vld [vmem:[%s2727 + $0x28] sm:$0xff]
    %v2734 = vld [vmem:[%s2727 + $0x30] sm:$0xff]
    %v2735 = vld [vmem:[%s2727 + $0x38] sm:$0xff]
    %v2736 = vld [vmem:[%s2727 + $0x40] sm:$0xff]
    %v2737 = vld [vmem:[%s2727 + $0x48] sm:$0xff]
    %v2738 = vld [vmem:[%s2727 + $0x50] sm:$0xff]
    %v2739 = vld [vmem:[%s2727 + $0x58] sm:$0xff]
    %v2740 = vld [vmem:[%s2727 + $0x60] sm:$0xff]
    %v2741 = vld [vmem:[%s2727 + $0x68] sm:$0xff]
    %v2742 = vld [vmem:[%s2727 + $0x70] sm:$0xff]
    %v2743 = vld [vmem:[%s2727 + $0x78] sm:$0xff]
    %v2744 = vld [vmem:[%s2727 + $0x80] sm:$0xff]
    %v2745 = vld [vmem:[%s2727 + $0x88] sm:$0xff]
    %v2746 = vld [vmem:[%s2727 + $0x90] sm:$0xff]
    %v2747 = vld [vmem:[%s2727 + $0x98] sm:$0xff]
    %v2748 = vld [vmem:[%s2727 + $0xa0] sm:$0xff]
    %v2749 = vld [vmem:[%s2727 + $0xa8] sm:$0xff]
    %v2750 = vld [vmem:[%s2727 + $0xb0] sm:$0xff]
    %v2751 = vld [vmem:[%s2727 + $0xb8] sm:$0xff]
    %v2752 = vld [vmem:[%s2727 + $0xc0] sm:$0xff]
    %v2753 = vld [vmem:[%s2727 + $0xc8] sm:$0xff]
    %v2754 = vld [vmem:[%s2727 + $0xd0] sm:$0xff]
    %v2755 = vld [vmem:[%s2727 + $0xd8] sm:$0xff]
    %v2756 = vld [vmem:[%s2727 + $0xe0] sm:$0xff]
    %v2757 = vld [vmem:[%s2727 + $0xe8] sm:$0xff]
    %v2758 = vld [vmem:[%s2727 + $0xf0] sm:$0xff]
    %v2759 = vld [vmem:[%s2727 + $0xf8] sm:$0xff]
    %2760 = vmatprep.subr.mxu0 %v2759
    %2761 = vmatpush1.msra.mxu0 %v2758
    %2762 = vmatprep.subr.mxu0 %v2757
    %2763 = vmatpush1.msra.mxu0 %v2756
    %2764 = vmatprep.subr.mxu0 %v2755
    %2765 = vmatpush1.msra.mxu0 %v2754
    %2766 = vmatprep.subr.mxu0 %v2753
    %2767 = vmatpush1.msra.mxu0 %v2752
    %2768 = vmatprep.subr.mxu0 %v2751
    %2769 = vmatpush1.msra.mxu0 %v2750
    %2770 = vmatprep.subr.mxu0 %v2749
    %2771 = vmatpush1.msra.mxu0 %v2748
    %2772 = vmatprep.subr.mxu0 %v2747
    %2773 = vmatpush1.msra.mxu0 %v2746
    %2774 = vmatprep.subr.mxu0 %v2745
    %2775 = vmatpush1.msra.mxu0 %v2744
    %2776 = vmatprep.subr.mxu0 %v2743
    %2777 = vmatpush1.msra.mxu0 %v2742
    %2778 = vmatprep.subr.mxu0 %v2741
    %2779 = vmatpush1.msra.mxu0 %v2740
    %2780 = vmatprep.subr.mxu0 %v2739
    %2781 = vmatpush1.msra.mxu0 %v2738
    %2782 = vmatprep.subr.mxu0 %v2737
    %2783 = vmatpush1.msra.mxu0 %v2736
    %2784 = vmatprep.subr.mxu0 %v2735
    %2785 = vmatpush1.msra.mxu0 %v2734
    %2786 = vmatprep.subr.mxu0 %v2733
    %2787 = vmatpush1.msra.mxu0 %v2732
    %2788 = vmatprep.subr.mxu0 %v2731
    %2789 = vmatpush1.msra.mxu0 %v2730
    %2790 = vmatprep.subr.mxu0 %v2729
    %2791 = vmatpush1.msra.mxu0 %v2728
    %2792 = vmatprep.subr.mxu0 0.0
    %2793 = vmatpush2.msra.mxu0 0.0
    %2794 = vmatprep.subr.mxu0 0.0
    %2795 = vmatpush2.msra.mxu0 0.0
    %2796 = vmatprep.subr.mxu0 0.0
    %2797 = vmatpush2.msra.mxu0 0.0
    %2798 = vmatprep.subr.mxu0 0.0
    %2799 = vmatpush2.msra.mxu0 0.0
    %2800 = vmatprep.subr.mxu0 0.0
    %2801 = vmatpush2.msra.mxu0 0.0
    %2802 = vmatprep.subr.mxu0 0.0
    %2803 = vmatpush2.msra.mxu0 0.0
    %2804 = vmatprep.subr.mxu0 0.0
    %2805 = vmatpush2.msra.mxu0 0.0
    %2806 = vmatprep.subr.mxu0 0.0
    %2807 = vmatpush2.msra.mxu0 0.0
    %2808 = vmatprep.subr.mxu0 0.0
    %2809 = vmatpush2.msra.mxu0 0.0
    %2810 = vmatprep.subr.mxu0 0.0
    %2811 = vmatpush2.msra.mxu0 0.0
    %2812 = vmatprep.subr.mxu0 0.0
    %2813 = vmatpush2.msra.mxu0 0.0
    %2814 = vmatprep.subr.mxu0 0.0
    %2815 = vmatpush2.msra.mxu0 0.0
    %2816 = vmatprep.subr.mxu0 0.0
    %2817 = vmatpush2.msra.mxu0 0.0
    %2818 = vmatprep.subr.mxu0 0.0
    %2819 = vmatpush2.msra.mxu0 0.0
    %2820 = vmatprep.subr.mxu0 0.0
    %2821 = vmatpush2.msra.mxu0 0.0
    %2822 = vmatprep.subr.mxu0 0.0
    %2823 = vmatpush2.msra.mxu0 0.0
    %2824 = vmatprep.mubr.f32.mxu0 0.0
    %2825 = vmatmul.mubr.f32.gmra.mxu0 %v2709
    %v2826 = vpop.f32.mrf.mxu0
    %v2827 = vadd.f32 0.0, %v2826
    %v2828 = vpop.f32.mrf.mxu0
    %v2829 = vadd.f32 0.0, %v2828
    %2830 = vmatprep.mubr.f32.mxu0 0.0
    %2831 = vmatmul.mubr.f32.gmra.mxu0 %v2714
    %v2832 = vpop.f32.mrf.mxu0
    %v2833 = vadd.f32 0.0, %v2832
    %v2834 = vpop.f32.mrf.mxu0
    %v2835 = vadd.f32 0.0, %v2834
    %2836 = vmatprep.mubr.f32.mxu0 0.0
    %2837 = vmatmul.mubr.f32.gmra.mxu0 %v2719
    %v2838 = vpop.f32.mrf.mxu0
    %v2839 = vadd.f32 0.0, %v2838
    %v2840 = vpop.f32.mrf.mxu0
    %v2841 = vadd.f32 0.0, %v2840
    %2842 = vmatprep.mubr.f32.mxu0 0.0
    %2843 = vmatmul.mubr.f32.gmra.mxu0 %v2724
    %v2844 = vpop.f32.mrf.mxu0
    %v2845 = vadd.f32 0.0, %v2844
    %v2846 = vpop.f32.mrf.mxu0
    %v2847 = vadd.f32 0.0, %v2846
    %2848 = vdwg.mxu0
    %v2849 = vadd.f32 %v2603, %v2827
    %v2850 = vadd.f32 %v2605, %v2829
    %v2851 = vadd.f32 %v2609, %v2833
    %v2852 = vadd.f32 %v2611, %v2835
    %v2853 = vadd.f32 %v2615, %v2839
    %v2854 = vadd.f32 %v2617, %v2841
    %v2855 = vadd.f32 %v2621, %v2845
    %v2856 = vadd.f32 %v2623, %v2847
    %v2857 = vld [vmem:[#allocation13] sm:$0x3]
    %v2859 = vlaneseq
    %v2860 = vshrl.u32 %v2859, 7
    %v2861 = vsub.s32 0, %v2860
    %v2862 = vrot.slane %v2857, %v2861
    %v2863 = vlaneseq
    %v2864 = vshrl.u32 %v2863, 7
    %v2865 = vsub.s32 1, %v2864
    %v2866 = vrot.slane %v2857, %v2865
    %v2869 = vadd.f32 %v2849, %v2862
    %v2870 = vadd.f32 %v2850, %v2866
    %v2871 = vadd.f32 %v2851, %v2862
    %v2872 = vadd.f32 %v2852, %v2866
    %v2873 = vadd.f32 %v2853, %v2862
    %v2874 = vadd.f32 %v2854, %v2866
    %v2875 = vadd.f32 %v2855, %v2862
    %v2876 = vadd.f32 %v2856, %v2866
    %v2877 = vmax.f32 %v2869, 0.0
    %v2878 = vmax.f32 %v2870, 0.0
    %v2879 = vmax.f32 %v2871, 0.0
    %v2880 = vmax.f32 %v2872, 0.0
    %v2881 = vmax.f32 %v2873, 0.0
    %v2882 = vmax.f32 %v2874, 0.0
    %v2883 = vmax.f32 %v2875, 0.0
    %v2884 = vmax.f32 %v2876, 0.0
    %v2885 = vld [vmem:[#allocation14] sm:$0x3]
    %v2886 = vld [vmem:[%s25] sm:$0xff]
    %v2887 = vld [vmem:[%s25 + $0x8] sm:$0xff]
    %v2888 = vld [vmem:[%s25 + $0x10] sm:$0xff]
    %v2889 = vld [vmem:[%s25 + $0x18] sm:$0xff]
    %v2890 = vld [vmem:[%s25 + $0x20] sm:$0xff]
    %v2891 = vld [vmem:[%s25 + $0x28] sm:$0xff]
    %v2892 = vld [vmem:[%s25 + $0x30] sm:$0xff]
    %v2893 = vld [vmem:[%s25 + $0x38] sm:$0xff]
    %v2894 = vld [vmem:[%s25 + $0x40] sm:$0xff]
    %v2895 = vld [vmem:[%s25 + $0x48] sm:$0xff]
    %v2896 = vld [vmem:[%s25 + $0x50] sm:$0xff]
    %v2897 = vld [vmem:[%s25 + $0x58] sm:$0xff]
    %v2898 = vld [vmem:[%s25 + $0x60] sm:$0xff]
    %v2899 = vld [vmem:[%s25 + $0x68] sm:$0xff]
    %v2900 = vld [vmem:[%s25 + $0x70] sm:$0xff]
    %v2901 = vld [vmem:[%s25 + $0x78] sm:$0xff]
    %v2902 = vld [vmem:[%s25 + $0x80] sm:$0xff]
    %v2903 = vld [vmem:[%s25 + $0x88] sm:$0xff]
    %v2904 = vld [vmem:[%s25 + $0x90] sm:$0xff]
    %v2905 = vld [vmem:[%s25 + $0x98] sm:$0xff]
    %v2906 = vld [vmem:[%s25 + $0xa0] sm:$0xff]
    %v2907 = vld [vmem:[%s25 + $0xa8] sm:$0xff]
    %v2908 = vld [vmem:[%s25 + $0xb0] sm:$0xff]
    %v2909 = vld [vmem:[%s25 + $0xb8] sm:$0xff]
    %v2910 = vld [vmem:[%s25 + $0xc0] sm:$0xff]
    %v2911 = vld [vmem:[%s25 + $0xc8] sm:$0xff]
    %v2912 = vld [vmem:[%s25 + $0xd0] sm:$0xff]
    %v2913 = vld [vmem:[%s25 + $0xd8] sm:$0xff]
    %v2914 = vld [vmem:[%s25 + $0xe0] sm:$0xff]
    %v2915 = vld [vmem:[%s25 + $0xe8] sm:$0xff]
    %v2916 = vld [vmem:[%s25 + $0xf0] sm:$0xff]
    %v2917 = vld [vmem:[%s25 + $0xf8] sm:$0xff]
    %v2918 = vld [vmem:[%s27] sm:$0xff]
    %v2919 = vld [vmem:[%s27 + $0x8] sm:$0xff]
    %v2920 = vld [vmem:[%s27 + $0x10] sm:$0xff]
    %v2921 = vld [vmem:[%s27 + $0x18] sm:$0xff]
    %v2922 = vadd.f32 %v2877, %v2879
    %v2923 = vadd.f32 %v2922, %v2881
    %v2924 = vadd.f32 %v2923, %v2883
    %v2925 = vrot.slane %v2924, 4
    %v2926 = vadd.f32 %v2924, %v2925
    %v2927 = vrot.slane %v2926, 2
    %v2928 = vadd.f32 %v2926, %v2927
    %v2929 = vrot.slane %v2928, 1
    %v2930 = vadd.f32 %v2928, %v2929
    %v2931 = vadd.f32 %v2878, %v2880
    %v2932 = vadd.f32 %v2931, %v2882
    %v2933 = vadd.f32 %v2932, %v2884
    %v2934 = vrot.slane %v2933, 4
    %v2935 = vadd.f32 %v2933, %v2934
    %v2936 = vrot.slane %v2935, 2
    %v2937 = vadd.f32 %v2935, %v2936
    %v2938 = vrot.slane %v2937, 1
    %v2939 = vadd.f32 %v2937, %v2938
    %2940 = vmatprep.subr.mxu0 0.0
    %2941 = vmatpush1.msra.mxu0 %v2901
    %2942 = vmatprep.subr.mxu0 0.0
    %2943 = vmatpush1.msra.mxu0 %v2900
    %2944 = vmatprep.subr.mxu0 0.0
    %2945 = vmatpush1.msra.mxu0 %v2899
    %2946 = vmatprep.subr.mxu0 0.0
    %2947 = vmatpush1.msra.mxu0 %v2898
    %2948 = vmatprep.subr.mxu0 0.0
    %2949 = vmatpush1.msra.mxu0 %v2897
    %2950 = vmatprep.subr.mxu0 0.0
    %2951 = vmatpush1.msra.mxu0 %v2896
    %2952 = vmatprep.subr.mxu0 0.0
    %2953 = vmatpush1.msra.mxu0 %v2895
    %2954 = vmatprep.subr.mxu0 0.0
    %2955 = vmatpush1.msra.mxu0 %v2894
    %2956 = vmatprep.subr.mxu0 0.0
    %2957 = vmatpush1.msra.mxu0 %v2893
    %2958 = vmatprep.subr.mxu0 0.0
    %2959 = vmatpush1.msra.mxu0 %v2892
    %2960 = vmatprep.subr.mxu0 0.0
    %2961 = vmatpush1.msra.mxu0 %v2891
    %2962 = vmatprep.subr.mxu0 0.0
    %2963 = vmatpush1.msra.mxu0 %v2890
    %2964 = vmatprep.subr.mxu0 0.0
    %2965 = vmatpush1.msra.mxu0 %v2889
    %2966 = vmatprep.subr.mxu0 0.0
    %2967 = vmatpush1.msra.mxu0 %v2888
    %2968 = vmatprep.subr.mxu0 0.0
    %2969 = vmatpush1.msra.mxu0 %v2887
    %2970 = vmatprep.subr.mxu0 0.0
    %2971 = vmatpush1.msra.mxu0 %v2886
    %2972 = vmatprep.subr.mxu0 0.0
    %2973 = vmatpush2.msra.mxu0 %v2917
    %2974 = vmatprep.subr.mxu0 0.0
    %2975 = vmatpush2.msra.mxu0 %v2916
    %2976 = vmatprep.subr.mxu0 0.0
    %2977 = vmatpush2.msra.mxu0 %v2915
    %2978 = vmatprep.subr.mxu0 0.0
    %2979 = vmatpush2.msra.mxu0 %v2914
    %2980 = vmatprep.subr.mxu0 0.0
    %2981 = vmatpush2.msra.mxu0 %v2913
    %2982 = vmatprep.subr.mxu0 0.0
    %2983 = vmatpush2.msra.mxu0 %v2912
    %2984 = vmatprep.subr.mxu0 0.0
    %2985 = vmatpush2.msra.mxu0 %v2911
    %2986 = vmatprep.subr.mxu0 0.0
    %2987 = vmatpush2.msra.mxu0 %v2910
    %2988 = vmatprep.subr.mxu0 0.0
    %2989 = vmatpush2.msra.mxu0 %v2909
    %2990 = vmatprep.subr.mxu0 0.0
    %2991 = vmatpush2.msra.mxu0 %v2908
    %2992 = vmatprep.subr.mxu0 0.0
    %2993 = vmatpush2.msra.mxu0 %v2907
    %2994 = vmatprep.subr.mxu0 0.0
    %2995 = vmatpush2.msra.mxu0 %v2906
    %2996 = vmatprep.subr.mxu0 0.0
    %2997 = vmatpush2.msra.mxu0 %v2905
    %2998 = vmatprep.subr.mxu0 0.0
    %2999 = vmatpush2.msra.mxu0 %v2904
    %3000 = vmatprep.subr.mxu0 0.0
    %3001 = vmatpush2.msra.mxu0 %v2903
    %3002 = vmatprep.subr.mxu0 0.0
    %3003 = vmatpush2.msra.mxu0 %v2902
    %3004 = vmatprep.mubr.f32.mxu0 %v2939
    %3005 = vmatmul.mubr.f32.gmra.mxu0 %v2930
    %v3006 = vpop.f32.mrf.mxu0
    %v3007 = vadd.f32 0.0, %v3006
    %v3008 = vpop.f32.mrf.mxu0
    %3009 = vdwg.mxu0
    %v3010 = vmul.f32 %v3007, 0.001953125
    %vm3011 = vcmask 130048
    %v3013 = vsel %vm3011, %v3010, 0
    %3015 = vmatprep.subr.mxu0 0.0
    %3016 = vmatpush1.msra.mxu0 0.0
    %3017 = vmatprep.subr.mxu0 0.0
    %3018 = vmatpush1.msra.mxu0 0.0
    %3019 = vmatprep.subr.mxu0 0.0
    %3020 = vmatpush1.msra.mxu0 0.0
    %3021 = vmatprep.subr.mxu0 0.0
    %3022 = vmatpush1.msra.mxu0 0.0
    %3023 = vmatprep.subr.mxu0 0.0
    %3024 = vmatpush1.msra.mxu0 0.0
    %3025 = vmatprep.subr.mxu0 0.0
    %3026 = vmatpush1.msra.mxu0 0.0
    %3027 = vmatprep.subr.mxu0 0.0
    %3028 = vmatpush1.msra.mxu0 0.0
    %3029 = vmatprep.subr.mxu0 0.0
    %3030 = vmatpush1.msra.mxu0 0.0
    %3031 = vmatprep.subr.mxu0 0.0
    %3032 = vmatpush1.msra.mxu0 0.0
    %3033 = vmatprep.subr.mxu0 0.0
    %3034 = vmatpush1.msra.mxu0 0.0
    %3035 = vmatprep.subr.mxu0 0.0
    %3036 = vmatpush1.msra.mxu0 0.0
    %3037 = vmatprep.subr.mxu0 0.0
    %3038 = vmatpush1.msra.mxu0 0.0
    %3039 = vmatprep.subr.mxu0 0.0
    %3040 = vmatpush1.msra.mxu0 0.0
    %3041 = vmatprep.subr.mxu0 0.0
    %3042 = vmatpush1.msra.mxu0 0.0
    %3043 = vmatprep.subr.mxu0 %v2921
    %3044 = vmatpush1.msra.mxu0 %v2920
    %3045 = vmatprep.subr.mxu0 %v2919
    %3046 = vmatpush1.msra.mxu0 %v2918
    %3047 = vmatprep.subr.mxu0 0.0
    %3048 = vmatpush2.msra.mxu0 0.0
    %3049 = vmatprep.subr.mxu0 0.0
    %3050 = vmatpush2.msra.mxu0 0.0
    %3051 = vmatprep.subr.mxu0 0.0
    %3052 = vmatpush2.msra.mxu0 0.0
    %3053 = vmatprep.subr.mxu0 0.0
    %3054 = vmatpush2.msra.mxu0 0.0
    %3055 = vmatprep.subr.mxu0 0.0
    %3056 = vmatpush2.msra.mxu0 0.0
    %3057 = vmatprep.subr.mxu0 0.0
    %3058 = vmatpush2.msra.mxu0 0.0
    %3059 = vmatprep.subr.mxu0 0.0
    %3060 = vmatpush2.msra.mxu0 0.0
    %3061 = vmatprep.subr.mxu0 0.0
    %3062 = vmatpush2.msra.mxu0 0.0
    %3063 = vmatprep.subr.mxu0 0.0
    %3064 = vmatpush2.msra.mxu0 0.0
    %3065 = vmatprep.subr.mxu0 0.0
    %3066 = vmatpush2.msra.mxu0 0.0
    %3067 = vmatprep.subr.mxu0 0.0
    %3068 = vmatpush2.msra.mxu0 0.0
    %3069 = vmatprep.subr.mxu0 0.0
    %3070 = vmatpush2.msra.mxu0 0.0
    %3071 = vmatprep.subr.mxu0 0.0
    %3072 = vmatpush2.msra.mxu0 0.0
    %3073 = vmatprep.subr.mxu0 0.0
    %3074 = vmatpush2.msra.mxu0 0.0
    %3075 = vmatprep.subr.mxu0 0.0
    %3076 = vmatpush2.msra.mxu0 0.0
    %3077 = vmatprep.subr.mxu0 0.0
    %3078 = vmatpush2.msra.mxu0 0.0
    %3079 = vmatprep.mubr.f32.mxu0 0.0
    %3080 = vmatmul.mubr.f32.gmra.mxu0 %v3013
    %v3081 = vpop.f32.mrf.mxu0
    %v3082 = vadd.f32 0.0, %v3081
    %v3083 = vpop.f32.mrf.mxu0
    %v3084 = vadd.f32 0.0, %v3083
    %3085 = vdwg.mxu0
    %v3086 = vlaneseq
    %v3087 = vshrl.u32 %v3086, 7
    %v3088 = vsub.s32 0, %v3087
    %v3089 = vrot.slane %v3082, %v3088
    %v3090 = vlaneseq
    %v3091 = vshrl.u32 %v3090, 7
    %v3092 = vsub.s32 0, %v3091
    %v3093 = vrot.slane %v3084, %v3092
    %v3094 = vsub.f32 %v2877, %v3089
    %v3095 = vsub.f32 %v2878, %v3093
    %v3096 = vsub.f32 %v2879, %v3089
    %v3097 = vsub.f32 %v2880, %v3093
    %v3098 = vsub.f32 %v2881, %v3089
    %v3099 = vsub.f32 %v2882, %v3093
    %v3100 = vsub.f32 %v2883, %v3089
    %v3101 = vsub.f32 %v2884, %v3093
    %v3102 = vmul.f32 %v3094, %v3094
    %v3103 = vmul.f32 %v3095, %v3095
    %v3104 = vmul.f32 %v3096, %v3096
    %v3105 = vmul.f32 %v3097, %v3097
    %v3106 = vmul.f32 %v3098, %v3098
    %v3107 = vmul.f32 %v3099, %v3099
    %v3108 = vmul.f32 %v3100, %v3100
    %v3109 = vmul.f32 %v3101, %v3101
    %v3110 = vadd.f32 %v3102, %v3104
    %v3111 = vadd.f32 %v3110, %v3106
    %v3112 = vadd.f32 %v3111, %v3108
    %v3113 = vrot.slane %v3112, 4
    %v3114 = vadd.f32 %v3112, %v3113
    %v3115 = vrot.slane %v3114, 2
    %v3116 = vadd.f32 %v3114, %v3115
    %v3117 = vrot.slane %v3116, 1
    %v3118 = vadd.f32 %v3116, %v3117
    %v3119 = vadd.f32 %v3103, %v3105
    %v3120 = vadd.f32 %v3119, %v3107
    %v3121 = vadd.f32 %v3120, %v3109
    %v3122 = vrot.slane %v3121, 4
    %v3123 = vadd.f32 %v3121, %v3122
    %v3124 = vrot.slane %v3123, 2
    %v3125 = vadd.f32 %v3123, %v3124
    %v3126 = vrot.slane %v3125, 1
    %v3127 = vadd.f32 %v3125, %v3126
    %3128 = vmatprep.subr.mxu0 0.0
    %3129 = vmatpush1.msra.mxu0 %v2901
    %3130 = vmatprep.subr.mxu0 0.0
    %3131 = vmatpush1.msra.mxu0 %v2900
    %3132 = vmatprep.subr.mxu0 0.0
    %3133 = vmatpush1.msra.mxu0 %v2899
    %3134 = vmatprep.subr.mxu0 0.0
    %3135 = vmatpush1.msra.mxu0 %v2898
    %3136 = vmatprep.subr.mxu0 0.0
    %3137 = vmatpush1.msra.mxu0 %v2897
    %3138 = vmatprep.subr.mxu0 0.0
    %3139 = vmatpush1.msra.mxu0 %v2896
    %3140 = vmatprep.subr.mxu0 0.0
    %3141 = vmatpush1.msra.mxu0 %v2895
    %3142 = vmatprep.subr.mxu0 0.0
    %3143 = vmatpush1.msra.mxu0 %v2894
    %3144 = vmatprep.subr.mxu0 0.0
    %3145 = vmatpush1.msra.mxu0 %v2893
    %3146 = vmatprep.subr.mxu0 0.0
    %3147 = vmatpush1.msra.mxu0 %v2892
    %3148 = vmatprep.subr.mxu0 0.0
    %3149 = vmatpush1.msra.mxu0 %v2891
    %3150 = vmatprep.subr.mxu0 0.0
    %3151 = vmatpush1.msra.mxu0 %v2890
    %3152 = vmatprep.subr.mxu0 0.0
    %3153 = vmatpush1.msra.mxu0 %v2889
    %3154 = vmatprep.subr.mxu0 0.0
    %3155 = vmatpush1.msra.mxu0 %v2888
    %3156 = vmatprep.subr.mxu0 0.0
    %3157 = vmatpush1.msra.mxu0 %v2887
    %3158 = vmatprep.subr.mxu0 0.0
    %3159 = vmatpush1.msra.mxu0 %v2886
    %3160 = vmatprep.subr.mxu0 0.0
    %3161 = vmatpush2.msra.mxu0 %v2917
    %3162 = vmatprep.subr.mxu0 0.0
    %3163 = vmatpush2.msra.mxu0 %v2916
    %3164 = vmatprep.subr.mxu0 0.0
    %3165 = vmatpush2.msra.mxu0 %v2915
    %3166 = vmatprep.subr.mxu0 0.0
    %3167 = vmatpush2.msra.mxu0 %v2914
    %3168 = vmatprep.subr.mxu0 0.0
    %3169 = vmatpush2.msra.mxu0 %v2913
    %3170 = vmatprep.subr.mxu0 0.0
    %3171 = vmatpush2.msra.mxu0 %v2912
    %3172 = vmatprep.subr.mxu0 0.0
    %3173 = vmatpush2.msra.mxu0 %v2911
    %3174 = vmatprep.subr.mxu0 0.0
    %3175 = vmatpush2.msra.mxu0 %v2910
    %3176 = vmatprep.subr.mxu0 0.0
    %3177 = vmatpush2.msra.mxu0 %v2909
    %3178 = vmatprep.subr.mxu0 0.0
    %3179 = vmatpush2.msra.mxu0 %v2908
    %3180 = vmatprep.subr.mxu0 0.0
    %3181 = vmatpush2.msra.mxu0 %v2907
    %3182 = vmatprep.subr.mxu0 0.0
    %3183 = vmatpush2.msra.mxu0 %v2906
    %3184 = vmatprep.subr.mxu0 0.0
    %3185 = vmatpush2.msra.mxu0 %v2905
    %3186 = vmatprep.subr.mxu0 0.0
    %3187 = vmatpush2.msra.mxu0 %v2904
    %3188 = vmatprep.subr.mxu0 0.0
    %3189 = vmatpush2.msra.mxu0 %v2903
    %3190 = vmatprep.subr.mxu0 0.0
    %3191 = vmatpush2.msra.mxu0 %v2902
    %3192 = vmatprep.mubr.f32.mxu0 %v3127
    %3193 = vmatmul.mubr.f32.gmra.mxu0 %v3118
    %v3194 = vpop.f32.mrf.mxu0
    %v3195 = vadd.f32 0.0, %v3194
    %v3196 = vpop.f32.mrf.mxu0
    %3197 = vdwg.mxu0
    %v3198 = vmul.f32 %v3195, 0.001953125
    %v3199 = vadd.f32 %v3198, 1e-05
    %v3200 = vrsqrt.pop %v3199
    %v3201 = vmul.f32 %v2885, %v3200
    %v3203 = vsel %vm3011, %v3201, 0
    %3205 = vmatprep.subr.mxu0 0.0
    %3206 = vmatpush1.msra.mxu0 0.0
    %3207 = vmatprep.subr.mxu0 0.0
    %3208 = vmatpush1.msra.mxu0 0.0
    %3209 = vmatprep.subr.mxu0 0.0
    %3210 = vmatpush1.msra.mxu0 0.0
    %3211 = vmatprep.subr.mxu0 0.0
    %3212 = vmatpush1.msra.mxu0 0.0
    %3213 = vmatprep.subr.mxu0 0.0
    %3214 = vmatpush1.msra.mxu0 0.0
    %3215 = vmatprep.subr.mxu0 0.0
    %3216 = vmatpush1.msra.mxu0 0.0
    %3217 = vmatprep.subr.mxu0 0.0
    %3218 = vmatpush1.msra.mxu0 0.0
    %3219 = vmatprep.subr.mxu0 0.0
    %3220 = vmatpush1.msra.mxu0 0.0
    %3221 = vmatprep.subr.mxu0 0.0
    %3222 = vmatpush1.msra.mxu0 0.0
    %3223 = vmatprep.subr.mxu0 0.0
    %3224 = vmatpush1.msra.mxu0 0.0
    %3225 = vmatprep.subr.mxu0 0.0
    %3226 = vmatpush1.msra.mxu0 0.0
    %3227 = vmatprep.subr.mxu0 0.0
    %3228 = vmatpush1.msra.mxu0 0.0
    %3229 = vmatprep.subr.mxu0 0.0
    %3230 = vmatpush1.msra.mxu0 0.0
    %3231 = vmatprep.subr.mxu0 0.0
    %3232 = vmatpush1.msra.mxu0 0.0
    %3233 = vmatprep.subr.mxu0 %v2921
    %3234 = vmatpush1.msra.mxu0 %v2920
    %3235 = vmatprep.subr.mxu0 %v2919
    %3236 = vmatpush1.msra.mxu0 %v2918
    %3237 = vmatprep.subr.mxu0 0.0
    %3238 = vmatpush2.msra.mxu0 0.0
    %3239 = vmatprep.subr.mxu0 0.0
    %3240 = vmatpush2.msra.mxu0 0.0
    %3241 = vmatprep.subr.mxu0 0.0
    %3242 = vmatpush2.msra.mxu0 0.0
    %3243 = vmatprep.subr.mxu0 0.0
    %3244 = vmatpush2.msra.mxu0 0.0
    %3245 = vmatprep.subr.mxu0 0.0
    %3246 = vmatpush2.msra.mxu0 0.0
    %3247 = vmatprep.subr.mxu0 0.0
    %3248 = vmatpush2.msra.mxu0 0.0
    %3249 = vmatprep.subr.mxu0 0.0
    %3250 = vmatpush2.msra.mxu0 0.0
    %3251 = vmatprep.subr.mxu0 0.0
    %3252 = vmatpush2.msra.mxu0 0.0
    %3253 = vmatprep.subr.mxu0 0.0
    %3254 = vmatpush2.msra.mxu0 0.0
    %3255 = vmatprep.subr.mxu0 0.0
    %3256 = vmatpush2.msra.mxu0 0.0
    %3257 = vmatprep.subr.mxu0 0.0
    %3258 = vmatpush2.msra.mxu0 0.0
    %3259 = vmatprep.subr.mxu0 0.0
    %3260 = vmatpush2.msra.mxu0 0.0
    %3261 = vmatprep.subr.mxu0 0.0
    %3262 = vmatpush2.msra.mxu0 0.0
    %3263 = vmatprep.subr.mxu0 0.0
    %3264 = vmatpush2.msra.mxu0 0.0
    %3265 = vmatprep.subr.mxu0 0.0
    %3266 = vmatpush2.msra.mxu0 0.0
    %3267 = vmatprep.subr.mxu0 0.0
    %3268 = vmatpush2.msra.mxu0 0.0
    %3269 = vmatprep.mubr.f32.mxu0 0.0
    %3270 = vmatmul.mubr.f32.gmra.mxu0 %v3203
    %v3271 = vpop.f32.mrf.mxu0
    %v3272 = vadd.f32 0.0, %v3271
    %v3273 = vpop.f32.mrf.mxu0
    %v3274 = vadd.f32 0.0, %v3273
    %3275 = vdwg.mxu0
    %v3276 = vlaneseq
    %v3277 = vshrl.u32 %v3276, 7
    %v3278 = vsub.s32 0, %v3277
    %v3279 = vrot.slane %v3272, %v3278
    %v3280 = vlaneseq
    %v3281 = vshrl.u32 %v3280, 7
    %v3282 = vsub.s32 0, %v3281
    %v3283 = vrot.slane %v3274, %v3282
    %v3284 = vmul.f32 %v3094, %v3279
    %v3285 = vmul.f32 %v3095, %v3283
    %v3286 = vmul.f32 %v3096, %v3279
    %v3287 = vmul.f32 %v3097, %v3283
    %v3288 = vmul.f32 %v3098, %v3279
    %v3289 = vmul.f32 %v3099, %v3283
    %v3290 = vmul.f32 %v3100, %v3279
    %v3291 = vmul.f32 %v3101, %v3283
    %v3293 = vrot.slane %v2885, 1
    %v3294 = vsel %vm3011, %v3293, 0
    %3296 = vmatprep.subr.mxu0 0.0
    %3297 = vmatpush1.msra.mxu0 0.0
    %3298 = vmatprep.subr.mxu0 0.0
    %3299 = vmatpush1.msra.mxu0 0.0
    %3300 = vmatprep.subr.mxu0 0.0
    %3301 = vmatpush1.msra.mxu0 0.0
    %3302 = vmatprep.subr.mxu0 0.0
    %3303 = vmatpush1.msra.mxu0 0.0
    %3304 = vmatprep.subr.mxu0 0.0
    %3305 = vmatpush1.msra.mxu0 0.0
    %3306 = vmatprep.subr.mxu0 0.0
    %3307 = vmatpush1.msra.mxu0 0.0
    %3308 = vmatprep.subr.mxu0 0.0
    %3309 = vmatpush1.msra.mxu0 0.0
    %3310 = vmatprep.subr.mxu0 0.0
    %3311 = vmatpush1.msra.mxu0 0.0
    %3312 = vmatprep.subr.mxu0 0.0
    %3313 = vmatpush1.msra.mxu0 0.0
    %3314 = vmatprep.subr.mxu0 0.0
    %3315 = vmatpush1.msra.mxu0 0.0
    %3316 = vmatprep.subr.mxu0 0.0
    %3317 = vmatpush1.msra.mxu0 0.0
    %3318 = vmatprep.subr.mxu0 0.0
    %3319 = vmatpush1.msra.mxu0 0.0
    %3320 = vmatprep.subr.mxu0 0.0
    %3321 = vmatpush1.msra.mxu0 0.0
    %3322 = vmatprep.subr.mxu0 0.0
    %3323 = vmatpush1.msra.mxu0 0.0
    %3324 = vmatprep.subr.mxu0 %v2921
    %3325 = vmatpush1.msra.mxu0 %v2920
    %3326 = vmatprep.subr.mxu0 %v2919
    %3327 = vmatpush1.msra.mxu0 %v2918
    %3328 = vmatprep.subr.mxu0 0.0
    %3329 = vmatpush2.msra.mxu0 0.0
    %3330 = vmatprep.subr.mxu0 0.0
    %3331 = vmatpush2.msra.mxu0 0.0
    %3332 = vmatprep.subr.mxu0 0.0
    %3333 = vmatpush2.msra.mxu0 0.0
    %3334 = vmatprep.subr.mxu0 0.0
    %3335 = vmatpush2.msra.mxu0 0.0
    %3336 = vmatprep.subr.mxu0 0.0
    %3337 = vmatpush2.msra.mxu0 0.0
    %3338 = vmatprep.subr.mxu0 0.0
    %3339 = vmatpush2.msra.mxu0 0.0
    %3340 = vmatprep.subr.mxu0 0.0
    %3341 = vmatpush2.msra.mxu0 0.0
    %3342 = vmatprep.subr.mxu0 0.0
    %3343 = vmatpush2.msra.mxu0 0.0
    %3344 = vmatprep.subr.mxu0 0.0
    %3345 = vmatpush2.msra.mxu0 0.0
    %3346 = vmatprep.subr.mxu0 0.0
    %3347 = vmatpush2.msra.mxu0 0.0
    %3348 = vmatprep.subr.mxu0 0.0
    %3349 = vmatpush2.msra.mxu0 0.0
    %3350 = vmatprep.subr.mxu0 0.0
    %3351 = vmatpush2.msra.mxu0 0.0
    %3352 = vmatprep.subr.mxu0 0.0
    %3353 = vmatpush2.msra.mxu0 0.0
    %3354 = vmatprep.subr.mxu0 0.0
    %3355 = vmatpush2.msra.mxu0 0.0
    %3356 = vmatprep.subr.mxu0 0.0
    %3357 = vmatpush2.msra.mxu0 0.0
    %3358 = vmatprep.subr.mxu0 0.0
    %3359 = vmatpush2.msra.mxu0 0.0
    %3360 = vmatprep.mubr.f32.mxu0 0.0
    %3361 = vmatmul.mubr.f32.gmra.mxu0 %v3294
    %v3362 = vpop.f32.mrf.mxu0
    %v3363 = vadd.f32 0.0, %v3362
    %v3364 = vpop.f32.mrf.mxu0
    %v3365 = vadd.f32 0.0, %v3364
    %3366 = vdwg.mxu0
    %v3367 = vlaneseq
    %v3368 = vshrl.u32 %v3367, 7
    %v3369 = vsub.s32 0, %v3368
    %v3370 = vrot.slane %v3363, %v3369
    %v3371 = vlaneseq
    %v3372 = vshrl.u32 %v3371, 7
    %v3373 = vsub.s32 0, %v3372
    %v3374 = vrot.slane %v3365, %v3373
    %v3375 = vadd.f32 %v3284, %v3370
    %v3376 = vadd.f32 %v3285, %v3374
    %v3377 = vadd.f32 %v3286, %v3370
    %v3378 = vadd.f32 %v3287, %v3374
    %v3379 = vadd.f32 %v3288, %v3370
    %v3380 = vadd.f32 %v3289, %v3374
    %v3381 = vadd.f32 %v3290, %v3370
    %v3382 = vadd.f32 %v3291, %v3374
    %v3383 = vld [vmem:[#allocation17] sm:$0xff]
    %v3384 = vld [vmem:[#allocation17 + $0x8] sm:$0xff]
    %v3386 = vsel %vm2317, %v3383, 0
    %v3389 = vsel %vm2317, %v3384, 0
    %3391 = vmatprep.subr.mxu0 0.0
    %3392 = vmatpush1.msra.mxu0 0.0
    %3393 = vmatprep.subr.mxu0 0.0
    %3394 = vmatpush1.msra.mxu0 0.0
    %3395 = vmatprep.subr.mxu0 0.0
    %3396 = vmatpush1.msra.mxu0 0.0
    %3397 = vmatprep.subr.mxu0 0.0
    %3398 = vmatpush1.msra.mxu0 0.0
    %3399 = vmatprep.subr.mxu0 0.0
    %3400 = vmatpush1.msra.mxu0 0.0
    %3401 = vmatprep.subr.mxu0 0.0
    %3402 = vmatpush1.msra.mxu0 0.0
    %3403 = vmatprep.subr.mxu0 0.0
    %3404 = vmatpush1.msra.mxu0 0.0
    %3405 = vmatprep.subr.mxu0 0.0
    %3406 = vmatpush1.msra.mxu0 0.0
    %3407 = vmatprep.subr.mxu0 0.0
    %3408 = vmatpush1.msra.mxu0 0.0
    %3409 = vmatprep.subr.mxu0 0.0
    %3410 = vmatpush1.msra.mxu0 0.0
    %3411 = vmatprep.subr.mxu0 0.0
    %3412 = vmatpush1.msra.mxu0 0.0
    %3413 = vmatprep.subr.mxu0 0.0
    %3414 = vmatpush1.msra.mxu0 0.0
    %3415 = vmatprep.subr.mxu0 %v3382
    %3416 = vmatpush1.msra.mxu0 %v3381
    %3417 = vmatprep.subr.mxu0 %v3380
    %3418 = vmatpush1.msra.mxu0 %v3379
    %3419 = vmatprep.subr.mxu0 %v3378
    %3420 = vmatpush1.msra.mxu0 %v3377
    %3421 = vmatprep.subr.mxu0 %v3376
    %3422 = vmatpush1.msra.mxu0 %v3375
    %3423 = vmatprep.subr.mxu0 0.0
    %3424 = vmatpush2.msra.mxu0 0.0
    %3425 = vmatprep.subr.mxu0 0.0
    %3426 = vmatpush2.msra.mxu0 0.0
    %3427 = vmatprep.subr.mxu0 0.0
    %3428 = vmatpush2.msra.mxu0 0.0
    %3429 = vmatprep.subr.mxu0 0.0
    %3430 = vmatpush2.msra.mxu0 0.0
    %3431 = vmatprep.subr.mxu0 0.0
    %3432 = vmatpush2.msra.mxu0 0.0
    %3433 = vmatprep.subr.mxu0 0.0
    %3434 = vmatpush2.msra.mxu0 0.0
    %3435 = vmatprep.subr.mxu0 0.0
    %3436 = vmatpush2.msra.mxu0 0.0
    %3437 = vmatprep.subr.mxu0 0.0
    %3438 = vmatpush2.msra.mxu0 0.0
    %3439 = vmatprep.subr.mxu0 0.0
    %3440 = vmatpush2.msra.mxu0 0.0
    %3441 = vmatprep.subr.mxu0 0.0
    %3442 = vmatpush2.msra.mxu0 0.0
    %3443 = vmatprep.subr.mxu0 0.0
    %3444 = vmatpush2.msra.mxu0 0.0
    %3445 = vmatprep.subr.mxu0 0.0
    %3446 = vmatpush2.msra.mxu0 0.0
    %3447 = vmatprep.subr.mxu0 0.0
    %3448 = vmatpush2.msra.mxu0 0.0
    %3449 = vmatprep.subr.mxu0 0.0
    %3450 = vmatpush2.msra.mxu0 0.0
    %3451 = vmatprep.subr.mxu0 0.0
    %3452 = vmatpush2.msra.mxu0 0.0
    %3453 = vmatprep.subr.mxu0 0.0
    %3454 = vmatpush2.msra.mxu0 0.0
    %3455 = vmatprep.mubr.f32.mxu0 0.0
    %3456 = vmatmul.mubr.f32.gmra.mxu0 %v3386
    %v3457 = vpop.f32.mrf.mxu0
    %v3458 = vadd.f32 0.0, %v3457
    %v3459 = vpop.f32.mrf.mxu0
    %v3460 = vadd.f32 0.0, %v3459
    %3461 = vmatprep.mubr.f32.mxu0 0.0
    %3462 = vmatmul.mubr.f32.gmra.mxu0 %v3389
    %v3463 = vpop.f32.mrf.mxu0
    %v3464 = vadd.f32 0.0, %v3463
    %v3465 = vpop.f32.mrf.mxu0
    %v3466 = vadd.f32 0.0, %v3465
    %3467 = vdwg.mxu0
    %s3468 = scalar_lea.vmem [#allocation17], 16
    %v3469 = vld [vmem:[%s3468] sm:$0xff]
    %v3470 = vld [vmem:[%s3468 + $0x8] sm:$0xff]
    %v3472 = vsel %vm2317, %v3469, 0
    %v3475 = vsel %vm2317, %v3470, 0
    %3477 = vmatprep.subr.mxu0 0.0
    %3478 = vmatpush1.msra.mxu0 0.0
    %3479 = vmatprep.subr.mxu0 0.0
    %3480 = vmatpush1.msra.mxu0 0.0
    %3481 = vmatprep.subr.mxu0 0.0
    %3482 = vmatpush1.msra.mxu0 0.0
    %3483 = vmatprep.subr.mxu0 0.0
    %3484 = vmatpush1.msra.mxu0 0.0
    %3485 = vmatprep.subr.mxu0 0.0
    %3486 = vmatpush1.msra.mxu0 0.0
    %3487 = vmatprep.subr.mxu0 0.0
    %3488 = vmatpush1.msra.mxu0 0.0
    %3489 = vmatprep.subr.mxu0 0.0
    %3490 = vmatpush1.msra.mxu0 0.0
    %3491 = vmatprep.subr.mxu0 0.0
    %3492 = vmatpush1.msra.mxu0 0.0
    %3493 = vmatprep.subr.mxu0 0.0
    %3494 = vmatpush1.msra.mxu0 0.0
    %3495 = vmatprep.subr.mxu0 0.0
    %3496 = vmatpush1.msra.mxu0 0.0
    %3497 = vmatprep.subr.mxu0 0.0
    %3498 = vmatpush1.msra.mxu0 0.0
    %3499 = vmatprep.subr.mxu0 0.0
    %3500 = vmatpush1.msra.mxu0 0.0
    %3501 = vmatprep.subr.mxu0 %v3382
    %3502 = vmatpush1.msra.mxu0 %v3381
    %3503 = vmatprep.subr.mxu0 %v3380
    %3504 = vmatpush1.msra.mxu0 %v3379
    %3505 = vmatprep.subr.mxu0 %v3378
    %3506 = vmatpush1.msra.mxu0 %v3377
    %3507 = vmatprep.subr.mxu0 %v3376
    %3508 = vmatpush1.msra.mxu0 %v3375
    %3509 = vmatprep.subr.mxu0 0.0
    %3510 = vmatpush2.msra.mxu0 0.0
    %3511 = vmatprep.subr.mxu0 0.0
    %3512 = vmatpush2.msra.mxu0 0.0
    %3513 = vmatprep.subr.mxu0 0.0
    %3514 = vmatpush2.msra.mxu0 0.0
    %3515 = vmatprep.subr.mxu0 0.0
    %3516 = vmatpush2.msra.mxu0 0.0
    %3517 = vmatprep.subr.mxu0 0.0
    %3518 = vmatpush2.msra.mxu0 0.0
    %3519 = vmatprep.subr.mxu0 0.0
    %3520 = vmatpush2.msra.mxu0 0.0
    %3521 = vmatprep.subr.mxu0 0.0
    %3522 = vmatpush2.msra.mxu0 0.0
    %3523 = vmatprep.subr.mxu0 0.0
    %3524 = vmatpush2.msra.mxu0 0.0
    %3525 = vmatprep.subr.mxu0 0.0
    %3526 = vmatpush2.msra.mxu0 0.0
    %3527 = vmatprep.subr.mxu0 0.0
    %3528 = vmatpush2.msra.mxu0 0.0
    %3529 = vmatprep.subr.mxu0 0.0
    %3530 = vmatpush2.msra.mxu0 0.0
    %3531 = vmatprep.subr.mxu0 0.0
    %3532 = vmatpush2.msra.mxu0 0.0
    %3533 = vmatprep.subr.mxu0 0.0
    %3534 = vmatpush2.msra.mxu0 0.0
    %3535 = vmatprep.subr.mxu0 0.0
    %3536 = vmatpush2.msra.mxu0 0.0
    %3537 = vmatprep.subr.mxu0 0.0
    %3538 = vmatpush2.msra.mxu0 0.0
    %3539 = vmatprep.subr.mxu0 0.0
    %3540 = vmatpush2.msra.mxu0 0.0
    %3541 = vmatprep.mubr.f32.mxu0 0.0
    %3542 = vmatmul.mubr.f32.gmra.mxu0 %v3472
    %v3543 = vpop.f32.mrf.mxu0
    %v3544 = vadd.f32 0.0, %v3543
    %v3545 = vpop.f32.mrf.mxu0
    %v3546 = vadd.f32 0.0, %v3545
    %3547 = vmatprep.mubr.f32.mxu0 0.0
    %3548 = vmatmul.mubr.f32.gmra.mxu0 %v3475
    %v3549 = vpop.f32.mrf.mxu0
    %v3550 = vadd.f32 0.0, %v3549
    %v3551 = vpop.f32.mrf.mxu0
    %v3552 = vadd.f32 0.0, %v3551
    %3553 = vdwg.mxu0
    %v3554 = vmax.f32 %v3458, %v3544
    %v3555 = vmax.f32 %v3460, %v3546
    %v3556 = vmax.f32 %v3464, %v3550
    %v3557 = vmax.f32 %v3466, %v3552
    %v3558 = vld [vmem:[#allocation19] sm:$0xff]
    %v3559 = vld [vmem:[#allocation19 + $0x8] sm:$0xff]
    %v3560 = vld [vmem:[#allocation19 + $0x10] sm:$0xff]
    %v3561 = vld [vmem:[#allocation19 + $0x18] sm:$0xff]
    %v3562 = vld [vmem:[#allocation19 + $0x20] sm:$0xff]
    %v3563 = vld [vmem:[#allocation19 + $0x28] sm:$0xff]
    %v3564 = vld [vmem:[#allocation19 + $0x30] sm:$0xff]
    %v3565 = vld [vmem:[#allocation19 + $0x38] sm:$0xff]
    %v3566 = vld [vmem:[#allocation19 + $0x40] sm:$0xff]
    %v3567 = vld [vmem:[#allocation19 + $0x48] sm:$0xff]
    %v3568 = vld [vmem:[#allocation19 + $0x50] sm:$0xff]
    %v3569 = vld [vmem:[#allocation19 + $0x58] sm:$0xff]
    %v3570 = vld [vmem:[#allocation19 + $0x60] sm:$0xff]
    %v3571 = vld [vmem:[#allocation19 + $0x68] sm:$0xff]
    %v3572 = vld [vmem:[#allocation19 + $0x70] sm:$0xff]
    %v3573 = vld [vmem:[#allocation19 + $0x78] sm:$0xff]
    %v3574 = vld [vmem:[#allocation19 + $0x80] sm:$0xff]
    %v3575 = vld [vmem:[#allocation19 + $0x88] sm:$0xff]
    %v3576 = vld [vmem:[#allocation19 + $0x90] sm:$0xff]
    %v3577 = vld [vmem:[#allocation19 + $0x98] sm:$0xff]
    %v3578 = vld [vmem:[#allocation19 + $0xa0] sm:$0xff]
    %v3579 = vld [vmem:[#allocation19 + $0xa8] sm:$0xff]
    %v3580 = vld [vmem:[#allocation19 + $0xb0] sm:$0xff]
    %v3581 = vld [vmem:[#allocation19 + $0xb8] sm:$0xff]
    %v3582 = vld [vmem:[#allocation19 + $0xc0] sm:$0xff]
    %v3583 = vld [vmem:[#allocation19 + $0xc8] sm:$0xff]
    %v3584 = vld [vmem:[#allocation19 + $0xd0] sm:$0xff]
    %v3585 = vld [vmem:[#allocation19 + $0xd8] sm:$0xff]
    %v3586 = vld [vmem:[#allocation19 + $0xe0] sm:$0xff]
    %v3587 = vld [vmem:[#allocation19 + $0xe8] sm:$0xff]
    %v3588 = vld [vmem:[#allocation19 + $0xf0] sm:$0xff]
    %v3589 = vld [vmem:[#allocation19 + $0xf8] sm:$0xff]
    %3590 = vmatprep.subr.mxu0 0.0
    %3591 = vmatpush1.msra.mxu0 %v3573
    %3592 = vmatprep.subr.mxu0 0.0
    %3593 = vmatpush1.msra.mxu0 %v3572
    %3594 = vmatprep.subr.mxu0 0.0
    %3595 = vmatpush1.msra.mxu0 %v3571
    %3596 = vmatprep.subr.mxu0 0.0
    %3597 = vmatpush1.msra.mxu0 %v3570
    %3598 = vmatprep.subr.mxu0 0.0
    %3599 = vmatpush1.msra.mxu0 %v3569
    %3600 = vmatprep.subr.mxu0 0.0
    %3601 = vmatpush1.msra.mxu0 %v3568
    %3602 = vmatprep.subr.mxu0 0.0
    %3603 = vmatpush1.msra.mxu0 %v3567
    %3604 = vmatprep.subr.mxu0 0.0
    %3605 = vmatpush1.msra.mxu0 %v3566
    %3606 = vmatprep.subr.mxu0 0.0
    %3607 = vmatpush1.msra.mxu0 %v3565
    %3608 = vmatprep.subr.mxu0 0.0
    %3609 = vmatpush1.msra.mxu0 %v3564
    %3610 = vmatprep.subr.mxu0 0.0
    %3611 = vmatpush1.msra.mxu0 %v3563
    %3612 = vmatprep.subr.mxu0 0.0
    %3613 = vmatpush1.msra.mxu0 %v3562
    %3614 = vmatprep.subr.mxu0 0.0
    %3615 = vmatpush1.msra.mxu0 %v3561
    %3616 = vmatprep.subr.mxu0 0.0
    %3617 = vmatpush1.msra.mxu0 %v3560
    %3618 = vmatprep.subr.mxu0 0.0
    %3619 = vmatpush1.msra.mxu0 %v3559
    %3620 = vmatprep.subr.mxu0 0.0
    %3621 = vmatpush1.msra.mxu0 %v3558
    %3622 = vmatprep.subr.mxu0 0.0
    %3623 = vmatpush2.msra.mxu0 %v3589
    %3624 = vmatprep.subr.mxu0 0.0
    %3625 = vmatpush2.msra.mxu0 %v3588
    %3626 = vmatprep.subr.mxu0 0.0
    %3627 = vmatpush2.msra.mxu0 %v3587
    %3628 = vmatprep.subr.mxu0 0.0
    %3629 = vmatpush2.msra.mxu0 %v3586
    %3630 = vmatprep.subr.mxu0 0.0
    %3631 = vmatpush2.msra.mxu0 %v3585
    %3632 = vmatprep.subr.mxu0 0.0
    %3633 = vmatpush2.msra.mxu0 %v3584
    %3634 = vmatprep.subr.mxu0 0.0
    %3635 = vmatpush2.msra.mxu0 %v3583
    %3636 = vmatprep.subr.mxu0 0.0
    %3637 = vmatpush2.msra.mxu0 %v3582
    %3638 = vmatprep.subr.mxu0 0.0
    %3639 = vmatpush2.msra.mxu0 %v3581
    %3640 = vmatprep.subr.mxu0 0.0
    %3641 = vmatpush2.msra.mxu0 %v3580
    %3642 = vmatprep.subr.mxu0 0.0
    %3643 = vmatpush2.msra.mxu0 %v3579
    %3644 = vmatprep.subr.mxu0 0.0
    %3645 = vmatpush2.msra.mxu0 %v3578
    %3646 = vmatprep.subr.mxu0 0.0
    %3647 = vmatpush2.msra.mxu0 %v3577
    %3648 = vmatprep.subr.mxu0 0.0
    %3649 = vmatpush2.msra.mxu0 %v3576
    %3650 = vmatprep.subr.mxu0 0.0
    %3651 = vmatpush2.msra.mxu0 %v3575
    %3652 = vmatprep.subr.mxu0 0.0
    %3653 = vmatpush2.msra.mxu0 %v3574
    %3654 = vmatprep.mubr.f32.mxu0 %v3555
    %3655 = vmatmul.mubr.f32.gmra.mxu0 %v3554
    %v3656 = vpop.f32.mrf.mxu0
    %v3657 = vadd.f32 0.0, %v3656
    %v3658 = vpop.f32.mrf.mxu0
    %3659 = vmatprep.mubr.f32.mxu0 %v3557
    %3660 = vmatmul.mubr.f32.gmra.mxu0 %v3556
    %v3661 = vpop.f32.mrf.mxu0
    %v3662 = vadd.f32 0.0, %v3661
    %v3663 = vpop.f32.mrf.mxu0
    %3664 = vdwg.mxu0
    %s3665 = scalar_lea.vmem [#allocation19], 256
    %v3666 = vld [vmem:[%s3665] sm:$0xff]
    %v3667 = vld [vmem:[%s3665 + $0x8] sm:$0xff]
    %v3668 = vld [vmem:[%s3665 + $0x10] sm:$0xff]
    %v3669 = vld [vmem:[%s3665 + $0x18] sm:$0xff]
    %v3670 = vld [vmem:[%s3665 + $0x20] sm:$0xff]
    %v3671 = vld [vmem:[%s3665 + $0x28] sm:$0xff]
    %v3672 = vld [vmem:[%s3665 + $0x30] sm:$0xff]
    %v3673 = vld [vmem:[%s3665 + $0x38] sm:$0xff]
    %v3674 = vld [vmem:[%s3665 + $0x40] sm:$0xff]
    %v3675 = vld [vmem:[%s3665 + $0x48] sm:$0xff]
    %v3676 = vld [vmem:[%s3665 + $0x50] sm:$0xff]
    %v3677 = vld [vmem:[%s3665 + $0x58] sm:$0xff]
    %v3678 = vld [vmem:[%s3665 + $0x60] sm:$0xff]
    %v3679 = vld [vmem:[%s3665 + $0x68] sm:$0xff]
    %v3680 = vld [vmem:[%s3665 + $0x70] sm:$0xff]
    %v3681 = vld [vmem:[%s3665 + $0x78] sm:$0xff]
    %v3682 = vld [vmem:[%s3665 + $0x80] sm:$0xff]
    %v3683 = vld [vmem:[%s3665 + $0x88] sm:$0xff]
    %v3684 = vld [vmem:[%s3665 + $0x90] sm:$0xff]
    %v3685 = vld [vmem:[%s3665 + $0x98] sm:$0xff]
    %v3686 = vld [vmem:[%s3665 + $0xa0] sm:$0xff]
    %v3687 = vld [vmem:[%s3665 + $0xa8] sm:$0xff]
    %v3688 = vld [vmem:[%s3665 + $0xb0] sm:$0xff]
    %v3689 = vld [vmem:[%s3665 + $0xb8] sm:$0xff]
    %v3690 = vld [vmem:[%s3665 + $0xc0] sm:$0xff]
    %v3691 = vld [vmem:[%s3665 + $0xc8] sm:$0xff]
    %v3692 = vld [vmem:[%s3665 + $0xd0] sm:$0xff]
    %v3693 = vld [vmem:[%s3665 + $0xd8] sm:$0xff]
    %v3694 = vld [vmem:[%s3665 + $0xe0] sm:$0xff]
    %v3695 = vld [vmem:[%s3665 + $0xe8] sm:$0xff]
    %v3696 = vld [vmem:[%s3665 + $0xf0] sm:$0xff]
    %v3697 = vld [vmem:[%s3665 + $0xf8] sm:$0xff]
    %3698 = vmatprep.subr.mxu0 0.0
    %3699 = vmatpush1.msra.mxu0 %v3681
    %3700 = vmatprep.subr.mxu0 0.0
    %3701 = vmatpush1.msra.mxu0 %v3680
    %3702 = vmatprep.subr.mxu0 0.0
    %3703 = vmatpush1.msra.mxu0 %v3679
    %3704 = vmatprep.subr.mxu0 0.0
    %3705 = vmatpush1.msra.mxu0 %v3678
    %3706 = vmatprep.subr.mxu0 0.0
    %3707 = vmatpush1.msra.mxu0 %v3677
    %3708 = vmatprep.subr.mxu0 0.0
    %3709 = vmatpush1.msra.mxu0 %v3676
    %3710 = vmatprep.subr.mxu0 0.0
    %3711 = vmatpush1.msra.mxu0 %v3675
    %3712 = vmatprep.subr.mxu0 0.0
    %3713 = vmatpush1.msra.mxu0 %v3674
    %3714 = vmatprep.subr.mxu0 0.0
    %3715 = vmatpush1.msra.mxu0 %v3673
    %3716 = vmatprep.subr.mxu0 0.0
    %3717 = vmatpush1.msra.mxu0 %v3672
    %3718 = vmatprep.subr.mxu0 0.0
    %3719 = vmatpush1.msra.mxu0 %v3671
    %3720 = vmatprep.subr.mxu0 0.0
    %3721 = vmatpush1.msra.mxu0 %v3670
    %3722 = vmatprep.subr.mxu0 0.0
    %3723 = vmatpush1.msra.mxu0 %v3669
    %3724 = vmatprep.subr.mxu0 0.0
    %3725 = vmatpush1.msra.mxu0 %v3668
    %3726 = vmatprep.subr.mxu0 0.0
    %3727 = vmatpush1.msra.mxu0 %v3667
    %3728 = vmatprep.subr.mxu0 0.0
    %3729 = vmatpush1.msra.mxu0 %v3666
    %3730 = vmatprep.subr.mxu0 0.0
    %3731 = vmatpush2.msra.mxu0 %v3697
    %3732 = vmatprep.subr.mxu0 0.0
    %3733 = vmatpush2.msra.mxu0 %v3696
    %3734 = vmatprep.subr.mxu0 0.0
    %3735 = vmatpush2.msra.mxu0 %v3695
    %3736 = vmatprep.subr.mxu0 0.0
    %3737 = vmatpush2.msra.mxu0 %v3694
    %3738 = vmatprep.subr.mxu0 0.0
    %3739 = vmatpush2.msra.mxu0 %v3693
    %3740 = vmatprep.subr.mxu0 0.0
    %3741 = vmatpush2.msra.mxu0 %v3692
    %3742 = vmatprep.subr.mxu0 0.0
    %3743 = vmatpush2.msra.mxu0 %v3691
    %3744 = vmatprep.subr.mxu0 0.0
    %3745 = vmatpush2.msra.mxu0 %v3690
    %3746 = vmatprep.subr.mxu0 0.0
    %3747 = vmatpush2.msra.mxu0 %v3689
    %3748 = vmatprep.subr.mxu0 0.0
    %3749 = vmatpush2.msra.mxu0 %v3688
    %3750 = vmatprep.subr.mxu0 0.0
    %3751 = vmatpush2.msra.mxu0 %v3687
    %3752 = vmatprep.subr.mxu0 0.0
    %3753 = vmatpush2.msra.mxu0 %v3686
    %3754 = vmatprep.subr.mxu0 0.0
    %3755 = vmatpush2.msra.mxu0 %v3685
    %3756 = vmatprep.subr.mxu0 0.0
    %3757 = vmatpush2.msra.mxu0 %v3684
    %3758 = vmatprep.subr.mxu0 0.0
    %3759 = vmatpush2.msra.mxu0 %v3683
    %3760 = vmatprep.subr.mxu0 0.0
    %3761 = vmatpush2.msra.mxu0 %v3682
    %3762 = vmatprep.mubr.f32.mxu0 %v3555
    %3763 = vmatmul.mubr.f32.gmra.mxu0 %v3554
    %v3764 = vpop.f32.mrf.mxu0
    %v3765 = vadd.f32 0.0, %v3764
    %v3766 = vpop.f32.mrf.mxu0
    %3767 = vmatprep.mubr.f32.mxu0 %v3557
    %3768 = vmatmul.mubr.f32.gmra.mxu0 %v3556
    %v3769 = vpop.f32.mrf.mxu0
    %v3770 = vadd.f32 0.0, %v3769
    %v3771 = vpop.f32.mrf.mxu0
    %3772 = vdwg.mxu0
    %v3773 = vmax.f32 %v3657, %v3765
    %v3774 = vmax.f32 %v3662, %v3770
    %s3775 = scalar_lea.vmem [#allocation20], 256
    %v3776 = vld [vmem:[%s3775] sm:$0xff]
    %v3777 = vld [vmem:[%s3775 + $0x8] sm:$0xff]
    %v3778 = vld [vmem:[%s3775 + $0x10] sm:$0xff]
    %v3779 = vld [vmem:[%s3775 + $0x18] sm:$0xff]
    %v3780 = vld [vmem:[%s3775 + $0x20] sm:$0xff]
    %v3781 = vld [vmem:[%s3775 + $0x28] sm:$0xff]
    %v3782 = vld [vmem:[%s3775 + $0x30] sm:$0xff]
    %v3783 = vld [vmem:[%s3775 + $0x38] sm:$0xff]
    %v3784 = vld [vmem:[%s3775 + $0x40] sm:$0xff]
    %v3785 = vld [vmem:[%s3775 + $0x48] sm:$0xff]
    %v3786 = vld [vmem:[%s3775 + $0x50] sm:$0xff]
    %v3787 = vld [vmem:[%s3775 + $0x58] sm:$0xff]
    %v3788 = vld [vmem:[%s3775 + $0x60] sm:$0xff]
    %v3789 = vld [vmem:[%s3775 + $0x68] sm:$0xff]
    %v3790 = vld [vmem:[%s3775 + $0x70] sm:$0xff]
    %v3791 = vld [vmem:[%s3775 + $0x78] sm:$0xff]
    %v3792 = vld [vmem:[%s3775 + $0x80] sm:$0xff]
    %v3793 = vld [vmem:[%s3775 + $0x88] sm:$0xff]
    %v3794 = vld [vmem:[%s3775 + $0x90] sm:$0xff]
    %v3795 = vld [vmem:[%s3775 + $0x98] sm:$0xff]
    %v3796 = vld [vmem:[%s3775 + $0xa0] sm:$0xff]
    %v3797 = vld [vmem:[%s3775 + $0xa8] sm:$0xff]
    %v3798 = vld [vmem:[%s3775 + $0xb0] sm:$0xff]
    %v3799 = vld [vmem:[%s3775 + $0xb8] sm:$0xff]
    %v3800 = vld [vmem:[%s3775 + $0xc0] sm:$0xff]
    %v3801 = vld [vmem:[%s3775 + $0xc8] sm:$0xff]
    %v3802 = vld [vmem:[%s3775 + $0xd0] sm:$0xff]
    %v3803 = vld [vmem:[%s3775 + $0xd8] sm:$0xff]
    %v3804 = vld [vmem:[%s3775 + $0xe0] sm:$0xff]
    %v3805 = vld [vmem:[%s3775 + $0xe8] sm:$0xff]
    %v3806 = vld [vmem:[%s3775 + $0xf0] sm:$0xff]
    %v3807 = vld [vmem:[%s3775 + $0xf8] sm:$0xff]
    %v3808 = vld [vmem:[#allocation26] sm:$0xff]
    %v3809 = vld [vmem:[#allocation26 + $0x8] sm:$0xff]
    %v3811 = vsel %vm3011, %v3808, 0
    %v3814 = vsel %vm3011, %v3809, 0
    %3816 = vmatprep.subr.mxu0 0.0
    %3817 = vmatpush1.msra.mxu0 0.0
    %3818 = vmatprep.subr.mxu0 0.0
    %3819 = vmatpush1.msra.mxu0 0.0
    %3820 = vmatprep.subr.mxu0 0.0
    %3821 = vmatpush1.msra.mxu0 0.0
    %3822 = vmatprep.subr.mxu0 0.0
    %3823 = vmatpush1.msra.mxu0 0.0
    %3824 = vmatprep.subr.mxu0 0.0
    %3825 = vmatpush1.msra.mxu0 0.0
    %3826 = vmatprep.subr.mxu0 0.0
    %3827 = vmatpush1.msra.mxu0 0.0
    %3828 = vmatprep.subr.mxu0 0.0
    %3829 = vmatpush1.msra.mxu0 0.0
    %3830 = vmatprep.subr.mxu0 0.0
    %3831 = vmatpush1.msra.mxu0 0.0
    %3832 = vmatprep.subr.mxu0 0.0
    %3833 = vmatpush1.msra.mxu0 0.0
    %3834 = vmatprep.subr.mxu0 0.0
    %3835 = vmatpush1.msra.mxu0 0.0
    %3836 = vmatprep.subr.mxu0 0.0
    %3837 = vmatpush1.msra.mxu0 0.0
    %3838 = vmatprep.subr.mxu0 0.0
    %3839 = vmatpush1.msra.mxu0 0.0
    %3840 = vmatprep.subr.mxu0 0.0
    %3841 = vmatpush1.msra.mxu0 0.0
    %3842 = vmatprep.subr.mxu0 0.0
    %3843 = vmatpush1.msra.mxu0 0.0
    %3844 = vmatprep.subr.mxu0 0.0
    %3845 = vmatpush1.msra.mxu0 %v3774
    %3846 = vmatprep.subr.mxu0 0.0
    %3847 = vmatpush1.msra.mxu0 %v3773
    %3848 = vmatprep.subr.mxu0 0.0
    %3849 = vmatpush2.msra.mxu0 0.0
    %3850 = vmatprep.subr.mxu0 0.0
    %3851 = vmatpush2.msra.mxu0 0.0
    %3852 = vmatprep.subr.mxu0 0.0
    %3853 = vmatpush2.msra.mxu0 0.0
    %3854 = vmatprep.subr.mxu0 0.0
    %3855 = vmatpush2.msra.mxu0 0.0
    %3856 = vmatprep.subr.mxu0 0.0
    %3857 = vmatpush2.msra.mxu0 0.0
    %3858 = vmatprep.subr.mxu0 0.0
    %3859 = vmatpush2.msra.mxu0 0.0
    %3860 = vmatprep.subr.mxu0 0.0
    %3861 = vmatpush2.msra.mxu0 0.0
    %3862 = vmatprep.subr.mxu0 0.0
    %3863 = vmatpush2.msra.mxu0 0.0
    %3864 = vmatprep.subr.mxu0 0.0
    %3865 = vmatpush2.msra.mxu0 0.0
    %3866 = vmatprep.subr.mxu0 0.0
    %3867 = vmatpush2.msra.mxu0 0.0
    %3868 = vmatprep.subr.mxu0 0.0
    %3869 = vmatpush2.msra.mxu0 0.0
    %3870 = vmatprep.subr.mxu0 0.0
    %3871 = vmatpush2.msra.mxu0 0.0
    %3872 = vmatprep.subr.mxu0 0.0
    %3873 = vmatpush2.msra.mxu0 0.0
    %3874 = vmatprep.subr.mxu0 0.0
    %3875 = vmatpush2.msra.mxu0 0.0
    %3876 = vmatprep.subr.mxu0 0.0
    %3877 = vmatpush2.msra.mxu0 0.0
    %3878 = vmatprep.subr.mxu0 0.0
    %3879 = vmatpush2.msra.mxu0 0.0
    %3880 = vmatprep.mubr.f32.mxu0 0.0
    %3881 = vmatmul.mubr.f32.gmra.mxu0 %v3811
    %v3882 = vpop.f32.mrf.mxu0
    %v3883 = vadd.f32 0.0, %v3882
    %v3884 = vpop.f32.mrf.mxu0
    %3885 = vmatprep.mubr.f32.mxu0 0.0
    %3886 = vmatmul.mubr.f32.gmra.mxu0 %v3814
    %v3887 = vpop.f32.mrf.mxu0
    %v3888 = vadd.f32 0.0, %v3887
    %v3889 = vpop.f32.mrf.mxu0
    %3890 = vdwg.mxu0
    %v3891 = vld [vmem:[#allocation20] sm:$0xff]
    %v3892 = vld [vmem:[#allocation20 + $0x8] sm:$0xff]
    %v3893 = vld [vmem:[#allocation20 + $0x10] sm:$0xff]
    %v3894 = vld [vmem:[#allocation20 + $0x18] sm:$0xff]
    %v3895 = vld [vmem:[#allocation20 + $0x20] sm:$0xff]
    %v3896 = vld [vmem:[#allocation20 + $0x28] sm:$0xff]
    %v3897 = vld [vmem:[#allocation20 + $0x30] sm:$0xff]
    %v3898 = vld [vmem:[#allocation20 + $0x38] sm:$0xff]
    %v3899 = vld [vmem:[#allocation20 + $0x40] sm:$0xff]
    %v3900 = vld [vmem:[#allocation20 + $0x48] sm:$0xff]
    %v3901 = vld [vmem:[#allocation20 + $0x50] sm:$0xff]
    %v3902 = vld [vmem:[#allocation20 + $0x58] sm:$0xff]
    %v3903 = vld [vmem:[#allocation20 + $0x60] sm:$0xff]
    %v3904 = vld [vmem:[#allocation20 + $0x68] sm:$0xff]
    %v3905 = vld [vmem:[#allocation20 + $0x70] sm:$0xff]
    %v3906 = vld [vmem:[#allocation20 + $0x78] sm:$0xff]
    %v3907 = vld [vmem:[#allocation20 + $0x80] sm:$0xff]
    %v3908 = vld [vmem:[#allocation20 + $0x88] sm:$0xff]
    %v3909 = vld [vmem:[#allocation20 + $0x90] sm:$0xff]
    %v3910 = vld [vmem:[#allocation20 + $0x98] sm:$0xff]
    %v3911 = vld [vmem:[#allocation20 + $0xa0] sm:$0xff]
    %v3912 = vld [vmem:[#allocation20 + $0xa8] sm:$0xff]
    %v3913 = vld [vmem:[#allocation20 + $0xb0] sm:$0xff]
    %v3914 = vld [vmem:[#allocation20 + $0xb8] sm:$0xff]
    %v3915 = vld [vmem:[#allocation20 + $0xc0] sm:$0xff]
    %v3916 = vld [vmem:[#allocation20 + $0xc8] sm:$0xff]
    %v3917 = vld [vmem:[#allocation20 + $0xd0] sm:$0xff]
    %v3918 = vld [vmem:[#allocation20 + $0xd8] sm:$0xff]
    %v3919 = vld [vmem:[#allocation20 + $0xe0] sm:$0xff]
    %v3920 = vld [vmem:[#allocation20 + $0xe8] sm:$0xff]
    %v3921 = vld [vmem:[#allocation20 + $0xf0] sm:$0xff]
    %v3922 = vld [vmem:[#allocation20 + $0xf8] sm:$0xff]
    %3923 = vmatprep.subr.mxu0 %v3922
    %3924 = vmatpush1.msra.mxu0 %v3921
    %3925 = vmatprep.subr.mxu0 %v3920
    %3926 = vmatpush1.msra.mxu0 %v3919
    %3927 = vmatprep.subr.mxu0 %v3918
    %3928 = vmatpush1.msra.mxu0 %v3917
    %3929 = vmatprep.subr.mxu0 %v3916
    %3930 = vmatpush1.msra.mxu0 %v3915
    %3931 = vmatprep.subr.mxu0 %v3914
    %3932 = vmatpush1.msra.mxu0 %v3913
    %3933 = vmatprep.subr.mxu0 %v3912
    %3934 = vmatpush1.msra.mxu0 %v3911
    %3935 = vmatprep.subr.mxu0 %v3910
    %3936 = vmatpush1.msra.mxu0 %v3909
    %3937 = vmatprep.subr.mxu0 %v3908
    %3938 = vmatpush1.msra.mxu0 %v3907
    %3939 = vmatprep.subr.mxu0 %v3906
    %3940 = vmatpush1.msra.mxu0 %v3905
    %3941 = vmatprep.subr.mxu0 %v3904
    %3942 = vmatpush1.msra.mxu0 %v3903
    %3943 = vmatprep.subr.mxu0 %v3902
    %3944 = vmatpush1.msra.mxu0 %v3901
    %3945 = vmatprep.subr.mxu0 %v3900
    %3946 = vmatpush1.msra.mxu0 %v3899
    %3947 = vmatprep.subr.mxu0 %v3898
    %3948 = vmatpush1.msra.mxu0 %v3897
    %3949 = vmatprep.subr.mxu0 %v3896
    %3950 = vmatpush1.msra.mxu0 %v3895
    %3951 = vmatprep.subr.mxu0 %v3894
    %3952 = vmatpush1.msra.mxu0 %v3893
    %3953 = vmatprep.subr.mxu0 %v3892
    %3954 = vmatpush1.msra.mxu0 %v3891
    %3955 = vmatprep.subr.mxu0 0.0
    %3956 = vmatpush2.msra.mxu0 0.0
    %3957 = vmatprep.subr.mxu0 0.0
    %3958 = vmatpush2.msra.mxu0 0.0
    %3959 = vmatprep.subr.mxu0 0.0
    %3960 = vmatpush2.msra.mxu0 0.0
    %3961 = vmatprep.subr.mxu0 0.0
    %3962 = vmatpush2.msra.mxu0 0.0
    %3963 = vmatprep.subr.mxu0 0.0
    %3964 = vmatpush2.msra.mxu0 0.0
    %3965 = vmatprep.subr.mxu0 0.0
    %3966 = vmatpush2.msra.mxu0 0.0
    %3967 = vmatprep.subr.mxu0 0.0
    %3968 = vmatpush2.msra.mxu0 0.0
    %3969 = vmatprep.subr.mxu0 0.0
    %3970 = vmatpush2.msra.mxu0 0.0
    %3971 = vmatprep.subr.mxu0 0.0
    %3972 = vmatpush2.msra.mxu0 0.0
    %3973 = vmatprep.subr.mxu0 0.0
    %3974 = vmatpush2.msra.mxu0 0.0
    %3975 = vmatprep.subr.mxu0 0.0
    %3976 = vmatpush2.msra.mxu0 0.0
    %3977 = vmatprep.subr.mxu0 0.0
    %3978 = vmatpush2.msra.mxu0 0.0
    %3979 = vmatprep.subr.mxu0 0.0
    %3980 = vmatpush2.msra.mxu0 0.0
    %3981 = vmatprep.subr.mxu0 0.0
    %3982 = vmatpush2.msra.mxu0 0.0
    %3983 = vmatprep.subr.mxu0 0.0
    %3984 = vmatpush2.msra.mxu0 0.0
    %3985 = vmatprep.subr.mxu0 0.0
    %3986 = vmatpush2.msra.mxu0 0.0
    %3987 = vmatprep.mubr.f32.mxu0 0.0
    %3988 = vmatmul.mubr.f32.gmra.mxu0 %v3883
    %v3989 = vpop.f32.mrf.mxu0
    %v3990 = vadd.f32 0.0, %v3989
    %v3991 = vpop.f32.mrf.mxu0
    %v3992 = vadd.f32 0.0, %v3991
    %3993 = vmatprep.mubr.f32.mxu0 0.0
    %3994 = vmatmul.mubr.f32.gmra.mxu0 %v3888
    %v3995 = vpop.f32.mrf.mxu0
    %v3996 = vadd.f32 0.0, %v3995
    %v3997 = vpop.f32.mrf.mxu0
    %v3998 = vadd.f32 0.0, %v3997
    %3999 = vdwg.mxu0
    %4000 = vmatprep.subr.mxu0 %v3807
    %4001 = vmatpush1.msra.mxu0 %v3806
    %4002 = vmatprep.subr.mxu0 %v3805
    %4003 = vmatpush1.msra.mxu0 %v3804
    %4004 = vmatprep.subr.mxu0 %v3803
    %4005 = vmatpush1.msra.mxu0 %v3802
    %4006 = vmatprep.subr.mxu0 %v3801
    %4007 = vmatpush1.msra.mxu0 %v3800
    %4008 = vmatprep.subr.mxu0 %v3799
    %4009 = vmatpush1.msra.mxu0 %v3798
    %4010 = vmatprep.subr.mxu0 %v3797
    %4011 = vmatpush1.msra.mxu0 %v3796
    %4012 = vmatprep.subr.mxu0 %v3795
    %4013 = vmatpush1.msra.mxu0 %v3794
    %4014 = vmatprep.subr.mxu0 %v3793
    %4015 = vmatpush1.msra.mxu0 %v3792
    %4016 = vmatprep.subr.mxu0 %v3791
    %4017 = vmatpush1.msra.mxu0 %v3790
    %4018 = vmatprep.subr.mxu0 %v3789
    %4019 = vmatpush1.msra.mxu0 %v3788
    %4020 = vmatprep.subr.mxu0 %v3787
    %4021 = vmatpush1.msra.mxu0 %v3786
    %4022 = vmatprep.subr.mxu0 %v3785
    %4023 = vmatpush1.msra.mxu0 %v3784
    %4024 = vmatprep.subr.mxu0 %v3783
    %4025 = vmatpush1.msra.mxu0 %v3782
    %4026 = vmatprep.subr.mxu0 %v3781
    %4027 = vmatpush1.msra.mxu0 %v3780
    %4028 = vmatprep.subr.mxu0 %v3779
    %4029 = vmatpush1.msra.mxu0 %v3778
    %4030 = vmatprep.subr.mxu0 %v3777
    %4031 = vmatpush1.msra.mxu0 %v3776
    %4032 = vmatprep.subr.mxu0 0.0
    %4033 = vmatpush2.msra.mxu0 0.0
    %4034 = vmatprep.subr.mxu0 0.0
    %4035 = vmatpush2.msra.mxu0 0.0
    %4036 = vmatprep.subr.mxu0 0.0
    %4037 = vmatpush2.msra.mxu0 0.0
    %4038 = vmatprep.subr.mxu0 0.0
    %4039 = vmatpush2.msra.mxu0 0.0
    %4040 = vmatprep.subr.mxu0 0.0
    %4041 = vmatpush2.msra.mxu0 0.0
    %4042 = vmatprep.subr.mxu0 0.0
    %4043 = vmatpush2.msra.mxu0 0.0
    %4044 = vmatprep.subr.mxu0 0.0
    %4045 = vmatpush2.msra.mxu0 0.0
    %4046 = vmatprep.subr.mxu0 0.0
    %4047 = vmatpush2.msra.mxu0 0.0
    %4048 = vmatprep.subr.mxu0 0.0
    %4049 = vmatpush2.msra.mxu0 0.0
    %4050 = vmatprep.subr.mxu0 0.0
    %4051 = vmatpush2.msra.mxu0 0.0
    %4052 = vmatprep.subr.mxu0 0.0
    %4053 = vmatpush2.msra.mxu0 0.0
    %4054 = vmatprep.subr.mxu0 0.0
    %4055 = vmatpush2.msra.mxu0 0.0
    %4056 = vmatprep.subr.mxu0 0.0
    %4057 = vmatpush2.msra.mxu0 0.0
    %4058 = vmatprep.subr.mxu0 0.0
    %4059 = vmatpush2.msra.mxu0 0.0
    %4060 = vmatprep.subr.mxu0 0.0
    %4061 = vmatpush2.msra.mxu0 0.0
    %4062 = vmatprep.subr.mxu0 0.0
    %4063 = vmatpush2.msra.mxu0 0.0
    %4064 = vmatprep.mubr.f32.mxu0 0.0
    %4065 = vmatmul.mubr.f32.gmra.mxu0 %v3773
    %v4066 = vpop.f32.mrf.mxu0
    %v4067 = vadd.f32 %v3990, %v4066
    %v4068 = vpop.f32.mrf.mxu0
    %v4069 = vadd.f32 %v3992, %v4068
    %4070 = vmatprep.mubr.f32.mxu0 0.0
    %4071 = vmatmul.mubr.f32.gmra.mxu0 %v3774
    %v4072 = vpop.f32.mrf.mxu0
    %v4073 = vadd.f32 %v3996, %v4072
    %v4074 = vpop.f32.mrf.mxu0
    %v4075 = vadd.f32 %v3998, %v4074
    %4076 = vdwg.mxu0
    %s4077 = scalar_lea.vmem [#allocation26], 16
    %v4078 = vld [vmem:[%s4077] sm:$0xff]
    %v4079 = vld [vmem:[%s4077 + $0x8] sm:$0xff]
    %v4081 = vsel %vm3011, %v4078, 0
    %v4084 = vsel %vm3011, %v4079, 0
    %4086 = vmatprep.subr.mxu0 0.0
    %4087 = vmatpush1.msra.mxu0 0.0
    %4088 = vmatprep.subr.mxu0 0.0
    %4089 = vmatpush1.msra.mxu0 0.0
    %4090 = vmatprep.subr.mxu0 0.0
    %4091 = vmatpush1.msra.mxu0 0.0
    %4092 = vmatprep.subr.mxu0 0.0
    %4093 = vmatpush1.msra.mxu0 0.0
    %4094 = vmatprep.subr.mxu0 0.0
    %4095 = vmatpush1.msra.mxu0 0.0
    %4096 = vmatprep.subr.mxu0 0.0
    %4097 = vmatpush1.msra.mxu0 0.0
    %4098 = vmatprep.subr.mxu0 0.0
    %4099 = vmatpush1.msra.mxu0 0.0
    %4100 = vmatprep.subr.mxu0 0.0
    %4101 = vmatpush1.msra.mxu0 0.0
    %4102 = vmatprep.subr.mxu0 0.0
    %4103 = vmatpush1.msra.mxu0 0.0
    %4104 = vmatprep.subr.mxu0 0.0
    %4105 = vmatpush1.msra.mxu0 0.0
    %4106 = vmatprep.subr.mxu0 0.0
    %4107 = vmatpush1.msra.mxu0 0.0
    %4108 = vmatprep.subr.mxu0 0.0
    %4109 = vmatpush1.msra.mxu0 0.0
    %4110 = vmatprep.subr.mxu0 0.0
    %4111 = vmatpush1.msra.mxu0 0.0
    %4112 = vmatprep.subr.mxu0 0.0
    %4113 = vmatpush1.msra.mxu0 0.0
    %4114 = vmatprep.subr.mxu0 0.0
    %4115 = vmatpush1.msra.mxu0 %v3774
    %4116 = vmatprep.subr.mxu0 0.0
    %4117 = vmatpush1.msra.mxu0 %v3773
    %4118 = vmatprep.subr.mxu0 0.0
    %4119 = vmatpush2.msra.mxu0 0.0
    %4120 = vmatprep.subr.mxu0 0.0
    %4121 = vmatpush2.msra.mxu0 0.0
    %4122 = vmatprep.subr.mxu0 0.0
    %4123 = vmatpush2.msra.mxu0 0.0
    %4124 = vmatprep.subr.mxu0 0.0
    %4125 = vmatpush2.msra.mxu0 0.0
    %4126 = vmatprep.subr.mxu0 0.0
    %4127 = vmatpush2.msra.mxu0 0.0
    %4128 = vmatprep.subr.mxu0 0.0
    %4129 = vmatpush2.msra.mxu0 0.0
    %4130 = vmatprep.subr.mxu0 0.0
    %4131 = vmatpush2.msra.mxu0 0.0
    %4132 = vmatprep.subr.mxu0 0.0
    %4133 = vmatpush2.msra.mxu0 0.0
    %4134 = vmatprep.subr.mxu0 0.0
    %4135 = vmatpush2.msra.mxu0 0.0
    %4136 = vmatprep.subr.mxu0 0.0
    %4137 = vmatpush2.msra.mxu0 0.0
    %4138 = vmatprep.subr.mxu0 0.0
    %4139 = vmatpush2.msra.mxu0 0.0
    %4140 = vmatprep.subr.mxu0 0.0
    %4141 = vmatpush2.msra.mxu0 0.0
    %4142 = vmatprep.subr.mxu0 0.0
    %4143 = vmatpush2.msra.mxu0 0.0
    %4144 = vmatprep.subr.mxu0 0.0
    %4145 = vmatpush2.msra.mxu0 0.0
    %4146 = vmatprep.subr.mxu0 0.0
    %4147 = vmatpush2.msra.mxu0 0.0
    %4148 = vmatprep.subr.mxu0 0.0
    %4149 = vmatpush2.msra.mxu0 0.0
    %4150 = vmatprep.mubr.f32.mxu0 0.0
    %4151 = vmatmul.mubr.f32.gmra.mxu0 %v4081
    %v4152 = vpop.f32.mrf.mxu0
    %v4153 = vadd.f32 0.0, %v4152
    %v4154 = vpop.f32.mrf.mxu0
    %4155 = vmatprep.mubr.f32.mxu0 0.0
    %4156 = vmatmul.mubr.f32.gmra.mxu0 %v4084
    %v4157 = vpop.f32.mrf.mxu0
    %v4158 = vadd.f32 0.0, %v4157
    %v4159 = vpop.f32.mrf.mxu0
    %4160 = vdwg.mxu0
    %s4161 = scalar_lea.vmem [#allocation20], 512
    %v4162 = vld [vmem:[%s4161] sm:$0xff]
    %v4163 = vld [vmem:[%s4161 + $0x8] sm:$0xff]
    %v4164 = vld [vmem:[%s4161 + $0x10] sm:$0xff]
    %v4165 = vld [vmem:[%s4161 + $0x18] sm:$0xff]
    %v4166 = vld [vmem:[%s4161 + $0x20] sm:$0xff]
    %v4167 = vld [vmem:[%s4161 + $0x28] sm:$0xff]
    %v4168 = vld [vmem:[%s4161 + $0x30] sm:$0xff]
    %v4169 = vld [vmem:[%s4161 + $0x38] sm:$0xff]
    %v4170 = vld [vmem:[%s4161 + $0x40] sm:$0xff]
    %v4171 = vld [vmem:[%s4161 + $0x48] sm:$0xff]
    %v4172 = vld [vmem:[%s4161 + $0x50] sm:$0xff]
    %v4173 = vld [vmem:[%s4161 + $0x58] sm:$0xff]
    %v4174 = vld [vmem:[%s4161 + $0x60] sm:$0xff]
    %v4175 = vld [vmem:[%s4161 + $0x68] sm:$0xff]
    %v4176 = vld [vmem:[%s4161 + $0x70] sm:$0xff]
    %v4177 = vld [vmem:[%s4161 + $0x78] sm:$0xff]
    %v4178 = vld [vmem:[%s4161 + $0x80] sm:$0xff]
    %v4179 = vld [vmem:[%s4161 + $0x88] sm:$0xff]
    %v4180 = vld [vmem:[%s4161 + $0x90] sm:$0xff]
    %v4181 = vld [vmem:[%s4161 + $0x98] sm:$0xff]
    %v4182 = vld [vmem:[%s4161 + $0xa0] sm:$0xff]
    %v4183 = vld [vmem:[%s4161 + $0xa8] sm:$0xff]
    %v4184 = vld [vmem:[%s4161 + $0xb0] sm:$0xff]
    %v4185 = vld [vmem:[%s4161 + $0xb8] sm:$0xff]
    %v4186 = vld [vmem:[%s4161 + $0xc0] sm:$0xff]
    %v4187 = vld [vmem:[%s4161 + $0xc8] sm:$0xff]
    %v4188 = vld [vmem:[%s4161 + $0xd0] sm:$0xff]
    %v4189 = vld [vmem:[%s4161 + $0xd8] sm:$0xff]
    %v4190 = vld [vmem:[%s4161 + $0xe0] sm:$0xff]
    %v4191 = vld [vmem:[%s4161 + $0xe8] sm:$0xff]
    %v4192 = vld [vmem:[%s4161 + $0xf0] sm:$0xff]
    %v4193 = vld [vmem:[%s4161 + $0xf8] sm:$0xff]
    %4194 = vmatprep.subr.mxu0 %v4193
    %4195 = vmatpush1.msra.mxu0 %v4192
    %4196 = vmatprep.subr.mxu0 %v4191
    %4197 = vmatpush1.msra.mxu0 %v4190
    %4198 = vmatprep.subr.mxu0 %v4189
    %4199 = vmatpush1.msra.mxu0 %v4188
    %4200 = vmatprep.subr.mxu0 %v4187
    %4201 = vmatpush1.msra.mxu0 %v4186
    %4202 = vmatprep.subr.mxu0 %v4185
    %4203 = vmatpush1.msra.mxu0 %v4184
    %4204 = vmatprep.subr.mxu0 %v4183
    %4205 = vmatpush1.msra.mxu0 %v4182
    %4206 = vmatprep.subr.mxu0 %v4181
    %4207 = vmatpush1.msra.mxu0 %v4180
    %4208 = vmatprep.subr.mxu0 %v4179
    %4209 = vmatpush1.msra.mxu0 %v4178
    %4210 = vmatprep.subr.mxu0 %v4177
    %4211 = vmatpush1.msra.mxu0 %v4176
    %4212 = vmatprep.subr.mxu0 %v4175
    %4213 = vmatpush1.msra.mxu0 %v4174
    %4214 = vmatprep.subr.mxu0 %v4173
    %4215 = vmatpush1.msra.mxu0 %v4172
    %4216 = vmatprep.subr.mxu0 %v4171
    %4217 = vmatpush1.msra.mxu0 %v4170
    %4218 = vmatprep.subr.mxu0 %v4169
    %4219 = vmatpush1.msra.mxu0 %v4168
    %4220 = vmatprep.subr.mxu0 %v4167
    %4221 = vmatpush1.msra.mxu0 %v4166
    %4222 = vmatprep.subr.mxu0 %v4165
    %4223 = vmatpush1.msra.mxu0 %v4164
    %4224 = vmatprep.subr.mxu0 %v4163
    %4225 = vmatpush1.msra.mxu0 %v4162
    %4226 = vmatprep.subr.mxu0 0.0
    %4227 = vmatpush2.msra.mxu0 0.0
    %4228 = vmatprep.subr.mxu0 0.0
    %4229 = vmatpush2.msra.mxu0 0.0
    %4230 = vmatprep.subr.mxu0 0.0
    %4231 = vmatpush2.msra.mxu0 0.0
    %4232 = vmatprep.subr.mxu0 0.0
    %4233 = vmatpush2.msra.mxu0 0.0
    %4234 = vmatprep.subr.mxu0 0.0
    %4235 = vmatpush2.msra.mxu0 0.0
    %4236 = vmatprep.subr.mxu0 0.0
    %4237 = vmatpush2.msra.mxu0 0.0
    %4238 = vmatprep.subr.mxu0 0.0
    %4239 = vmatpush2.msra.mxu0 0.0
    %4240 = vmatprep.subr.mxu0 0.0
    %4241 = vmatpush2.msra.mxu0 0.0
    %4242 = vmatprep.subr.mxu0 0.0
    %4243 = vmatpush2.msra.mxu0 0.0
    %4244 = vmatprep.subr.mxu0 0.0
    %4245 = vmatpush2.msra.mxu0 0.0
    %4246 = vmatprep.subr.mxu0 0.0
    %4247 = vmatpush2.msra.mxu0 0.0
    %4248 = vmatprep.subr.mxu0 0.0
    %4249 = vmatpush2.msra.mxu0 0.0
    %4250 = vmatprep.subr.mxu0 0.0
    %4251 = vmatpush2.msra.mxu0 0.0
    %4252 = vmatprep.subr.mxu0 0.0
    %4253 = vmatpush2.msra.mxu0 0.0
    %4254 = vmatprep.subr.mxu0 0.0
    %4255 = vmatpush2.msra.mxu0 0.0
    %4256 = vmatprep.subr.mxu0 0.0
    %4257 = vmatpush2.msra.mxu0 0.0
    %4258 = vmatprep.mubr.f32.mxu0 0.0
    %4259 = vmatmul.mubr.f32.gmra.mxu0 %v4153
    %v4260 = vpop.f32.mrf.mxu0
    %v4261 = vadd.f32 0.0, %v4260
    %v4262 = vpop.f32.mrf.mxu0
    %v4263 = vadd.f32 0.0, %v4262
    %4264 = vmatprep.mubr.f32.mxu0 0.0
    %4265 = vmatmul.mubr.f32.gmra.mxu0 %v4158
    %v4266 = vpop.f32.mrf.mxu0
    %v4267 = vadd.f32 0.0, %v4266
    %v4268 = vpop.f32.mrf.mxu0
    %v4269 = vadd.f32 0.0, %v4268
    %4270 = vdwg.mxu0
    %v4271 = vadd.f32 %v4067, %v4261
    %v4272 = vadd.f32 %v4069, %v4263
    %v4273 = vadd.f32 %v4073, %v4267
    %v4274 = vadd.f32 %v4075, %v4269
    %v4275 = vld [vmem:[#allocation22] sm:$0x3]
    %v4277 = vlaneseq
    %v4278 = vshrl.u32 %v4277, 7
    %v4279 = vsub.s32 0, %v4278
    %v4280 = vrot.slane %v4275, %v4279
    %v4281 = vlaneseq
    %v4282 = vshrl.u32 %v4281, 7
    %v4283 = vsub.s32 1, %v4282
    %v4284 = vrot.slane %v4275, %v4283
    %v4287 = vadd.f32 %v4271, %v4280
    %v4288 = vadd.f32 %v4272, %v4284
    %v4289 = vadd.f32 %v4273, %v4280
    %v4290 = vadd.f32 %v4274, %v4284
    %v4291 = vmax.f32 %v4287, 0.0
    %v4292 = vmax.f32 %v4288, 0.0
    %v4293 = vmax.f32 %v4289, 0.0
    %v4294 = vmax.f32 %v4290, 0.0
    %v4295 = vld [vmem:[#allocation23] sm:$0x3]
    %v4296 = vld [vmem:[%s41] sm:$0xff]
    %v4297 = vld [vmem:[%s41 + $0x8] sm:$0xff]
    %v4298 = vld [vmem:[%s41 + $0x10] sm:$0xff]
    %v4299 = vld [vmem:[%s41 + $0x18] sm:$0xff]
    %v4300 = vld [vmem:[%s41 + $0x20] sm:$0xff]
    %v4301 = vld [vmem:[%s41 + $0x28] sm:$0xff]
    %v4302 = vld [vmem:[%s41 + $0x30] sm:$0xff]
    %v4303 = vld [vmem:[%s41 + $0x38] sm:$0xff]
    %v4304 = vld [vmem:[%s41 + $0x40] sm:$0xff]
    %v4305 = vld [vmem:[%s41 + $0x48] sm:$0xff]
    %v4306 = vld [vmem:[%s41 + $0x50] sm:$0xff]
    %v4307 = vld [vmem:[%s41 + $0x58] sm:$0xff]
    %v4308 = vld [vmem:[%s41 + $0x60] sm:$0xff]
    %v4309 = vld [vmem:[%s41 + $0x68] sm:$0xff]
    %v4310 = vld [vmem:[%s41 + $0x70] sm:$0xff]
    %v4311 = vld [vmem:[%s41 + $0x78] sm:$0xff]
    %v4312 = vld [vmem:[%s41 + $0x80] sm:$0xff]
    %v4313 = vld [vmem:[%s41 + $0x88] sm:$0xff]
    %v4314 = vld [vmem:[%s41 + $0x90] sm:$0xff]
    %v4315 = vld [vmem:[%s41 + $0x98] sm:$0xff]
    %v4316 = vld [vmem:[%s41 + $0xa0] sm:$0xff]
    %v4317 = vld [vmem:[%s41 + $0xa8] sm:$0xff]
    %v4318 = vld [vmem:[%s41 + $0xb0] sm:$0xff]
    %v4319 = vld [vmem:[%s41 + $0xb8] sm:$0xff]
    %v4320 = vld [vmem:[%s41 + $0xc0] sm:$0xff]
    %v4321 = vld [vmem:[%s41 + $0xc8] sm:$0xff]
    %v4322 = vld [vmem:[%s41 + $0xd0] sm:$0xff]
    %v4323 = vld [vmem:[%s41 + $0xd8] sm:$0xff]
    %v4324 = vld [vmem:[%s41 + $0xe0] sm:$0xff]
    %v4325 = vld [vmem:[%s41 + $0xe8] sm:$0xff]
    %v4326 = vld [vmem:[%s41 + $0xf0] sm:$0xff]
    %v4327 = vld [vmem:[%s41 + $0xf8] sm:$0xff]
    %v4328 = vld [vmem:[#allocation25] sm:$0xff]
    %v4329 = vld [vmem:[#allocation25 + $0x8] sm:$0xff]
    %v4330 = vld [vmem:[#allocation25 + $0x10] sm:$0xff]
    %v4331 = vld [vmem:[#allocation25 + $0x18] sm:$0xff]
    %v4332 = vld [vmem:[#allocation25 + $0x20] sm:$0xff]
    %v4333 = vld [vmem:[#allocation25 + $0x28] sm:$0xff]
    %v4334 = vld [vmem:[#allocation25 + $0x30] sm:$0xff]
    %v4335 = vld [vmem:[#allocation25 + $0x38] sm:$0xff]
    %v4336 = vadd.f32 %v4291, %v4293
    %v4337 = vrot.slane %v4336, 4
    %v4338 = vadd.f32 %v4336, %v4337
    %v4339 = vrot.slane %v4338, 2
    %v4340 = vadd.f32 %v4338, %v4339
    %v4341 = vrot.slane %v4340, 1
    %v4342 = vadd.f32 %v4340, %v4341
    %v4343 = vadd.f32 %v4292, %v4294
    %v4344 = vrot.slane %v4343, 4
    %v4345 = vadd.f32 %v4343, %v4344
    %v4346 = vrot.slane %v4345, 2
    %v4347 = vadd.f32 %v4345, %v4346
    %v4348 = vrot.slane %v4347, 1
    %v4349 = vadd.f32 %v4347, %v4348
    %4350 = vmatprep.subr.mxu0 0.0
    %4351 = vmatpush1.msra.mxu0 %v4311
    %4352 = vmatprep.subr.mxu0 0.0
    %4353 = vmatpush1.msra.mxu0 %v4310
    %4354 = vmatprep.subr.mxu0 0.0
    %4355 = vmatpush1.msra.mxu0 %v4309
    %4356 = vmatprep.subr.mxu0 0.0
    %4357 = vmatpush1.msra.mxu0 %v4308
    %4358 = vmatprep.subr.mxu0 0.0
    %4359 = vmatpush1.msra.mxu0 %v4307
    %4360 = vmatprep.subr.mxu0 0.0
    %4361 = vmatpush1.msra.mxu0 %v4306
    %4362 = vmatprep.subr.mxu0 0.0
    %4363 = vmatpush1.msra.mxu0 %v4305
    %4364 = vmatprep.subr.mxu0 0.0
    %4365 = vmatpush1.msra.mxu0 %v4304
    %4366 = vmatprep.subr.mxu0 0.0
    %4367 = vmatpush1.msra.mxu0 %v4303
    %4368 = vmatprep.subr.mxu0 0.0
    %4369 = vmatpush1.msra.mxu0 %v4302
    %4370 = vmatprep.subr.mxu0 0.0
    %4371 = vmatpush1.msra.mxu0 %v4301
    %4372 = vmatprep.subr.mxu0 0.0
    %4373 = vmatpush1.msra.mxu0 %v4300
    %4374 = vmatprep.subr.mxu0 0.0
    %4375 = vmatpush1.msra.mxu0 %v4299
    %4376 = vmatprep.subr.mxu0 0.0
    %4377 = vmatpush1.msra.mxu0 %v4298
    %4378 = vmatprep.subr.mxu0 0.0
    %4379 = vmatpush1.msra.mxu0 %v4297
    %4380 = vmatprep.subr.mxu0 0.0
    %4381 = vmatpush1.msra.mxu0 %v4296
    %4382 = vmatprep.subr.mxu0 0.0
    %4383 = vmatpush2.msra.mxu0 %v4327
    %4384 = vmatprep.subr.mxu0 0.0
    %4385 = vmatpush2.msra.mxu0 %v4326
    %4386 = vmatprep.subr.mxu0 0.0
    %4387 = vmatpush2.msra.mxu0 %v4325
    %4388 = vmatprep.subr.mxu0 0.0
    %4389 = vmatpush2.msra.mxu0 %v4324
    %4390 = vmatprep.subr.mxu0 0.0
    %4391 = vmatpush2.msra.mxu0 %v4323
    %4392 = vmatprep.subr.mxu0 0.0
    %4393 = vmatpush2.msra.mxu0 %v4322
    %4394 = vmatprep.subr.mxu0 0.0
    %4395 = vmatpush2.msra.mxu0 %v4321
    %4396 = vmatprep.subr.mxu0 0.0
    %4397 = vmatpush2.msra.mxu0 %v4320
    %4398 = vmatprep.subr.mxu0 0.0
    %4399 = vmatpush2.msra.mxu0 %v4319
    %4400 = vmatprep.subr.mxu0 0.0
    %4401 = vmatpush2.msra.mxu0 %v4318
    %4402 = vmatprep.subr.mxu0 0.0
    %4403 = vmatpush2.msra.mxu0 %v4317
    %4404 = vmatprep.subr.mxu0 0.0
    %4405 = vmatpush2.msra.mxu0 %v4316
    %4406 = vmatprep.subr.mxu0 0.0
    %4407 = vmatpush2.msra.mxu0 %v4315
    %4408 = vmatprep.subr.mxu0 0.0
    %4409 = vmatpush2.msra.mxu0 %v4314
    %4410 = vmatprep.subr.mxu0 0.0
    %4411 = vmatpush2.msra.mxu0 %v4313
    %4412 = vmatprep.subr.mxu0 0.0
    %4413 = vmatpush2.msra.mxu0 %v4312
    %4414 = vmatprep.mubr.f32.mxu0 %v4349
    %4415 = vmatmul.mubr.f32.gmra.mxu0 %v4342
    %v4416 = vpop.f32.mrf.mxu0
    %v4417 = vadd.f32 0.0, %v4416
    %v4418 = vpop.f32.mrf.mxu0
    %4419 = vdwg.mxu0
    %v4420 = vmul.f32 %v4417, 0.0078125
    %v4422 = vsel %vm2317, %v4420, 0
    %4424 = vmatprep.subr.mxu0 0.0
    %4425 = vmatpush1.msra.mxu0 0.0
    %4426 = vmatprep.subr.mxu0 0.0
    %4427 = vmatpush1.msra.mxu0 0.0
    %4428 = vmatprep.subr.mxu0 0.0
    %4429 = vmatpush1.msra.mxu0 0.0
    %4430 = vmatprep.subr.mxu0 0.0
    %4431 = vmatpush1.msra.mxu0 0.0
    %4432 = vmatprep.subr.mxu0 0.0
    %4433 = vmatpush1.msra.mxu0 0.0
    %4434 = vmatprep.subr.mxu0 0.0
    %4435 = vmatpush1.msra.mxu0 0.0
    %4436 = vmatprep.subr.mxu0 0.0
    %4437 = vmatpush1.msra.mxu0 0.0
    %4438 = vmatprep.subr.mxu0 0.0
    %4439 = vmatpush1.msra.mxu0 0.0
    %4440 = vmatprep.subr.mxu0 0.0
    %4441 = vmatpush1.msra.mxu0 0.0
    %4442 = vmatprep.subr.mxu0 0.0
    %4443 = vmatpush1.msra.mxu0 0.0
    %4444 = vmatprep.subr.mxu0 0.0
    %4445 = vmatpush1.msra.mxu0 0.0
    %4446 = vmatprep.subr.mxu0 0.0
    %4447 = vmatpush1.msra.mxu0 0.0
    %4448 = vmatprep.subr.mxu0 %v4335
    %4449 = vmatpush1.msra.mxu0 %v4334
    %4450 = vmatprep.subr.mxu0 %v4333
    %4451 = vmatpush1.msra.mxu0 %v4332
    %4452 = vmatprep.subr.mxu0 %v4331
    %4453 = vmatpush1.msra.mxu0 %v4330
    %4454 = vmatprep.subr.mxu0 %v4329
    %4455 = vmatpush1.msra.mxu0 %v4328
    %4456 = vmatprep.subr.mxu0 0.0
    %4457 = vmatpush2.msra.mxu0 0.0
    %4458 = vmatprep.subr.mxu0 0.0
    %4459 = vmatpush2.msra.mxu0 0.0
    %4460 = vmatprep.subr.mxu0 0.0
    %4461 = vmatpush2.msra.mxu0 0.0
    %4462 = vmatprep.subr.mxu0 0.0
    %4463 = vmatpush2.msra.mxu0 0.0
    %4464 = vmatprep.subr.mxu0 0.0
    %4465 = vmatpush2.msra.mxu0 0.0
    %4466 = vmatprep.subr.mxu0 0.0
    %4467 = vmatpush2.msra.mxu0 0.0
    %4468 = vmatprep.subr.mxu0 0.0
    %4469 = vmatpush2.msra.mxu0 0.0
    %4470 = vmatprep.subr.mxu0 0.0
    %4471 = vmatpush2.msra.mxu0 0.0
    %4472 = vmatprep.subr.mxu0 0.0
    %4473 = vmatpush2.msra.mxu0 0.0
    %4474 = vmatprep.subr.mxu0 0.0
    %4475 = vmatpush2.msra.mxu0 0.0
    %4476 = vmatprep.subr.mxu0 0.0
    %4477 = vmatpush2.msra.mxu0 0.0
    %4478 = vmatprep.subr.mxu0 0.0
    %4479 = vmatpush2.msra.mxu0 0.0
    %4480 = vmatprep.subr.mxu0 0.0
    %4481 = vmatpush2.msra.mxu0 0.0
    %4482 = vmatprep.subr.mxu0 0.0
    %4483 = vmatpush2.msra.mxu0 0.0
    %4484 = vmatprep.subr.mxu0 0.0
    %4485 = vmatpush2.msra.mxu0 0.0
    %4486 = vmatprep.subr.mxu0 0.0
    %4487 = vmatpush2.msra.mxu0 0.0
    %4488 = vmatprep.mubr.f32.mxu0 0.0
    %4489 = vmatmul.mubr.f32.gmra.mxu0 %v4422
    %v4490 = vpop.f32.mrf.mxu0
    %v4491 = vadd.f32 0.0, %v4490
    %v4492 = vpop.f32.mrf.mxu0
    %v4493 = vadd.f32 0.0, %v4492
    %4494 = vdwg.mxu0
    %v4495 = vlaneseq
    %v4496 = vshrl.u32 %v4495, 7
    %v4497 = vsub.s32 0, %v4496
    %v4498 = vrot.slane %v4491, %v4497
    %v4499 = vlaneseq
    %v4500 = vshrl.u32 %v4499, 7
    %v4501 = vsub.s32 0, %v4500
    %v4502 = vrot.slane %v4493, %v4501
    %v4503 = vsub.f32 %v4291, %v4498
    %v4504 = vsub.f32 %v4292, %v4502
    %v4505 = vsub.f32 %v4293, %v4498
    %v4506 = vsub.f32 %v4294, %v4502
    %v4507 = vmul.f32 %v4503, %v4503
    %v4508 = vmul.f32 %v4504, %v4504
    %v4509 = vmul.f32 %v4505, %v4505
    %v4510 = vmul.f32 %v4506, %v4506
    %v4511 = vadd.f32 %v4507, %v4509
    %v4512 = vrot.slane %v4511, 4
    %v4513 = vadd.f32 %v4511, %v4512
    %v4514 = vrot.slane %v4513, 2
    %v4515 = vadd.f32 %v4513, %v4514
    %v4516 = vrot.slane %v4515, 1
    %v4517 = vadd.f32 %v4515, %v4516
    %v4518 = vadd.f32 %v4508, %v4510
    %v4519 = vrot.slane %v4518, 4
    %v4520 = vadd.f32 %v4518, %v4519
    %v4521 = vrot.slane %v4520, 2
    %v4522 = vadd.f32 %v4520, %v4521
    %v4523 = vrot.slane %v4522, 1
    %v4524 = vadd.f32 %v4522, %v4523
    %4525 = vmatprep.subr.mxu0 0.0
    %4526 = vmatpush1.msra.mxu0 %v4311
    %4527 = vmatprep.subr.mxu0 0.0
    %4528 = vmatpush1.msra.mxu0 %v4310
    %4529 = vmatprep.subr.mxu0 0.0
    %4530 = vmatpush1.msra.mxu0 %v4309
    %4531 = vmatprep.subr.mxu0 0.0
    %4532 = vmatpush1.msra.mxu0 %v4308
    %4533 = vmatprep.subr.mxu0 0.0
    %4534 = vmatpush1.msra.mxu0 %v4307
    %4535 = vmatprep.subr.mxu0 0.0
    %4536 = vmatpush1.msra.mxu0 %v4306
    %4537 = vmatprep.subr.mxu0 0.0
    %4538 = vmatpush1.msra.mxu0 %v4305
    %4539 = vmatprep.subr.mxu0 0.0
    %4540 = vmatpush1.msra.mxu0 %v4304
    %4541 = vmatprep.subr.mxu0 0.0
    %4542 = vmatpush1.msra.mxu0 %v4303
    %4543 = vmatprep.subr.mxu0 0.0
    %4544 = vmatpush1.msra.mxu0 %v4302
    %4545 = vmatprep.subr.mxu0 0.0
    %4546 = vmatpush1.msra.mxu0 %v4301
    %4547 = vmatprep.subr.mxu0 0.0
    %4548 = vmatpush1.msra.mxu0 %v4300
    %4549 = vmatprep.subr.mxu0 0.0
    %4550 = vmatpush1.msra.mxu0 %v4299
    %4551 = vmatprep.subr.mxu0 0.0
    %4552 = vmatpush1.msra.mxu0 %v4298
    %4553 = vmatprep.subr.mxu0 0.0
    %4554 = vmatpush1.msra.mxu0 %v4297
    %4555 = vmatprep.subr.mxu0 0.0
    %4556 = vmatpush1.msra.mxu0 %v4296
    %4557 = vmatprep.subr.mxu0 0.0
    %4558 = vmatpush2.msra.mxu0 %v4327
    %4559 = vmatprep.subr.mxu0 0.0
    %4560 = vmatpush2.msra.mxu0 %v4326
    %4561 = vmatprep.subr.mxu0 0.0
    %4562 = vmatpush2.msra.mxu0 %v4325
    %4563 = vmatprep.subr.mxu0 0.0
    %4564 = vmatpush2.msra.mxu0 %v4324
    %4565 = vmatprep.subr.mxu0 0.0
    %4566 = vmatpush2.msra.mxu0 %v4323
    %4567 = vmatprep.subr.mxu0 0.0
    %4568 = vmatpush2.msra.mxu0 %v4322
    %4569 = vmatprep.subr.mxu0 0.0
    %4570 = vmatpush2.msra.mxu0 %v4321
    %4571 = vmatprep.subr.mxu0 0.0
    %4572 = vmatpush2.msra.mxu0 %v4320
    %4573 = vmatprep.subr.mxu0 0.0
    %4574 = vmatpush2.msra.mxu0 %v4319
    %4575 = vmatprep.subr.mxu0 0.0
    %4576 = vmatpush2.msra.mxu0 %v4318
    %4577 = vmatprep.subr.mxu0 0.0
    %4578 = vmatpush2.msra.mxu0 %v4317
    %4579 = vmatprep.subr.mxu0 0.0
    %4580 = vmatpush2.msra.mxu0 %v4316
    %4581 = vmatprep.subr.mxu0 0.0
    %4582 = vmatpush2.msra.mxu0 %v4315
    %4583 = vmatprep.subr.mxu0 0.0
    %4584 = vmatpush2.msra.mxu0 %v4314
    %4585 = vmatprep.subr.mxu0 0.0
    %4586 = vmatpush2.msra.mxu0 %v4313
    %4587 = vmatprep.subr.mxu0 0.0
    %4588 = vmatpush2.msra.mxu0 %v4312
    %4589 = vmatprep.mubr.f32.mxu0 %v4524
    %4590 = vmatmul.mubr.f32.gmra.mxu0 %v4517
    %v4591 = vpop.f32.mrf.mxu0
    %v4592 = vadd.f32 0.0, %v4591
    %v4593 = vpop.f32.mrf.mxu0
    %4594 = vdwg.mxu0
    %v4595 = vmul.f32 %v4592, 0.0078125
    %v4596 = vadd.f32 %v4595, 1e-05
    %v4597 = vrsqrt.pop %v4596
    %v4598 = vmul.f32 %v4295, %v4597
    %v4600 = vsel %vm2317, %v4598, 0
    %4602 = vmatprep.subr.mxu0 0.0
    %4603 = vmatpush1.msra.mxu0 0.0
    %4604 = vmatprep.subr.mxu0 0.0
    %4605 = vmatpush1.msra.mxu0 0.0
    %4606 = vmatprep.subr.mxu0 0.0
    %4607 = vmatpush1.msra.mxu0 0.0
    %4608 = vmatprep.subr.mxu0 0.0
    %4609 = vmatpush1.msra.mxu0 0.0
    %4610 = vmatprep.subr.mxu0 0.0
    %4611 = vmatpush1.msra.mxu0 0.0
    %4612 = vmatprep.subr.mxu0 0.0
    %4613 = vmatpush1.msra.mxu0 0.0
    %4614 = vmatprep.subr.mxu0 0.0
    %4615 = vmatpush1.msra.mxu0 0.0
    %4616 = vmatprep.subr.mxu0 0.0
    %4617 = vmatpush1.msra.mxu0 0.0
    %4618 = vmatprep.subr.mxu0 0.0
    %4619 = vmatpush1.msra.mxu0 0.0
    %4620 = vmatprep.subr.mxu0 0.0
    %4621 = vmatpush1.msra.mxu0 0.0
    %4622 = vmatprep.subr.mxu0 0.0
    %4623 = vmatpush1.msra.mxu0 0.0
    %4624 = vmatprep.subr.mxu0 0.0
    %4625 = vmatpush1.msra.mxu0 0.0
    %4626 = vmatprep.subr.mxu0 %v4335
    %4627 = vmatpush1.msra.mxu0 %v4334
    %4628 = vmatprep.subr.mxu0 %v4333
    %4629 = vmatpush1.msra.mxu0 %v4332
    %4630 = vmatprep.subr.mxu0 %v4331
    %4631 = vmatpush1.msra.mxu0 %v4330
    %4632 = vmatprep.subr.mxu0 %v4329
    %4633 = vmatpush1.msra.mxu0 %v4328
    %4634 = vmatprep.subr.mxu0 0.0
    %4635 = vmatpush2.msra.mxu0 0.0
    %4636 = vmatprep.subr.mxu0 0.0
    %4637 = vmatpush2.msra.mxu0 0.0
    %4638 = vmatprep.subr.mxu0 0.0
    %4639 = vmatpush2.msra.mxu0 0.0
    %4640 = vmatprep.subr.mxu0 0.0
    %4641 = vmatpush2.msra.mxu0 0.0
    %4642 = vmatprep.subr.mxu0 0.0
    %4643 = vmatpush2.msra.mxu0 0.0
    %4644 = vmatprep.subr.mxu0 0.0
    %4645 = vmatpush2.msra.mxu0 0.0
    %4646 = vmatprep.subr.mxu0 0.0
    %4647 = vmatpush2.msra.mxu0 0.0
    %4648 = vmatprep.subr.mxu0 0.0
    %4649 = vmatpush2.msra.mxu0 0.0
    %4650 = vmatprep.subr.mxu0 0.0
    %4651 = vmatpush2.msra.mxu0 0.0
    %4652 = vmatprep.subr.mxu0 0.0
    %4653 = vmatpush2.msra.mxu0 0.0
    %4654 = vmatprep.subr.mxu0 0.0
    %4655 = vmatpush2.msra.mxu0 0.0
    %4656 = vmatprep.subr.mxu0 0.0
    %4657 = vmatpush2.msra.mxu0 0.0
    %4658 = vmatprep.subr.mxu0 0.0
    %4659 = vmatpush2.msra.mxu0 0.0
    %4660 = vmatprep.subr.mxu0 0.0
    %4661 = vmatpush2.msra.mxu0 0.0
    %4662 = vmatprep.subr.mxu0 0.0
    %4663 = vmatpush2.msra.mxu0 0.0
    %4664 = vmatprep.subr.mxu0 0.0
    %4665 = vmatpush2.msra.mxu0 0.0
    %4666 = vmatprep.mubr.f32.mxu0 0.0
    %4667 = vmatmul.mubr.f32.gmra.mxu0 %v4600
    %v4668 = vpop.f32.mrf.mxu0
    %v4669 = vadd.f32 0.0, %v4668
    %v4670 = vpop.f32.mrf.mxu0
    %v4671 = vadd.f32 0.0, %v4670
    %4672 = vdwg.mxu0
    %v4673 = vlaneseq
    %v4674 = vshrl.u32 %v4673, 7
    %v4675 = vsub.s32 0, %v4674
    %v4676 = vrot.slane %v4669, %v4675
    %v4677 = vlaneseq
    %v4678 = vshrl.u32 %v4677, 7
    %v4679 = vsub.s32 0, %v4678
    %v4680 = vrot.slane %v4671, %v4679
    %v4681 = vmul.f32 %v4503, %v4676
    %v4682 = vmul.f32 %v4504, %v4680
    %v4683 = vmul.f32 %v4505, %v4676
    %v4684 = vmul.f32 %v4506, %v4680
    %v4686 = vrot.slane %v4295, 1
    %v4687 = vsel %vm2317, %v4686, 0
    %4689 = vmatprep.subr.mxu0 0.0
    %4690 = vmatpush1.msra.mxu0 0.0
    %4691 = vmatprep.subr.mxu0 0.0
    %4692 = vmatpush1.msra.mxu0 0.0
    %4693 = vmatprep.subr.mxu0 0.0
    %4694 = vmatpush1.msra.mxu0 0.0
    %4695 = vmatprep.subr.mxu0 0.0
    %4696 = vmatpush1.msra.mxu0 0.0
    %4697 = vmatprep.subr.mxu0 0.0
    %4698 = vmatpush1.msra.mxu0 0.0
    %4699 = vmatprep.subr.mxu0 0.0
    %4700 = vmatpush1.msra.mxu0 0.0
    %4701 = vmatprep.subr.mxu0 0.0
    %4702 = vmatpush1.msra.mxu0 0.0
    %4703 = vmatprep.subr.mxu0 0.0
    %4704 = vmatpush1.msra.mxu0 0.0
    %4705 = vmatprep.subr.mxu0 0.0
    %4706 = vmatpush1.msra.mxu0 0.0
    %4707 = vmatprep.subr.mxu0 0.0
    %4708 = vmatpush1.msra.mxu0 0.0
    %4709 = vmatprep.subr.mxu0 0.0
    %4710 = vmatpush1.msra.mxu0 0.0
    %4711 = vmatprep.subr.mxu0 0.0
    %4712 = vmatpush1.msra.mxu0 0.0
    %4713 = vmatprep.subr.mxu0 %v4335
    %4714 = vmatpush1.msra.mxu0 %v4334
    %4715 = vmatprep.subr.mxu0 %v4333
    %4716 = vmatpush1.msra.mxu0 %v4332
    %4717 = vmatprep.subr.mxu0 %v4331
    %4718 = vmatpush1.msra.mxu0 %v4330
    %4719 = vmatprep.subr.mxu0 %v4329
    %4720 = vmatpush1.msra.mxu0 %v4328
    %4721 = vmatprep.subr.mxu0 0.0
    %4722 = vmatpush2.msra.mxu0 0.0
    %4723 = vmatprep.subr.mxu0 0.0
    %4724 = vmatpush2.msra.mxu0 0.0
    %4725 = vmatprep.subr.mxu0 0.0
    %4726 = vmatpush2.msra.mxu0 0.0
    %4727 = vmatprep.subr.mxu0 0.0
    %4728 = vmatpush2.msra.mxu0 0.0
    %4729 = vmatprep.subr.mxu0 0.0
    %4730 = vmatpush2.msra.mxu0 0.0
    %4731 = vmatprep.subr.mxu0 0.0
    %4732 = vmatpush2.msra.mxu0 0.0
    %4733 = vmatprep.subr.mxu0 0.0
    %4734 = vmatpush2.msra.mxu0 0.0
    %4735 = vmatprep.subr.mxu0 0.0
    %4736 = vmatpush2.msra.mxu0 0.0
    %4737 = vmatprep.subr.mxu0 0.0
    %4738 = vmatpush2.msra.mxu0 0.0
    %4739 = vmatprep.subr.mxu0 0.0
    %4740 = vmatpush2.msra.mxu0 0.0
    %4741 = vmatprep.subr.mxu0 0.0
    %4742 = vmatpush2.msra.mxu0 0.0
    %4743 = vmatprep.subr.mxu0 0.0
    %4744 = vmatpush2.msra.mxu0 0.0
    %4745 = vmatprep.subr.mxu0 0.0
    %4746 = vmatpush2.msra.mxu0 0.0
    %4747 = vmatprep.subr.mxu0 0.0
    %4748 = vmatpush2.msra.mxu0 0.0
    %4749 = vmatprep.subr.mxu0 0.0
    %4750 = vmatpush2.msra.mxu0 0.0
    %4751 = vmatprep.subr.mxu0 0.0
    %4752 = vmatpush2.msra.mxu0 0.0
    %4753 = vmatprep.mubr.f32.mxu0 0.0
    %4754 = vmatmul.mubr.f32.gmra.mxu0 %v4687
    %v4755 = vpop.f32.mrf.mxu0
    %v4756 = vadd.f32 0.0, %v4755
    %v4757 = vpop.f32.mrf.mxu0
    %v4758 = vadd.f32 0.0, %v4757
    %4759 = vdwg.mxu0
    %v4760 = vlaneseq
    %v4761 = vshrl.u32 %v4760, 7
    %v4762 = vsub.s32 0, %v4761
    %v4763 = vrot.slane %v4756, %v4762
    %v4764 = vlaneseq
    %v4765 = vshrl.u32 %v4764, 7
    %v4766 = vsub.s32 0, %v4765
    %v4767 = vrot.slane %v4758, %v4766
    %v4768 = vadd.f32 %v4681, %v4763
    %v4769 = vadd.f32 %v4682, %v4767
    %v4770 = vadd.f32 %v4683, %v4763
    %v4771 = vadd.f32 %v4684, %v4767
    %s4772 = scalar_lea.vmem %s47, 512
    %v4773 = vld [vmem:[%s4772] sm:$0xff]
    %v4774 = vld [vmem:[%s4772 + $0x8] sm:$0xff]
    %v4775 = vld [vmem:[%s4772 + $0x10] sm:$0xff]
    %v4776 = vld [vmem:[%s4772 + $0x18] sm:$0xff]
    %v4777 = vld [vmem:[%s4772 + $0x20] sm:$0xff]
    %v4778 = vld [vmem:[%s4772 + $0x28] sm:$0xff]
    %v4779 = vld [vmem:[%s4772 + $0x30] sm:$0xff]
    %v4780 = vld [vmem:[%s4772 + $0x38] sm:$0xff]
    %v4781 = vld [vmem:[%s4772 + $0x40] sm:$0xff]
    %v4782 = vld [vmem:[%s4772 + $0x48] sm:$0xff]
    %v4783 = vld [vmem:[%s4772 + $0x50] sm:$0xff]
    %v4784 = vld [vmem:[%s4772 + $0x58] sm:$0xff]
    %v4785 = vld [vmem:[%s4772 + $0x60] sm:$0xff]
    %v4786 = vld [vmem:[%s4772 + $0x68] sm:$0xff]
    %v4787 = vld [vmem:[%s4772 + $0x70] sm:$0xff]
    %v4788 = vld [vmem:[%s4772 + $0x78] sm:$0xff]
    %v4789 = vld [vmem:[%s4772 + $0x80] sm:$0xff]
    %v4790 = vld [vmem:[%s4772 + $0x88] sm:$0xff]
    %v4791 = vld [vmem:[%s4772 + $0x90] sm:$0xff]
    %v4792 = vld [vmem:[%s4772 + $0x98] sm:$0xff]
    %v4793 = vld [vmem:[%s4772 + $0xa0] sm:$0xff]
    %v4794 = vld [vmem:[%s4772 + $0xa8] sm:$0xff]
    %v4795 = vld [vmem:[%s4772 + $0xb0] sm:$0xff]
    %v4796 = vld [vmem:[%s4772 + $0xb8] sm:$0xff]
    %v4797 = vld [vmem:[%s4772 + $0xc0] sm:$0xff]
    %v4798 = vld [vmem:[%s4772 + $0xc8] sm:$0xff]
    %v4799 = vld [vmem:[%s4772 + $0xd0] sm:$0xff]
    %v4800 = vld [vmem:[%s4772 + $0xd8] sm:$0xff]
    %v4801 = vld [vmem:[%s4772 + $0xe0] sm:$0xff]
    %v4802 = vld [vmem:[%s4772 + $0xe8] sm:$0xff]
    %v4803 = vld [vmem:[%s4772 + $0xf0] sm:$0xff]
    %v4804 = vld [vmem:[%s4772 + $0xf8] sm:$0xff]
    %v4805 = vld [vmem:[%s4772 + $0x100] sm:$0xff]
    %v4806 = vld [vmem:[%s4772 + $0x108] sm:$0xff]
    %v4807 = vld [vmem:[%s4772 + $0x110] sm:$0xff]
    %v4808 = vld [vmem:[%s4772 + $0x118] sm:$0xff]
    %v4809 = vld [vmem:[%s4772 + $0x120] sm:$0xff]
    %v4810 = vld [vmem:[%s4772 + $0x128] sm:$0xff]
    %v4811 = vld [vmem:[%s4772 + $0x130] sm:$0xff]
    %v4812 = vld [vmem:[%s4772 + $0x138] sm:$0xff]
    %v4813 = vld [vmem:[%s4772 + $0x140] sm:$0xff]
    %v4814 = vld [vmem:[%s4772 + $0x148] sm:$0xff]
    %v4815 = vld [vmem:[%s4772 + $0x150] sm:$0xff]
    %v4816 = vld [vmem:[%s4772 + $0x158] sm:$0xff]
    %v4817 = vld [vmem:[%s4772 + $0x160] sm:$0xff]
    %v4818 = vld [vmem:[%s4772 + $0x168] sm:$0xff]
    %v4819 = vld [vmem:[%s4772 + $0x170] sm:$0xff]
    %v4820 = vld [vmem:[%s4772 + $0x178] sm:$0xff]
    %v4821 = vld [vmem:[%s4772 + $0x180] sm:$0xff]
    %v4822 = vld [vmem:[%s4772 + $0x188] sm:$0xff]
    %v4823 = vld [vmem:[%s4772 + $0x190] sm:$0xff]
    %v4824 = vld [vmem:[%s4772 + $0x198] sm:$0xff]
    %v4825 = vld [vmem:[%s4772 + $0x1a0] sm:$0xff]
    %v4826 = vld [vmem:[%s4772 + $0x1a8] sm:$0xff]
    %v4827 = vld [vmem:[%s4772 + $0x1b0] sm:$0xff]
    %v4828 = vld [vmem:[%s4772 + $0x1b8] sm:$0xff]
    %v4829 = vld [vmem:[%s4772 + $0x1c0] sm:$0xff]
    %v4830 = vld [vmem:[%s4772 + $0x1c8] sm:$0xff]
    %v4831 = vld [vmem:[%s4772 + $0x1d0] sm:$0xff]
    %v4832 = vld [vmem:[%s4772 + $0x1d8] sm:$0xff]
    %v4833 = vld [vmem:[%s4772 + $0x1e0] sm:$0xff]
    %v4834 = vld [vmem:[%s4772 + $0x1e8] sm:$0xff]
    %v4835 = vld [vmem:[%s4772 + $0x1f0] sm:$0xff]
    %v4836 = vld [vmem:[%s4772 + $0x1f8] sm:$0xff]
    %v4837 = vld [vmem:[#allocation32] sm:$0xff]
    %v4838 = vld [vmem:[#allocation32 + $0x8] sm:$0xff]
    %v4840 = vsel %vm3011, %v4837, 0
    %v4843 = vsel %vm3011, %v4838, 0
    %4845 = vmatprep.subr.mxu0 0.0
    %4846 = vmatpush1.msra.mxu0 0.0
    %4847 = vmatprep.subr.mxu0 0.0
    %4848 = vmatpush1.msra.mxu0 0.0
    %4849 = vmatprep.subr.mxu0 0.0
    %4850 = vmatpush1.msra.mxu0 0.0
    %4851 = vmatprep.subr.mxu0 0.0
    %4852 = vmatpush1.msra.mxu0 0.0
    %4853 = vmatprep.subr.mxu0 0.0
    %4854 = vmatpush1.msra.mxu0 0.0
    %4855 = vmatprep.subr.mxu0 0.0
    %4856 = vmatpush1.msra.mxu0 0.0
    %4857 = vmatprep.subr.mxu0 0.0
    %4858 = vmatpush1.msra.mxu0 0.0
    %4859 = vmatprep.subr.mxu0 0.0
    %4860 = vmatpush1.msra.mxu0 0.0
    %4861 = vmatprep.subr.mxu0 0.0
    %4862 = vmatpush1.msra.mxu0 0.0
    %4863 = vmatprep.subr.mxu0 0.0
    %4864 = vmatpush1.msra.mxu0 0.0
    %4865 = vmatprep.subr.mxu0 0.0
    %4866 = vmatpush1.msra.mxu0 0.0
    %4867 = vmatprep.subr.mxu0 0.0
    %4868 = vmatpush1.msra.mxu0 0.0
    %4869 = vmatprep.subr.mxu0 0.0
    %4870 = vmatpush1.msra.mxu0 0.0
    %4871 = vmatprep.subr.mxu0 0.0
    %4872 = vmatpush1.msra.mxu0 0.0
    %4873 = vmatprep.subr.mxu0 %v4771
    %4874 = vmatpush1.msra.mxu0 %v4770
    %4875 = vmatprep.subr.mxu0 %v4769
    %4876 = vmatpush1.msra.mxu0 %v4768
    %4877 = vmatprep.subr.mxu0 0.0
    %4878 = vmatpush2.msra.mxu0 0.0
    %4879 = vmatprep.subr.mxu0 0.0
    %4880 = vmatpush2.msra.mxu0 0.0
    %4881 = vmatprep.subr.mxu0 0.0
    %4882 = vmatpush2.msra.mxu0 0.0
    %4883 = vmatprep.subr.mxu0 0.0
    %4884 = vmatpush2.msra.mxu0 0.0
    %4885 = vmatprep.subr.mxu0 0.0
    %4886 = vmatpush2.msra.mxu0 0.0
    %4887 = vmatprep.subr.mxu0 0.0
    %4888 = vmatpush2.msra.mxu0 0.0
    %4889 = vmatprep.subr.mxu0 0.0
    %4890 = vmatpush2.msra.mxu0 0.0
    %4891 = vmatprep.subr.mxu0 0.0
    %4892 = vmatpush2.msra.mxu0 0.0
    %4893 = vmatprep.subr.mxu0 0.0
    %4894 = vmatpush2.msra.mxu0 0.0
    %4895 = vmatprep.subr.mxu0 0.0
    %4896 = vmatpush2.msra.mxu0 0.0
    %4897 = vmatprep.subr.mxu0 0.0
    %4898 = vmatpush2.msra.mxu0 0.0
    %4899 = vmatprep.subr.mxu0 0.0
    %4900 = vmatpush2.msra.mxu0 0.0
    %4901 = vmatprep.subr.mxu0 0.0
    %4902 = vmatpush2.msra.mxu0 0.0
    %4903 = vmatprep.subr.mxu0 0.0
    %4904 = vmatpush2.msra.mxu0 0.0
    %4905 = vmatprep.subr.mxu0 0.0
    %4906 = vmatpush2.msra.mxu0 0.0
    %4907 = vmatprep.subr.mxu0 0.0
    %4908 = vmatpush2.msra.mxu0 0.0
    %4909 = vmatprep.mubr.f32.mxu0 0.0
    %4910 = vmatmul.mubr.f32.gmra.mxu0 %v4840
    %v4911 = vpop.f32.mrf.mxu0
    %v4912 = vadd.f32 0.0, %v4911
    %v4913 = vpop.f32.mrf.mxu0
    %v4914 = vadd.f32 0.0, %v4913
    %4915 = vmatprep.mubr.f32.mxu0 0.0
    %4916 = vmatmul.mubr.f32.gmra.mxu0 %v4843
    %v4917 = vpop.f32.mrf.mxu0
    %v4918 = vadd.f32 0.0, %v4917
    %v4919 = vpop.f32.mrf.mxu0
    %v4920 = vadd.f32 0.0, %v4919
    %4921 = vdwg.mxu0
    %v4922 = vld [vmem:[%s47] sm:$0xff]
    %v4923 = vld [vmem:[%s47 + $0x8] sm:$0xff]
    %v4924 = vld [vmem:[%s47 + $0x10] sm:$0xff]
    %v4925 = vld [vmem:[%s47 + $0x18] sm:$0xff]
    %v4926 = vld [vmem:[%s47 + $0x20] sm:$0xff]
    %v4927 = vld [vmem:[%s47 + $0x28] sm:$0xff]
    %v4928 = vld [vmem:[%s47 + $0x30] sm:$0xff]
    %v4929 = vld [vmem:[%s47 + $0x38] sm:$0xff]
    %v4930 = vld [vmem:[%s47 + $0x40] sm:$0xff]
    %v4931 = vld [vmem:[%s47 + $0x48] sm:$0xff]
    %v4932 = vld [vmem:[%s47 + $0x50] sm:$0xff]
    %v4933 = vld [vmem:[%s47 + $0x58] sm:$0xff]
    %v4934 = vld [vmem:[%s47 + $0x60] sm:$0xff]
    %v4935 = vld [vmem:[%s47 + $0x68] sm:$0xff]
    %v4936 = vld [vmem:[%s47 + $0x70] sm:$0xff]
    %v4937 = vld [vmem:[%s47 + $0x78] sm:$0xff]
    %v4938 = vld [vmem:[%s47 + $0x80] sm:$0xff]
    %v4939 = vld [vmem:[%s47 + $0x88] sm:$0xff]
    %v4940 = vld [vmem:[%s47 + $0x90] sm:$0xff]
    %v4941 = vld [vmem:[%s47 + $0x98] sm:$0xff]
    %v4942 = vld [vmem:[%s47 + $0xa0] sm:$0xff]
    %v4943 = vld [vmem:[%s47 + $0xa8] sm:$0xff]
    %v4944 = vld [vmem:[%s47 + $0xb0] sm:$0xff]
    %v4945 = vld [vmem:[%s47 + $0xb8] sm:$0xff]
    %v4946 = vld [vmem:[%s47 + $0xc0] sm:$0xff]
    %v4947 = vld [vmem:[%s47 + $0xc8] sm:$0xff]
    %v4948 = vld [vmem:[%s47 + $0xd0] sm:$0xff]
    %v4949 = vld [vmem:[%s47 + $0xd8] sm:$0xff]
    %v4950 = vld [vmem:[%s47 + $0xe0] sm:$0xff]
    %v4951 = vld [vmem:[%s47 + $0xe8] sm:$0xff]
    %v4952 = vld [vmem:[%s47 + $0xf0] sm:$0xff]
    %v4953 = vld [vmem:[%s47 + $0xf8] sm:$0xff]
    %v4954 = vld [vmem:[%s47 + $0x100] sm:$0xff]
    %v4955 = vld [vmem:[%s47 + $0x108] sm:$0xff]
    %v4956 = vld [vmem:[%s47 + $0x110] sm:$0xff]
    %v4957 = vld [vmem:[%s47 + $0x118] sm:$0xff]
    %v4958 = vld [vmem:[%s47 + $0x120] sm:$0xff]
    %v4959 = vld [vmem:[%s47 + $0x128] sm:$0xff]
    %v4960 = vld [vmem:[%s47 + $0x130] sm:$0xff]
    %v4961 = vld [vmem:[%s47 + $0x138] sm:$0xff]
    %v4962 = vld [vmem:[%s47 + $0x140] sm:$0xff]
    %v4963 = vld [vmem:[%s47 + $0x148] sm:$0xff]
    %v4964 = vld [vmem:[%s47 + $0x150] sm:$0xff]
    %v4965 = vld [vmem:[%s47 + $0x158] sm:$0xff]
    %v4966 = vld [vmem:[%s47 + $0x160] sm:$0xff]
    %v4967 = vld [vmem:[%s47 + $0x168] sm:$0xff]
    %v4968 = vld [vmem:[%s47 + $0x170] sm:$0xff]
    %v4969 = vld [vmem:[%s47 + $0x178] sm:$0xff]
    %v4970 = vld [vmem:[%s47 + $0x180] sm:$0xff]
    %v4971 = vld [vmem:[%s47 + $0x188] sm:$0xff]
    %v4972 = vld [vmem:[%s47 + $0x190] sm:$0xff]
    %v4973 = vld [vmem:[%s47 + $0x198] sm:$0xff]
    %v4974 = vld [vmem:[%s47 + $0x1a0] sm:$0xff]
    %v4975 = vld [vmem:[%s47 + $0x1a8] sm:$0xff]
    %v4976 = vld [vmem:[%s47 + $0x1b0] sm:$0xff]
    %v4977 = vld [vmem:[%s47 + $0x1b8] sm:$0xff]
    %v4978 = vld [vmem:[%s47 + $0x1c0] sm:$0xff]
    %v4979 = vld [vmem:[%s47 + $0x1c8] sm:$0xff]
    %v4980 = vld [vmem:[%s47 + $0x1d0] sm:$0xff]
    %v4981 = vld [vmem:[%s47 + $0x1d8] sm:$0xff]
    %v4982 = vld [vmem:[%s47 + $0x1e0] sm:$0xff]
    %v4983 = vld [vmem:[%s47 + $0x1e8] sm:$0xff]
    %v4984 = vld [vmem:[%s47 + $0x1f0] sm:$0xff]
    %v4985 = vld [vmem:[%s47 + $0x1f8] sm:$0xff]
    %4986 = vmatprep.subr.mxu0 %v4953
    %4987 = vmatpush1.msra.mxu0 %v4952
    %4988 = vmatprep.subr.mxu0 %v4951
    %4989 = vmatpush1.msra.mxu0 %v4950
    %4990 = vmatprep.subr.mxu0 %v4949
    %4991 = vmatpush1.msra.mxu0 %v4948
    %4992 = vmatprep.subr.mxu0 %v4947
    %4993 = vmatpush1.msra.mxu0 %v4946
    %4994 = vmatprep.subr.mxu0 %v4945
    %4995 = vmatpush1.msra.mxu0 %v4944
    %4996 = vmatprep.subr.mxu0 %v4943
    %4997 = vmatpush1.msra.mxu0 %v4942
    %4998 = vmatprep.subr.mxu0 %v4941
    %4999 = vmatpush1.msra.mxu0 %v4940
    %5000 = vmatprep.subr.mxu0 %v4939
    %5001 = vmatpush1.msra.mxu0 %v4938
    %5002 = vmatprep.subr.mxu0 %v4937
    %5003 = vmatpush1.msra.mxu0 %v4936
    %5004 = vmatprep.subr.mxu0 %v4935
    %5005 = vmatpush1.msra.mxu0 %v4934
    %5006 = vmatprep.subr.mxu0 %v4933
    %5007 = vmatpush1.msra.mxu0 %v4932
    %5008 = vmatprep.subr.mxu0 %v4931
    %5009 = vmatpush1.msra.mxu0 %v4930
    %5010 = vmatprep.subr.mxu0 %v4929
    %5011 = vmatpush1.msra.mxu0 %v4928
    %5012 = vmatprep.subr.mxu0 %v4927
    %5013 = vmatpush1.msra.mxu0 %v4926
    %5014 = vmatprep.subr.mxu0 %v4925
    %5015 = vmatpush1.msra.mxu0 %v4924
    %5016 = vmatprep.subr.mxu0 %v4923
    %5017 = vmatpush1.msra.mxu0 %v4922
    %5018 = vmatprep.subr.mxu0 %v4985
    %5019 = vmatpush2.msra.mxu0 %v4984
    %5020 = vmatprep.subr.mxu0 %v4983
    %5021 = vmatpush2.msra.mxu0 %v4982
    %5022 = vmatprep.subr.mxu0 %v4981
    %5023 = vmatpush2.msra.mxu0 %v4980
    %5024 = vmatprep.subr.mxu0 %v4979
    %5025 = vmatpush2.msra.mxu0 %v4978
    %5026 = vmatprep.subr.mxu0 %v4977
    %5027 = vmatpush2.msra.mxu0 %v4976
    %5028 = vmatprep.subr.mxu0 %v4975
    %5029 = vmatpush2.msra.mxu0 %v4974
    %5030 = vmatprep.subr.mxu0 %v4973
    %5031 = vmatpush2.msra.mxu0 %v4972
    %5032 = vmatprep.subr.mxu0 %v4971
    %5033 = vmatpush2.msra.mxu0 %v4970
    %5034 = vmatprep.subr.mxu0 %v4969
    %5035 = vmatpush2.msra.mxu0 %v4968
    %5036 = vmatprep.subr.mxu0 %v4967
    %5037 = vmatpush2.msra.mxu0 %v4966
    %5038 = vmatprep.subr.mxu0 %v4965
    %5039 = vmatpush2.msra.mxu0 %v4964
    %5040 = vmatprep.subr.mxu0 %v4963
    %5041 = vmatpush2.msra.mxu0 %v4962
    %5042 = vmatprep.subr.mxu0 %v4961
    %5043 = vmatpush2.msra.mxu0 %v4960
    %5044 = vmatprep.subr.mxu0 %v4959
    %5045 = vmatpush2.msra.mxu0 %v4958
    %5046 = vmatprep.subr.mxu0 %v4957
    %5047 = vmatpush2.msra.mxu0 %v4956
    %5048 = vmatprep.subr.mxu0 %v4955
    %5049 = vmatpush2.msra.mxu0 %v4954
    %5050 = vmatprep.mubr.f32.mxu0 %v4914
    %5051 = vmatmul.mubr.f32.gmra.mxu0 %v4912
    %v5052 = vpop.f32.mrf.mxu0
    %v5053 = vadd.f32 0.0, %v5052
    %v5054 = vpop.f32.mrf.mxu0
    %v5055 = vadd.f32 0.0, %v5054
    %5056 = vmatprep.mubr.f32.mxu0 %v4920
    %5057 = vmatmul.mubr.f32.gmra.mxu0 %v4918
    %v5058 = vpop.f32.mrf.mxu0
    %v5059 = vadd.f32 0.0, %v5058
    %v5060 = vpop.f32.mrf.mxu0
    %v5061 = vadd.f32 0.0, %v5060
    %5062 = vdwg.mxu0
    %5063 = vmatprep.subr.mxu0 %v4804
    %5064 = vmatpush1.msra.mxu0 %v4803
    %5065 = vmatprep.subr.mxu0 %v4802
    %5066 = vmatpush1.msra.mxu0 %v4801
    %5067 = vmatprep.subr.mxu0 %v4800
    %5068 = vmatpush1.msra.mxu0 %v4799
    %5069 = vmatprep.subr.mxu0 %v4798
    %5070 = vmatpush1.msra.mxu0 %v4797
    %5071 = vmatprep.subr.mxu0 %v4796
    %5072 = vmatpush1.msra.mxu0 %v4795
    %5073 = vmatprep.subr.mxu0 %v4794
    %5074 = vmatpush1.msra.mxu0 %v4793
    %5075 = vmatprep.subr.mxu0 %v4792
    %5076 = vmatpush1.msra.mxu0 %v4791
    %5077 = vmatprep.subr.mxu0 %v4790
    %5078 = vmatpush1.msra.mxu0 %v4789
    %5079 = vmatprep.subr.mxu0 %v4788
    %5080 = vmatpush1.msra.mxu0 %v4787
    %5081 = vmatprep.subr.mxu0 %v4786
    %5082 = vmatpush1.msra.mxu0 %v4785
    %5083 = vmatprep.subr.mxu0 %v4784
    %5084 = vmatpush1.msra.mxu0 %v4783
    %5085 = vmatprep.subr.mxu0 %v4782
    %5086 = vmatpush1.msra.mxu0 %v4781
    %5087 = vmatprep.subr.mxu0 %v4780
    %5088 = vmatpush1.msra.mxu0 %v4779
    %5089 = vmatprep.subr.mxu0 %v4778
    %5090 = vmatpush1.msra.mxu0 %v4777
    %5091 = vmatprep.subr.mxu0 %v4776
    %5092 = vmatpush1.msra.mxu0 %v4775
    %5093 = vmatprep.subr.mxu0 %v4774
    %5094 = vmatpush1.msra.mxu0 %v4773
    %5095 = vmatprep.subr.mxu0 %v4836
    %5096 = vmatpush2.msra.mxu0 %v4835
    %5097 = vmatprep.subr.mxu0 %v4834
    %5098 = vmatpush2.msra.mxu0 %v4833
    %5099 = vmatprep.subr.mxu0 %v4832
    %5100 = vmatpush2.msra.mxu0 %v4831
    %5101 = vmatprep.subr.mxu0 %v4830
    %5102 = vmatpush2.msra.mxu0 %v4829
    %5103 = vmatprep.subr.mxu0 %v4828
    %5104 = vmatpush2.msra.mxu0 %v4827
    %5105 = vmatprep.subr.mxu0 %v4826
    %5106 = vmatpush2.msra.mxu0 %v4825
    %5107 = vmatprep.subr.mxu0 %v4824
    %5108 = vmatpush2.msra.mxu0 %v4823
    %5109 = vmatprep.subr.mxu0 %v4822
    %5110 = vmatpush2.msra.mxu0 %v4821
    %5111 = vmatprep.subr.mxu0 %v4820
    %5112 = vmatpush2.msra.mxu0 %v4819
    %5113 = vmatprep.subr.mxu0 %v4818
    %5114 = vmatpush2.msra.mxu0 %v4817
    %5115 = vmatprep.subr.mxu0 %v4816
    %5116 = vmatpush2.msra.mxu0 %v4815
    %5117 = vmatprep.subr.mxu0 %v4814
    %5118 = vmatpush2.msra.mxu0 %v4813
    %5119 = vmatprep.subr.mxu0 %v4812
    %5120 = vmatpush2.msra.mxu0 %v4811
    %5121 = vmatprep.subr.mxu0 %v4810
    %5122 = vmatpush2.msra.mxu0 %v4809
    %5123 = vmatprep.subr.mxu0 %v4808
    %5124 = vmatpush2.msra.mxu0 %v4807
    %5125 = vmatprep.subr.mxu0 %v4806
    %5126 = vmatpush2.msra.mxu0 %v4805
    %5127 = vmatprep.mubr.f32.mxu0 %v4769
    %5128 = vmatmul.mubr.f32.gmra.mxu0 %v4768
    %v5129 = vpop.f32.mrf.mxu0
    %v5130 = vadd.f32 %v5053, %v5129
    %v5131 = vpop.f32.mrf.mxu0
    %v5132 = vadd.f32 %v5055, %v5131
    %5133 = vmatprep.mubr.f32.mxu0 %v4771
    %5134 = vmatmul.mubr.f32.gmra.mxu0 %v4770
    %v5135 = vpop.f32.mrf.mxu0
    %v5136 = vadd.f32 %v5059, %v5135
    %v5137 = vpop.f32.mrf.mxu0
    %v5138 = vadd.f32 %v5061, %v5137
    %5139 = vdwg.mxu0
    %s5140 = scalar_lea.vmem [#allocation32], 16
    %v5141 = vld [vmem:[%s5140] sm:$0xff]
    %v5142 = vld [vmem:[%s5140 + $0x8] sm:$0xff]
    %v5144 = vsel %vm3011, %v5141, 0
    %v5147 = vsel %vm3011, %v5142, 0
    %5149 = vmatprep.subr.mxu0 0.0
    %5150 = vmatpush1.msra.mxu0 0.0
    %5151 = vmatprep.subr.mxu0 0.0
    %5152 = vmatpush1.msra.mxu0 0.0
    %5153 = vmatprep.subr.mxu0 0.0
    %5154 = vmatpush1.msra.mxu0 0.0
    %5155 = vmatprep.subr.mxu0 0.0
    %5156 = vmatpush1.msra.mxu0 0.0
    %5157 = vmatprep.subr.mxu0 0.0
    %5158 = vmatpush1.msra.mxu0 0.0
    %5159 = vmatprep.subr.mxu0 0.0
    %5160 = vmatpush1.msra.mxu0 0.0
    %5161 = vmatprep.subr.mxu0 0.0
    %5162 = vmatpush1.msra.mxu0 0.0
    %5163 = vmatprep.subr.mxu0 0.0
    %5164 = vmatpush1.msra.mxu0 0.0
    %5165 = vmatprep.subr.mxu0 0.0
    %5166 = vmatpush1.msra.mxu0 0.0
    %5167 = vmatprep.subr.mxu0 0.0
    %5168 = vmatpush1.msra.mxu0 0.0
    %5169 = vmatprep.subr.mxu0 0.0
    %5170 = vmatpush1.msra.mxu0 0.0
    %5171 = vmatprep.subr.mxu0 0.0
    %5172 = vmatpush1.msra.mxu0 0.0
    %5173 = vmatprep.subr.mxu0 0.0
    %5174 = vmatpush1.msra.mxu0 0.0
    %5175 = vmatprep.subr.mxu0 0.0
    %5176 = vmatpush1.msra.mxu0 0.0
    %5177 = vmatprep.subr.mxu0 %v4771
    %5178 = vmatpush1.msra.mxu0 %v4770
    %5179 = vmatprep.subr.mxu0 %v4769
    %5180 = vmatpush1.msra.mxu0 %v4768
    %5181 = vmatprep.subr.mxu0 0.0
    %5182 = vmatpush2.msra.mxu0 0.0
    %5183 = vmatprep.subr.mxu0 0.0
    %5184 = vmatpush2.msra.mxu0 0.0
    %5185 = vmatprep.subr.mxu0 0.0
    %5186 = vmatpush2.msra.mxu0 0.0
    %5187 = vmatprep.subr.mxu0 0.0
    %5188 = vmatpush2.msra.mxu0 0.0
    %5189 = vmatprep.subr.mxu0 0.0
    %5190 = vmatpush2.msra.mxu0 0.0
    %5191 = vmatprep.subr.mxu0 0.0
    %5192 = vmatpush2.msra.mxu0 0.0
    %5193 = vmatprep.subr.mxu0 0.0
    %5194 = vmatpush2.msra.mxu0 0.0
    %5195 = vmatprep.subr.mxu0 0.0
    %5196 = vmatpush2.msra.mxu0 0.0
    %5197 = vmatprep.subr.mxu0 0.0
    %5198 = vmatpush2.msra.mxu0 0.0
    %5199 = vmatprep.subr.mxu0 0.0
    %5200 = vmatpush2.msra.mxu0 0.0
    %5201 = vmatprep.subr.mxu0 0.0
    %5202 = vmatpush2.msra.mxu0 0.0
    %5203 = vmatprep.subr.mxu0 0.0
    %5204 = vmatpush2.msra.mxu0 0.0
    %5205 = vmatprep.subr.mxu0 0.0
    %5206 = vmatpush2.msra.mxu0 0.0
    %5207 = vmatprep.subr.mxu0 0.0
    %5208 = vmatpush2.msra.mxu0 0.0
    %5209 = vmatprep.subr.mxu0 0.0
    %5210 = vmatpush2.msra.mxu0 0.0
    %5211 = vmatprep.subr.mxu0 0.0
    %5212 = vmatpush2.msra.mxu0 0.0
    %5213 = vmatprep.mubr.f32.mxu0 0.0
    %5214 = vmatmul.mubr.f32.gmra.mxu0 %v5144
    %v5215 = vpop.f32.mrf.mxu0
    %v5216 = vadd.f32 0.0, %v5215
    %v5217 = vpop.f32.mrf.mxu0
    %v5218 = vadd.f32 0.0, %v5217
    %5219 = vmatprep.mubr.f32.mxu0 0.0
    %5220 = vmatmul.mubr.f32.gmra.mxu0 %v5147
    %v5221 = vpop.f32.mrf.mxu0
    %v5222 = vadd.f32 0.0, %v5221
    %v5223 = vpop.f32.mrf.mxu0
    %v5224 = vadd.f32 0.0, %v5223
    %5225 = vdwg.mxu0
    %s5226 = scalar_lea.vmem %s47, 1024
    %v5227 = vld [vmem:[%s5226] sm:$0xff]
    %v5228 = vld [vmem:[%s5226 + $0x8] sm:$0xff]
    %v5229 = vld [vmem:[%s5226 + $0x10] sm:$0xff]
    %v5230 = vld [vmem:[%s5226 + $0x18] sm:$0xff]
    %v5231 = vld [vmem:[%s5226 + $0x20] sm:$0xff]
    %v5232 = vld [vmem:[%s5226 + $0x28] sm:$0xff]
    %v5233 = vld [vmem:[%s5226 + $0x30] sm:$0xff]
    %v5234 = vld [vmem:[%s5226 + $0x38] sm:$0xff]
    %v5235 = vld [vmem:[%s5226 + $0x40] sm:$0xff]
    %v5236 = vld [vmem:[%s5226 + $0x48] sm:$0xff]
    %v5237 = vld [vmem:[%s5226 + $0x50] sm:$0xff]
    %v5238 = vld [vmem:[%s5226 + $0x58] sm:$0xff]
    %v5239 = vld [vmem:[%s5226 + $0x60] sm:$0xff]
    %v5240 = vld [vmem:[%s5226 + $0x68] sm:$0xff]
    %v5241 = vld [vmem:[%s5226 + $0x70] sm:$0xff]
    %v5242 = vld [vmem:[%s5226 + $0x78] sm:$0xff]
    %v5243 = vld [vmem:[%s5226 + $0x80] sm:$0xff]
    %v5244 = vld [vmem:[%s5226 + $0x88] sm:$0xff]
    %v5245 = vld [vmem:[%s5226 + $0x90] sm:$0xff]
    %v5246 = vld [vmem:[%s5226 + $0x98] sm:$0xff]
    %v5247 = vld [vmem:[%s5226 + $0xa0] sm:$0xff]
    %v5248 = vld [vmem:[%s5226 + $0xa8] sm:$0xff]
    %v5249 = vld [vmem:[%s5226 + $0xb0] sm:$0xff]
    %v5250 = vld [vmem:[%s5226 + $0xb8] sm:$0xff]
    %v5251 = vld [vmem:[%s5226 + $0xc0] sm:$0xff]
    %v5252 = vld [vmem:[%s5226 + $0xc8] sm:$0xff]
    %v5253 = vld [vmem:[%s5226 + $0xd0] sm:$0xff]
    %v5254 = vld [vmem:[%s5226 + $0xd8] sm:$0xff]
    %v5255 = vld [vmem:[%s5226 + $0xe0] sm:$0xff]
    %v5256 = vld [vmem:[%s5226 + $0xe8] sm:$0xff]
    %v5257 = vld [vmem:[%s5226 + $0xf0] sm:$0xff]
    %v5258 = vld [vmem:[%s5226 + $0xf8] sm:$0xff]
    %v5259 = vld [vmem:[%s5226 + $0x100] sm:$0xff]
    %v5260 = vld [vmem:[%s5226 + $0x108] sm:$0xff]
    %v5261 = vld [vmem:[%s5226 + $0x110] sm:$0xff]
    %v5262 = vld [vmem:[%s5226 + $0x118] sm:$0xff]
    %v5263 = vld [vmem:[%s5226 + $0x120] sm:$0xff]
    %v5264 = vld [vmem:[%s5226 + $0x128] sm:$0xff]
    %v5265 = vld [vmem:[%s5226 + $0x130] sm:$0xff]
    %v5266 = vld [vmem:[%s5226 + $0x138] sm:$0xff]
    %v5267 = vld [vmem:[%s5226 + $0x140] sm:$0xff]
    %v5268 = vld [vmem:[%s5226 + $0x148] sm:$0xff]
    %v5269 = vld [vmem:[%s5226 + $0x150] sm:$0xff]
    %v5270 = vld [vmem:[%s5226 + $0x158] sm:$0xff]
    %v5271 = vld [vmem:[%s5226 + $0x160] sm:$0xff]
    %v5272 = vld [vmem:[%s5226 + $0x168] sm:$0xff]
    %v5273 = vld [vmem:[%s5226 + $0x170] sm:$0xff]
    %v5274 = vld [vmem:[%s5226 + $0x178] sm:$0xff]
    %v5275 = vld [vmem:[%s5226 + $0x180] sm:$0xff]
    %v5276 = vld [vmem:[%s5226 + $0x188] sm:$0xff]
    %v5277 = vld [vmem:[%s5226 + $0x190] sm:$0xff]
    %v5278 = vld [vmem:[%s5226 + $0x198] sm:$0xff]
    %v5279 = vld [vmem:[%s5226 + $0x1a0] sm:$0xff]
    %v5280 = vld [vmem:[%s5226 + $0x1a8] sm:$0xff]
    %v5281 = vld [vmem:[%s5226 + $0x1b0] sm:$0xff]
    %v5282 = vld [vmem:[%s5226 + $0x1b8] sm:$0xff]
    %v5283 = vld [vmem:[%s5226 + $0x1c0] sm:$0xff]
    %v5284 = vld [vmem:[%s5226 + $0x1c8] sm:$0xff]
    %v5285 = vld [vmem:[%s5226 + $0x1d0] sm:$0xff]
    %v5286 = vld [vmem:[%s5226 + $0x1d8] sm:$0xff]
    %v5287 = vld [vmem:[%s5226 + $0x1e0] sm:$0xff]
    %v5288 = vld [vmem:[%s5226 + $0x1e8] sm:$0xff]
    %v5289 = vld [vmem:[%s5226 + $0x1f0] sm:$0xff]
    %v5290 = vld [vmem:[%s5226 + $0x1f8] sm:$0xff]
    %5291 = vmatprep.subr.mxu0 %v5258
    %5292 = vmatpush1.msra.mxu0 %v5257
    %5293 = vmatprep.subr.mxu0 %v5256
    %5294 = vmatpush1.msra.mxu0 %v5255
    %5295 = vmatprep.subr.mxu0 %v5254
    %5296 = vmatpush1.msra.mxu0 %v5253
    %5297 = vmatprep.subr.mxu0 %v5252
    %5298 = vmatpush1.msra.mxu0 %v5251
    %5299 = vmatprep.subr.mxu0 %v5250
    %5300 = vmatpush1.msra.mxu0 %v5249
    %5301 = vmatprep.subr.mxu0 %v5248
    %5302 = vmatpush1.msra.mxu0 %v5247
    %5303 = vmatprep.subr.mxu0 %v5246
    %5304 = vmatpush1.msra.mxu0 %v5245
    %5305 = vmatprep.subr.mxu0 %v5244
    %5306 = vmatpush1.msra.mxu0 %v5243
    %5307 = vmatprep.subr.mxu0 %v5242
    %5308 = vmatpush1.msra.mxu0 %v5241
    %5309 = vmatprep.subr.mxu0 %v5240
    %5310 = vmatpush1.msra.mxu0 %v5239
    %5311 = vmatprep.subr.mxu0 %v5238
    %5312 = vmatpush1.msra.mxu0 %v5237
    %5313 = vmatprep.subr.mxu0 %v5236
    %5314 = vmatpush1.msra.mxu0 %v5235
    %5315 = vmatprep.subr.mxu0 %v5234
    %5316 = vmatpush1.msra.mxu0 %v5233
    %5317 = vmatprep.subr.mxu0 %v5232
    %5318 = vmatpush1.msra.mxu0 %v5231
    %5319 = vmatprep.subr.mxu0 %v5230
    %5320 = vmatpush1.msra.mxu0 %v5229
    %5321 = vmatprep.subr.mxu0 %v5228
    %5322 = vmatpush1.msra.mxu0 %v5227
    %5323 = vmatprep.subr.mxu0 %v5290
    %5324 = vmatpush2.msra.mxu0 %v5289
    %5325 = vmatprep.subr.mxu0 %v5288
    %5326 = vmatpush2.msra.mxu0 %v5287
    %5327 = vmatprep.subr.mxu0 %v5286
    %5328 = vmatpush2.msra.mxu0 %v5285
    %5329 = vmatprep.subr.mxu0 %v5284
    %5330 = vmatpush2.msra.mxu0 %v5283
    %5331 = vmatprep.subr.mxu0 %v5282
    %5332 = vmatpush2.msra.mxu0 %v5281
    %5333 = vmatprep.subr.mxu0 %v5280
    %5334 = vmatpush2.msra.mxu0 %v5279
    %5335 = vmatprep.subr.mxu0 %v5278
    %5336 = vmatpush2.msra.mxu0 %v5277
    %5337 = vmatprep.subr.mxu0 %v5276
    %5338 = vmatpush2.msra.mxu0 %v5275
    %5339 = vmatprep.subr.mxu0 %v5274
    %5340 = vmatpush2.msra.mxu0 %v5273
    %5341 = vmatprep.subr.mxu0 %v5272
    %5342 = vmatpush2.msra.mxu0 %v5271
    %5343 = vmatprep.subr.mxu0 %v5270
    %5344 = vmatpush2.msra.mxu0 %v5269
    %5345 = vmatprep.subr.mxu0 %v5268
    %5346 = vmatpush2.msra.mxu0 %v5267
    %5347 = vmatprep.subr.mxu0 %v5266
    %5348 = vmatpush2.msra.mxu0 %v5265
    %5349 = vmatprep.subr.mxu0 %v5264
    %5350 = vmatpush2.msra.mxu0 %v5263
    %5351 = vmatprep.subr.mxu0 %v5262
    %5352 = vmatpush2.msra.mxu0 %v5261
    %5353 = vmatprep.subr.mxu0 %v5260
    %5354 = vmatpush2.msra.mxu0 %v5259
    %5355 = vmatprep.mubr.f32.mxu0 %v5218
    %5356 = vmatmul.mubr.f32.gmra.mxu0 %v5216
    %v5357 = vpop.f32.mrf.mxu0
    %v5358 = vadd.f32 0.0, %v5357
    %v5359 = vpop.f32.mrf.mxu0
    %v5360 = vadd.f32 0.0, %v5359
    %5361 = vmatprep.mubr.f32.mxu0 %v5224
    %5362 = vmatmul.mubr.f32.gmra.mxu0 %v5222
    %v5363 = vpop.f32.mrf.mxu0
    %v5364 = vadd.f32 0.0, %v5363
    %v5365 = vpop.f32.mrf.mxu0
    %v5366 = vadd.f32 0.0, %v5365
    %5367 = vdwg.mxu0
    %v5368 = vadd.f32 %v5130, %v5358
    %v5369 = vadd.f32 %v5132, %v5360
    %v5370 = vadd.f32 %v5136, %v5364
    %v5371 = vadd.f32 %v5138, %v5366
    %v5372 = vld [vmem:[#allocation28] sm:$0x3]
    %v5374 = vlaneseq
    %v5375 = vshrl.u32 %v5374, 7
    %v5376 = vsub.s32 0, %v5375
    %v5377 = vrot.slane %v5372, %v5376
    %v5378 = vlaneseq
    %v5379 = vshrl.u32 %v5378, 7
    %v5380 = vsub.s32 1, %v5379
    %v5381 = vrot.slane %v5372, %v5380
    %v5384 = vadd.f32 %v5368, %v5377
    %v5385 = vadd.f32 %v5369, %v5381
    %v5386 = vadd.f32 %v5370, %v5377
    %v5387 = vadd.f32 %v5371, %v5381
    %v5388 = vmax.f32 %v5384, 0.0
    %v5389 = vmax.f32 %v5385, 0.0
    %v5390 = vmax.f32 %v5386, 0.0
    %v5391 = vmax.f32 %v5387, 0.0
    %v5392 = vld [vmem:[#allocation29] sm:$0x3]
    %v5393 = vld [vmem:[%s53] sm:$0xff]
    %v5394 = vld [vmem:[%s53 + $0x8] sm:$0xff]
    %v5395 = vld [vmem:[%s53 + $0x10] sm:$0xff]
    %v5396 = vld [vmem:[%s53 + $0x18] sm:$0xff]
    %v5397 = vld [vmem:[%s53 + $0x20] sm:$0xff]
    %v5398 = vld [vmem:[%s53 + $0x28] sm:$0xff]
    %v5399 = vld [vmem:[%s53 + $0x30] sm:$0xff]
    %v5400 = vld [vmem:[%s53 + $0x38] sm:$0xff]
    %v5401 = vld [vmem:[%s53 + $0x40] sm:$0xff]
    %v5402 = vld [vmem:[%s53 + $0x48] sm:$0xff]
    %v5403 = vld [vmem:[%s53 + $0x50] sm:$0xff]
    %v5404 = vld [vmem:[%s53 + $0x58] sm:$0xff]
    %v5405 = vld [vmem:[%s53 + $0x60] sm:$0xff]
    %v5406 = vld [vmem:[%s53 + $0x68] sm:$0xff]
    %v5407 = vld [vmem:[%s53 + $0x70] sm:$0xff]
    %v5408 = vld [vmem:[%s53 + $0x78] sm:$0xff]
    %v5409 = vld [vmem:[%s53 + $0x80] sm:$0xff]
    %v5410 = vld [vmem:[%s53 + $0x88] sm:$0xff]
    %v5411 = vld [vmem:[%s53 + $0x90] sm:$0xff]
    %v5412 = vld [vmem:[%s53 + $0x98] sm:$0xff]
    %v5413 = vld [vmem:[%s53 + $0xa0] sm:$0xff]
    %v5414 = vld [vmem:[%s53 + $0xa8] sm:$0xff]
    %v5415 = vld [vmem:[%s53 + $0xb0] sm:$0xff]
    %v5416 = vld [vmem:[%s53 + $0xb8] sm:$0xff]
    %v5417 = vld [vmem:[%s53 + $0xc0] sm:$0xff]
    %v5418 = vld [vmem:[%s53 + $0xc8] sm:$0xff]
    %v5419 = vld [vmem:[%s53 + $0xd0] sm:$0xff]
    %v5420 = vld [vmem:[%s53 + $0xd8] sm:$0xff]
    %v5421 = vld [vmem:[%s53 + $0xe0] sm:$0xff]
    %v5422 = vld [vmem:[%s53 + $0xe8] sm:$0xff]
    %v5423 = vld [vmem:[%s53 + $0xf0] sm:$0xff]
    %v5424 = vld [vmem:[%s53 + $0xf8] sm:$0xff]
    %v5425 = vld [vmem:[#allocation31] sm:$0xff]
    %v5426 = vld [vmem:[#allocation31 + $0x8] sm:$0xff]
    %v5427 = vld [vmem:[#allocation31 + $0x10] sm:$0xff]
    %v5428 = vld [vmem:[#allocation31 + $0x18] sm:$0xff]
    %v5429 = vld [vmem:[#allocation31 + $0x20] sm:$0xff]
    %v5430 = vld [vmem:[#allocation31 + $0x28] sm:$0xff]
    %v5431 = vld [vmem:[#allocation31 + $0x30] sm:$0xff]
    %v5432 = vld [vmem:[#allocation31 + $0x38] sm:$0xff]
    %v5433 = vadd.f32 %v5388, %v5390
    %v5434 = vrot.slane %v5433, 4
    %v5435 = vadd.f32 %v5433, %v5434
    %v5436 = vrot.slane %v5435, 2
    %v5437 = vadd.f32 %v5435, %v5436
    %v5438 = vrot.slane %v5437, 1
    %v5439 = vadd.f32 %v5437, %v5438
    %v5440 = vadd.f32 %v5389, %v5391
    %v5441 = vrot.slane %v5440, 4
    %v5442 = vadd.f32 %v5440, %v5441
    %v5443 = vrot.slane %v5442, 2
    %v5444 = vadd.f32 %v5442, %v5443
    %v5445 = vrot.slane %v5444, 1
    %v5446 = vadd.f32 %v5444, %v5445
    %5447 = vmatprep.subr.mxu0 0.0
    %5448 = vmatpush1.msra.mxu0 %v5408
    %5449 = vmatprep.subr.mxu0 0.0
    %5450 = vmatpush1.msra.mxu0 %v5407
    %5451 = vmatprep.subr.mxu0 0.0
    %5452 = vmatpush1.msra.mxu0 %v5406
    %5453 = vmatprep.subr.mxu0 0.0
    %5454 = vmatpush1.msra.mxu0 %v5405
    %5455 = vmatprep.subr.mxu0 0.0
    %5456 = vmatpush1.msra.mxu0 %v5404
    %5457 = vmatprep.subr.mxu0 0.0
    %5458 = vmatpush1.msra.mxu0 %v5403
    %5459 = vmatprep.subr.mxu0 0.0
    %5460 = vmatpush1.msra.mxu0 %v5402
    %5461 = vmatprep.subr.mxu0 0.0
    %5462 = vmatpush1.msra.mxu0 %v5401
    %5463 = vmatprep.subr.mxu0 0.0
    %5464 = vmatpush1.msra.mxu0 %v5400
    %5465 = vmatprep.subr.mxu0 0.0
    %5466 = vmatpush1.msra.mxu0 %v5399
    %5467 = vmatprep.subr.mxu0 0.0
    %5468 = vmatpush1.msra.mxu0 %v5398
    %5469 = vmatprep.subr.mxu0 0.0
    %5470 = vmatpush1.msra.mxu0 %v5397
    %5471 = vmatprep.subr.mxu0 0.0
    %5472 = vmatpush1.msra.mxu0 %v5396
    %5473 = vmatprep.subr.mxu0 0.0
    %5474 = vmatpush1.msra.mxu0 %v5395
    %5475 = vmatprep.subr.mxu0 0.0
    %5476 = vmatpush1.msra.mxu0 %v5394
    %5477 = vmatprep.subr.mxu0 0.0
    %5478 = vmatpush1.msra.mxu0 %v5393
    %5479 = vmatprep.subr.mxu0 0.0
    %5480 = vmatpush2.msra.mxu0 %v5424
    %5481 = vmatprep.subr.mxu0 0.0
    %5482 = vmatpush2.msra.mxu0 %v5423
    %5483 = vmatprep.subr.mxu0 0.0
    %5484 = vmatpush2.msra.mxu0 %v5422
    %5485 = vmatprep.subr.mxu0 0.0
    %5486 = vmatpush2.msra.mxu0 %v5421
    %5487 = vmatprep.subr.mxu0 0.0
    %5488 = vmatpush2.msra.mxu0 %v5420
    %5489 = vmatprep.subr.mxu0 0.0
    %5490 = vmatpush2.msra.mxu0 %v5419
    %5491 = vmatprep.subr.mxu0 0.0
    %5492 = vmatpush2.msra.mxu0 %v5418
    %5493 = vmatprep.subr.mxu0 0.0
    %5494 = vmatpush2.msra.mxu0 %v5417
    %5495 = vmatprep.subr.mxu0 0.0
    %5496 = vmatpush2.msra.mxu0 %v5416
    %5497 = vmatprep.subr.mxu0 0.0
    %5498 = vmatpush2.msra.mxu0 %v5415
    %5499 = vmatprep.subr.mxu0 0.0
    %5500 = vmatpush2.msra.mxu0 %v5414
    %5501 = vmatprep.subr.mxu0 0.0
    %5502 = vmatpush2.msra.mxu0 %v5413
    %5503 = vmatprep.subr.mxu0 0.0
    %5504 = vmatpush2.msra.mxu0 %v5412
    %5505 = vmatprep.subr.mxu0 0.0
    %5506 = vmatpush2.msra.mxu0 %v5411
    %5507 = vmatprep.subr.mxu0 0.0
    %5508 = vmatpush2.msra.mxu0 %v5410
    %5509 = vmatprep.subr.mxu0 0.0
    %5510 = vmatpush2.msra.mxu0 %v5409
    %5511 = vmatprep.mubr.f32.mxu0 %v5446
    %5512 = vmatmul.mubr.f32.gmra.mxu0 %v5439
    %v5513 = vpop.f32.mrf.mxu0
    %v5514 = vadd.f32 0.0, %v5513
    %v5515 = vpop.f32.mrf.mxu0
    %5516 = vdwg.mxu0
    %v5517 = vmul.f32 %v5514, 0.0078125
    %v5519 = vsel %vm2317, %v5517, 0
    %5521 = vmatprep.subr.mxu0 0.0
    %5522 = vmatpush1.msra.mxu0 0.0
    %5523 = vmatprep.subr.mxu0 0.0
    %5524 = vmatpush1.msra.mxu0 0.0
    %5525 = vmatprep.subr.mxu0 0.0
    %5526 = vmatpush1.msra.mxu0 0.0
    %5527 = vmatprep.subr.mxu0 0.0
    %5528 = vmatpush1.msra.mxu0 0.0
    %5529 = vmatprep.subr.mxu0 0.0
    %5530 = vmatpush1.msra.mxu0 0.0
    %5531 = vmatprep.subr.mxu0 0.0
    %5532 = vmatpush1.msra.mxu0 0.0
    %5533 = vmatprep.subr.mxu0 0.0
    %5534 = vmatpush1.msra.mxu0 0.0
    %5535 = vmatprep.subr.mxu0 0.0
    %5536 = vmatpush1.msra.mxu0 0.0
    %5537 = vmatprep.subr.mxu0 0.0
    %5538 = vmatpush1.msra.mxu0 0.0
    %5539 = vmatprep.subr.mxu0 0.0
    %5540 = vmatpush1.msra.mxu0 0.0
    %5541 = vmatprep.subr.mxu0 0.0
    %5542 = vmatpush1.msra.mxu0 0.0
    %5543 = vmatprep.subr.mxu0 0.0
    %5544 = vmatpush1.msra.mxu0 0.0
    %5545 = vmatprep.subr.mxu0 %v5432
    %5546 = vmatpush1.msra.mxu0 %v5431
    %5547 = vmatprep.subr.mxu0 %v5430
    %5548 = vmatpush1.msra.mxu0 %v5429
    %5549 = vmatprep.subr.mxu0 %v5428
    %5550 = vmatpush1.msra.mxu0 %v5427
    %5551 = vmatprep.subr.mxu0 %v5426
    %5552 = vmatpush1.msra.mxu0 %v5425
    %5553 = vmatprep.subr.mxu0 0.0
    %5554 = vmatpush2.msra.mxu0 0.0
    %5555 = vmatprep.subr.mxu0 0.0
    %5556 = vmatpush2.msra.mxu0 0.0
    %5557 = vmatprep.subr.mxu0 0.0
    %5558 = vmatpush2.msra.mxu0 0.0
    %5559 = vmatprep.subr.mxu0 0.0
    %5560 = vmatpush2.msra.mxu0 0.0
    %5561 = vmatprep.subr.mxu0 0.0
    %5562 = vmatpush2.msra.mxu0 0.0
    %5563 = vmatprep.subr.mxu0 0.0
    %5564 = vmatpush2.msra.mxu0 0.0
    %5565 = vmatprep.subr.mxu0 0.0
    %5566 = vmatpush2.msra.mxu0 0.0
    %5567 = vmatprep.subr.mxu0 0.0
    %5568 = vmatpush2.msra.mxu0 0.0
    %5569 = vmatprep.subr.mxu0 0.0
    %5570 = vmatpush2.msra.mxu0 0.0
    %5571 = vmatprep.subr.mxu0 0.0
    %5572 = vmatpush2.msra.mxu0 0.0
    %5573 = vmatprep.subr.mxu0 0.0
    %5574 = vmatpush2.msra.mxu0 0.0
    %5575 = vmatprep.subr.mxu0 0.0
    %5576 = vmatpush2.msra.mxu0 0.0
    %5577 = vmatprep.subr.mxu0 0.0
    %5578 = vmatpush2.msra.mxu0 0.0
    %5579 = vmatprep.subr.mxu0 0.0
    %5580 = vmatpush2.msra.mxu0 0.0
    %5581 = vmatprep.subr.mxu0 0.0
    %5582 = vmatpush2.msra.mxu0 0.0
    %5583 = vmatprep.subr.mxu0 0.0
    %5584 = vmatpush2.msra.mxu0 0.0
    %5585 = vmatprep.mubr.f32.mxu0 0.0
    %5586 = vmatmul.mubr.f32.gmra.mxu0 %v5519
    %v5587 = vpop.f32.mrf.mxu0
    %v5588 = vadd.f32 0.0, %v5587
    %v5589 = vpop.f32.mrf.mxu0
    %v5590 = vadd.f32 0.0, %v5589
    %5591 = vdwg.mxu0
    %v5592 = vlaneseq
    %v5593 = vshrl.u32 %v5592, 7
    %v5594 = vsub.s32 0, %v5593
    %v5595 = vrot.slane %v5588, %v5594
    %v5596 = vlaneseq
    %v5597 = vshrl.u32 %v5596, 7
    %v5598 = vsub.s32 0, %v5597
    %v5599 = vrot.slane %v5590, %v5598
    %v5600 = vsub.f32 %v5388, %v5595
    %v5601 = vsub.f32 %v5389, %v5599
    %v5602 = vsub.f32 %v5390, %v5595
    %v5603 = vsub.f32 %v5391, %v5599
    %v5604 = vmul.f32 %v5600, %v5600
    %v5605 = vmul.f32 %v5601, %v5601
    %v5606 = vmul.f32 %v5602, %v5602
    %v5607 = vmul.f32 %v5603, %v5603
    %v5608 = vadd.f32 %v5604, %v5606
    %v5609 = vrot.slane %v5608, 4
    %v5610 = vadd.f32 %v5608, %v5609
    %v5611 = vrot.slane %v5610, 2
    %v5612 = vadd.f32 %v5610, %v5611
    %v5613 = vrot.slane %v5612, 1
    %v5614 = vadd.f32 %v5612, %v5613
    %v5615 = vadd.f32 %v5605, %v5607
    %v5616 = vrot.slane %v5615, 4
    %v5617 = vadd.f32 %v5615, %v5616
    %v5618 = vrot.slane %v5617, 2
    %v5619 = vadd.f32 %v5617, %v5618
    %v5620 = vrot.slane %v5619, 1
    %v5621 = vadd.f32 %v5619, %v5620
    %5622 = vmatprep.subr.mxu0 0.0
    %5623 = vmatpush1.msra.mxu0 %v5408
    %5624 = vmatprep.subr.mxu0 0.0
    %5625 = vmatpush1.msra.mxu0 %v5407
    %5626 = vmatprep.subr.mxu0 0.0
    %5627 = vmatpush1.msra.mxu0 %v5406
    %5628 = vmatprep.subr.mxu0 0.0
    %5629 = vmatpush1.msra.mxu0 %v5405
    %5630 = vmatprep.subr.mxu0 0.0
    %5631 = vmatpush1.msra.mxu0 %v5404
    %5632 = vmatprep.subr.mxu0 0.0
    %5633 = vmatpush1.msra.mxu0 %v5403
    %5634 = vmatprep.subr.mxu0 0.0
    %5635 = vmatpush1.msra.mxu0 %v5402
    %5636 = vmatprep.subr.mxu0 0.0
    %5637 = vmatpush1.msra.mxu0 %v5401
    %5638 = vmatprep.subr.mxu0 0.0
    %5639 = vmatpush1.msra.mxu0 %v5400
    %5640 = vmatprep.subr.mxu0 0.0
    %5641 = vmatpush1.msra.mxu0 %v5399
    %5642 = vmatprep.subr.mxu0 0.0
    %5643 = vmatpush1.msra.mxu0 %v5398
    %5644 = vmatprep.subr.mxu0 0.0
    %5645 = vmatpush1.msra.mxu0 %v5397
    %5646 = vmatprep.subr.mxu0 0.0
    %5647 = vmatpush1.msra.mxu0 %v5396
    %5648 = vmatprep.subr.mxu0 0.0
    %5649 = vmatpush1.msra.mxu0 %v5395
    %5650 = vmatprep.subr.mxu0 0.0
    %5651 = vmatpush1.msra.mxu0 %v5394
    %5652 = vmatprep.subr.mxu0 0.0
    %5653 = vmatpush1.msra.mxu0 %v5393
    %5654 = vmatprep.subr.mxu0 0.0
    %5655 = vmatpush2.msra.mxu0 %v5424
    %5656 = vmatprep.subr.mxu0 0.0
    %5657 = vmatpush2.msra.mxu0 %v5423
    %5658 = vmatprep.subr.mxu0 0.0
    %5659 = vmatpush2.msra.mxu0 %v5422
    %5660 = vmatprep.subr.mxu0 0.0
    %5661 = vmatpush2.msra.mxu0 %v5421
    %5662 = vmatprep.subr.mxu0 0.0
    %5663 = vmatpush2.msra.mxu0 %v5420
    %5664 = vmatprep.subr.mxu0 0.0
    %5665 = vmatpush2.msra.mxu0 %v5419
    %5666 = vmatprep.subr.mxu0 0.0
    %5667 = vmatpush2.msra.mxu0 %v5418
    %5668 = vmatprep.subr.mxu0 0.0
    %5669 = vmatpush2.msra.mxu0 %v5417
    %5670 = vmatprep.subr.mxu0 0.0
    %5671 = vmatpush2.msra.mxu0 %v5416
    %5672 = vmatprep.subr.mxu0 0.0
    %5673 = vmatpush2.msra.mxu0 %v5415
    %5674 = vmatprep.subr.mxu0 0.0
    %5675 = vmatpush2.msra.mxu0 %v5414
    %5676 = vmatprep.subr.mxu0 0.0
    %5677 = vmatpush2.msra.mxu0 %v5413
    %5678 = vmatprep.subr.mxu0 0.0
    %5679 = vmatpush2.msra.mxu0 %v5412
    %5680 = vmatprep.subr.mxu0 0.0
    %5681 = vmatpush2.msra.mxu0 %v5411
    %5682 = vmatprep.subr.mxu0 0.0
    %5683 = vmatpush2.msra.mxu0 %v5410
    %5684 = vmatprep.subr.mxu0 0.0
    %5685 = vmatpush2.msra.mxu0 %v5409
    %5686 = vmatprep.mubr.f32.mxu0 %v5621
    %5687 = vmatmul.mubr.f32.gmra.mxu0 %v5614
    %v5688 = vpop.f32.mrf.mxu0
    %v5689 = vadd.f32 0.0, %v5688
    %v5690 = vpop.f32.mrf.mxu0
    %5691 = vdwg.mxu0
    %v5692 = vmul.f32 %v5689, 0.0078125
    %v5693 = vadd.f32 %v5692, 1e-05
    %v5694 = vrsqrt.pop %v5693
    %v5695 = vmul.f32 %v5392, %v5694
    %v5697 = vsel %vm2317, %v5695, 0
    %5699 = vmatprep.subr.mxu0 0.0
    %5700 = vmatpush1.msra.mxu0 0.0
    %5701 = vmatprep.subr.mxu0 0.0
    %5702 = vmatpush1.msra.mxu0 0.0
    %5703 = vmatprep.subr.mxu0 0.0
    %5704 = vmatpush1.msra.mxu0 0.0
    %5705 = vmatprep.subr.mxu0 0.0
    %5706 = vmatpush1.msra.mxu0 0.0
    %5707 = vmatprep.subr.mxu0 0.0
    %5708 = vmatpush1.msra.mxu0 0.0
    %5709 = vmatprep.subr.mxu0 0.0
    %5710 = vmatpush1.msra.mxu0 0.0
    %5711 = vmatprep.subr.mxu0 0.0
    %5712 = vmatpush1.msra.mxu0 0.0
    %5713 = vmatprep.subr.mxu0 0.0
    %5714 = vmatpush1.msra.mxu0 0.0
    %5715 = vmatprep.subr.mxu0 0.0
    %5716 = vmatpush1.msra.mxu0 0.0
    %5717 = vmatprep.subr.mxu0 0.0
    %5718 = vmatpush1.msra.mxu0 0.0
    %5719 = vmatprep.subr.mxu0 0.0
    %5720 = vmatpush1.msra.mxu0 0.0
    %5721 = vmatprep.subr.mxu0 0.0
    %5722 = vmatpush1.msra.mxu0 0.0
    %5723 = vmatprep.subr.mxu0 %v5432
    %5724 = vmatpush1.msra.mxu0 %v5431
    %5725 = vmatprep.subr.mxu0 %v5430
    %5726 = vmatpush1.msra.mxu0 %v5429
    %5727 = vmatprep.subr.mxu0 %v5428
    %5728 = vmatpush1.msra.mxu0 %v5427
    %5729 = vmatprep.subr.mxu0 %v5426
    %5730 = vmatpush1.msra.mxu0 %v5425
    %5731 = vmatprep.subr.mxu0 0.0
    %5732 = vmatpush2.msra.mxu0 0.0
    %5733 = vmatprep.subr.mxu0 0.0
    %5734 = vmatpush2.msra.mxu0 0.0
    %5735 = vmatprep.subr.mxu0 0.0
    %5736 = vmatpush2.msra.mxu0 0.0
    %5737 = vmatprep.subr.mxu0 0.0
    %5738 = vmatpush2.msra.mxu0 0.0
    %5739 = vmatprep.subr.mxu0 0.0
    %5740 = vmatpush2.msra.mxu0 0.0
    %5741 = vmatprep.subr.mxu0 0.0
    %5742 = vmatpush2.msra.mxu0 0.0
    %5743 = vmatprep.subr.mxu0 0.0
    %5744 = vmatpush2.msra.mxu0 0.0
    %5745 = vmatprep.subr.mxu0 0.0
    %5746 = vmatpush2.msra.mxu0 0.0
    %5747 = vmatprep.subr.mxu0 0.0
    %5748 = vmatpush2.msra.mxu0 0.0
    %5749 = vmatprep.subr.mxu0 0.0
    %5750 = vmatpush2.msra.mxu0 0.0
    %5751 = vmatprep.subr.mxu0 0.0
    %5752 = vmatpush2.msra.mxu0 0.0
    %5753 = vmatprep.subr.mxu0 0.0
    %5754 = vmatpush2.msra.mxu0 0.0
    %5755 = vmatprep.subr.mxu0 0.0
    %5756 = vmatpush2.msra.mxu0 0.0
    %5757 = vmatprep.subr.mxu0 0.0
    %5758 = vmatpush2.msra.mxu0 0.0
    %5759 = vmatprep.subr.mxu0 0.0
    %5760 = vmatpush2.msra.mxu0 0.0
    %5761 = vmatprep.subr.mxu0 0.0
    %5762 = vmatpush2.msra.mxu0 0.0
    %5763 = vmatprep.mubr.f32.mxu0 0.0
    %5764 = vmatmul.mubr.f32.gmra.mxu0 %v5697
    %v5765 = vpop.f32.mrf.mxu0
    %v5766 = vadd.f32 0.0, %v5765
    %v5767 = vpop.f32.mrf.mxu0
    %v5768 = vadd.f32 0.0, %v5767
    %5769 = vdwg.mxu0
    %v5770 = vlaneseq
    %v5771 = vshrl.u32 %v5770, 7
    %v5772 = vsub.s32 0, %v5771
    %v5773 = vrot.slane %v5766, %v5772
    %v5774 = vlaneseq
    %v5775 = vshrl.u32 %v5774, 7
    %v5776 = vsub.s32 0, %v5775
    %v5777 = vrot.slane %v5768, %v5776
    %v5778 = vmul.f32 %v5600, %v5773
    %v5779 = vmul.f32 %v5601, %v5777
    %v5780 = vmul.f32 %v5602, %v5773
    %v5781 = vmul.f32 %v5603, %v5777
    %v5783 = vrot.slane %v5392, 1
    %v5784 = vsel %vm2317, %v5783, 0
    %5786 = vmatprep.subr.mxu0 0.0
    %5787 = vmatpush1.msra.mxu0 0.0
    %5788 = vmatprep.subr.mxu0 0.0
    %5789 = vmatpush1.msra.mxu0 0.0
    %5790 = vmatprep.subr.mxu0 0.0
    %5791 = vmatpush1.msra.mxu0 0.0
    %5792 = vmatprep.subr.mxu0 0.0
    %5793 = vmatpush1.msra.mxu0 0.0
    %5794 = vmatprep.subr.mxu0 0.0
    %5795 = vmatpush1.msra.mxu0 0.0
    %5796 = vmatprep.subr.mxu0 0.0
    %5797 = vmatpush1.msra.mxu0 0.0
    %5798 = vmatprep.subr.mxu0 0.0
    %5799 = vmatpush1.msra.mxu0 0.0
    %5800 = vmatprep.subr.mxu0 0.0
    %5801 = vmatpush1.msra.mxu0 0.0
    %5802 = vmatprep.subr.mxu0 0.0
    %5803 = vmatpush1.msra.mxu0 0.0
    %5804 = vmatprep.subr.mxu0 0.0
    %5805 = vmatpush1.msra.mxu0 0.0
    %5806 = vmatprep.subr.mxu0 0.0
    %5807 = vmatpush1.msra.mxu0 0.0
    %5808 = vmatprep.subr.mxu0 0.0
    %5809 = vmatpush1.msra.mxu0 0.0
    %5810 = vmatprep.subr.mxu0 %v5432
    %5811 = vmatpush1.msra.mxu0 %v5431
    %5812 = vmatprep.subr.mxu0 %v5430
    %5813 = vmatpush1.msra.mxu0 %v5429
    %5814 = vmatprep.subr.mxu0 %v5428
    %5815 = vmatpush1.msra.mxu0 %v5427
    %5816 = vmatprep.subr.mxu0 %v5426
    %5817 = vmatpush1.msra.mxu0 %v5425
    %5818 = vmatprep.subr.mxu0 0.0
    %5819 = vmatpush2.msra.mxu0 0.0
    %5820 = vmatprep.subr.mxu0 0.0
    %5821 = vmatpush2.msra.mxu0 0.0
    %5822 = vmatprep.subr.mxu0 0.0
    %5823 = vmatpush2.msra.mxu0 0.0
    %5824 = vmatprep.subr.mxu0 0.0
    %5825 = vmatpush2.msra.mxu0 0.0
    %5826 = vmatprep.subr.mxu0 0.0
    %5827 = vmatpush2.msra.mxu0 0.0
    %5828 = vmatprep.subr.mxu0 0.0
    %5829 = vmatpush2.msra.mxu0 0.0
    %5830 = vmatprep.subr.mxu0 0.0
    %5831 = vmatpush2.msra.mxu0 0.0
    %5832 = vmatprep.subr.mxu0 0.0
    %5833 = vmatpush2.msra.mxu0 0.0
    %5834 = vmatprep.subr.mxu0 0.0
    %5835 = vmatpush2.msra.mxu0 0.0
    %5836 = vmatprep.subr.mxu0 0.0
    %5837 = vmatpush2.msra.mxu0 0.0
    %5838 = vmatprep.subr.mxu0 0.0
    %5839 = vmatpush2.msra.mxu0 0.0
    %5840 = vmatprep.subr.mxu0 0.0
    %5841 = vmatpush2.msra.mxu0 0.0
    %5842 = vmatprep.subr.mxu0 0.0
    %5843 = vmatpush2.msra.mxu0 0.0
    %5844 = vmatprep.subr.mxu0 0.0
    %5845 = vmatpush2.msra.mxu0 0.0
    %5846 = vmatprep.subr.mxu0 0.0
    %5847 = vmatpush2.msra.mxu0 0.0
    %5848 = vmatprep.subr.mxu0 0.0
    %5849 = vmatpush2.msra.mxu0 0.0
    %5850 = vmatprep.mubr.f32.mxu0 0.0
    %5851 = vmatmul.mubr.f32.gmra.mxu0 %v5784
    %v5852 = vpop.f32.mrf.mxu0
    %v5853 = vadd.f32 0.0, %v5852
    %v5854 = vpop.f32.mrf.mxu0
    %v5855 = vadd.f32 0.0, %v5854
    %5856 = vdwg.mxu0
    %v5857 = vlaneseq
    %v5858 = vshrl.u32 %v5857, 7
    %v5859 = vsub.s32 0, %v5858
    %v5860 = vrot.slane %v5853, %v5859
    %v5861 = vlaneseq
    %v5862 = vshrl.u32 %v5861, 7
    %v5863 = vsub.s32 0, %v5862
    %v5864 = vrot.slane %v5855, %v5863
    %v5865 = vadd.f32 %v5778, %v5860
    %v5866 = vadd.f32 %v5779, %v5864
    %v5867 = vadd.f32 %v5780, %v5860
    %v5868 = vadd.f32 %v5781, %v5864
    %v5869 = vld [vmem:[#allocation34] sm:$0xff]
    %v5871 = vsel %vm3011, %v5869, 0
    %5873 = vmatprep.subr.mxu0 0.0
    %5874 = vmatpush1.msra.mxu0 0.0
    %5875 = vmatprep.subr.mxu0 0.0
    %5876 = vmatpush1.msra.mxu0 0.0
    %5877 = vmatprep.subr.mxu0 0.0
    %5878 = vmatpush1.msra.mxu0 0.0
    %5879 = vmatprep.subr.mxu0 0.0
    %5880 = vmatpush1.msra.mxu0 0.0
    %5881 = vmatprep.subr.mxu0 0.0
    %5882 = vmatpush1.msra.mxu0 0.0
    %5883 = vmatprep.subr.mxu0 0.0
    %5884 = vmatpush1.msra.mxu0 0.0
    %5885 = vmatprep.subr.mxu0 0.0
    %5886 = vmatpush1.msra.mxu0 0.0
    %5887 = vmatprep.subr.mxu0 0.0
    %5888 = vmatpush1.msra.mxu0 0.0
    %5889 = vmatprep.subr.mxu0 0.0
    %5890 = vmatpush1.msra.mxu0 0.0
    %5891 = vmatprep.subr.mxu0 0.0
    %5892 = vmatpush1.msra.mxu0 0.0
    %5893 = vmatprep.subr.mxu0 0.0
    %5894 = vmatpush1.msra.mxu0 0.0
    %5895 = vmatprep.subr.mxu0 0.0
    %5896 = vmatpush1.msra.mxu0 0.0
    %5897 = vmatprep.subr.mxu0 0.0
    %5898 = vmatpush1.msra.mxu0 0.0
    %5899 = vmatprep.subr.mxu0 0.0
    %5900 = vmatpush1.msra.mxu0 0.0
    %5901 = vmatprep.subr.mxu0 %v5868
    %5902 = vmatpush1.msra.mxu0 %v5867
    %5903 = vmatprep.subr.mxu0 %v5866
    %5904 = vmatpush1.msra.mxu0 %v5865
    %5905 = vmatprep.subr.mxu0 0.0
    %5906 = vmatpush2.msra.mxu0 0.0
    %5907 = vmatprep.subr.mxu0 0.0
    %5908 = vmatpush2.msra.mxu0 0.0
    %5909 = vmatprep.subr.mxu0 0.0
    %5910 = vmatpush2.msra.mxu0 0.0
    %5911 = vmatprep.subr.mxu0 0.0
    %5912 = vmatpush2.msra.mxu0 0.0
    %5913 = vmatprep.subr.mxu0 0.0
    %5914 = vmatpush2.msra.mxu0 0.0
    %5915 = vmatprep.subr.mxu0 0.0
    %5916 = vmatpush2.msra.mxu0 0.0
    %5917 = vmatprep.subr.mxu0 0.0
    %5918 = vmatpush2.msra.mxu0 0.0
    %5919 = vmatprep.subr.mxu0 0.0
    %5920 = vmatpush2.msra.mxu0 0.0
    %5921 = vmatprep.subr.mxu0 0.0
    %5922 = vmatpush2.msra.mxu0 0.0
    %5923 = vmatprep.subr.mxu0 0.0
    %5924 = vmatpush2.msra.mxu0 0.0
    %5925 = vmatprep.subr.mxu0 0.0
    %5926 = vmatpush2.msra.mxu0 0.0
    %5927 = vmatprep.subr.mxu0 0.0
    %5928 = vmatpush2.msra.mxu0 0.0
    %5929 = vmatprep.subr.mxu0 0.0
    %5930 = vmatpush2.msra.mxu0 0.0
    %5931 = vmatprep.subr.mxu0 0.0
    %5932 = vmatpush2.msra.mxu0 0.0
    %5933 = vmatprep.subr.mxu0 0.0
    %5934 = vmatpush2.msra.mxu0 0.0
    %5935 = vmatprep.subr.mxu0 0.0
    %5936 = vmatpush2.msra.mxu0 0.0
    %5937 = vmatprep.mubr.f32.mxu0 0.0
    %5938 = vmatmul.mubr.f32.gmra.mxu0 %v5871
    %v5939 = vpop.f32.mrf.mxu0
    %v5940 = vadd.f32 0.0, %v5939
    %v5941 = vpop.f32.mrf.mxu0
    %v5942 = vadd.f32 0.0, %v5941
    %5943 = vdwg.mxu0
    %s5944 = scalar_lea.vmem [#allocation34], 8
    %v5945 = vld [vmem:[%s5944] sm:$0xff]
    %v5947 = vsel %vm3011, %v5945, 0
    %5949 = vmatprep.subr.mxu0 0.0
    %5950 = vmatpush1.msra.mxu0 0.0
    %5951 = vmatprep.subr.mxu0 0.0
    %5952 = vmatpush1.msra.mxu0 0.0
    %5953 = vmatprep.subr.mxu0 0.0
    %5954 = vmatpush1.msra.mxu0 0.0
    %5955 = vmatprep.subr.mxu0 0.0
    %5956 = vmatpush1.msra.mxu0 0.0
    %5957 = vmatprep.subr.mxu0 0.0
    %5958 = vmatpush1.msra.mxu0 0.0
    %5959 = vmatprep.subr.mxu0 0.0
    %5960 = vmatpush1.msra.mxu0 0.0
    %5961 = vmatprep.subr.mxu0 0.0
    %5962 = vmatpush1.msra.mxu0 0.0
    %5963 = vmatprep.subr.mxu0 0.0
    %5964 = vmatpush1.msra.mxu0 0.0
    %5965 = vmatprep.subr.mxu0 0.0
    %5966 = vmatpush1.msra.mxu0 0.0
    %5967 = vmatprep.subr.mxu0 0.0
    %5968 = vmatpush1.msra.mxu0 0.0
    %5969 = vmatprep.subr.mxu0 0.0
    %5970 = vmatpush1.msra.mxu0 0.0
    %5971 = vmatprep.subr.mxu0 0.0
    %5972 = vmatpush1.msra.mxu0 0.0
    %5973 = vmatprep.subr.mxu0 0.0
    %5974 = vmatpush1.msra.mxu0 0.0
    %5975 = vmatprep.subr.mxu0 0.0
    %5976 = vmatpush1.msra.mxu0 0.0
    %5977 = vmatprep.subr.mxu0 %v5868
    %5978 = vmatpush1.msra.mxu0 %v5867
    %5979 = vmatprep.subr.mxu0 %v5866
    %5980 = vmatpush1.msra.mxu0 %v5865
    %5981 = vmatprep.subr.mxu0 0.0
    %5982 = vmatpush2.msra.mxu0 0.0
    %5983 = vmatprep.subr.mxu0 0.0
    %5984 = vmatpush2.msra.mxu0 0.0
    %5985 = vmatprep.subr.mxu0 0.0
    %5986 = vmatpush2.msra.mxu0 0.0
    %5987 = vmatprep.subr.mxu0 0.0
    %5988 = vmatpush2.msra.mxu0 0.0
    %5989 = vmatprep.subr.mxu0 0.0
    %5990 = vmatpush2.msra.mxu0 0.0
    %5991 = vmatprep.subr.mxu0 0.0
    %5992 = vmatpush2.msra.mxu0 0.0
    %5993 = vmatprep.subr.mxu0 0.0
    %5994 = vmatpush2.msra.mxu0 0.0
    %5995 = vmatprep.subr.mxu0 0.0
    %5996 = vmatpush2.msra.mxu0 0.0
    %5997 = vmatprep.subr.mxu0 0.0
    %5998 = vmatpush2.msra.mxu0 0.0
    %5999 = vmatprep.subr.mxu0 0.0
    %6000 = vmatpush2.msra.mxu0 0.0
    %6001 = vmatprep.subr.mxu0 0.0
    %6002 = vmatpush2.msra.mxu0 0.0
    %6003 = vmatprep.subr.mxu0 0.0
    %6004 = vmatpush2.msra.mxu0 0.0
    %6005 = vmatprep.subr.mxu0 0.0
    %6006 = vmatpush2.msra.mxu0 0.0
    %6007 = vmatprep.subr.mxu0 0.0
    %6008 = vmatpush2.msra.mxu0 0.0
    %6009 = vmatprep.subr.mxu0 0.0
    %6010 = vmatpush2.msra.mxu0 0.0
    %6011 = vmatprep.subr.mxu0 0.0
    %6012 = vmatpush2.msra.mxu0 0.0
    %6013 = vmatprep.mubr.f32.mxu0 0.0
    %6014 = vmatmul.mubr.f32.gmra.mxu0 %v5947
    %v6015 = vpop.f32.mrf.mxu0
    %v6016 = vadd.f32 0.0, %v6015
    %v6017 = vpop.f32.mrf.mxu0
    %v6018 = vadd.f32 0.0, %v6017
    %6019 = vdwg.mxu0
    %v6020 = vmax.f32 %v5940, %v6016
    %v6021 = vmax.f32 %v5942, %v6018
    %v6022 = vld [vmem:[#allocation35] sm:$0xff]
    %v6023 = vld [vmem:[#allocation35 + $0x8] sm:$0xff]
    %v6024 = vld [vmem:[#allocation35 + $0x10] sm:$0xff]
    %v6025 = vld [vmem:[#allocation35 + $0x18] sm:$0xff]
    %v6026 = vld [vmem:[#allocation35 + $0x20] sm:$0xff]
    %v6027 = vld [vmem:[#allocation35 + $0x28] sm:$0xff]
    %v6028 = vld [vmem:[#allocation35 + $0x30] sm:$0xff]
    %v6029 = vld [vmem:[#allocation35 + $0x38] sm:$0xff]
    %v6030 = vld [vmem:[#allocation35 + $0x40] sm:$0xff]
    %v6031 = vld [vmem:[#allocation35 + $0x48] sm:$0xff]
    %v6032 = vld [vmem:[#allocation35 + $0x50] sm:$0xff]
    %v6033 = vld [vmem:[#allocation35 + $0x58] sm:$0xff]
    %v6034 = vld [vmem:[#allocation35 + $0x60] sm:$0xff]
    %v6035 = vld [vmem:[#allocation35 + $0x68] sm:$0xff]
    %v6036 = vld [vmem:[#allocation35 + $0x70] sm:$0xff]
    %v6037 = vld [vmem:[#allocation35 + $0x78] sm:$0xff]
    %v6038 = vld [vmem:[#allocation35 + $0x80] sm:$0xff]
    %v6039 = vld [vmem:[#allocation35 + $0x88] sm:$0xff]
    %v6040 = vld [vmem:[#allocation35 + $0x90] sm:$0xff]
    %v6041 = vld [vmem:[#allocation35 + $0x98] sm:$0xff]
    %v6042 = vld [vmem:[#allocation35 + $0xa0] sm:$0xff]
    %v6043 = vld [vmem:[#allocation35 + $0xa8] sm:$0xff]
    %v6044 = vld [vmem:[#allocation35 + $0xb0] sm:$0xff]
    %v6045 = vld [vmem:[#allocation35 + $0xb8] sm:$0xff]
    %v6046 = vld [vmem:[#allocation35 + $0xc0] sm:$0xff]
    %v6047 = vld [vmem:[#allocation35 + $0xc8] sm:$0xff]
    %v6048 = vld [vmem:[#allocation35 + $0xd0] sm:$0xff]
    %v6049 = vld [vmem:[#allocation35 + $0xd8] sm:$0xff]
    %v6050 = vld [vmem:[#allocation35 + $0xe0] sm:$0xff]
    %v6051 = vld [vmem:[#allocation35 + $0xe8] sm:$0xff]
    %v6052 = vld [vmem:[#allocation35 + $0xf0] sm:$0xff]
    %v6053 = vld [vmem:[#allocation35 + $0xf8] sm:$0xff]
    %6054 = vmatprep.subr.mxu0 0.0
    %6055 = vmatpush1.msra.mxu0 %v6037
    %6056 = vmatprep.subr.mxu0 0.0
    %6057 = vmatpush1.msra.mxu0 %v6036
    %6058 = vmatprep.subr.mxu0 0.0
    %6059 = vmatpush1.msra.mxu0 %v6035
    %6060 = vmatprep.subr.mxu0 0.0
    %6061 = vmatpush1.msra.mxu0 %v6034
    %6062 = vmatprep.subr.mxu0 0.0
    %6063 = vmatpush1.msra.mxu0 %v6033
    %6064 = vmatprep.subr.mxu0 0.0
    %6065 = vmatpush1.msra.mxu0 %v6032
    %6066 = vmatprep.subr.mxu0 0.0
    %6067 = vmatpush1.msra.mxu0 %v6031
    %6068 = vmatprep.subr.mxu0 0.0
    %6069 = vmatpush1.msra.mxu0 %v6030
    %6070 = vmatprep.subr.mxu0 0.0
    %6071 = vmatpush1.msra.mxu0 %v6029
    %6072 = vmatprep.subr.mxu0 0.0
    %6073 = vmatpush1.msra.mxu0 %v6028
    %6074 = vmatprep.subr.mxu0 0.0
    %6075 = vmatpush1.msra.mxu0 %v6027
    %6076 = vmatprep.subr.mxu0 0.0
    %6077 = vmatpush1.msra.mxu0 %v6026
    %6078 = vmatprep.subr.mxu0 0.0
    %6079 = vmatpush1.msra.mxu0 %v6025
    %6080 = vmatprep.subr.mxu0 0.0
    %6081 = vmatpush1.msra.mxu0 %v6024
    %6082 = vmatprep.subr.mxu0 0.0
    %6083 = vmatpush1.msra.mxu0 %v6023
    %6084 = vmatprep.subr.mxu0 0.0
    %6085 = vmatpush1.msra.mxu0 %v6022
    %6086 = vmatprep.subr.mxu0 0.0
    %6087 = vmatpush2.msra.mxu0 %v6053
    %6088 = vmatprep.subr.mxu0 0.0
    %6089 = vmatpush2.msra.mxu0 %v6052
    %6090 = vmatprep.subr.mxu0 0.0
    %6091 = vmatpush2.msra.mxu0 %v6051
    %6092 = vmatprep.subr.mxu0 0.0
    %6093 = vmatpush2.msra.mxu0 %v6050
    %6094 = vmatprep.subr.mxu0 0.0
    %6095 = vmatpush2.msra.mxu0 %v6049
    %6096 = vmatprep.subr.mxu0 0.0
    %6097 = vmatpush2.msra.mxu0 %v6048
    %6098 = vmatprep.subr.mxu0 0.0
    %6099 = vmatpush2.msra.mxu0 %v6047
    %6100 = vmatprep.subr.mxu0 0.0
    %6101 = vmatpush2.msra.mxu0 %v6046
    %6102 = vmatprep.subr.mxu0 0.0
    %6103 = vmatpush2.msra.mxu0 %v6045
    %6104 = vmatprep.subr.mxu0 0.0
    %6105 = vmatpush2.msra.mxu0 %v6044
    %6106 = vmatprep.subr.mxu0 0.0
    %6107 = vmatpush2.msra.mxu0 %v6043
    %6108 = vmatprep.subr.mxu0 0.0
    %6109 = vmatpush2.msra.mxu0 %v6042
    %6110 = vmatprep.subr.mxu0 0.0
    %6111 = vmatpush2.msra.mxu0 %v6041
    %6112 = vmatprep.subr.mxu0 0.0
    %6113 = vmatpush2.msra.mxu0 %v6040
    %6114 = vmatprep.subr.mxu0 0.0
    %6115 = vmatpush2.msra.mxu0 %v6039
    %6116 = vmatprep.subr.mxu0 0.0
    %6117 = vmatpush2.msra.mxu0 %v6038
    %6118 = vmatprep.mubr.f32.mxu0 %v6021
    %6119 = vmatmul.mubr.f32.gmra.mxu0 %v6020
    %v6120 = vpop.f32.mrf.mxu0
    %v6121 = vadd.f32 0.0, %v6120
    %v6122 = vpop.f32.mrf.mxu0
    %6123 = vdwg.mxu0
    %s6124 = scalar_lea.vmem [#allocation35], 256
    %v6125 = vld [vmem:[%s6124] sm:$0xff]
    %v6126 = vld [vmem:[%s6124 + $0x8] sm:$0xff]
    %v6127 = vld [vmem:[%s6124 + $0x10] sm:$0xff]
    %v6128 = vld [vmem:[%s6124 + $0x18] sm:$0xff]
    %v6129 = vld [vmem:[%s6124 + $0x20] sm:$0xff]
    %v6130 = vld [vmem:[%s6124 + $0x28] sm:$0xff]
    %v6131 = vld [vmem:[%s6124 + $0x30] sm:$0xff]
    %v6132 = vld [vmem:[%s6124 + $0x38] sm:$0xff]
    %v6133 = vld [vmem:[%s6124 + $0x40] sm:$0xff]
    %v6134 = vld [vmem:[%s6124 + $0x48] sm:$0xff]
    %v6135 = vld [vmem:[%s6124 + $0x50] sm:$0xff]
    %v6136 = vld [vmem:[%s6124 + $0x58] sm:$0xff]
    %v6137 = vld [vmem:[%s6124 + $0x60] sm:$0xff]
    %v6138 = vld [vmem:[%s6124 + $0x68] sm:$0xff]
    %v6139 = vld [vmem:[%s6124 + $0x70] sm:$0xff]
    %v6140 = vld [vmem:[%s6124 + $0x78] sm:$0xff]
    %v6141 = vld [vmem:[%s6124 + $0x80] sm:$0xff]
    %v6142 = vld [vmem:[%s6124 + $0x88] sm:$0xff]
    %v6143 = vld [vmem:[%s6124 + $0x90] sm:$0xff]
    %v6144 = vld [vmem:[%s6124 + $0x98] sm:$0xff]
    %v6145 = vld [vmem:[%s6124 + $0xa0] sm:$0xff]
    %v6146 = vld [vmem:[%s6124 + $0xa8] sm:$0xff]
    %v6147 = vld [vmem:[%s6124 + $0xb0] sm:$0xff]
    %v6148 = vld [vmem:[%s6124 + $0xb8] sm:$0xff]
    %v6149 = vld [vmem:[%s6124 + $0xc0] sm:$0xff]
    %v6150 = vld [vmem:[%s6124 + $0xc8] sm:$0xff]
    %v6151 = vld [vmem:[%s6124 + $0xd0] sm:$0xff]
    %v6152 = vld [vmem:[%s6124 + $0xd8] sm:$0xff]
    %v6153 = vld [vmem:[%s6124 + $0xe0] sm:$0xff]
    %v6154 = vld [vmem:[%s6124 + $0xe8] sm:$0xff]
    %v6155 = vld [vmem:[%s6124 + $0xf0] sm:$0xff]
    %v6156 = vld [vmem:[%s6124 + $0xf8] sm:$0xff]
    %6157 = vmatprep.subr.mxu0 0.0
    %6158 = vmatpush1.msra.mxu0 %v6140
    %6159 = vmatprep.subr.mxu0 0.0
    %6160 = vmatpush1.msra.mxu0 %v6139
    %6161 = vmatprep.subr.mxu0 0.0
    %6162 = vmatpush1.msra.mxu0 %v6138
    %6163 = vmatprep.subr.mxu0 0.0
    %6164 = vmatpush1.msra.mxu0 %v6137
    %6165 = vmatprep.subr.mxu0 0.0
    %6166 = vmatpush1.msra.mxu0 %v6136
    %6167 = vmatprep.subr.mxu0 0.0
    %6168 = vmatpush1.msra.mxu0 %v6135
    %6169 = vmatprep.subr.mxu0 0.0
    %6170 = vmatpush1.msra.mxu0 %v6134
    %6171 = vmatprep.subr.mxu0 0.0
    %6172 = vmatpush1.msra.mxu0 %v6133
    %6173 = vmatprep.subr.mxu0 0.0
    %6174 = vmatpush1.msra.mxu0 %v6132
    %6175 = vmatprep.subr.mxu0 0.0
    %6176 = vmatpush1.msra.mxu0 %v6131
    %6177 = vmatprep.subr.mxu0 0.0
    %6178 = vmatpush1.msra.mxu0 %v6130
    %6179 = vmatprep.subr.mxu0 0.0
    %6180 = vmatpush1.msra.mxu0 %v6129
    %6181 = vmatprep.subr.mxu0 0.0
    %6182 = vmatpush1.msra.mxu0 %v6128
    %6183 = vmatprep.subr.mxu0 0.0
    %6184 = vmatpush1.msra.mxu0 %v6127
    %6185 = vmatprep.subr.mxu0 0.0
    %6186 = vmatpush1.msra.mxu0 %v6126
    %6187 = vmatprep.subr.mxu0 0.0
    %6188 = vmatpush1.msra.mxu0 %v6125
    %6189 = vmatprep.subr.mxu0 0.0
    %6190 = vmatpush2.msra.mxu0 %v6156
    %6191 = vmatprep.subr.mxu0 0.0
    %6192 = vmatpush2.msra.mxu0 %v6155
    %6193 = vmatprep.subr.mxu0 0.0
    %6194 = vmatpush2.msra.mxu0 %v6154
    %6195 = vmatprep.subr.mxu0 0.0
    %6196 = vmatpush2.msra.mxu0 %v6153
    %6197 = vmatprep.subr.mxu0 0.0
    %6198 = vmatpush2.msra.mxu0 %v6152
    %6199 = vmatprep.subr.mxu0 0.0
    %6200 = vmatpush2.msra.mxu0 %v6151
    %6201 = vmatprep.subr.mxu0 0.0
    %6202 = vmatpush2.msra.mxu0 %v6150
    %6203 = vmatprep.subr.mxu0 0.0
    %6204 = vmatpush2.msra.mxu0 %v6149
    %6205 = vmatprep.subr.mxu0 0.0
    %6206 = vmatpush2.msra.mxu0 %v6148
    %6207 = vmatprep.subr.mxu0 0.0
    %6208 = vmatpush2.msra.mxu0 %v6147
    %6209 = vmatprep.subr.mxu0 0.0
    %6210 = vmatpush2.msra.mxu0 %v6146
    %6211 = vmatprep.subr.mxu0 0.0
    %6212 = vmatpush2.msra.mxu0 %v6145
    %6213 = vmatprep.subr.mxu0 0.0
    %6214 = vmatpush2.msra.mxu0 %v6144
    %6215 = vmatprep.subr.mxu0 0.0
    %6216 = vmatpush2.msra.mxu0 %v6143
    %6217 = vmatprep.subr.mxu0 0.0
    %6218 = vmatpush2.msra.mxu0 %v6142
    %6219 = vmatprep.subr.mxu0 0.0
    %6220 = vmatpush2.msra.mxu0 %v6141
    %6221 = vmatprep.mubr.f32.mxu0 %v6021
    %6222 = vmatmul.mubr.f32.gmra.mxu0 %v6020
    %v6223 = vpop.f32.mrf.mxu0
    %v6224 = vadd.f32 0.0, %v6223
    %v6225 = vpop.f32.mrf.mxu0
    %6226 = vdwg.mxu0
    %v6227 = vmax.f32 %v6121, %v6224
    %v6228 = vld [vmem:[#allocation37] sm:$0x3]
    %v6230 = vsel %vm1410, %v6228, 0
    %6232 = vmatprep.subr.mxu0 0.0
    %6233 = vmatpush1.msra.mxu0 0.0
    %6234 = vmatprep.subr.mxu0 0.0
    %6235 = vmatpush1.msra.mxu0 0.0
    %6236 = vmatprep.subr.mxu0 0.0
    %6237 = vmatpush1.msra.mxu0 0.0
    %6238 = vmatprep.subr.mxu0 0.0
    %6239 = vmatpush1.msra.mxu0 0.0
    %6240 = vmatprep.subr.mxu0 0.0
    %6241 = vmatpush1.msra.mxu0 0.0
    %6242 = vmatprep.subr.mxu0 0.0
    %6243 = vmatpush1.msra.mxu0 0.0
    %6244 = vmatprep.subr.mxu0 0.0
    %6245 = vmatpush1.msra.mxu0 0.0
    %6246 = vmatprep.subr.mxu0 0.0
    %6247 = vmatpush1.msra.mxu0 0.0
    %6248 = vmatprep.subr.mxu0 0.0
    %6249 = vmatpush1.msra.mxu0 0.0
    %6250 = vmatprep.subr.mxu0 0.0
    %6251 = vmatpush1.msra.mxu0 0.0
    %6252 = vmatprep.subr.mxu0 0.0
    %6253 = vmatpush1.msra.mxu0 0.0
    %6254 = vmatprep.subr.mxu0 0.0
    %6255 = vmatpush1.msra.mxu0 0.0
    %6256 = vmatprep.subr.mxu0 0.0
    %6257 = vmatpush1.msra.mxu0 0.0
    %6258 = vmatprep.subr.mxu0 0.0
    %6259 = vmatpush1.msra.mxu0 0.0
    %6260 = vmatprep.subr.mxu0 0.0
    %6261 = vmatpush1.msra.mxu0 0.0
    %6262 = vmatprep.subr.mxu0 0.0
    %6263 = vmatpush1.msra.mxu0 %v6227
    %6264 = vmatprep.subr.mxu0 0.0
    %6265 = vmatpush2.msra.mxu0 0.0
    %6266 = vmatprep.subr.mxu0 0.0
    %6267 = vmatpush2.msra.mxu0 0.0
    %6268 = vmatprep.subr.mxu0 0.0
    %6269 = vmatpush2.msra.mxu0 0.0
    %6270 = vmatprep.subr.mxu0 0.0
    %6271 = vmatpush2.msra.mxu0 0.0
    %6272 = vmatprep.subr.mxu0 0.0
    %6273 = vmatpush2.msra.mxu0 0.0
    %6274 = vmatprep.subr.mxu0 0.0
    %6275 = vmatpush2.msra.mxu0 0.0
    %6276 = vmatprep.subr.mxu0 0.0
    %6277 = vmatpush2.msra.mxu0 0.0
    %6278 = vmatprep.subr.mxu0 0.0
    %6279 = vmatpush2.msra.mxu0 0.0
    %6280 = vmatprep.subr.mxu0 0.0
    %6281 = vmatpush2.msra.mxu0 0.0
    %6282 = vmatprep.subr.mxu0 0.0
    %6283 = vmatpush2.msra.mxu0 0.0
    %6284 = vmatprep.subr.mxu0 0.0
    %6285 = vmatpush2.msra.mxu0 0.0
    %6286 = vmatprep.subr.mxu0 0.0
    %6287 = vmatpush2.msra.mxu0 0.0
    %6288 = vmatprep.subr.mxu0 0.0
    %6289 = vmatpush2.msra.mxu0 0.0
    %6290 = vmatprep.subr.mxu0 0.0
    %6291 = vmatpush2.msra.mxu0 0.0
    %6292 = vmatprep.subr.mxu0 0.0
    %6293 = vmatpush2.msra.mxu0 0.0
    %6294 = vmatprep.subr.mxu0 0.0
    %6295 = vmatpush2.msra.mxu0 0.0
    %6296 = vmatprep.mubr.f32.mxu0 0.0
    %6297 = vmatmul.mubr.f32.gmra.mxu0 %v6230
    %v6298 = vpop.f32.mrf.mxu0
    %v6299 = vadd.f32 0.0, %v6298
    %v6300 = vpop.f32.mrf.mxu0
    %6301 = vdwg.mxu0
    %v6302 = vld [vmem:[%s65] sm:$0xff]
    %v6303 = vld [vmem:[%s65 + $0x8] sm:$0xff]
    %v6304 = vld [vmem:[%s65 + $0x10] sm:$0xff]
    %v6305 = vld [vmem:[%s65 + $0x18] sm:$0xff]
    %v6306 = vld [vmem:[%s65 + $0x20] sm:$0xff]
    %v6307 = vld [vmem:[%s65 + $0x28] sm:$0xff]
    %v6308 = vld [vmem:[%s65 + $0x30] sm:$0xff]
    %v6309 = vld [vmem:[%s65 + $0x38] sm:$0xff]
    %v6310 = vld [vmem:[%s65 + $0x40] sm:$0xff]
    %v6311 = vld [vmem:[%s65 + $0x48] sm:$0xff]
    %v6312 = vld [vmem:[%s65 + $0x50] sm:$0xff]
    %v6313 = vld [vmem:[%s65 + $0x58] sm:$0xff]
    %v6314 = vld [vmem:[%s65 + $0x60] sm:$0xff]
    %v6315 = vld [vmem:[%s65 + $0x68] sm:$0xff]
    %v6316 = vld [vmem:[%s65 + $0x70] sm:$0xff]
    %v6317 = vld [vmem:[%s65 + $0x78] sm:$0xff]
    %s6318 = scalar_lea.vmem [#allocation37], 2
    %v6319 = vld [vmem:[%s6318] sm:$0x3]
    %v6321 = vsel %vm1410, %v6319, 0
    %6323 = vmatprep.subr.mxu0 0.0
    %6324 = vmatpush1.msra.mxu0 0.0
    %6325 = vmatprep.subr.mxu0 0.0
    %6326 = vmatpush1.msra.mxu0 0.0
    %6327 = vmatprep.subr.mxu0 0.0
    %6328 = vmatpush1.msra.mxu0 0.0
    %6329 = vmatprep.subr.mxu0 0.0
    %6330 = vmatpush1.msra.mxu0 0.0
    %6331 = vmatprep.subr.mxu0 0.0
    %6332 = vmatpush1.msra.mxu0 0.0
    %6333 = vmatprep.subr.mxu0 0.0
    %6334 = vmatpush1.msra.mxu0 0.0
    %6335 = vmatprep.subr.mxu0 0.0
    %6336 = vmatpush1.msra.mxu0 0.0
    %6337 = vmatprep.subr.mxu0 0.0
    %6338 = vmatpush1.msra.mxu0 0.0
    %6339 = vmatprep.subr.mxu0 0.0
    %6340 = vmatpush1.msra.mxu0 0.0
    %6341 = vmatprep.subr.mxu0 0.0
    %6342 = vmatpush1.msra.mxu0 0.0
    %6343 = vmatprep.subr.mxu0 0.0
    %6344 = vmatpush1.msra.mxu0 0.0
    %6345 = vmatprep.subr.mxu0 0.0
    %6346 = vmatpush1.msra.mxu0 0.0
    %6347 = vmatprep.subr.mxu0 0.0
    %6348 = vmatpush1.msra.mxu0 0.0
    %6349 = vmatprep.subr.mxu0 0.0
    %6350 = vmatpush1.msra.mxu0 0.0
    %6351 = vmatprep.subr.mxu0 0.0
    %6352 = vmatpush1.msra.mxu0 0.0
    %6353 = vmatprep.subr.mxu0 0.0
    %6354 = vmatpush1.msra.mxu0 %v6227
    %6355 = vmatprep.subr.mxu0 0.0
    %6356 = vmatpush2.msra.mxu0 0.0
    %6357 = vmatprep.subr.mxu0 0.0
    %6358 = vmatpush2.msra.mxu0 0.0
    %6359 = vmatprep.subr.mxu0 0.0
    %6360 = vmatpush2.msra.mxu0 0.0
    %6361 = vmatprep.subr.mxu0 0.0
    %6362 = vmatpush2.msra.mxu0 0.0
    %6363 = vmatprep.subr.mxu0 0.0
    %6364 = vmatpush2.msra.mxu0 0.0
    %6365 = vmatprep.subr.mxu0 0.0
    %6366 = vmatpush2.msra.mxu0 0.0
    %6367 = vmatprep.subr.mxu0 0.0
    %6368 = vmatpush2.msra.mxu0 0.0
    %6369 = vmatprep.subr.mxu0 0.0
    %6370 = vmatpush2.msra.mxu0 0.0
    %6371 = vmatprep.subr.mxu0 0.0
    %6372 = vmatpush2.msra.mxu0 0.0
    %6373 = vmatprep.subr.mxu0 0.0
    %6374 = vmatpush2.msra.mxu0 0.0
    %6375 = vmatprep.subr.mxu0 0.0
    %6376 = vmatpush2.msra.mxu0 0.0
    %6377 = vmatprep.subr.mxu0 0.0
    %6378 = vmatpush2.msra.mxu0 0.0
    %6379 = vmatprep.subr.mxu0 0.0
    %6380 = vmatpush2.msra.mxu0 0.0
    %6381 = vmatprep.subr.mxu0 0.0
    %6382 = vmatpush2.msra.mxu0 0.0
    %6383 = vmatprep.subr.mxu0 0.0
    %6384 = vmatpush2.msra.mxu0 0.0
    %6385 = vmatprep.subr.mxu0 0.0
    %6386 = vmatpush2.msra.mxu0 0.0
    %6387 = vmatprep.mubr.f32.mxu0 0.0
    %6388 = vmatmul.mubr.f32.gmra.mxu0 %v6321
    %v6389 = vpop.f32.mrf.mxu0
    %v6390 = vadd.f32 0.0, %v6389
    %v6391 = vpop.f32.mrf.mxu0
    %6392 = vdwg.mxu0
    %s6393 = scalar_lea.vmem %s65, 128
    %v6394 = vld [vmem:[%s6393] sm:$0xff]
    %v6395 = vld [vmem:[%s6393 + $0x8] sm:$0xff]
    %v6396 = vld [vmem:[%s6393 + $0x10] sm:$0xff]
    %v6397 = vld [vmem:[%s6393 + $0x18] sm:$0xff]
    %v6398 = vld [vmem:[%s6393 + $0x20] sm:$0xff]
    %v6399 = vld [vmem:[%s6393 + $0x28] sm:$0xff]
    %v6400 = vld [vmem:[%s6393 + $0x30] sm:$0xff]
    %v6401 = vld [vmem:[%s6393 + $0x38] sm:$0xff]
    %v6402 = vld [vmem:[%s6393 + $0x40] sm:$0xff]
    %v6403 = vld [vmem:[%s6393 + $0x48] sm:$0xff]
    %v6404 = vld [vmem:[%s6393 + $0x50] sm:$0xff]
    %v6405 = vld [vmem:[%s6393 + $0x58] sm:$0xff]
    %v6406 = vld [vmem:[%s6393 + $0x60] sm:$0xff]
    %v6407 = vld [vmem:[%s6393 + $0x68] sm:$0xff]
    %v6408 = vld [vmem:[%s6393 + $0x70] sm:$0xff]
    %v6409 = vld [vmem:[%s6393 + $0x78] sm:$0xff]
    %6410 = vmatprep.subr.mxu0 0.0
    %6411 = vmatpush1.msra.mxu0 %v6409
    %6412 = vmatprep.subr.mxu0 0.0
    %6413 = vmatpush1.msra.mxu0 %v6408
    %6414 = vmatprep.subr.mxu0 0.0
    %6415 = vmatpush1.msra.mxu0 %v6407
    %6416 = vmatprep.subr.mxu0 0.0
    %6417 = vmatpush1.msra.mxu0 %v6406
    %6418 = vmatprep.subr.mxu0 0.0
    %6419 = vmatpush1.msra.mxu0 %v6405
    %6420 = vmatprep.subr.mxu0 0.0
    %6421 = vmatpush1.msra.mxu0 %v6404
    %6422 = vmatprep.subr.mxu0 0.0
    %6423 = vmatpush1.msra.mxu0 %v6403
    %6424 = vmatprep.subr.mxu0 0.0
    %6425 = vmatpush1.msra.mxu0 %v6402
    %6426 = vmatprep.subr.mxu0 0.0
    %6427 = vmatpush1.msra.mxu0 %v6401
    %6428 = vmatprep.subr.mxu0 0.0
    %6429 = vmatpush1.msra.mxu0 %v6400
    %6430 = vmatprep.subr.mxu0 0.0
    %6431 = vmatpush1.msra.mxu0 %v6399
    %6432 = vmatprep.subr.mxu0 0.0
    %6433 = vmatpush1.msra.mxu0 %v6398
    %6434 = vmatprep.subr.mxu0 0.0
    %6435 = vmatpush1.msra.mxu0 %v6397
    %6436 = vmatprep.subr.mxu0 0.0
    %6437 = vmatpush1.msra.mxu0 %v6396
    %6438 = vmatprep.subr.mxu0 0.0
    %6439 = vmatpush1.msra.mxu0 %v6395
    %6440 = vmatprep.subr.mxu0 0.0
    %6441 = vmatpush1.msra.mxu0 %v6394
    %6442 = vmatprep.subr.mxu0 0.0
    %6443 = vmatpush2.msra.mxu0 0.0
    %6444 = vmatprep.subr.mxu0 0.0
    %6445 = vmatpush2.msra.mxu0 0.0
    %6446 = vmatprep.subr.mxu0 0.0
    %6447 = vmatpush2.msra.mxu0 0.0
    %6448 = vmatprep.subr.mxu0 0.0
    %6449 = vmatpush2.msra.mxu0 0.0
    %6450 = vmatprep.subr.mxu0 0.0
    %6451 = vmatpush2.msra.mxu0 0.0
    %6452 = vmatprep.subr.mxu0 0.0
    %6453 = vmatpush2.msra.mxu0 0.0
    %6454 = vmatprep.subr.mxu0 0.0
    %6455 = vmatpush2.msra.mxu0 0.0
    %6456 = vmatprep.subr.mxu0 0.0
    %6457 = vmatpush2.msra.mxu0 0.0
    %6458 = vmatprep.subr.mxu0 0.0
    %6459 = vmatpush2.msra.mxu0 0.0
    %6460 = vmatprep.subr.mxu0 0.0
    %6461 = vmatpush2.msra.mxu0 0.0
    %6462 = vmatprep.subr.mxu0 0.0
    %6463 = vmatpush2.msra.mxu0 0.0
    %6464 = vmatprep.subr.mxu0 0.0
    %6465 = vmatpush2.msra.mxu0 0.0
    %6466 = vmatprep.subr.mxu0 0.0
    %6467 = vmatpush2.msra.mxu0 0.0
    %6468 = vmatprep.subr.mxu0 0.0
    %6469 = vmatpush2.msra.mxu0 0.0
    %6470 = vmatprep.subr.mxu0 0.0
    %6471 = vmatpush2.msra.mxu0 0.0
    %6472 = vmatprep.subr.mxu0 0.0
    %6473 = vmatpush2.msra.mxu0 0.0
    %6474 = vmatprep.mubr.f32.mxu0 0.0
    %6475 = vmatmul.mubr.f32.gmra.mxu0 %v6390
    %v6476 = vpop.f32.mrf.mxu0
    %v6477 = vadd.f32 0.0, %v6476
    %v6478 = vpop.f32.mrf.mxu0
    %6479 = vdwg.mxu0
    %6480 = vmatprep.subr.mxu0 0.0
    %6481 = vmatpush1.msra.mxu0 %v6317
    %6482 = vmatprep.subr.mxu0 0.0
    %6483 = vmatpush1.msra.mxu0 %v6316
    %6484 = vmatprep.subr.mxu0 0.0
    %6485 = vmatpush1.msra.mxu0 %v6315
    %6486 = vmatprep.subr.mxu0 0.0
    %6487 = vmatpush1.msra.mxu0 %v6314
    %6488 = vmatprep.subr.mxu0 0.0
    %6489 = vmatpush1.msra.mxu0 %v6313
    %6490 = vmatprep.subr.mxu0 0.0
    %6491 = vmatpush1.msra.mxu0 %v6312
    %6492 = vmatprep.subr.mxu0 0.0
    %6493 = vmatpush1.msra.mxu0 %v6311
    %6494 = vmatprep.subr.mxu0 0.0
    %6495 = vmatpush1.msra.mxu0 %v6310
    %6496 = vmatprep.subr.mxu0 0.0
    %6497 = vmatpush1.msra.mxu0 %v6309
    %6498 = vmatprep.subr.mxu0 0.0
    %6499 = vmatpush1.msra.mxu0 %v6308
    %6500 = vmatprep.subr.mxu0 0.0
    %6501 = vmatpush1.msra.mxu0 %v6307
    %6502 = vmatprep.subr.mxu0 0.0
    %6503 = vmatpush1.msra.mxu0 %v6306
    %6504 = vmatprep.subr.mxu0 0.0
    %6505 = vmatpush1.msra.mxu0 %v6305
    %6506 = vmatprep.subr.mxu0 0.0
    %6507 = vmatpush1.msra.mxu0 %v6304
    %6508 = vmatprep.subr.mxu0 0.0
    %6509 = vmatpush1.msra.mxu0 %v6303
    %6510 = vmatprep.subr.mxu0 0.0
    %6511 = vmatpush1.msra.mxu0 %v6302
    %6512 = vmatprep.subr.mxu0 0.0
    %6513 = vmatpush2.msra.mxu0 0.0
    %6514 = vmatprep.subr.mxu0 0.0
    %6515 = vmatpush2.msra.mxu0 0.0
    %6516 = vmatprep.subr.mxu0 0.0
    %6517 = vmatpush2.msra.mxu0 0.0
    %6518 = vmatprep.subr.mxu0 0.0
    %6519 = vmatpush2.msra.mxu0 0.0
    %6520 = vmatprep.subr.mxu0 0.0
    %6521 = vmatpush2.msra.mxu0 0.0
    %6522 = vmatprep.subr.mxu0 0.0
    %6523 = vmatpush2.msra.mxu0 0.0
    %6524 = vmatprep.subr.mxu0 0.0
    %6525 = vmatpush2.msra.mxu0 0.0
    %6526 = vmatprep.subr.mxu0 0.0
    %6527 = vmatpush2.msra.mxu0 0.0
    %6528 = vmatprep.subr.mxu0 0.0
    %6529 = vmatpush2.msra.mxu0 0.0
    %6530 = vmatprep.subr.mxu0 0.0
    %6531 = vmatpush2.msra.mxu0 0.0
    %6532 = vmatprep.subr.mxu0 0.0
    %6533 = vmatpush2.msra.mxu0 0.0
    %6534 = vmatprep.subr.mxu0 0.0
    %6535 = vmatpush2.msra.mxu0 0.0
    %6536 = vmatprep.subr.mxu0 0.0
    %6537 = vmatpush2.msra.mxu0 0.0
    %6538 = vmatprep.subr.mxu0 0.0
    %6539 = vmatpush2.msra.mxu0 0.0
    %6540 = vmatprep.subr.mxu0 0.0
    %6541 = vmatpush2.msra.mxu0 0.0
    %6542 = vmatprep.subr.mxu0 0.0
    %6543 = vmatpush2.msra.mxu0 0.0
    %6544 = vmatprep.mubr.f32.mxu0 0.0
    %6545 = vmatmul.mubr.f32.gmra.mxu0 %v6299
    %v6546 = vpop.f32.mrf.mxu0
    %v6547 = vadd.f32 %v6477, %v6546
    %v6548 = vpop.f32.mrf.mxu0
    %6549 = vdwg.mxu0
    %s6550 = scalar_lea.vmem [#allocation37], 4
    %v6551 = vld [vmem:[%s6550] sm:$0x3]
    %v6553 = vsel %vm1410, %v6551, 0
    %6555 = vmatprep.subr.mxu0 0.0
    %6556 = vmatpush1.msra.mxu0 0.0
    %6557 = vmatprep.subr.mxu0 0.0
    %6558 = vmatpush1.msra.mxu0 0.0
    %6559 = vmatprep.subr.mxu0 0.0
    %6560 = vmatpush1.msra.mxu0 0.0
    %6561 = vmatprep.subr.mxu0 0.0
    %6562 = vmatpush1.msra.mxu0 0.0
    %6563 = vmatprep.subr.mxu0 0.0
    %6564 = vmatpush1.msra.mxu0 0.0
    %6565 = vmatprep.subr.mxu0 0.0
    %6566 = vmatpush1.msra.mxu0 0.0
    %6567 = vmatprep.subr.mxu0 0.0
    %6568 = vmatpush1.msra.mxu0 0.0
    %6569 = vmatprep.subr.mxu0 0.0
    %6570 = vmatpush1.msra.mxu0 0.0
    %6571 = vmatprep.subr.mxu0 0.0
    %6572 = vmatpush1.msra.mxu0 0.0
    %6573 = vmatprep.subr.mxu0 0.0
    %6574 = vmatpush1.msra.mxu0 0.0
    %6575 = vmatprep.subr.mxu0 0.0
    %6576 = vmatpush1.msra.mxu0 0.0
    %6577 = vmatprep.subr.mxu0 0.0
    %6578 = vmatpush1.msra.mxu0 0.0
    %6579 = vmatprep.subr.mxu0 0.0
    %6580 = vmatpush1.msra.mxu0 0.0
    %6581 = vmatprep.subr.mxu0 0.0
    %6582 = vmatpush1.msra.mxu0 0.0
    %6583 = vmatprep.subr.mxu0 0.0
    %6584 = vmatpush1.msra.mxu0 0.0
    %6585 = vmatprep.subr.mxu0 0.0
    %6586 = vmatpush1.msra.mxu0 %v6227
    %6587 = vmatprep.subr.mxu0 0.0
    %6588 = vmatpush2.msra.mxu0 0.0
    %6589 = vmatprep.subr.mxu0 0.0
    %6590 = vmatpush2.msra.mxu0 0.0
    %6591 = vmatprep.subr.mxu0 0.0
    %6592 = vmatpush2.msra.mxu0 0.0
    %6593 = vmatprep.subr.mxu0 0.0
    %6594 = vmatpush2.msra.mxu0 0.0
    %6595 = vmatprep.subr.mxu0 0.0
    %6596 = vmatpush2.msra.mxu0 0.0
    %6597 = vmatprep.subr.mxu0 0.0
    %6598 = vmatpush2.msra.mxu0 0.0
    %6599 = vmatprep.subr.mxu0 0.0
    %6600 = vmatpush2.msra.mxu0 0.0
    %6601 = vmatprep.subr.mxu0 0.0
    %6602 = vmatpush2.msra.mxu0 0.0
    %6603 = vmatprep.subr.mxu0 0.0
    %6604 = vmatpush2.msra.mxu0 0.0
    %6605 = vmatprep.subr.mxu0 0.0
    %6606 = vmatpush2.msra.mxu0 0.0
    %6607 = vmatprep.subr.mxu0 0.0
    %6608 = vmatpush2.msra.mxu0 0.0
    %6609 = vmatprep.subr.mxu0 0.0
    %6610 = vmatpush2.msra.mxu0 0.0
    %6611 = vmatprep.subr.mxu0 0.0
    %6612 = vmatpush2.msra.mxu0 0.0
    %6613 = vmatprep.subr.mxu0 0.0
    %6614 = vmatpush2.msra.mxu0 0.0
    %6615 = vmatprep.subr.mxu0 0.0
    %6616 = vmatpush2.msra.mxu0 0.0
    %6617 = vmatprep.subr.mxu0 0.0
    %6618 = vmatpush2.msra.mxu0 0.0
    %6619 = vmatprep.mubr.f32.mxu0 0.0
    %6620 = vmatmul.mubr.f32.gmra.mxu0 %v6553
    %v6621 = vpop.f32.mrf.mxu0
    %v6622 = vadd.f32 0.0, %v6621
    %v6623 = vpop.f32.mrf.mxu0
    %6624 = vdwg.mxu0
    %s6625 = scalar_lea.vmem %s65, 256
    %v6626 = vld [vmem:[%s6625] sm:$0xff]
    %v6627 = vld [vmem:[%s6625 + $0x8] sm:$0xff]
    %v6628 = vld [vmem:[%s6625 + $0x10] sm:$0xff]
    %v6629 = vld [vmem:[%s6625 + $0x18] sm:$0xff]
    %v6630 = vld [vmem:[%s6625 + $0x20] sm:$0xff]
    %v6631 = vld [vmem:[%s6625 + $0x28] sm:$0xff]
    %v6632 = vld [vmem:[%s6625 + $0x30] sm:$0xff]
    %v6633 = vld [vmem:[%s6625 + $0x38] sm:$0xff]
    %v6634 = vld [vmem:[%s6625 + $0x40] sm:$0xff]
    %v6635 = vld [vmem:[%s6625 + $0x48] sm:$0xff]
    %v6636 = vld [vmem:[%s6625 + $0x50] sm:$0xff]
    %v6637 = vld [vmem:[%s6625 + $0x58] sm:$0xff]
    %v6638 = vld [vmem:[%s6625 + $0x60] sm:$0xff]
    %v6639 = vld [vmem:[%s6625 + $0x68] sm:$0xff]
    %v6640 = vld [vmem:[%s6625 + $0x70] sm:$0xff]
    %v6641 = vld [vmem:[%s6625 + $0x78] sm:$0xff]
    %6642 = vmatprep.subr.mxu0 0.0
    %6643 = vmatpush1.msra.mxu0 %v6641
    %6644 = vmatprep.subr.mxu0 0.0
    %6645 = vmatpush1.msra.mxu0 %v6640
    %6646 = vmatprep.subr.mxu0 0.0
    %6647 = vmatpush1.msra.mxu0 %v6639
    %6648 = vmatprep.subr.mxu0 0.0
    %6649 = vmatpush1.msra.mxu0 %v6638
    %6650 = vmatprep.subr.mxu0 0.0
    %6651 = vmatpush1.msra.mxu0 %v6637
    %6652 = vmatprep.subr.mxu0 0.0
    %6653 = vmatpush1.msra.mxu0 %v6636
    %6654 = vmatprep.subr.mxu0 0.0
    %6655 = vmatpush1.msra.mxu0 %v6635
    %6656 = vmatprep.subr.mxu0 0.0
    %6657 = vmatpush1.msra.mxu0 %v6634
    %6658 = vmatprep.subr.mxu0 0.0
    %6659 = vmatpush1.msra.mxu0 %v6633
    %6660 = vmatprep.subr.mxu0 0.0
    %6661 = vmatpush1.msra.mxu0 %v6632
    %6662 = vmatprep.subr.mxu0 0.0
    %6663 = vmatpush1.msra.mxu0 %v6631
    %6664 = vmatprep.subr.mxu0 0.0
    %6665 = vmatpush1.msra.mxu0 %v6630
    %6666 = vmatprep.subr.mxu0 0.0
    %6667 = vmatpush1.msra.mxu0 %v6629
    %6668 = vmatprep.subr.mxu0 0.0
    %6669 = vmatpush1.msra.mxu0 %v6628
    %6670 = vmatprep.subr.mxu0 0.0
    %6671 = vmatpush1.msra.mxu0 %v6627
    %6672 = vmatprep.subr.mxu0 0.0
    %6673 = vmatpush1.msra.mxu0 %v6626
    %6674 = vmatprep.subr.mxu0 0.0
    %6675 = vmatpush2.msra.mxu0 0.0
    %6676 = vmatprep.subr.mxu0 0.0
    %6677 = vmatpush2.msra.mxu0 0.0
    %6678 = vmatprep.subr.mxu0 0.0
    %6679 = vmatpush2.msra.mxu0 0.0
    %6680 = vmatprep.subr.mxu0 0.0
    %6681 = vmatpush2.msra.mxu0 0.0
    %6682 = vmatprep.subr.mxu0 0.0
    %6683 = vmatpush2.msra.mxu0 0.0
    %6684 = vmatprep.subr.mxu0 0.0
    %6685 = vmatpush2.msra.mxu0 0.0
    %6686 = vmatprep.subr.mxu0 0.0
    %6687 = vmatpush2.msra.mxu0 0.0
    %6688 = vmatprep.subr.mxu0 0.0
    %6689 = vmatpush2.msra.mxu0 0.0
    %6690 = vmatprep.subr.mxu0 0.0
    %6691 = vmatpush2.msra.mxu0 0.0
    %6692 = vmatprep.subr.mxu0 0.0
    %6693 = vmatpush2.msra.mxu0 0.0
    %6694 = vmatprep.subr.mxu0 0.0
    %6695 = vmatpush2.msra.mxu0 0.0
    %6696 = vmatprep.subr.mxu0 0.0
    %6697 = vmatpush2.msra.mxu0 0.0
    %6698 = vmatprep.subr.mxu0 0.0
    %6699 = vmatpush2.msra.mxu0 0.0
    %6700 = vmatprep.subr.mxu0 0.0
    %6701 = vmatpush2.msra.mxu0 0.0
    %6702 = vmatprep.subr.mxu0 0.0
    %6703 = vmatpush2.msra.mxu0 0.0
    %6704 = vmatprep.subr.mxu0 0.0
    %6705 = vmatpush2.msra.mxu0 0.0
    %6706 = vmatprep.mubr.f32.mxu0 0.0
    %6707 = vmatmul.mubr.f32.gmra.mxu0 %v6622
    %v6708 = vpop.f32.mrf.mxu0
    %v6709 = vadd.f32 0.0, %v6708
    %v6710 = vpop.f32.mrf.mxu0
    %6711 = vdwg.mxu0
    %v6712 = vadd.f32 %v6547, %v6709
    %s6713 = scalar_lea.vmem [#allocation37], 6
    %v6714 = vld [vmem:[%s6713] sm:$0x3]
    %v6716 = vsel %vm1410, %v6714, 0
    %6718 = vmatprep.subr.mxu0 0.0
    %6719 = vmatpush1.msra.mxu0 0.0
    %6720 = vmatprep.subr.mxu0 0.0
    %6721 = vmatpush1.msra.mxu0 0.0
    %6722 = vmatprep.subr.mxu0 0.0
    %6723 = vmatpush1.msra.mxu0 0.0
    %6724 = vmatprep.subr.mxu0 0.0
    %6725 = vmatpush1.msra.mxu0 0.0
    %6726 = vmatprep.subr.mxu0 0.0
    %6727 = vmatpush1.msra.mxu0 0.0
    %6728 = vmatprep.subr.mxu0 0.0
    %6729 = vmatpush1.msra.mxu0 0.0
    %6730 = vmatprep.subr.mxu0 0.0
    %6731 = vmatpush1.msra.mxu0 0.0
    %6732 = vmatprep.subr.mxu0 0.0
    %6733 = vmatpush1.msra.mxu0 0.0
    %6734 = vmatprep.subr.mxu0 0.0
    %6735 = vmatpush1.msra.mxu0 0.0
    %6736 = vmatprep.subr.mxu0 0.0
    %6737 = vmatpush1.msra.mxu0 0.0
    %6738 = vmatprep.subr.mxu0 0.0
    %6739 = vmatpush1.msra.mxu0 0.0
    %6740 = vmatprep.subr.mxu0 0.0
    %6741 = vmatpush1.msra.mxu0 0.0
    %6742 = vmatprep.subr.mxu0 0.0
    %6743 = vmatpush1.msra.mxu0 0.0
    %6744 = vmatprep.subr.mxu0 0.0
    %6745 = vmatpush1.msra.mxu0 0.0
    %6746 = vmatprep.subr.mxu0 0.0
    %6747 = vmatpush1.msra.mxu0 0.0
    %6748 = vmatprep.subr.mxu0 0.0
    %6749 = vmatpush1.msra.mxu0 %v6227
    %6750 = vmatprep.subr.mxu0 0.0
    %6751 = vmatpush2.msra.mxu0 0.0
    %6752 = vmatprep.subr.mxu0 0.0
    %6753 = vmatpush2.msra.mxu0 0.0
    %6754 = vmatprep.subr.mxu0 0.0
    %6755 = vmatpush2.msra.mxu0 0.0
    %6756 = vmatprep.subr.mxu0 0.0
    %6757 = vmatpush2.msra.mxu0 0.0
    %6758 = vmatprep.subr.mxu0 0.0
    %6759 = vmatpush2.msra.mxu0 0.0
    %6760 = vmatprep.subr.mxu0 0.0
    %6761 = vmatpush2.msra.mxu0 0.0
    %6762 = vmatprep.subr.mxu0 0.0
    %6763 = vmatpush2.msra.mxu0 0.0
    %6764 = vmatprep.subr.mxu0 0.0
    %6765 = vmatpush2.msra.mxu0 0.0
    %6766 = vmatprep.subr.mxu0 0.0
    %6767 = vmatpush2.msra.mxu0 0.0
    %6768 = vmatprep.subr.mxu0 0.0
    %6769 = vmatpush2.msra.mxu0 0.0
    %6770 = vmatprep.subr.mxu0 0.0
    %6771 = vmatpush2.msra.mxu0 0.0
    %6772 = vmatprep.subr.mxu0 0.0
    %6773 = vmatpush2.msra.mxu0 0.0
    %6774 = vmatprep.subr.mxu0 0.0
    %6775 = vmatpush2.msra.mxu0 0.0
    %6776 = vmatprep.subr.mxu0 0.0
    %6777 = vmatpush2.msra.mxu0 0.0
    %6778 = vmatprep.subr.mxu0 0.0
    %6779 = vmatpush2.msra.mxu0 0.0
    %6780 = vmatprep.subr.mxu0 0.0
    %6781 = vmatpush2.msra.mxu0 0.0
    %6782 = vmatprep.mubr.f32.mxu0 0.0
    %6783 = vmatmul.mubr.f32.gmra.mxu0 %v6716
    %v6784 = vpop.f32.mrf.mxu0
    %v6785 = vadd.f32 0.0, %v6784
    %v6786 = vpop.f32.mrf.mxu0
    %6787 = vdwg.mxu0
    %s6788 = scalar_lea.vmem %s65, 384
    %v6789 = vld [vmem:[%s6788] sm:$0xff]
    %v6790 = vld [vmem:[%s6788 + $0x8] sm:$0xff]
    %v6791 = vld [vmem:[%s6788 + $0x10] sm:$0xff]
    %v6792 = vld [vmem:[%s6788 + $0x18] sm:$0xff]
    %v6793 = vld [vmem:[%s6788 + $0x20] sm:$0xff]
    %v6794 = vld [vmem:[%s6788 + $0x28] sm:$0xff]
    %v6795 = vld [vmem:[%s6788 + $0x30] sm:$0xff]
    %v6796 = vld [vmem:[%s6788 + $0x38] sm:$0xff]
    %v6797 = vld [vmem:[%s6788 + $0x40] sm:$0xff]
    %v6798 = vld [vmem:[%s6788 + $0x48] sm:$0xff]
    %v6799 = vld [vmem:[%s6788 + $0x50] sm:$0xff]
    %v6800 = vld [vmem:[%s6788 + $0x58] sm:$0xff]
    %v6801 = vld [vmem:[%s6788 + $0x60] sm:$0xff]
    %v6802 = vld [vmem:[%s6788 + $0x68] sm:$0xff]
    %v6803 = vld [vmem:[%s6788 + $0x70] sm:$0xff]
    %v6804 = vld [vmem:[%s6788 + $0x78] sm:$0xff]
    %6805 = vmatprep.subr.mxu0 0.0
    %6806 = vmatpush1.msra.mxu0 %v6804
    %6807 = vmatprep.subr.mxu0 0.0
    %6808 = vmatpush1.msra.mxu0 %v6803
    %6809 = vmatprep.subr.mxu0 0.0
    %6810 = vmatpush1.msra.mxu0 %v6802
    %6811 = vmatprep.subr.mxu0 0.0
    %6812 = vmatpush1.msra.mxu0 %v6801
    %6813 = vmatprep.subr.mxu0 0.0
    %6814 = vmatpush1.msra.mxu0 %v6800
    %6815 = vmatprep.subr.mxu0 0.0
    %6816 = vmatpush1.msra.mxu0 %v6799
    %6817 = vmatprep.subr.mxu0 0.0
    %6818 = vmatpush1.msra.mxu0 %v6798
    %6819 = vmatprep.subr.mxu0 0.0
    %6820 = vmatpush1.msra.mxu0 %v6797
    %6821 = vmatprep.subr.mxu0 0.0
    %6822 = vmatpush1.msra.mxu0 %v6796
    %6823 = vmatprep.subr.mxu0 0.0
    %6824 = vmatpush1.msra.mxu0 %v6795
    %6825 = vmatprep.subr.mxu0 0.0
    %6826 = vmatpush1.msra.mxu0 %v6794
    %6827 = vmatprep.subr.mxu0 0.0
    %6828 = vmatpush1.msra.mxu0 %v6793
    %6829 = vmatprep.subr.mxu0 0.0
    %6830 = vmatpush1.msra.mxu0 %v6792
    %6831 = vmatprep.subr.mxu0 0.0
    %6832 = vmatpush1.msra.mxu0 %v6791
    %6833 = vmatprep.subr.mxu0 0.0
    %6834 = vmatpush1.msra.mxu0 %v6790
    %6835 = vmatprep.subr.mxu0 0.0
    %6836 = vmatpush1.msra.mxu0 %v6789
    %6837 = vmatprep.subr.mxu0 0.0
    %6838 = vmatpush2.msra.mxu0 0.0
    %6839 = vmatprep.subr.mxu0 0.0
    %6840 = vmatpush2.msra.mxu0 0.0
    %6841 = vmatprep.subr.mxu0 0.0
    %6842 = vmatpush2.msra.mxu0 0.0
    %6843 = vmatprep.subr.mxu0 0.0
    %6844 = vmatpush2.msra.mxu0 0.0
    %6845 = vmatprep.subr.mxu0 0.0
    %6846 = vmatpush2.msra.mxu0 0.0
    %6847 = vmatprep.subr.mxu0 0.0
    %6848 = vmatpush2.msra.mxu0 0.0
    %6849 = vmatprep.subr.mxu0 0.0
    %6850 = vmatpush2.msra.mxu0 0.0
    %6851 = vmatprep.subr.mxu0 0.0
    %6852 = vmatpush2.msra.mxu0 0.0
    %6853 = vmatprep.subr.mxu0 0.0
    %6854 = vmatpush2.msra.mxu0 0.0
    %6855 = vmatprep.subr.mxu0 0.0
    %6856 = vmatpush2.msra.mxu0 0.0
    %6857 = vmatprep.subr.mxu0 0.0
    %6858 = vmatpush2.msra.mxu0 0.0
    %6859 = vmatprep.subr.mxu0 0.0
    %6860 = vmatpush2.msra.mxu0 0.0
    %6861 = vmatprep.subr.mxu0 0.0
    %6862 = vmatpush2.msra.mxu0 0.0
    %6863 = vmatprep.subr.mxu0 0.0
    %6864 = vmatpush2.msra.mxu0 0.0
    %6865 = vmatprep.subr.mxu0 0.0
    %6866 = vmatpush2.msra.mxu0 0.0
    %6867 = vmatprep.subr.mxu0 0.0
    %6868 = vmatpush2.msra.mxu0 0.0
    %6869 = vmatprep.mubr.f32.mxu0 0.0
    %6870 = vmatmul.mubr.f32.gmra.mxu0 %v6785
    %v6871 = vpop.f32.mrf.mxu0
    %v6872 = vadd.f32 0.0, %v6871
    %v6873 = vpop.f32.mrf.mxu0
    %6874 = vdwg.mxu0
    %v6875 = vadd.f32 %v6712, %v6872
    %v6876 = vld [vmem:[%s67] sm:$0x1]
    %v6878 = vlaneseq
    %v6879 = vshrl.u32 %v6878, 7
    %v6880 = vsub.s32 0, %v6879
    %v6881 = vrot.slane %v6876, %v6880
    %v6883 = vadd.f32 %v6875, %v6881
    %v6884 = vmax.f32 %v6883, 0.0
    %vm6885 = vcmask 517120
    %v6886 = vsel %vm6885, %v6884, 0.0
    %v6887 = vrot.slane %v6886, 4
    %v6888 = vadd.f32 %v6886, %v6887
    %v6889 = vrot.slane %v6888, 2
    %v6890 = vadd.f32 %v6888, %v6889
    %v6891 = vrot.slane %v6890, 1
    %v6892 = vadd.f32 %v6890, %v6891
    %v6893 = vmul.f32 %v6892, 0.5
    %v6894 = vsub.f32 %v6884, %v6893
    %v6895 = vmul.f32 %v6894, %v6894
    %v6896 = vsel %vm6885, %v6895, 0.0
    %v6897 = vrot.slane %v6896, 4
    %v6898 = vadd.f32 %v6896, %v6897
    %v6899 = vrot.slane %v6898, 2
    %v6900 = vadd.f32 %v6898, %v6899
    %v6901 = vrot.slane %v6900, 1
    %v6902 = vadd.f32 %v6900, %v6901
    %v6903 = vmul.f32 %v6902, 0.5
    %v6904 = vld [vmem:[%s69] sm:$0x3]
    %v6905 = vadd.f32 %v6903, 1e-05
    %v6906 = vrsqrt.pop %v6905
    %v6907 = vmul.f32 %v6904, %v6906
    %v6908 = vlaneseq
    %v6909 = vshrl.u32 %v6908, 7
    %v6910 = vsub.s32 0, %v6909
    %v6911 = vrot.slane %v6907, %v6910
    %v6912 = vmul.f32 %v6894, %v6911
    %v6913 = vlaneseq
    %v6914 = vshrl.u32 %v6913, 7
    %v6915 = vsub.s32 1, %v6914
    %v6916 = vrot.slane %v6904, %v6915
    %v6917 = vadd.f32 %v6912, %v6916
    %v6918 = vld [vmem:[%s71] sm:$0xff]
    %v6919 = vld [vmem:[%s71 + $0x8] sm:$0xff]
    %v6920 = vld [vmem:[%s71 + $0x10] sm:$0xff]
    %v6921 = vld [vmem:[%s71 + $0x18] sm:$0xff]
    %v6922 = vld [vmem:[%s71 + $0x20] sm:$0xff]
    %v6923 = vld [vmem:[%s71 + $0x28] sm:$0xff]
    %v6924 = vld [vmem:[%s71 + $0x30] sm:$0xff]
    %v6925 = vld [vmem:[%s71 + $0x38] sm:$0xff]
    %v6926 = vld [vmem:[%s73] sm:$0x1]
    %v6928 = vlaneseq
    %v6929 = vshrl.u32 %v6928, 7
    %v6930 = vsub.s32 0, %v6929
    %v6931 = vrot.slane %v6926, %v6930
    %v6934 = vsel %vm489, %v6917, 0
    %6936 = vmatprep.subr.mxu0 0.0
    %6937 = vmatpush1.msra.mxu0 0.0
    %6938 = vmatprep.subr.mxu0 0.0
    %6939 = vmatpush1.msra.mxu0 0.0
    %6940 = vmatprep.subr.mxu0 0.0
    %6941 = vmatpush1.msra.mxu0 0.0
    %6942 = vmatprep.subr.mxu0 0.0
    %6943 = vmatpush1.msra.mxu0 0.0
    %6944 = vmatprep.subr.mxu0 0.0
    %6945 = vmatpush1.msra.mxu0 0.0
    %6946 = vmatprep.subr.mxu0 0.0
    %6947 = vmatpush1.msra.mxu0 0.0
    %6948 = vmatprep.subr.mxu0 0.0
    %6949 = vmatpush1.msra.mxu0 0.0
    %6950 = vmatprep.subr.mxu0 0.0
    %6951 = vmatpush1.msra.mxu0 0.0
    %6952 = vmatprep.subr.mxu0 0.0
    %6953 = vmatpush1.msra.mxu0 %v6925
    %6954 = vmatprep.subr.mxu0 0.0
    %6955 = vmatpush1.msra.mxu0 %v6924
    %6956 = vmatprep.subr.mxu0 0.0
    %6957 = vmatpush1.msra.mxu0 %v6923
    %6958 = vmatprep.subr.mxu0 0.0
    %6959 = vmatpush1.msra.mxu0 %v6922
    %6960 = vmatprep.subr.mxu0 0.0
    %6961 = vmatpush1.msra.mxu0 %v6921
    %6962 = vmatprep.subr.mxu0 0.0
    %6963 = vmatpush1.msra.mxu0 %v6920
    %6964 = vmatprep.subr.mxu0 0.0
    %6965 = vmatpush1.msra.mxu0 %v6919
    %6966 = vmatprep.subr.mxu0 0.0
    %6967 = vmatpush1.msra.mxu0 %v6918
    %6968 = vmatprep.subr.mxu0 0.0
    %6969 = vmatpush2.msra.mxu0 0.0
    %6970 = vmatprep.subr.mxu0 0.0
    %6971 = vmatpush2.msra.mxu0 0.0
    %6972 = vmatprep.subr.mxu0 0.0
    %6973 = vmatpush2.msra.mxu0 0.0
    %6974 = vmatprep.subr.mxu0 0.0
    %6975 = vmatpush2.msra.mxu0 0.0
    %6976 = vmatprep.subr.mxu0 0.0
    %6977 = vmatpush2.msra.mxu0 0.0
    %6978 = vmatprep.subr.mxu0 0.0
    %6979 = vmatpush2.msra.mxu0 0.0
    %6980 = vmatprep.subr.mxu0 0.0
    %6981 = vmatpush2.msra.mxu0 0.0
    %6982 = vmatprep.subr.mxu0 0.0
    %6983 = vmatpush2.msra.mxu0 0.0
    %6984 = vmatprep.subr.mxu0 0.0
    %6985 = vmatpush2.msra.mxu0 0.0
    %6986 = vmatprep.subr.mxu0 0.0
    %6987 = vmatpush2.msra.mxu0 0.0
    %6988 = vmatprep.subr.mxu0 0.0
    %6989 = vmatpush2.msra.mxu0 0.0
    %6990 = vmatprep.subr.mxu0 0.0
    %6991 = vmatpush2.msra.mxu0 0.0
    %6992 = vmatprep.subr.mxu0 0.0
    %6993 = vmatpush2.msra.mxu0 0.0
    %6994 = vmatprep.subr.mxu0 0.0
    %6995 = vmatpush2.msra.mxu0 0.0
    %6996 = vmatprep.subr.mxu0 0.0
    %6997 = vmatpush2.msra.mxu0 0.0
    %6998 = vmatprep.subr.mxu0 0.0
    %6999 = vmatpush2.msra.mxu0 0.0
    %7000 = vmatprep.mubr.f32.mxu0 0.0
    %7001 = vmatmul.mubr.f32.gmra.mxu0 %v6934
    %v7002 = vpop.f32.mrf.mxu0
    %v7003 = vadd.f32 %v6931, %v7002
    %v7004 = vpop.f32.mrf.mxu0
    %7005 = vdwg.mxu0
    %vm7006 = vcmask 74752
    %7007 = vst.msk [vmem:[#allocation38] sm:$0x3] %vm7006, %v7003
    // Predicated region
    $region242: #{model_forward.1} parent=1 // pred_check
      _
    $region243: #{model_forward.1} parent=1 // pred_check_branch
      %7009 = sbr.rel (0) target = $region245
    $region244: #{model_forward.1} parent=1 // pred_region
      %s7011 = ssub.s32 32, 32
      %7012 = vsyncadd [#allocation4], %s7011
      %s7014 = sshll.u32 [#allocation38], 4
      %s7015 = int_to_ptr.vmem [resolvable:$true] %s7014
      %7017 = dma.vmem_to_hbm [thread:$0]  %s7015, 32, %s75, [#allocation4]
    $region245: #{model_forward.1} parent=1 // pred_fallthru
      _
    // Predicated region
    $region246: #{model_forward.1} parent=1 // pred_check
      _
    $region247: #{model_forward.1} parent=1 // pred_check_branch
      %7019 = sbr.rel (0) target = $region249
    $region248: #{model_forward.1} parent=1 // pred_region
      %7020 = dma.done [#allocation4], 32
    $region249: #{model_forward.1} parent=1 // pred_fallthru
      _
    %7021 = vsyncpa [#allocation3], 1
    %7022 = vsyncpa [#allocation6], 1
    %7023 = vsyncpa [#allocation9], 1
    %7024 = vsyncpa [#allocation12], 1
    %7025 = vsyncpa [#allocation15], 1
    %7026 = vsyncpa [#allocation18], 1
    %7027 = vsyncpa [#allocation21], 1
    %7028 = vsyncpa [#allocation24], 1
    %7029 = vsyncpa [#allocation27], 1
    %7030 = vsyncpa [#allocation30], 1
    %7031 = vsyncpa [#allocation33], 1
    %7032 = vsyncpa [#allocation36], 1
    %7033 = vsyncpa [#allocation4], 1

</llo_original>
